<compile_context>
chip_gen: v5e
topology: v5e:2x2
jax: 0.10.0
libtpu: 0.0.40
codegen_flags: <defaults>
</compile_context>

<pallas_src>
import jax
import jax.numpy as jnp
from jax.experimental import pallas as pl
from jax.experimental.pallas import tpu as pltpu


OC_PAD = 128                   # lane-dense output width for every matmul
K1P = 32                       # conv1 im2col K (25) padded to bf16 sublane tile
K2P = 160                      # conv2 im2col K (150) padded to bf16 sublane tile
TM_TARGET = 2048               # max rows per grid block for the conv1 kernel
BB_TARGET = 128                # max batch rows per grid block for kernel B
VMEM_LIMIT = 32 * 1024 * 1024  # explicit scoped-VMEM budget (portable to v7x)


def _round_up(v, m):
    return -(-v // m) * m


def _pick_tm(m):
    """Row tile: multiple of 8, capped, and >=2 grid blocks whenever possible."""
    if m <= 8:
        return m
    return min(TM_TARGET, _round_up(_round_up(m, 2) // 2, 8))


def _pick_bb(n):
    """Batch tile for kernel B: full batch if small, else multiple of 8 with >=2 blocks."""
    if n < 16:
        return n
    return min(BB_TARGET, _round_up(_round_up(n, 2) // 2, 8))


# ----------------------------- Pallas kernels ------------------------------


def _conv_pool_kernel(t_ref, w_ref, b_ref, o_ref):
    """Fused conv1 matmul + bias + ReLU + 2x2 max-pool (running max).

    t_ref: (4, TM, K1P) bf16 -- 4 pool taps of the im2col patches
    w_ref: (K1P, 128) bf16   -- conv weights, out channels zero-padded to 128
    b_ref: (1, 128)  f32
    o_ref: (TM, 128) bf16    -- pooled activations, lane-dense, bf16 store
    """
    w = w_ref[...]
    b = b_ref[...]
    y = jnp.maximum(jnp.dot(t_ref[0], w, preferred_element_type=jnp.float32) + b, 0.0)
    for i in range(1, 4):
        y = jnp.maximum(
            y, jnp.maximum(jnp.dot(t_ref[i], w, preferred_element_type=jnp.float32) + b, 0.0))
    o_ref[...] = y.astype(o_ref.dtype)


def _conv2_mlp_kernel(t_ref, w2_ref, b2_ref, w1f_ref, b1f_ref,
                      w2f_ref, b2f_ref, w3f_ref, b3f_ref, o_ref):
    """Fused conv2 (+bias+ReLU+pool) -> fc1 -> fc2 -> fc3.

    The NCHW flatten is folded into w1f: for each of the 25 output positions p,
    w1f[p] is a (128,128) slice whose rows c<16 are fc1_w[c*25 + p, :], so
    fc1 = sum_p pooled_p @ w1f[p]  -- no in-kernel reshape/transpose needed.

    t_ref : (4, 25, BB, K2P) bf16 -- 4 pool taps x 25 output positions
    w2_ref: (K2P, 128) bf16, w1f_ref: (25, 128, 128) bf16,
    w2f_ref/w3f_ref: (128, 128) bf16, biases (1, 128) f32 -- all VMEM-resident.
    o_ref : (BB, 128) f32 -- logits in [:, :10]
    """
    w2 = w2_ref[...]
    b2 = b2_ref[...]
    a1 = None
    for p in range(25):
        h = jnp.maximum(
            jnp.dot(t_ref[0, p], w2, preferred_element_type=jnp.float32) + b2, 0.0)
        for i in range(1, 4):
            h = jnp.maximum(
                h, jnp.maximum(
                    jnp.dot(t_ref[i, p], w2, preferred_element_type=jnp.float32) + b2, 0.0))
        c = jnp.dot(h.astype(jnp.bfloat16), w1f_ref[p], preferred_element_type=jnp.float32)
        a1 = c if a1 is None else a1 + c
    a1 = jnp.maximum(a1 + b1f_ref[...], 0.0).astype(jnp.bfloat16)
    a2 = jnp.maximum(
        jnp.dot(a1, w2f_ref[...], preferred_element_type=jnp.float32) + b2f_ref[...],
        0.0).astype(jnp.bfloat16)
    a3 = jnp.dot(a2, w3f_ref[...], preferred_element_type=jnp.float32) + b3f_ref[...]
    o_ref[...] = a3.astype(o_ref.dtype)


# ----------------------------- pallas_call wrappers --------------------------


def conv1_relu_pool(taps, w, b):
    """taps: [4, M, K1P] bf16 -> [M, 128] bf16 (real channels in [:, :6])."""
    _, m, k = taps.shape
    tm = _pick_tm(m)
    return pl.pallas_call(
        _conv_pool_kernel,
        out_shape=jax.ShapeDtypeStruct((m, OC_PAD), jnp.bfloat16),
        grid=(pl.cdiv(m, tm),),
        in_specs=[
            pl.BlockSpec((4, tm, k), lambda i: (0, i, 0)),
            pl.BlockSpec((k, OC_PAD), lambda i: (0, 0)),      # resident
            pl.BlockSpec((1, OC_PAD), lambda i: (0, 0)),      # resident
        ],
        out_specs=pl.BlockSpec((tm, OC_PAD), lambda i: (i, 0)),
        compiler_params=pltpu.CompilerParams(
            dimension_semantics=("parallel",),
            vmem_limit_bytes=VMEM_LIMIT),
    )(taps, w, b)


def conv2_mlp(taps, p):
    """taps: [4, 25, N, K2P] bf16 -> [N, 128] f32 (logits in [:, :10])."""
    _, _, n, k = taps.shape
    bb = _pick_bb(n)
    return pl.pallas_call(
        _conv2_mlp_kernel,
        out_shape=jax.ShapeDtypeStruct((n, OC_PAD), jnp.float32),
        grid=(pl.cdiv(n, bb),),
        in_specs=[
            pl.BlockSpec((4, 25, bb, k), lambda i: (0, 0, i, 0)),
            pl.BlockSpec((k, OC_PAD), lambda i: (0, 0)),            # conv2 w (resident)
            pl.BlockSpec((1, OC_PAD), lambda i: (0, 0)),            # conv2 b
            pl.BlockSpec((25, OC_PAD, OC_PAD), lambda i: (0, 0, 0)),  # fc1 (folded flatten)
            pl.BlockSpec((1, OC_PAD), lambda i: (0, 0)),
            pl.BlockSpec((OC_PAD, OC_PAD), lambda i: (0, 0)),       # fc2
            pl.BlockSpec((1, OC_PAD), lambda i: (0, 0)),
            pl.BlockSpec((OC_PAD, OC_PAD), lambda i: (0, 0)),       # fc3
            pl.BlockSpec((1, OC_PAD), lambda i: (0, 0)),
        ],
        out_specs=pl.BlockSpec((bb, OC_PAD), lambda i: (i, 0)),
        compiler_params=pltpu.CompilerParams(
            dimension_semantics=("parallel",),
            vmem_limit_bytes=VMEM_LIMIT),
    )(taps, p["c2_w"], p["c2_b"], p["fc1_w"], p["fc1_b"],
      p["fc2_w"], p["fc2_b"], p["fc3_w"], p["fc3_b"])


# ----------------------------- wrapper-side im2col ---------------------------


def _build_conv1_taps(xb):
    """xb: [N, 32, 32] bf16 -> [4, N*14*14, K1P] bf16 (direct strided slices)."""
    n, h, w = xb.shape
    kh_, kw_ = 5, 5
    oh, ow = h - kh_ + 1, w - kw_ + 1
    assert oh % 2 == 0 and ow % 2 == 0, "pool-tap construction needs even conv output"
    oh2, ow2 = oh // 2, ow // 2
    taps = []
    for py in range(2):
        for px in range(2):
            feats = [xb[:, py + kh: py + kh + oh: 2, px + kw: px + kw + ow: 2]
                     for kh in range(kh_) for kw in range(kw_)]
            taps.append(jnp.stack(feats, axis=-1))                 # [N, 14, 14, 25]
    t = jnp.stack(taps, axis=0).reshape(4, n * oh2 * ow2, kh_ * kw_)
    return jnp.pad(t, ((0, 0), (0, 0), (0, K1P - kh_ * kw_)))      # K 25 -> 32


def _build_conv2_taps(h1):
    """h1: [N, 14, 14, 6] bf16 -> [4, 25, N, K2P] bf16 (position-major)."""
    n, h, w, c = h1.shape
    kh_, kw_ = 5, 5
    oh, ow = h - kh_ + 1, w - kw_ + 1
    assert oh % 2 == 0 and ow % 2 == 0, "pool-tap construction needs even conv output"
    oh2, ow2 = oh // 2, ow // 2
    taps = []
    for py in range(2):
        for px in range(2):
            feats = [h1[:, py + kh: py + kh + oh: 2, px + kw: px + kw + ow: 2, :]
                     for kh in range(kh_) for kw in range(kw_)]
            taps.append(jnp.concatenate(feats, axis=-1))           # [N, 5, 5, 150]
    t = jnp.stack(taps, axis=0).reshape(4, n, oh2 * ow2, kh_ * kw_ * c)
    t = jnp.transpose(t, (0, 2, 1, 3))                             # [4, 25, N, 150]
    return jnp.pad(t, ((0, 0), (0, 0), (0, 0), (0, K2P - kh_ * kw_ * c)))


# ----------------------------- Parameter setup -------------------------------


def init_params(key):
    """Deterministic init with the PyTorch module's shapes ([in,out] for FC)."""
    keys = jax.random.split(key, 10)

    def uniform(k, shape, fan_in):
        bound = 1.0 / jnp.sqrt(float(fan_in))
        return jax.random.uniform(k, shape, jnp.float32, -bound, bound)

    return {
        "conv1_w": uniform(keys[0], (6, 1, 5, 5), 1 * 5 * 5),
        "conv1_b": uniform(keys[1], (6,), 1 * 5 * 5),
        "conv2_w": uniform(keys[2], (16, 6, 5, 5), 6 * 5 * 5),
        "conv2_b": uniform(keys[3], (16,), 6 * 5 * 5),
        "fc1_w": uniform(keys[4], (16 * 5 * 5, 120), 16 * 5 * 5),
        "fc1_b": uniform(keys[5], (120,), 16 * 5 * 5),
        "fc2_w": uniform(keys[6], (120, 84), 120),
        "fc2_b": uniform(keys[7], (84,), 120),
        "fc3_w": uniform(keys[8], (84, 10), 84),
        "fc3_b": uniform(keys[9], (10,), 84),
    }


def prepare_params(params):
    """One-time weight prep (pad / cast / reorder / fold flatten) -- hoisted
    out of the jitted forward so no weight-prep HLOs run per step."""
    f32, bf16 = jnp.float32, jnp.bfloat16

    def conv_w(w, kpad):
        co, ci, kh, kw = w.shape
        k = ci * kh * kw
        wm = jnp.transpose(w, (2, 3, 1, 0)).reshape(k, co)        # (kh,kw,cin) major
        return jnp.zeros((kpad, OC_PAD), f32).at[:k, :co].set(wm).astype(bf16)

    def vec_pad(b):
        return jnp.zeros((1, OC_PAD), f32).at[0, :b.shape[0]].set(b)

    # fc1 with the NCHW flatten folded in: w1f[p, c, j] = fc1_w[c*25 + p, j].
    w1f = jnp.transpose(params["fc1_w"].reshape(16, 25, 120), (1, 0, 2))
    w1f = jnp.zeros((25, OC_PAD, OC_PAD), f32).at[:, :16, :120].set(w1f).astype(bf16)
    w2f = jnp.zeros((OC_PAD, OC_PAD), f32).at[:120, :84].set(params["fc2_w"]).astype(bf16)
    w3f = jnp.zeros((OC_PAD, OC_PAD), f32).at[:84, :10].set(params["fc3_w"]).astype(bf16)

    return {
        "c1_w": conv_w(params["conv1_w"], K1P), "c1_b": vec_pad(params["conv1_b"]),
        "c2_w": conv_w(params["conv2_w"], K2P), "c2_b": vec_pad(params["conv2_b"]),
        "fc1_w": w1f, "fc1_b": vec_pad(params["fc1_b"]),
        "fc2_w": w2f, "fc2_b": vec_pad(params["fc2_b"]),
        "fc3_w": w3f, "fc3_b": vec_pad(params["fc3_b"]),
    }


# ----------------------------- Forward pass ----------------------------------


@jax.jit
def net_forward(prepared, x):
    # x: [N, 1, 32, 32] f32 (NCHW, as in PyTorch)
    n = x.shape[0]
    xb = x[:, 0, :, :].astype(jnp.bfloat16)                       # early bf16 cast
    taps1 = _build_conv1_taps(xb)                                 # [4, N*196, 32]
    h1 = conv1_relu_pool(taps1, prepared["c1_w"], prepared["c1_b"])  # [N*196,128] bf16
    h1 = h1.reshape(n, 14, 14, OC_PAD)[..., :6]                   # real channels only
    taps2 = _build_conv2_taps(h1)                                 # [4, 25, N, 160]
    logits = conv2_mlp(taps2, prepared)                           # [N, 128] f32
    return logits[:, :10]


# ----------------------------- Pure-JAX reference ----------------------------


def _reference_forward(params, x):
    def conv(z, w, b):
        y = jax.lax.conv_general_dilated(
            z, w, (1, 1), "VALID", dimension_numbers=("NCHW", "OIHW", "NCHW"))
        return jax.nn.relu(y + b.reshape(1, -1, 1, 1))

    def pool(z):
        return jax.lax.reduce_window(z, -jnp.inf, jax.lax.max,
                                     (1, 1, 2, 2), (1, 1, 2, 2), "VALID")

    h = pool(conv(x, params["conv1_w"], params["conv1_b"]))
    h = pool(conv(h, params["conv2_w"], params["conv2_b"]))
    h = h.reshape(h.shape[0], -1)
    h = jax.nn.relu(h @ params["fc1_w"] + params["fc1_b"])
    h = jax.nn.relu(h @ params["fc2_w"] + params["fc2_b"])
    return h @ params["fc3_w"] + params["fc3_b"]


if __name__ == "__main__":
    key = jax.random.PRNGKey(0)
    pkey, xkey = jax.random.split(key)
    params = init_params(pkey)
    prepared = prepare_params(params)          # one-time weight prep (hoisted)
    # Input must be [N, 1, 32, 32] so 16*5*5 = 400 features reach fc1.
    x = jax.random.normal(xkey, (2, 1, 32, 32), jnp.float32)

    out = jax.block_until_ready(net_forward(prepared, x))
    assert out.shape == (2, 10), out.shape
    assert bool(jnp.all(jnp.isfinite(out)))

    ref = _reference_forward(params, x)
    max_err = float(jnp.max(jnp.abs(out - ref)))
    assert max_err < 0.1, f"mismatch vs reference: max abs err {max_err}"

    print("KERNEL_OK")
</pallas_src>

<mosaic_0001>
module attributes {stable_mosaic.version = 11 : i64} {
  func.func @_conv_pool_kernel(%arg0: i32, %arg1: memref<4x200x32xbf16, #tpu.memory_space<vmem>>, %arg2: memref<32x128xbf16, #tpu.memory_space<vmem>>, %arg3: memref<1x128xf32, #tpu.memory_space<vmem>>, %arg4: memref<200x128xbf16, #tpu.memory_space<vmem>>) attributes {dimension_semantics = [#tpu.dimension_semantics<parallel>], iteration_bounds = array<i64: 2>, scalar_prefetch = 0 : i64, scratch_operands = 0 : i64, tpu.core_type = #tpu.core_type<tc>, window_params = [{transform_indices = @transform_0, window_bounds = array<i64: 4, 200, 32>}, {pipeline_mode = #tpu.pipeline_mode<synchronous>, transform_indices = @transform_1, window_bounds = array<i64: 32, 128>}, {pipeline_mode = #tpu.pipeline_mode<synchronous>, transform_indices = @transform_2, window_bounds = array<i64: 1, 128>}, {transform_indices = @transform_3, window_bounds = array<i64: 200, 128>}]} {
    %c0 = arith.constant 0 : index
    %c0_0 = arith.constant 0 : index
    %0 = vector.load %arg2[%c0, %c0_0] : memref<32x128xbf16, #tpu.memory_space<vmem>>, vector<32x128xbf16>
    %c0_1 = arith.constant 0 : index
    %c0_2 = arith.constant 0 : index
    %1 = vector.load %arg3[%c0_1, %c0_2] : memref<1x128xf32, #tpu.memory_space<vmem>>, vector<1x128xf32>
    %c0_3 = arith.constant 0 : index
    %c0_4 = arith.constant 0 : index
    %c0_5 = arith.constant 0 : index
    %2 = vector.load %arg1[%c0_3, %c0_4, %c0_5] : memref<4x200x32xbf16, #tpu.memory_space<vmem>>, vector<1x200x32xbf16>
    %3 = vector.shape_cast %2 : vector<1x200x32xbf16> to vector<200x32xbf16>
    %cst = arith.constant dense<0.000000e+00> : vector<200x128xf32>
    %4 = tpu.matmul %3, %0, %cst {dimension_numbers = #tpu.dot_dimension_numbers<[1], [0], [0], [1], [0, 0, 1, 1], [], []>} : vector<200x32xbf16>, vector<32x128xbf16>, vector<200x128xf32> -> vector<200x128xf32>
    %5 = vector.broadcast %1 : vector<1x128xf32> to vector<200x128xf32>
    %6 = arith.addf %4, %5 : vector<200x128xf32>
    %cst_6 = arith.constant 0.000000e+00 : f32
    %7 = vector.broadcast %cst_6 : f32 to vector<200x128xf32>
    %8 = arith.maximumf %6, %7 : vector<200x128xf32>
    %c1 = arith.constant 1 : index
    %c0_7 = arith.constant 0 : index
    %c0_8 = arith.constant 0 : index
    %9 = vector.load %arg1[%c1, %c0_7, %c0_8] : memref<4x200x32xbf16, #tpu.memory_space<vmem>>, vector<1x200x32xbf16>
    %10 = vector.shape_cast %9 : vector<1x200x32xbf16> to vector<200x32xbf16>
    %cst_9 = arith.constant dense<0.000000e+00> : vector<200x128xf32>
    %11 = tpu.matmul %10, %0, %cst_9 {dimension_numbers = #tpu.dot_dimension_numbers<[1], [0], [0], [1], [0, 0, 1, 1], [], []>} : vector<200x32xbf16>, vector<32x128xbf16>, vector<200x128xf32> -> vector<200x128xf32>
    %12 = vector.broadcast %1 : vector<1x128xf32> to vector<200x128xf32>
    %13 = arith.addf %11, %12 : vector<200x128xf32>
    %cst_10 = arith.constant 0.000000e+00 : f32
    %14 = vector.broadcast %cst_10 : f32 to vector<200x128xf32>
    %15 = arith.maximumf %13, %14 : vector<200x128xf32>
    %16 = arith.maximumf %8, %15 : vector<200x128xf32>
    %c2 = arith.constant 2 : index
    %c0_11 = arith.constant 0 : index
    %c0_12 = arith.constant 0 : index
    %17 = vector.load %arg1[%c2, %c0_11, %c0_12] : memref<4x200x32xbf16, #tpu.memory_space<vmem>>, vector<1x200x32xbf16>
    %18 = vector.shape_cast %17 : vector<1x200x32xbf16> to vector<200x32xbf16>
    %cst_13 = arith.constant dense<0.000000e+00> : vector<200x128xf32>
    %19 = tpu.matmul %18, %0, %cst_13 {dimension_numbers = #tpu.dot_dimension_numbers<[1], [0], [0], [1], [0, 0, 1, 1], [], []>} : vector<200x32xbf16>, vector<32x128xbf16>, vector<200x128xf32> -> vector<200x128xf32>
    %20 = vector.broadcast %1 : vector<1x128xf32> to vector<200x128xf32>
    %21 = arith.addf %19, %20 : vector<200x128xf32>
    %cst_14 = arith.constant 0.000000e+00 : f32
    %22 = vector.broadcast %cst_14 : f32 to vector<200x128xf32>
    %23 = arith.maximumf %21, %22 : vector<200x128xf32>
    %24 = arith.maximumf %16, %23 : vector<200x128xf32>
    %c3 = arith.constant 3 : index
    %c0_15 = arith.constant 0 : index
    %c0_16 = arith.constant 0 : index
    %25 = vector.load %arg1[%c3, %c0_15, %c0_16] : memref<4x200x32xbf16, #tpu.memory_space<vmem>>, vector<1x200x32xbf16>
    %26 = vector.shape_cast %25 : vector<1x200x32xbf16> to vector<200x32xbf16>
    %cst_17 = arith.constant dense<0.000000e+00> : vector<200x128xf32>
    %27 = tpu.matmul %26, %0, %cst_17 {dimension_numbers = #tpu.dot_dimension_numbers<[1], [0], [0], [1], [0, 0, 1, 1], [], []>} : vector<200x32xbf16>, vector<32x128xbf16>, vector<200x128xf32> -> vector<200x128xf32>
    %28 = vector.broadcast %1 : vector<1x128xf32> to vector<200x128xf32>
    %29 = arith.addf %27, %28 : vector<200x128xf32>
    %cst_18 = arith.constant 0.000000e+00 : f32
    %30 = vector.broadcast %cst_18 : f32 to vector<200x128xf32>
    %31 = arith.maximumf %29, %30 : vector<200x128xf32>
    %32 = arith.maximumf %24, %31 : vector<200x128xf32>
    %33 = arith.truncf %32 : vector<200x128xf32> to vector<200x128xbf16>
    %c0_19 = arith.constant 0 : index
    %c0_20 = arith.constant 0 : index
    %34 = vector.load %arg4[%c0_19, %c0_20] : memref<200x128xbf16, #tpu.memory_space<vmem>>, vector<200x128xbf16>
    tpu.vector_store %arg4[%c0_19, %c0_20], %33 {strides = array<i32>} : memref<200x128xbf16, #tpu.memory_space<vmem>>, vector<200x128xbf16>,
    return
  }
  func.func @transform_0(%arg0: i32) -> (i32, i32, i32) {
    %c0_i32 = arith.constant 0 : i32
    %c0_i32_0 = arith.constant 0 : i32
    %c0_i32_1 = arith.constant 0 : i32
    return %c0_i32, %arg0, %c0_i32_0 : i32, i32, i32
  }
  func.func @transform_1(%arg0: i32) -> (i32, i32) {
    %c0_i32 = arith.constant 0 : i32
    %c0_i32_0 = arith.constant 0 : i32
    %c0_i32_1 = arith.constant 0 : i32
    return %c0_i32, %c0_i32_0 : i32, i32
  }
  func.func @transform_2(%arg0: i32) -> (i32, i32) {
    %c0_i32 = arith.constant 0 : i32
    %c0_i32_0 = arith.constant 0 : i32
    %c0_i32_1 = arith.constant 0 : i32
    return %c0_i32, %c0_i32_0 : i32, i32
  }
  func.func @transform_3(%arg0: i32) -> (i32, i32) {
    %c0_i32 = arith.constant 0 : i32
    %c0_i32_0 = arith.constant 0 : i32
    return %arg0, %c0_i32 : i32, i32
  }
}

module attributes {stable_mosaic.version = 11 : i64} {
  func.func @_conv2_mlp_kernel(%arg0: i32, %arg1: memref<4x25x2x160xbf16, #tpu.memory_space<vmem>>, %arg2: memref<160x128xbf16, #tpu.memory_space<vmem>>, %arg3: memref<1x128xf32, #tpu.memory_space<vmem>>, %arg4: memref<25x128x128xbf16, #tpu.memory_space<vmem>>, %arg5: memref<1x128xf32, #tpu.memory_space<vmem>>, %arg6: memref<128x128xbf16, #tpu.memory_space<vmem>>, %arg7: memref<1x128xf32, #tpu.memory_space<vmem>>, %arg8: memref<128x128xbf16, #tpu.memory_space<vmem>>, %arg9: memref<1x128xf32, #tpu.memory_space<vmem>>, %arg10: memref<2x128xf32, #tpu.memory_space<vmem>>) attributes {dimension_semantics = [#tpu.dimension_semantics<parallel>], iteration_bounds = array<i64: 1>, scalar_prefetch = 0 : i64, scratch_operands = 0 : i64, tpu.core_type = #tpu.core_type<tc>, window_params = [{transform_indices = @transform_0, window_bounds = array<i64: 4, 25, 2, 160>}, {pipeline_mode = #tpu.pipeline_mode<synchronous>, transform_indices = @transform_1, window_bounds = array<i64: 160, 128>}, {pipeline_mode = #tpu.pipeline_mode<synchronous>, transform_indices = @transform_2, window_bounds = array<i64: 1, 128>}, {pipeline_mode = #tpu.pipeline_mode<synchronous>, transform_indices = @transform_3, window_bounds = array<i64: 25, 128, 128>}, {pipeline_mode = #tpu.pipeline_mode<synchronous>, transform_indices = @transform_4, window_bounds = array<i64: 1, 128>}, {pipeline_mode = #tpu.pipeline_mode<synchronous>, transform_indices = @transform_5, window_bounds = array<i64: 128, 128>}, {pipeline_mode = #tpu.pipeline_mode<synchronous>, transform_indices = @transform_6, window_bounds = array<i64: 1, 128>}, {pipeline_mode = #tpu.pipeline_mode<synchronous>, transform_indices = @transform_7, window_bounds = array<i64: 128, 128>}, {pipeline_mode = #tpu.pipeline_mode<synchronous>, transform_indices = @transform_8, window_bounds = array<i64: 1, 128>}, {transform_indices = @transform_9, window_bounds = array<i64: 2, 128>}]} {
    %c0 = arith.constant 0 : index
    %c0_0 = arith.constant 0 : index
    %0 = vector.load %arg2[%c0, %c0_0] : memref<160x128xbf16, #tpu.memory_space<vmem>>, vector<160x128xbf16>
    %c0_1 = arith.constant 0 : index
    %c0_2 = arith.constant 0 : index
    %1 = vector.load %arg3[%c0_1, %c0_2] : memref<1x128xf32, #tpu.memory_space<vmem>>, vector<1x128xf32>
    %c0_3 = arith.constant 0 : index
    %c0_4 = arith.constant 0 : index
    %c0_5 = arith.constant 0 : index
    %c0_6 = arith.constant 0 : index
    %2 = vector.load %arg1[%c0_3, %c0_4, %c0_5, %c0_6] : memref<4x25x2x160xbf16, #tpu.memory_space<vmem>>, vector<1x1x2x160xbf16>
    %3 = vector.shape_cast %2 : vector<1x1x2x160xbf16> to vector<2x160xbf16>
    %cst = arith.constant dense<0.000000e+00> : vector<2x128xf32>
    %4 = tpu.matmul %3, %0, %cst {dimension_numbers = #tpu.dot_dimension_numbers<[1], [0], [0], [1], [0, 0, 1, 1], [], []>} : vector<2x160xbf16>, vector<160x128xbf16>, vector<2x128xf32> -> vector<2x128xf32>
    %5 = vector.broadcast %1 : vector<1x128xf32> to vector<2x128xf32>
    %6 = arith.addf %4, %5 : vector<2x128xf32>
    %cst_7 = arith.constant 0.000000e+00 : f32
    %7 = vector.broadcast %cst_7 : f32 to vector<2x128xf32>
    %8 = arith.maximumf %6, %7 : vector<2x128xf32>
    %c1 = arith.constant 1 : index
    %c0_8 = arith.constant 0 : index
    %c0_9 = arith.constant 0 : index
    %c0_10 = arith.constant 0 : index
    %9 = vector.load %arg1[%c1, %c0_8, %c0_9, %c0_10] : memref<4x25x2x160xbf16, #tpu.memory_space<vmem>>, vector<1x1x2x160xbf16>
    %10 = vector.shape_cast %9 : vector<1x1x2x160xbf16> to vector<2x160xbf16>
    %cst_11 = arith.constant dense<0.000000e+00> : vector<2x128xf32>
    %11 = tpu.matmul %10, %0, %cst_11 {dimension_numbers = #tpu.dot_dimension_numbers<[1], [0], [0], [1], [0, 0, 1, 1], [], []>} : vector<2x160xbf16>, vector<160x128xbf16>, vector<2x128xf32> -> vector<2x128xf32>
    %12 = vector.broadcast %1 : vector<1x128xf32> to vector<2x128xf32>
    %13 = arith.addf %11, %12 : vector<2x128xf32>
    %cst_12 = arith.constant 0.000000e+00 : f32
    %14 = vector.broadcast %cst_12 : f32 to vector<2x128xf32>
    %15 = arith.maximumf %13, %14 : vector<2x128xf32>
    %16 = arith.maximumf %8, %15 : vector<2x128xf32>
    %c2 = arith.constant 2 : index
    %c0_13 = arith.constant 0 : index
    %c0_14 = arith.constant 0 : index
    %c0_15 = arith.constant 0 : index
    %17 = vector.load %arg1[%c2, %c0_13, %c0_14, %c0_15] : memref<4x25x2x160xbf16, #tpu.memory_space<vmem>>, vector<1x1x2x160xbf16>
    %18 = vector.shape_cast %17 : vector<1x1x2x160xbf16> to vector<2x160xbf16>
    %cst_16 = arith.constant dense<0.000000e+00> : vector<2x128xf32>
    %19 = tpu.matmul %18, %0, %cst_16 {dimension_numbers = #tpu.dot_dimension_numbers<[1], [0], [0], [1], [0, 0, 1, 1], [], []>} : vector<2x160xbf16>, vector<160x128xbf16>, vector<2x128xf32> -> vector<2x128xf32>
    %20 = vector.broadcast %1 : vector<1x128xf32> to vector<2x128xf32>
    %21 = arith.addf %19, %20 : vector<2x128xf32>
    %cst_17 = arith.constant 0.000000e+00 : f32
    %22 = vector.broadcast %cst_17 : f32 to vector<2x128xf32>
    %23 = arith.maximumf %21, %22 : vector<2x128xf32>
    %24 = arith.maximumf %16, %23 : vector<2x128xf32>
    %c3 = arith.constant 3 : index
    %c0_18 = arith.constant 0 : index
    %c0_19 = arith.constant 0 : index
    %c0_20 = arith.constant 0 : index
    %25 = vector.load %arg1[%c3, %c0_18, %c0_19, %c0_20] : memref<4x25x2x160xbf16, #tpu.memory_space<vmem>>, vector<1x1x2x160xbf16>
    %26 = vector.shape_cast %25 : vector<1x1x2x160xbf16> to vector<2x160xbf16>
    %cst_21 = arith.constant dense<0.000000e+00> : vector<2x128xf32>
    %27 = tpu.matmul %26, %0, %cst_21 {dimension_numbers = #tpu.dot_dimension_numbers<[1], [0], [0], [1], [0, 0, 1, 1], [], []>} : vector<2x160xbf16>, vector<160x128xbf16>, vector<2x128xf32> -> vector<2x128xf32>
    %28 = vector.broadcast %1 : vector<1x128xf32> to vector<2x128xf32>
    %29 = arith.addf %27, %28 : vector<2x128xf32>
    %cst_22 = arith.constant 0.000000e+00 : f32
    %30 = vector.broadcast %cst_22 : f32 to vector<2x128xf32>
    %31 = arith.maximumf %29, %30 : vector<2x128xf32>
    %32 = arith.maximumf %24, %31 : vector<2x128xf32>
    %33 = arith.truncf %32 : vector<2x128xf32> to vector<2x128xbf16>
    %c0_23 = arith.constant 0 : index
    %c0_24 = arith.constant 0 : index
    %c0_25 = arith.constant 0 : index
    %34 = vector.load %arg4[%c0_23, %c0_24, %c0_25] : memref<25x128x128xbf16, #tpu.memory_space<vmem>>, vector<1x128x128xbf16>
    %35 = vector.shape_cast %34 : vector<1x128x128xbf16> to vector<128x128xbf16>
    %cst_26 = arith.constant dense<0.000000e+00> : vector<2x128xf32>
    %36 = tpu.matmul %33, %35, %cst_26 {dimension_numbers = #tpu.dot_dimension_numbers<[1], [0], [0], [1], [0, 0, 1, 1], [], []>} : vector<2x128xbf16>, vector<128x128xbf16>, vector<2x128xf32> -> vector<2x128xf32>
    %c0_27 = arith.constant 0 : index
    %c1_28 = arith.constant 1 : index
    %c0_29 = arith.constant 0 : index
    %c0_30 = arith.constant 0 : index
    %37 = vector.load %arg1[%c0_27, %c1_28, %c0_29, %c0_30] : memref<4x25x2x160xbf16, #tpu.memory_space<vmem>>, vector<1x1x2x160xbf16>
    %38 = vector.shape_cast %37 : vector<1x1x2x160xbf16> to vector<2x160xbf16>
    %cst_31 = arith.constant dense<0.000000e+00> : vector<2x128xf32>
    %39 = tpu.matmul %38, %0, %cst_31 {dimension_numbers = #tpu.dot_dimension_numbers<[1], [0], [0], [1], [0, 0, 1, 1], [], []>} : vector<2x160xbf16>, vector<160x128xbf16>, vector<2x128xf32> -> vector<2x128xf32>
    %40 = vector.broadcast %1 : vector<1x128xf32> to vector<2x128xf32>
    %41 = arith.addf %39, %40 : vector<2x128xf32>
    %cst_32 = arith.constant 0.000000e+00 : f32
    %42 = vector.broadcast %cst_32 : f32 to vector<2x128xf32>
    %43 = arith.maximumf %41, %42 : vector<2x128xf32>
    %c1_33 = arith.constant 1 : index
    %c1_34 = arith.constant 1 : index
    %c0_35 = arith.constant 0 : index
    %c0_36 = arith.constant 0 : index
    %44 = vector.load %arg1[%c1_33, %c1_34, %c0_35, %c0_36] : memref<4x25x2x160xbf16, #tpu.memory_space<vmem>>, vector<1x1x2x160xbf16>
    %45 = vector.shape_cast %44 : vector<1x1x2x160xbf16> to vector<2x160xbf16>
    %cst_37 = arith.constant dense<0.000000e+00> : vector<2x128xf32>
    %46 = tpu.matmul %45, %0, %cst_37 {dimension_numbers = #tpu.dot_dimension_numbers<[1], [0], [0], [1], [0, 0, 1, 1], [], []>} : vector<2x160xbf16>, vector<160x128xbf16>, vector<2x128xf32> -> vector<2x128xf32>
    %47 = vector.broadcast %1 : vector<1x128xf32> to vector<2x128xf32>
    %48 = arith.addf %46, %47 : vector<2x128xf32>
    %cst_38 = arith.constant 0.000000e+00 : f32
    %49 = vector.broadcast %cst_38 : f32 to vector<2x128xf32>
    %50 = arith.maximumf %48, %49 : vector<2x128xf32>
    %51 = arith.maximumf %43, %50 : vector<2x128xf32>
    %c2_39 = arith.constant 2 : index
    %c1_40 = arith.constant 1 : index
    %c0_41 = arith.constant 0 : index
    %c0_42 = arith.constant 0 : index
    %52 = vector.load %arg1[%c2_39, %c1_40, %c0_41, %c0_42] : memref<4x25x2x160xbf16, #tpu.memory_space<vmem>>, vector<1x1x2x160xbf16>
    %53 = vector.shape_cast %52 : vector<1x1x2x160xbf16> to vector<2x160xbf16>
    %cst_43 = arith.constant dense<0.000000e+00> : vector<2x128xf32>
    %54 = tpu.matmul %53, %0, %cst_43 {dimension_numbers = #tpu.dot_dimension_numbers<[1], [0], [0], [1], [0, 0, 1, 1], [], []>} : vector<2x160xbf16>, vector<160x128xbf16>, vector<2x128xf32> -> vector<2x128xf32>
    %55 = vector.broadcast %1 : vector<1x128xf32> to vector<2x128xf32>
    %56 = arith.addf %54, %55 : vector<2x128xf32>
    %cst_44 = arith.constant 0.000000e+00 : f32
    %57 = vector.broadcast %cst_44 : f32 to vector<2x128xf32>
    %58 = arith.maximumf %56, %57 : vector<2x128xf32>
    %59 = arith.maximumf %51, %58 : vector<2x128xf32>
    %c3_45 = arith.constant 3 : index
    %c1_46 = arith.constant 1 : index
    %c0_47 = arith.constant 0 : index
    %c0_48 = arith.constant 0 : index
    %60 = vector.load %arg1[%c3_45, %c1_46, %c0_47, %c0_48] : memref<4x25x2x160xbf16, #tpu.memory_space<vmem>>, vector<1x1x2x160xbf16>
    %61 = vector.shape_cast %60 : vector<1x1x2x160xbf16> to vector<2x160xbf16>
    %cst_49 = arith.constant dense<0.000000e+00> : vector<2x128xf32>
    %62 = tpu.matmul %61, %0, %cst_49 {dimension_numbers = #tpu.dot_dimension_numbers<[1], [0], [0], [1], [0, 0, 1, 1], [], []>} : vector<2x160xbf16>, vector<160x128xbf16>, vector<2x128xf32> -> vector<2x128xf32>
    %63 = vector.broadcast %1 : vector<1x128xf32> to vector<2x128xf32>
    %64 = arith.addf %62, %63 : vector<2x128xf32>
    %cst_50 = arith.constant 0.000000e+00 : f32
    %65 = vector.broadcast %cst_50 : f32 to vector<2x128xf32>
    %66 = arith.maximumf %64, %65 : vector<2x128xf32>
    %67 = arith.maximumf %59, %66 : vector<2x128xf32>
    %68 = arith.truncf %67 : vector<2x128xf32> to vector<2x128xbf16>
    %c1_51 = arith.constant 1 : index
    %c0_52 = arith.constant 0 : index
    %c0_53 = arith.constant 0 : index
    %69 = vector.load %arg4[%c1_51, %c0_52, %c0_53] : memref<25x128x128xbf16, #tpu.memory_space<vmem>>, vector<1x128x128xbf16>
    %70 = vector.shape_cast %69 : vector<1x128x128xbf16> to vector<128x128xbf16>
    %cst_54 = arith.constant dense<0.000000e+00> : vector<2x128xf32>
    %71 = tpu.matmul %68, %70, %cst_54 {dimension_numbers = #tpu.dot_dimension_numbers<[1], [0], [0], [1], [0, 0, 1, 1], [], []>} : vector<2x128xbf16>, vector<128x128xbf16>, vector<2x128xf32> -> vector<2x128xf32>
    %72 = arith.addf %36, %71 : vector<2x128xf32>
    %c0_55 = arith.constant 0 : index
    %c2_56 = arith.constant 2 : index
    %c0_57 = arith.constant 0 : index
    %c0_58 = arith.constant 0 : index
    %73 = vector.load %arg1[%c0_55, %c2_56, %c0_57, %c0_58] : memref<4x25x2x160xbf16, #tpu.memory_space<vmem>>, vector<1x1x2x160xbf16>
    %74 = vector.shape_cast %73 : vector<1x1x2x160xbf16> to vector<2x160xbf16>
    %cst_59 = arith.constant dense<0.000000e+00> : vector<2x128xf32>
    %75 = tpu.matmul %74, %0, %cst_59 {dimension_numbers = #tpu.dot_dimension_numbers<[1], [0], [0], [1], [0, 0, 1, 1], [], []>} : vector<2x160xbf16>, vector<160x128xbf16>, vector<2x128xf32> -> vector<2x128xf32>
    %76 = vector.broadcast %1 : vector<1x128xf32> to vector<2x128xf32>
    %77 = arith.addf %75, %76 : vector<2x128xf32>
    %cst_60 = arith.constant 0.000000e+00 : f32
    %78 = vector.broadcast %cst_60 : f32 to vector<2x128xf32>
    %79 = arith.maximumf %77, %78 : vector<2x128xf32>
    %c1_61 = arith.constant 1 : index
    %c2_62 = arith.constant 2 : index
    %c0_63 = arith.constant 0 : index
    %c0_64 = arith.constant 0 : index
    %80 = vector.load %arg1[%c1_61, %c2_62, %c0_63, %c0_64] : memref<4x25x2x160xbf16, #tpu.memory_space<vmem>>, vector<1x1x2x160xbf16>
    %81 = vector.shape_cast %80 : vector<1x1x2x160xbf16> to vector<2x160xbf16>
    %cst_65 = arith.constant dense<0.000000e+00> : vector<2x128xf32>
    %82 = tpu.matmul %81, %0, %cst_65 {dimension_numbers = #tpu.dot_dimension_numbers<[1], [0], [0], [1], [0, 0, 1, 1], [], []>} : vector<2x160xbf16>, vector<160x128xbf16>, vector<2x128xf32> -> vector<2x128xf32>
    %83 = vector.broadcast %1 : vector<1x128xf32> to vector<2x128xf32>
    %84 = arith.addf %82, %83 : vector<2x128xf32>
    %cst_66 = arith.constant 0.000000e+00 : f32
    %85 = vector.broadcast %cst_66 : f32 to vector<2x128xf32>
    %86 = arith.maximumf %84, %85 : vector<2x128xf32>
    %87 = arith.maximumf %79, %86 : vector<2x128xf32>
    %c2_67 = arith.constant 2 : index
    %c2_68 = arith.constant 2 : index
    %c0_69 = arith.constant 0 : index
    %c0_70 = arith.constant 0 : index
    %88 = vector.load %arg1[%c2_67, %c2_68, %c0_69, %c0_70] : memref<4x25x2x160xbf16, #tpu.memory_space<vmem>>, vector<1x1x2x160xbf16>
    %89 = vector.shape_cast %88 : vector<1x1x2x160xbf16> to vector<2x160xbf16>
    %cst_71 = arith.constant dense<0.000000e+00> : vector<2x128xf32>
    %90 = tpu.matmul %89, %0, %cst_71 {dimension_numbers = #tpu.dot_dimension_numbers<[1], [0], [0], [1], [0, 0, 1, 1], [], []>} : vector<2x160xbf16>, vector<160x128xbf16>, vector<2x128xf32> -> vector<2x128xf32>
    %91 = vector.broadcast %1 : vector<1x128xf32> to vector<2x128xf32>
    %92 = arith.addf %90, %91 : vector<2x128xf32>
    %cst_72 = arith.constant 0.000000e+00 : f32
    %93 = vector.broadcast %cst_72 : f32 to vector<2x128xf32>
    %94 = arith.maximumf %92, %93 : vector<2x128xf32>
    %95 = arith.maximumf %87, %94 : vector<2x128xf32>
    %c3_73 = arith.constant 3 : index
    %c2_74 = arith.constant 2 : index
    %c0_75 = arith.constant 0 : index
    %c0_76 = arith.constant 0 : index
    %96 = vector.load %arg1[%c3_73, %c2_74, %c0_75, %c0_76] : memref<4x25x2x160xbf16, #tpu.memory_space<vmem>>, vector<1x1x2x160xbf16>
    %97 = vector.shape_cast %96 : vector<1x1x2x160xbf16> to vector<2x160xbf16>
    %cst_77 = arith.constant dense<0.000000e+00> : vector<2x128xf32>
    %98 = tpu.matmul %97, %0, %cst_77 {dimension_numbers = #tpu.dot_dimension_numbers<[1], [0], [0], [1], [0, 0, 1, 1], [], []>} : vector<2x160xbf16>, vector<160x128xbf16>, vector<2x128xf32> -> vector<2x128xf32>
    %99 = vector.broadcast %1 : vector<1x128xf32> to vector<2x128xf32>
    %100 = arith.addf %98, %99 : vector<2x128xf32>
    %cst_78 = arith.constant 0.000000e+00 : f32
    %101 = vector.broadcast %cst_78 : f32 to vector<2x128xf32>
    %102 = arith.maximumf %100, %101 : vector<2x128xf32>
    %103 = arith.maximumf %95, %102 : vector<2x128xf32>
    %104 = arith.truncf %103 : vector<2x128xf32> to vector<2x128xbf16>
    %c2_79 = arith.constant 2 : index
    %c0_80 = arith.constant 0 : index
    %c0_81 = arith.constant 0 : index
    %105 = vector.load %arg4[%c2_79, %c0_80, %c0_81] : memref<25x128x128xbf16, #tpu.memory_space<vmem>>, vector<1x128x128xbf16>
    %106 = vector.shape_cast %105 : vector<1x128x128xbf16> to vector<128x128xbf16>
    %cst_82 = arith.constant dense<0.000000e+00> : vector<2x128xf32>
    %107 = tpu.matmul %104, %106, %cst_82 {dimension_numbers = #tpu.dot_dimension_numbers<[1], [0], [0], [1], [0, 0, 1, 1], [], []>} : vector<2x128xbf16>, vector<128x128xbf16>, vector<2x128xf32> -> vector<2x128xf32>
    %108 = arith.addf %72, %107 : vector<2x128xf32>
    %c0_83 = arith.constant 0 : index
    %c3_84 = arith.constant 3 : index
    %c0_85 = arith.constant 0 : index
    %c0_86 = arith.constant 0 : index
    %109 = vector.load %arg1[%c0_83, %c3_84, %c0_85, %c0_86] : memref<4x25x2x160xbf16, #tpu.memory_space<vmem>>, vector<1x1x2x160xbf16>
    %110 = vector.shape_cast %109 : vector<1x1x2x160xbf16> to vector<2x160xbf16>
    %cst_87 = arith.constant dense<0.000000e+00> : vector<2x128xf32>
    %111 = tpu.matmul %110, %0, %cst_87 {dimension_numbers = #tpu.dot_dimension_numbers<[1], [0], [0], [1], [0, 0, 1, 1], [], []>} : vector<2x160xbf16>, vector<160x128xbf16>, vector<2x128xf32> -> vector<2x128xf32>
    %112 = vector.broadcast %1 : vector<1x128xf32> to vector<2x128xf32>
    %113 = arith.addf %111, %112 : vector<2x128xf32>
    %cst_88 = arith.constant 0.000000e+00 : f32
    %114 = vector.broadcast %cst_88 : f32 to vector<2x128xf32>
    %115 = arith.maximumf %113, %114 : vector<2x128xf32>
    %c1_89 = arith.constant 1 : index
    %c3_90 = arith.constant 3 : index
    %c0_91 = arith.constant 0 : index
    %c0_92 = arith.constant 0 : index
    %116 = vector.load %arg1[%c1_89, %c3_90, %c0_91, %c0_92] : memref<4x25x2x160xbf16, #tpu.memory_space<vmem>>, vector<1x1x2x160xbf16>
    %117 = vector.shape_cast %116 : vector<1x1x2x160xbf16> to vector<2x160xbf16>
    %cst_93 = arith.constant dense<0.000000e+00> : vector<2x128xf32>
    %118 = tpu.matmul %117, %0, %cst_93 {dimension_numbers = #tpu.dot_dimension_numbers<[1], [0], [0], [1], [0, 0, 1, 1], [], []>} : vector<2x160xbf16>, vector<160x128xbf16>, vector<2x128xf32> -> vector<2x128xf32>
    %119 = vector.broadcast %1 : vector<1x128xf32> to vector<2x128xf32>
    %120 = arith.addf %118, %119 : vector<2x128xf32>
    %cst_94 = arith.constant 0.000000e+00 : f32
    %121 = vector.broadcast %cst_94 : f32 to vector<2x128xf32>
    %122 = arith.maximumf %120, %121 : vector<2x128xf32>
    %123 = arith.maximumf %115, %122 : vector<2x128xf32>
    %c2_95 = arith.constant 2 : index
    %c3_96 = arith.constant 3 : index
    %c0_97 = arith.constant 0 : index
    %c0_98 = arith.constant 0 : index
    %124 = vector.load %arg1[%c2_95, %c3_96, %c0_97, %c0_98] : memref<4x25x2x160xbf16, #tpu.memory_space<vmem>>, vector<1x1x2x160xbf16>
    %125 = vector.shape_cast %124 : vector<1x1x2x160xbf16> to vector<2x160xbf16>
    %cst_99 = arith.constant dense<0.000000e+00> : vector<2x128xf32>
    %126 = tpu.matmul %125, %0, %cst_99 {dimension_numbers = #tpu.dot_dimension_numbers<[1], [0], [0], [1], [0, 0, 1, 1], [], []>} : vector<2x160xbf16>, vector<160x128xbf16>, vector<2x128xf32> -> vector<2x128xf32>
    %127 = vector.broadcast %1 : vector<1x128xf32> to vector<2x128xf32>
    %128 = arith.addf %126, %127 : vector<2x128xf32>
    %cst_100 = arith.constant 0.000000e+00 : f32
    %129 = vector.broadcast %cst_100 : f32 to vector<2x128xf32>
    %130 = arith.maximumf %128, %129 : vector<2x128xf32>
    %131 = arith.maximumf %123, %130 : vector<2x128xf32>
    %c3_101 = arith.constant 3 : index
    %c3_102 = arith.constant 3 : index
    %c0_103 = arith.constant 0 : index
    %c0_104 = arith.constant 0 : index
    %132 = vector.load %arg1[%c3_101, %c3_102, %c0_103, %c0_104] : memref<4x25x2x160xbf16, #tpu.memory_space<vmem>>, vector<1x1x2x160xbf16>
    %133 = vector.shape_cast %132 : vector<1x1x2x160xbf16> to vector<2x160xbf16>
    %cst_105 = arith.constant dense<0.000000e+00> : vector<2x128xf32>
    %134 = tpu.matmul %133, %0, %cst_105 {dimension_numbers = #tpu.dot_dimension_numbers<[1], [0], [0], [1], [0, 0, 1, 1], [], []>} : vector<2x160xbf16>, vector<160x128xbf16>, vector<2x128xf32> -> vector<2x128xf32>
    %135 = vector.broadcast %1 : vector<1x128xf32> to vector<2x128xf32>
    %136 = arith.addf %134, %135 : vector<2x128xf32>
    %cst_106 = arith.constant 0.000000e+00 : f32
    %137 = vector.broadcast %cst_106 : f32 to vector<2x128xf32>
    %138 = arith.maximumf %136, %137 : vector<2x128xf32>
    %139 = arith.maximumf %131, %138 : vector<2x128xf32>
    %140 = arith.truncf %139 : vector<2x128xf32> to vector<2x128xbf16>
    %c3_107 = arith.constant 3 : index
    %c0_108 = arith.constant 0 : index
    %c0_109 = arith.constant 0 : index
    %141 = vector.load %arg4[%c3_107, %c0_108, %c0_109] : memref<25x128x128xbf16, #tpu.memory_space<vmem>>, vector<1x128x128xbf16>
    %142 = vector.shape_cast %141 : vector<1x128x128xbf16> to vector<128x128xbf16>
    %cst_110 = arith.constant dense<0.000000e+00> : vector<2x128xf32>
    %143 = tpu.matmul %140, %142, %cst_110 {dimension_numbers = #tpu.dot_dimension_numbers<[1], [0], [0], [1], [0, 0, 1, 1], [], []>} : vector<2x128xbf16>, vector<128x128xbf16>, vector<2x128xf32> -> vector<2x128xf32>
    %144 = arith.addf %108, %143 : vector<2x128xf32>
    %c0_111 = arith.constant 0 : index
    %c4 = arith.constant 4 : index
    %c0_112 = arith.constant 0 : index
    %c0_113 = arith.constant 0 : index
    %145 = vector.load %arg1[%c0_111, %c4, %c0_112, %c0_113] : memref<4x25x2x160xbf16, #tpu.memory_space<vmem>>, vector<1x1x2x160xbf16>
    %146 = vector.shape_cast %145 : vector<1x1x2x160xbf16> to vector<2x160xbf16>
    %cst_114 = arith.constant dense<0.000000e+00> : vector<2x128xf32>
    %147 = tpu.matmul %146, %0, %cst_114 {dimension_numbers = #tpu.dot_dimension_numbers<[1], [0], [0], [1], [0, 0, 1, 1], [], []>} : vector<2x160xbf16>, vector<160x128xbf16>, vector<2x128xf32> -> vector<2x128xf32>
    %148 = vector.broadcast %1 : vector<1x128xf32> to vector<2x128xf32>
    %149 = arith.addf %147, %148 : vector<2x128xf32>
    %cst_115 = arith.constant 0.000000e+00 : f32
    %150 = vector.broadcast %cst_115 : f32 to vector<2x128xf32>
    %151 = arith.maximumf %149, %150 : vector<2x128xf32>
    %c1_116 = arith.constant 1 : index
    %c4_117 = arith.constant 4 : index
    %c0_118 = arith.constant 0 : index
    %c0_119 = arith.constant 0 : index
    %152 = vector.load %arg1[%c1_116, %c4_117, %c0_118, %c0_119] : memref<4x25x2x160xbf16, #tpu.memory_space<vmem>>, vector<1x1x2x160xbf16>
    %153 = vector.shape_cast %152 : vector<1x1x2x160xbf16> to vector<2x160xbf16>
    %cst_120 = arith.constant dense<0.000000e+00> : vector<2x128xf32>
    %154 = tpu.matmul %153, %0, %cst_120 {dimension_numbers = #tpu.dot_dimension_numbers<[1], [0], [0], [1], [0, 0, 1, 1], [], []>} : vector<2x160xbf16>, vector<160x128xbf16>, vector<2x128xf32> -> vector<2x128xf32>
    %155 = vector.broadcast %1 : vector<1x128xf32> to vector<2x128xf32>
    %156 = arith.addf %154, %155 : vector<2x128xf32>
    %cst_121 = arith.constant 0.000000e+00 : f32
    %157 = vector.broadcast %cst_121 : f32 to vector<2x128xf32>
    %158 = arith.maximumf %156, %157 : vector<2x128xf32>
    %159 = arith.maximumf %151, %158 : vector<2x128xf32>
    %c2_122 = arith.constant 2 : index
    %c4_123 = arith.constant 4 : index
    %c0_124 = arith.constant 0 : index
    %c0_125 = arith.constant 0 : index
    %160 = vector.load %arg1[%c2_122, %c4_123, %c0_124, %c0_125] : memref<4x25x2x160xbf16, #tpu.memory_space<vmem>>, vector<1x1x2x160xbf16>
    %161 = vector.shape_cast %160 : vector<1x1x2x160xbf16> to vector<2x160xbf16>
    %cst_126 = arith.constant dense<0.000000e+00> : vector<2x128xf32>
    %162 = tpu.matmul %161, %0, %cst_126 {dimension_numbers = #tpu.dot_dimension_numbers<[1], [0], [0], [1], [0, 0, 1, 1], [], []>} : vector<2x160xbf16>, vector<160x128xbf16>, vector<2x128xf32> -> vector<2x128xf32>
    %163 = vector.broadcast %1 : vector<1x128xf32> to vector<2x128xf32>
    %164 = arith.addf %162, %163 : vector<2x128xf32>
    %cst_127 = arith.constant 0.000000e+00 : f32
    %165 = vector.broadcast %cst_127 : f32 to vector<2x128xf32>
    %166 = arith.maximumf %164, %165 : vector<2x128xf32>
    %167 = arith.maximumf %159, %166 : vector<2x128xf32>
    %c3_128 = arith.constant 3 : index
    %c4_129 = arith.constant 4 : index
    %c0_130 = arith.constant 0 : index
    %c0_131 = arith.constant 0 : index
    %168 = vector.load %arg1[%c3_128, %c4_129, %c0_130, %c0_131] : memref<4x25x2x160xbf16, #tpu.memory_space<vmem>>, vector<1x1x2x160xbf16>
    %169 = vector.shape_cast %168 : vector<1x1x2x160xbf16> to vector<2x160xbf16>
    %cst_132 = arith.constant dense<0.000000e+00> : vector<2x128xf32>
    %170 = tpu.matmul %169, %0, %cst_132 {dimension_numbers = #tpu.dot_dimension_numbers<[1], [0], [0], [1], [0, 0, 1, 1], [], []>} : vector<2x160xbf16>, vector<160x128xbf16>, vector<2x128xf32> -> vector<2x128xf32>
    %171 = vector.broadcast %1 : vector<1x128xf32> to vector<2x128xf32>
    %172 = arith.addf %170, %171 : vector<2x128xf32>
    %cst_133 = arith.constant 0.000000e+00 : f32
    %173 = vector.broadcast %cst_133 : f32 to vector<2x128xf32>
    %174 = arith.maximumf %172, %173 : vector<2x128xf32>
    %175 = arith.maximumf %167, %174 : vector<2x128xf32>
    %176 = arith.truncf %175 : vector<2x128xf32> to vector<2x128xbf16>
    %c4_134 = arith.constant 4 : index
    %c0_135 = arith.constant 0 : index
    %c0_136 = arith.constant 0 : index
    %177 = vector.load %arg4[%c4_134, %c0_135, %c0_136] : memref<25x128x128xbf16, #tpu.memory_space<vmem>>, vector<1x128x128xbf16>
    %178 = vector.shape_cast %177 : vector<1x128x128xbf16> to vector<128x128xbf16>
    %cst_137 = arith.constant dense<0.000000e+00> : vector<2x128xf32>
    %179 = tpu.matmul %176, %178, %cst_137 {dimension_numbers = #tpu.dot_dimension_numbers<[1], [0], [0], [1], [0, 0, 1, 1], [], []>} : vector<2x128xbf16>, vector<128x128xbf16>, vector<2x128xf32> -> vector<2x128xf32>
    %180 = arith.addf %144, %179 : vector<2x128xf32>
    %c0_138 = arith.constant 0 : index
    %c5 = arith.constant 5 : index
    %c0_139 = arith.constant 0 : index
    %c0_140 = arith.constant 0 : index
    %181 = vector.load %arg1[%c0_138, %c5, %c0_139, %c0_140] : memref<4x25x2x160xbf16, #tpu.memory_space<vmem>>, vector<1x1x2x160xbf16>
    %182 = vector.shape_cast %181 : vector<1x1x2x160xbf16> to vector<2x160xbf16>
    %cst_141 = arith.constant dense<0.000000e+00> : vector<2x128xf32>
    %183 = tpu.matmul %182, %0, %cst_141 {dimension_numbers = #tpu.dot_dimension_numbers<[1], [0], [0], [1], [0, 0, 1, 1], [], []>} : vector<2x160xbf16>, vector<160x128xbf16>, vector<2x128xf32> -> vector<2x128xf32>
    %184 = vector.broadcast %1 : vector<1x128xf32> to vector<2x128xf32>
    %185 = arith.addf %183, %184 : vector<2x128xf32>
    %cst_142 = arith.constant 0.000000e+00 : f32
    %186 = vector.broadcast %cst_142 : f32 to vector<2x128xf32>
    %187 = arith.maximumf %185, %186 : vector<2x128xf32>
    %c1_143 = arith.constant 1 : index
    %c5_144 = arith.constant 5 : index
    %c0_145 = arith.constant 0 : index
    %c0_146 = arith.constant 0 : index
    %188 = vector.load %arg1[%c1_143, %c5_144, %c0_145, %c0_146] : memref<4x25x2x160xbf16, #tpu.memory_space<vmem>>, vector<1x1x2x160xbf16>
    %189 = vector.shape_cast %188 : vector<1x1x2x160xbf16> to vector<2x160xbf16>
    %cst_147 = arith.constant dense<0.000000e+00> : vector<2x128xf32>
    %190 = tpu.matmul %189, %0, %cst_147 {dimension_numbers = #tpu.dot_dimension_numbers<[1], [0], [0], [1], [0, 0, 1, 1], [], []>} : vector<2x160xbf16>, vector<160x128xbf16>, vector<2x128xf32> -> vector<2x128xf32>
    %191 = vector.broadcast %1 : vector<1x128xf32> to vector<2x128xf32>
    %192 = arith.addf %190, %191 : vector<2x128xf32>
    %cst_148 = arith.constant 0.000000e+00 : f32
    %193 = vector.broadcast %cst_148 : f32 to vector<2x128xf32>
    %194 = arith.maximumf %192, %193 : vector<2x128xf32>
    %195 = arith.maximumf %187, %194 : vector<2x128xf32>
    %c2_149 = arith.constant 2 : index
    %c5_150 = arith.constant 5 : index
    %c0_151 = arith.constant 0 : index
    %c0_152 = arith.constant 0 : index
    %196 = vector.load %arg1[%c2_149, %c5_150, %c0_151, %c0_152] : memref<4x25x2x160xbf16, #tpu.memory_space<vmem>>, vector<1x1x2x160xbf16>
    %197 = vector.shape_cast %196 : vector<1x1x2x160xbf16> to vector<2x160xbf16>
    %cst_153 = arith.constant dense<0.000000e+00> : vector<2x128xf32>
    %198 = tpu.matmul %197, %0, %cst_153 {dimension_numbers = #tpu.dot_dimension_numbers<[1], [0], [0], [1], [0, 0, 1, 1], [], []>} : vector<2x160xbf16>, vector<160x128xbf16>, vector<2x128xf32> -> vector<2x128xf32>
    %199 = vector.broadcast %1 : vector<1x128xf32> to vector<2x128xf32>
    %200 = arith.addf %198, %199 : vector<2x128xf32>
    %cst_154 = arith.constant 0.000000e+00 : f32
    %201 = vector.broadcast %cst_154 : f32 to vector<2x128xf32>
    %202 = arith.maximumf %200, %201 : vector<2x128xf32>
    %203 = arith.maximumf %195, %202 : vector<2x128xf32>
    %c3_155 = arith.constant 3 : index
    %c5_156 = arith.constant 5 : index
    %c0_157 = arith.constant 0 : index
    %c0_158 = arith.constant 0 : index
    %204 = vector.load %arg1[%c3_155, %c5_156, %c0_157, %c0_158] : memref<4x25x2x160xbf16, #tpu.memory_space<vmem>>, vector<1x1x2x160xbf16>
    %205 = vector.shape_cast %204 : vector<1x1x2x160xbf16> to vector<2x160xbf16>
    %cst_159 = arith.constant dense<0.000000e+00> : vector<2x128xf32>
    %206 = tpu.matmul %205, %0, %cst_159 {dimension_numbers = #tpu.dot_dimension_numbers<[1], [0], [0], [1], [0, 0, 1, 1], [], []>} : vector<2x160xbf16>, vector<160x128xbf16>, vector<2x128xf32> -> vector<2x128xf32>
    %207 = vector.broadcast %1 : vector<1x128xf32> to vector<2x128xf32>
    %208 = arith.addf %206, %207 : vector<2x128xf32>
    %cst_160 = arith.constant 0.000000e+00 : f32
    %209 = vector.broadcast %cst_160 : f32 to vector<2x128xf32>
    %210 = arith.maximumf %208, %209 : vector<2x128xf32>
    %211 = arith.maximumf %203, %210 : vector<2x128xf32>
    %212 = arith.truncf %211 : vector<2x128xf32> to vector<2x128xbf16>
    %c5_161 = arith.constant 5 : index
    %c0_162 = arith.constant 0 : index
    %c0_163 = arith.constant 0 : index
    %213 = vector.load %arg4[%c5_161, %c0_162, %c0_163] : memref<25x128x128xbf16, #tpu.memory_space<vmem>>, vector<1x128x128xbf16>
    %214 = vector.shape_cast %213 : vector<1x128x128xbf16> to vector<128x128xbf16>
    %cst_164 = arith.constant dense<0.000000e+00> : vector<2x128xf32>
    %215 = tpu.matmul %212, %214, %cst_164 {dimension_numbers = #tpu.dot_dimension_numbers<[1], [0], [0], [1], [0, 0, 1, 1], [], []>} : vector<2x128xbf16>, vector<128x128xbf16>, vector<2x128xf32> -> vector<2x128xf32>
    %216 = arith.addf %180, %215 : vector<2x128xf32>
    %c0_165 = arith.constant 0 : index
    %c6 = arith.constant 6 : index
    %c0_166 = arith.constant 0 : index
    %c0_167 = arith.constant 0 : index
    %217 = vector.load %arg1[%c0_165, %c6, %c0_166, %c0_167] : memref<4x25x2x160xbf16, #tpu.memory_space<vmem>>, vector<1x1x2x160xbf16>
    %218 = vector.shape_cast %217 : vector<1x1x2x160xbf16> to vector<2x160xbf16>
    %cst_168 = arith.constant dense<0.000000e+00> : vector<2x128xf32>
    %219 = tpu.matmul %218, %0, %cst_168 {dimension_numbers = #tpu.dot_dimension_numbers<[1], [0], [0], [1], [0, 0, 1, 1], [], []>} : vector<2x160xbf16>, vector<160x128xbf16>, vector<2x128xf32> -> vector<2x128xf32>
    %220 = vector.broadcast %1 : vector<1x128xf32> to vector<2x128xf32>
    %221 = arith.addf %219, %220 : vector<2x128xf32>
    %cst_169 = arith.constant 0.000000e+00 : f32
    %222 = vector.broadcast %cst_169 : f32 to vector<2x128xf32>
    %223 = arith.maximumf %221, %222 : vector<2x128xf32>
    %c1_170 = arith.constant 1 : index
    %c6_171 = arith.constant 6 : index
    %c0_172 = arith.constant 0 : index
    %c0_173 = arith.constant 0 : index
    %224 = vector.load %arg1[%c1_170, %c6_171, %c0_172, %c0_173] : memref<4x25x2x160xbf16, #tpu.memory_space<vmem>>, vector<1x1x2x160xbf16>
    %225 = vector.shape_cast %224 : vector<1x1x2x160xbf16> to vector<2x160xbf16>
    %cst_174 = arith.constant dense<0.000000e+00> : vector<2x128xf32>
    %226 = tpu.matmul %225, %0, %cst_174 {dimension_numbers = #tpu.dot_dimension_numbers<[1], [0], [0], [1], [0, 0, 1, 1], [], []>} : vector<2x160xbf16>, vector<160x128xbf16>, vector<2x128xf32> -> vector<2x128xf32>
    %227 = vector.broadcast %1 : vector<1x128xf32> to vector<2x128xf32>
    %228 = arith.addf %226, %227 : vector<2x128xf32>
    %cst_175 = arith.constant 0.000000e+00 : f32
    %229 = vector.broadcast %cst_175 : f32 to vector<2x128xf32>
    %230 = arith.maximumf %228, %229 : vector<2x128xf32>
    %231 = arith.maximumf %223, %230 : vector<2x128xf32>
    %c2_176 = arith.constant 2 : index
    %c6_177 = arith.constant 6 : index
    %c0_178 = arith.constant 0 : index
    %c0_179 = arith.constant 0 : index
    %232 = vector.load %arg1[%c2_176, %c6_177, %c0_178, %c0_179] : memref<4x25x2x160xbf16, #tpu.memory_space<vmem>>, vector<1x1x2x160xbf16>
    %233 = vector.shape_cast %232 : vector<1x1x2x160xbf16> to vector<2x160xbf16>
    %cst_180 = arith.constant dense<0.000000e+00> : vector<2x128xf32>
    %234 = tpu.matmul %233, %0, %cst_180 {dimension_numbers = #tpu.dot_dimension_numbers<[1], [0], [0], [1], [0, 0, 1, 1], [], []>} : vector<2x160xbf16>, vector<160x128xbf16>, vector<2x128xf32> -> vector<2x128xf32>
    %235 = vector.broadcast %1 : vector<1x128xf32> to vector<2x128xf32>
    %236 = arith.addf %234, %235 : vector<2x128xf32>
    %cst_181 = arith.constant 0.000000e+00 : f32
    %237 = vector.broadcast %cst_181 : f32 to vector<2x128xf32>
    %238 = arith.maximumf %236, %237 : vector<2x128xf32>
    %239 = arith.maximumf %231, %238 : vector<2x128xf32>
    %c3_182 = arith.constant 3 : index
    %c6_183 = arith.constant 6 : index
    %c0_184 = arith.constant 0 : index
    %c0_185 = arith.constant 0 : index
    %240 = vector.load %arg1[%c3_182, %c6_183, %c0_184, %c0_185] : memref<4x25x2x160xbf16, #tpu.memory_space<vmem>>, vector<1x1x2x160xbf16>
    %241 = vector.shape_cast %240 : vector<1x1x2x160xbf16> to vector<2x160xbf16>
    %cst_186 = arith.constant dense<0.000000e+00> : vector<2x128xf32>
    %242 = tpu.matmul %241, %0, %cst_186 {dimension_numbers = #tpu.dot_dimension_numbers<[1], [0], [0], [1], [0, 0, 1, 1], [], []>} : vector<2x160xbf16>, vector<160x128xbf16>, vector<2x128xf32> -> vector<2x128xf32>
    %243 = vector.broadcast %1 : vector<1x128xf32> to vector<2x128xf32>
    %244 = arith.addf %242, %243 : vector<2x128xf32>
    %cst_187 = arith.constant 0.000000e+00 : f32
    %245 = vector.broadcast %cst_187 : f32 to vector<2x128xf32>
    %246 = arith.maximumf %244, %245 : vector<2x128xf32>
    %247 = arith.maximumf %239, %246 : vector<2x128xf32>
    %248 = arith.truncf %247 : vector<2x128xf32> to vector<2x128xbf16>
    %c6_188 = arith.constant 6 : index
    %c0_189 = arith.constant 0 : index
    %c0_190 = arith.constant 0 : index
    %249 = vector.load %arg4[%c6_188, %c0_189, %c0_190] : memref<25x128x128xbf16, #tpu.memory_space<vmem>>, vector<1x128x128xbf16>
    %250 = vector.shape_cast %249 : vector<1x128x128xbf16> to vector<128x128xbf16>
    %cst_191 = arith.constant dense<0.000000e+00> : vector<2x128xf32>
    %251 = tpu.matmul %248, %250, %cst_191 {dimension_numbers = #tpu.dot_dimension_numbers<[1], [0], [0], [1], [0, 0, 1, 1], [], []>} : vector<2x128xbf16>, vector<128x128xbf16>, vector<2x128xf32> -> vector<2x128xf32>
    %252 = arith.addf %216, %251 : vector<2x128xf32>
    %c0_192 = arith.constant 0 : index
    %c7 = arith.constant 7 : index
    %c0_193 = arith.constant 0 : index
    %c0_194 = arith.constant 0 : index
    %253 = vector.load %arg1[%c0_192, %c7, %c0_193, %c0_194] : memref<4x25x2x160xbf16, #tpu.memory_space<vmem>>, vector<1x1x2x160xbf16>
    %254 = vector.shape_cast %253 : vector<1x1x2x160xbf16> to vector<2x160xbf16>
    %cst_195 = arith.constant dense<0.000000e+00> : vector<2x128xf32>
    %255 = tpu.matmul %254, %0, %cst_195 {dimension_numbers = #tpu.dot_dimension_numbers<[1], [0], [0], [1], [0, 0, 1, 1], [], []>} : vector<2x160xbf16>, vector<160x128xbf16>, vector<2x128xf32> -> vector<2x128xf32>
    %256 = vector.broadcast %1 : vector<1x128xf32> to vector<2x128xf32>
    %257 = arith.addf %255, %256 : vector<2x128xf32>
    %cst_196 = arith.constant 0.000000e+00 : f32
    %258 = vector.broadcast %cst_196 : f32 to vector<2x128xf32>
    %259 = arith.maximumf %257, %258 : vector<2x128xf32>
    %c1_197 = arith.constant 1 : index
    %c7_198 = arith.constant 7 : index
    %c0_199 = arith.constant 0 : index
    %c0_200 = arith.constant 0 : index
    %260 = vector.load %arg1[%c1_197, %c7_198, %c0_199, %c0_200] : memref<4x25x2x160xbf16, #tpu.memory_space<vmem>>, vector<1x1x2x160xbf16>
    %261 = vector.shape_cast %260 : vector<1x1x2x160xbf16> to vector<2x160xbf16>
    %cst_201 = arith.constant dense<0.000000e+00> : vector<2x128xf32>
    %262 = tpu.matmul %261, %0, %cst_201 {dimension_numbers = #tpu.dot_dimension_numbers<[1], [0], [0], [1], [0, 0, 1, 1], [], []>} : vector<2x160xbf16>, vector<160x128xbf16>, vector<2x128xf32> -> vector<2x128xf32>
    %263 = vector.broadcast %1 : vector<1x128xf32> to vector<2x128xf32>
    %264 = arith.addf %262, %263 : vector<2x128xf32>
    %cst_202 = arith.constant 0.000000e+00 : f32
    %265 = vector.broadcast %cst_202 : f32 to vector<2x128xf32>
    %266 = arith.maximumf %264, %265 : vector<2x128xf32>
    %267 = arith.maximumf %259, %266 : vector<2x128xf32>
    %c2_203 = arith.constant 2 : index
    %c7_204 = arith.constant 7 : index
    %c0_205 = arith.constant 0 : index
    %c0_206 = arith.constant 0 : index
    %268 = vector.load %arg1[%c2_203, %c7_204, %c0_205, %c0_206] : memref<4x25x2x160xbf16, #tpu.memory_space<vmem>>, vector<1x1x2x160xbf16>
    %269 = vector.shape_cast %268 : vector<1x1x2x160xbf16> to vector<2x160xbf16>
    %cst_207 = arith.constant dense<0.000000e+00> : vector<2x128xf32>
    %270 = tpu.matmul %269, %0, %cst_207 {dimension_numbers = #tpu.dot_dimension_numbers<[1], [0], [0], [1], [0, 0, 1, 1], [], []>} : vector<2x160xbf16>, vector<160x128xbf16>, vector<2x128xf32> -> vector<2x128xf32>
    %271 = vector.broadcast %1 : vector<1x128xf32> to vector<2x128xf32>
    %272 = arith.addf %270, %271 : vector<2x128xf32>
    %cst_208 = arith.constant 0.000000e+00 : f32
    %273 = vector.broadcast %cst_208 : f32 to vector<2x128xf32>
    %274 = arith.maximumf %272, %273 : vector<2x128xf32>
    %275 = arith.maximumf %267, %274 : vector<2x128xf32>
    %c3_209 = arith.constant 3 : index
    %c7_210 = arith.constant 7 : index
    %c0_211 = arith.constant 0 : index
    %c0_212 = arith.constant 0 : index
    %276 = vector.load %arg1[%c3_209, %c7_210, %c0_211, %c0_212] : memref<4x25x2x160xbf16, #tpu.memory_space<vmem>>, vector<1x1x2x160xbf16>
    %277 = vector.shape_cast %276 : vector<1x1x2x160xbf16> to vector<2x160xbf16>
    %cst_213 = arith.constant dense<0.000000e+00> : vector<2x128xf32>
    %278 = tpu.matmul %277, %0, %cst_213 {dimension_numbers = #tpu.dot_dimension_numbers<[1], [0], [0], [1], [0, 0, 1, 1], [], []>} : vector<2x160xbf16>, vector<160x128xbf16>, vector<2x128xf32> -> vector<2x128xf32>
    %279 = vector.broadcast %1 : vector<1x128xf32> to vector<2x128xf32>
    %280 = arith.addf %278, %279 : vector<2x128xf32>
    %cst_214 = arith.constant 0.000000e+00 : f32
    %281 = vector.broadcast %cst_214 : f32 to vector<2x128xf32>
    %282 = arith.maximumf %280, %281 : vector<2x128xf32>
    %283 = arith.maximumf %275, %282 : vector<2x128xf32>
    %284 = arith.truncf %283 : vector<2x128xf32> to vector<2x128xbf16>
    %c7_215 = arith.constant 7 : index
    %c0_216 = arith.constant 0 : index
    %c0_217 = arith.constant 0 : index
    %285 = vector.load %arg4[%c7_215, %c0_216, %c0_217] : memref<25x128x128xbf16, #tpu.memory_space<vmem>>, vector<1x128x128xbf16>
    %286 = vector.shape_cast %285 : vector<1x128x128xbf16> to vector<128x128xbf16>
    %cst_218 = arith.constant dense<0.000000e+00> : vector<2x128xf32>
    %287 = tpu.matmul %284, %286, %cst_218 {dimension_numbers = #tpu.dot_dimension_numbers<[1], [0], [0], [1], [0, 0, 1, 1], [], []>} : vector<2x128xbf16>, vector<128x128xbf16>, vector<2x128xf32> -> vector<2x128xf32>
    %288 = arith.addf %252, %287 : vector<2x128xf32>
    %c0_219 = arith.constant 0 : index
    %c8 = arith.constant 8 : index
    %c0_220 = arith.constant 0 : index
    %c0_221 = arith.constant 0 : index
    %289 = vector.load %arg1[%c0_219, %c8, %c0_220, %c0_221] : memref<4x25x2x160xbf16, #tpu.memory_space<vmem>>, vector<1x1x2x160xbf16>
    %290 = vector.shape_cast %289 : vector<1x1x2x160xbf16> to vector<2x160xbf16>
    %cst_222 = arith.constant dense<0.000000e+00> : vector<2x128xf32>
    %291 = tpu.matmul %290, %0, %cst_222 {dimension_numbers = #tpu.dot_dimension_numbers<[1], [0], [0], [1], [0, 0, 1, 1], [], []>} : vector<2x160xbf16>, vector<160x128xbf16>, vector<2x128xf32> -> vector<2x128xf32>
    %292 = vector.broadcast %1 : vector<1x128xf32> to vector<2x128xf32>
    %293 = arith.addf %291, %292 : vector<2x128xf32>
    %cst_223 = arith.constant 0.000000e+00 : f32
    %294 = vector.broadcast %cst_223 : f32 to vector<2x128xf32>
    %295 = arith.maximumf %293, %294 : vector<2x128xf32>
    %c1_224 = arith.constant 1 : index
    %c8_225 = arith.constant 8 : index
    %c0_226 = arith.constant 0 : index
    %c0_227 = arith.constant 0 : index
    %296 = vector.load %arg1[%c1_224, %c8_225, %c0_226, %c0_227] : memref<4x25x2x160xbf16, #tpu.memory_space<vmem>>, vector<1x1x2x160xbf16>
    %297 = vector.shape_cast %296 : vector<1x1x2x160xbf16> to vector<2x160xbf16>
    %cst_228 = arith.constant dense<0.000000e+00> : vector<2x128xf32>
    %298 = tpu.matmul %297, %0, %cst_228 {dimension_numbers = #tpu.dot_dimension_numbers<[1], [0], [0], [1], [0, 0, 1, 1], [], []>} : vector<2x160xbf16>, vector<160x128xbf16>, vector<2x128xf32> -> vector<2x128xf32>
    %299 = vector.broadcast %1 : vector<1x128xf32> to vector<2x128xf32>
    %300 = arith.addf %298, %299 : vector<2x128xf32>
    %cst_229 = arith.constant 0.000000e+00 : f32
    %301 = vector.broadcast %cst_229 : f32 to vector<2x128xf32>
    %302 = arith.maximumf %300, %301 : vector<2x128xf32>
    %303 = arith.maximumf %295, %302 : vector<2x128xf32>
    %c2_230 = arith.constant 2 : index
    %c8_231 = arith.constant 8 : index
    %c0_232 = arith.constant 0 : index
    %c0_233 = arith.constant 0 : index
    %304 = vector.load %arg1[%c2_230, %c8_231, %c0_232, %c0_233] : memref<4x25x2x160xbf16, #tpu.memory_space<vmem>>, vector<1x1x2x160xbf16>
    %305 = vector.shape_cast %304 : vector<1x1x2x160xbf16> to vector<2x160xbf16>
    %cst_234 = arith.constant dense<0.000000e+00> : vector<2x128xf32>
    %306 = tpu.matmul %305, %0, %cst_234 {dimension_numbers = #tpu.dot_dimension_numbers<[1], [0], [0], [1], [0, 0, 1, 1], [], []>} : vector<2x160xbf16>, vector<160x128xbf16>, vector<2x128xf32> -> vector<2x128xf32>
    %307 = vector.broadcast %1 : vector<1x128xf32> to vector<2x128xf32>
    %308 = arith.addf %306, %307 : vector<2x128xf32>
    %cst_235 = arith.constant 0.000000e+00 : f32
    %309 = vector.broadcast %cst_235 : f32 to vector<2x128xf32>
    %310 = arith.maximumf %308, %309 : vector<2x128xf32>
    %311 = arith.maximumf %303, %310 : vector<2x128xf32>
    %c3_236 = arith.constant 3 : index
    %c8_237 = arith.constant 8 : index
    %c0_238 = arith.constant 0 : index
    %c0_239 = arith.constant 0 : index
    %312 = vector.load %arg1[%c3_236, %c8_237, %c0_238, %c0_239] : memref<4x25x2x160xbf16, #tpu.memory_space<vmem>>, vector<1x1x2x160xbf16>
    %313 = vector.shape_cast %312 : vector<1x1x2x160xbf16> to vector<2x160xbf16>
    %cst_240 = arith.constant dense<0.000000e+00> : vector<2x128xf32>
    %314 = tpu.matmul %313, %0, %cst_240 {dimension_numbers = #tpu.dot_dimension_numbers<[1], [0], [0], [1], [0, 0, 1, 1], [], []>} : vector<2x160xbf16>, vector<160x128xbf16>, vector<2x128xf32> -> vector<2x128xf32>
    %315 = vector.broadcast %1 : vector<1x128xf32> to vector<2x128xf32>
    %316 = arith.addf %314, %315 : vector<2x128xf32>
    %cst_241 = arith.constant 0.000000e+00 : f32
    %317 = vector.broadcast %cst_241 : f32 to vector<2x128xf32>
    %318 = arith.maximumf %316, %317 : vector<2x128xf32>
    %319 = arith.maximumf %311, %318 : vector<2x128xf32>
    %320 = arith.truncf %319 : vector<2x128xf32> to vector<2x128xbf16>
    %c8_242 = arith.constant 8 : index
    %c0_243 = arith.constant 0 : index
    %c0_244 = arith.constant 0 : index
    %321 = vector.load %arg4[%c8_242, %c0_243, %c0_244] : memref<25x128x128xbf16, #tpu.memory_space<vmem>>, vector<1x128x128xbf16>
    %322 = vector.shape_cast %321 : vector<1x128x128xbf16> to vector<128x128xbf16>
    %cst_245 = arith.constant dense<0.000000e+00> : vector<2x128xf32>
    %323 = tpu.matmul %320, %322, %cst_245 {dimension_numbers = #tpu.dot_dimension_numbers<[1], [0], [0], [1], [0, 0, 1, 1], [], []>} : vector<2x128xbf16>, vector<128x128xbf16>, vector<2x128xf32> -> vector<2x128xf32>
    %324 = arith.addf %288, %323 : vector<2x128xf32>
    %c0_246 = arith.constant 0 : index
    %c9 = arith.constant 9 : index
    %c0_247 = arith.constant 0 : index
    %c0_248 = arith.constant 0 : index
    %325 = vector.load %arg1[%c0_246, %c9, %c0_247, %c0_248] : memref<4x25x2x160xbf16, #tpu.memory_space<vmem>>, vector<1x1x2x160xbf16>
    %326 = vector.shape_cast %325 : vector<1x1x2x160xbf16> to vector<2x160xbf16>
    %cst_249 = arith.constant dense<0.000000e+00> : vector<2x128xf32>
    %327 = tpu.matmul %326, %0, %cst_249 {dimension_numbers = #tpu.dot_dimension_numbers<[1], [0], [0], [1], [0, 0, 1, 1], [], []>} : vector<2x160xbf16>, vector<160x128xbf16>, vector<2x128xf32> -> vector<2x128xf32>
    %328 = vector.broadcast %1 : vector<1x128xf32> to vector<2x128xf32>
    %329 = arith.addf %327, %328 : vector<2x128xf32>
    %cst_250 = arith.constant 0.000000e+00 : f32
    %330 = vector.broadcast %cst_250 : f32 to vector<2x128xf32>
    %331 = arith.maximumf %329, %330 : vector<2x128xf32>
    %c1_251 = arith.constant 1 : index
    %c9_252 = arith.constant 9 : index
    %c0_253 = arith.constant 0 : index
    %c0_254 = arith.constant 0 : index
    %332 = vector.load %arg1[%c1_251, %c9_252, %c0_253, %c0_254] : memref<4x25x2x160xbf16, #tpu.memory_space<vmem>>, vector<1x1x2x160xbf16>
    %333 = vector.shape_cast %332 : vector<1x1x2x160xbf16> to vector<2x160xbf16>
    %cst_255 = arith.constant dense<0.000000e+00> : vector<2x128xf32>
    %334 = tpu.matmul %333, %0, %cst_255 {dimension_numbers = #tpu.dot_dimension_numbers<[1], [0], [0], [1], [0, 0, 1, 1], [], []>} : vector<2x160xbf16>, vector<160x128xbf16>, vector<2x128xf32> -> vector<2x128xf32>
    %335 = vector.broadcast %1 : vector<1x128xf32> to vector<2x128xf32>
    %336 = arith.addf %334, %335 : vector<2x128xf32>
    %cst_256 = arith.constant 0.000000e+00 : f32
    %337 = vector.broadcast %cst_256 : f32 to vector<2x128xf32>
    %338 = arith.maximumf %336, %337 : vector<2x128xf32>
    %339 = arith.maximumf %331, %338 : vector<2x128xf32>
    %c2_257 = arith.constant 2 : index
    %c9_258 = arith.constant 9 : index
    %c0_259 = arith.constant 0 : index
    %c0_260 = arith.constant 0 : index
    %340 = vector.load %arg1[%c2_257, %c9_258, %c0_259, %c0_260] : memref<4x25x2x160xbf16, #tpu.memory_space<vmem>>, vector<1x1x2x160xbf16>
    %341 = vector.shape_cast %340 : vector<1x1x2x160xbf16> to vector<2x160xbf16>
    %cst_261 = arith.constant dense<0.000000e+00> : vector<2x128xf32>
    %342 = tpu.matmul %341, %0, %cst_261 {dimension_numbers = #tpu.dot_dimension_numbers<[1], [0], [0], [1], [0, 0, 1, 1], [], []>} : vector<2x160xbf16>, vector<160x128xbf16>, vector<2x128xf32> -> vector<2x128xf32>
    %343 = vector.broadcast %1 : vector<1x128xf32> to vector<2x128xf32>
    %344 = arith.addf %342, %343 : vector<2x128xf32>
    %cst_262 = arith.constant 0.000000e+00 : f32
    %345 = vector.broadcast %cst_262 : f32 to vector<2x128xf32>
    %346 = arith.maximumf %344, %345 : vector<2x128xf32>
    %347 = arith.maximumf %339, %346 : vector<2x128xf32>
    %c3_263 = arith.constant 3 : index
    %c9_264 = arith.constant 9 : index
    %c0_265 = arith.constant 0 : index
    %c0_266 = arith.constant 0 : index
    %348 = vector.load %arg1[%c3_263, %c9_264, %c0_265, %c0_266] : memref<4x25x2x160xbf16, #tpu.memory_space<vmem>>, vector<1x1x2x160xbf16>
    %349 = vector.shape_cast %348 : vector<1x1x2x160xbf16> to vector<2x160xbf16>
    %cst_267 = arith.constant dense<0.000000e+00> : vector<2x128xf32>
    %350 = tpu.matmul %349, %0, %cst_267 {dimension_numbers = #tpu.dot_dimension_numbers<[1], [0], [0], [1], [0, 0, 1, 1], [], []>} : vector<2x160xbf16>, vector<160x128xbf16>, vector<2x128xf32> -> vector<2x128xf32>
    %351 = vector.broadcast %1 : vector<1x128xf32> to vector<2x128xf32>
    %352 = arith.addf %350, %351 : vector<2x128xf32>
    %cst_268 = arith.constant 0.000000e+00 : f32
    %353 = vector.broadcast %cst_268 : f32 to vector<2x128xf32>
    %354 = arith.maximumf %352, %353 : vector<2x128xf32>
    %355 = arith.maximumf %347, %354 : vector<2x128xf32>
    %356 = arith.truncf %355 : vector<2x128xf32> to vector<2x128xbf16>
    %c9_269 = arith.constant 9 : index
    %c0_270 = arith.constant 0 : index
    %c0_271 = arith.constant 0 : index
    %357 = vector.load %arg4[%c9_269, %c0_270, %c0_271] : memref<25x128x128xbf16, #tpu.memory_space<vmem>>, vector<1x128x128xbf16>
    %358 = vector.shape_cast %357 : vector<1x128x128xbf16> to vector<128x128xbf16>
    %cst_272 = arith.constant dense<0.000000e+00> : vector<2x128xf32>
    %359 = tpu.matmul %356, %358, %cst_272 {dimension_numbers = #tpu.dot_dimension_numbers<[1], [0], [0], [1], [0, 0, 1, 1], [], []>} : vector<2x128xbf16>, vector<128x128xbf16>, vector<2x128xf32> -> vector<2x128xf32>
    %360 = arith.addf %324, %359 : vector<2x128xf32>
    %c0_273 = arith.constant 0 : index
    %c10 = arith.constant 10 : index
    %c0_274 = arith.constant 0 : index
    %c0_275 = arith.constant 0 : index
    %361 = vector.load %arg1[%c0_273, %c10, %c0_274, %c0_275] : memref<4x25x2x160xbf16, #tpu.memory_space<vmem>>, vector<1x1x2x160xbf16>
    %362 = vector.shape_cast %361 : vector<1x1x2x160xbf16> to vector<2x160xbf16>
    %cst_276 = arith.constant dense<0.000000e+00> : vector<2x128xf32>
    %363 = tpu.matmul %362, %0, %cst_276 {dimension_numbers = #tpu.dot_dimension_numbers<[1], [0], [0], [1], [0, 0, 1, 1], [], []>} : vector<2x160xbf16>, vector<160x128xbf16>, vector<2x128xf32> -> vector<2x128xf32>
    %364 = vector.broadcast %1 : vector<1x128xf32> to vector<2x128xf32>
    %365 = arith.addf %363, %364 : vector<2x128xf32>
    %cst_277 = arith.constant 0.000000e+00 : f32
    %366 = vector.broadcast %cst_277 : f32 to vector<2x128xf32>
    %367 = arith.maximumf %365, %366 : vector<2x128xf32>
    %c1_278 = arith.constant 1 : index
    %c10_279 = arith.constant 10 : index
    %c0_280 = arith.constant 0 : index
    %c0_281 = arith.constant 0 : index
    %368 = vector.load %arg1[%c1_278, %c10_279, %c0_280, %c0_281] : memref<4x25x2x160xbf16, #tpu.memory_space<vmem>>, vector<1x1x2x160xbf16>
    %369 = vector.shape_cast %368 : vector<1x1x2x160xbf16> to vector<2x160xbf16>
    %cst_282 = arith.constant dense<0.000000e+00> : vector<2x128xf32>
    %370 = tpu.matmul %369, %0, %cst_282 {dimension_numbers = #tpu.dot_dimension_numbers<[1], [0], [0], [1], [0, 0, 1, 1], [], []>} : vector<2x160xbf16>, vector<160x128xbf16>, vector<2x128xf32> -> vector<2x128xf32>
    %371 = vector.broadcast %1 : vector<1x128xf32> to vector<2x128xf32>
    %372 = arith.addf %370, %371 : vector<2x128xf32>
    %cst_283 = arith.constant 0.000000e+00 : f32
    %373 = vector.broadcast %cst_283 : f32 to vector<2x128xf32>
    %374 = arith.maximumf %372, %373 : vector<2x128xf32>
    %375 = arith.maximumf %367, %374 : vector<2x128xf32>
    %c2_284 = arith.constant 2 : index
    %c10_285 = arith.constant 10 : index
    %c0_286 = arith.constant 0 : index
    %c0_287 = arith.constant 0 : index
    %376 = vector.load %arg1[%c2_284, %c10_285, %c0_286, %c0_287] : memref<4x25x2x160xbf16, #tpu.memory_space<vmem>>, vector<1x1x2x160xbf16>
    %377 = vector.shape_cast %376 : vector<1x1x2x160xbf16> to vector<2x160xbf16>
    %cst_288 = arith.constant dense<0.000000e+00> : vector<2x128xf32>
    %378 = tpu.matmul %377, %0, %cst_288 {dimension_numbers = #tpu.dot_dimension_numbers<[1], [0], [0], [1], [0, 0, 1, 1], [], []>} : vector<2x160xbf16>, vector<160x128xbf16>, vector<2x128xf32> -> vector<2x128xf32>
    %379 = vector.broadcast %1 : vector<1x128xf32> to vector<2x128xf32>
    %380 = arith.addf %378, %379 : vector<2x128xf32>
    %cst_289 = arith.constant 0.000000e+00 : f32
    %381 = vector.broadcast %cst_289 : f32 to vector<2x128xf32>
    %382 = arith.maximumf %380, %381 : vector<2x128xf32>
    %383 = arith.maximumf %375, %382 : vector<2x128xf32>
    %c3_290 = arith.constant 3 : index
    %c10_291 = arith.constant 10 : index
    %c0_292 = arith.constant 0 : index
    %c0_293 = arith.constant 0 : index
    %384 = vector.load %arg1[%c3_290, %c10_291, %c0_292, %c0_293] : memref<4x25x2x160xbf16, #tpu.memory_space<vmem>>, vector<1x1x2x160xbf16>
    %385 = vector.shape_cast %384 : vector<1x1x2x160xbf16> to vector<2x160xbf16>
    %cst_294 = arith.constant dense<0.000000e+00> : vector<2x128xf32>
    %386 = tpu.matmul %385, %0, %cst_294 {dimension_numbers = #tpu.dot_dimension_numbers<[1], [0], [0], [1], [0, 0, 1, 1], [], []>} : vector<2x160xbf16>, vector<160x128xbf16>, vector<2x128xf32> -> vector<2x128xf32>
    %387 = vector.broadcast %1 : vector<1x128xf32> to vector<2x128xf32>
    %388 = arith.addf %386, %387 : vector<2x128xf32>
    %cst_295 = arith.constant 0.000000e+00 : f32
    %389 = vector.broadcast %cst_295 : f32 to vector<2x128xf32>
    %390 = arith.maximumf %388, %389 : vector<2x128xf32>
    %391 = arith.maximumf %383, %390 : vector<2x128xf32>
    %392 = arith.truncf %391 : vector<2x128xf32> to vector<2x128xbf16>
    %c10_296 = arith.constant 10 : index
    %c0_297 = arith.constant 0 : index
    %c0_298 = arith.constant 0 : index
    %393 = vector.load %arg4[%c10_296, %c0_297, %c0_298] : memref<25x128x128xbf16, #tpu.memory_space<vmem>>, vector<1x128x128xbf16>
    %394 = vector.shape_cast %393 : vector<1x128x128xbf16> to vector<128x128xbf16>
    %cst_299 = arith.constant dense<0.000000e+00> : vector<2x128xf32>
    %395 = tpu.matmul %392, %394, %cst_299 {dimension_numbers = #tpu.dot_dimension_numbers<[1], [0], [0], [1], [0, 0, 1, 1], [], []>} : vector<2x128xbf16>, vector<128x128xbf16>, vector<2x128xf32> -> vector<2x128xf32>
    %396 = arith.addf %360, %395 : vector<2x128xf32>
    %c0_300 = arith.constant 0 : index
    %c11 = arith.constant 11 : index
    %c0_301 = arith.constant 0 : index
    %c0_302 = arith.constant 0 : index
    %397 = vector.load %arg1[%c0_300, %c11, %c0_301, %c0_302] : memref<4x25x2x160xbf16, #tpu.memory_space<vmem>>, vector<1x1x2x160xbf16>
    %398 = vector.shape_cast %397 : vector<1x1x2x160xbf16> to vector<2x160xbf16>
    %cst_303 = arith.constant dense<0.000000e+00> : vector<2x128xf32>
    %399 = tpu.matmul %398, %0, %cst_303 {dimension_numbers = #tpu.dot_dimension_numbers<[1], [0], [0], [1], [0, 0, 1, 1], [], []>} : vector<2x160xbf16>, vector<160x128xbf16>, vector<2x128xf32> -> vector<2x128xf32>
    %400 = vector.broadcast %1 : vector<1x128xf32> to vector<2x128xf32>
    %401 = arith.addf %399, %400 : vector<2x128xf32>
    %cst_304 = arith.constant 0.000000e+00 : f32
    %402 = vector.broadcast %cst_304 : f32 to vector<2x128xf32>
    %403 = arith.maximumf %401, %402 : vector<2x128xf32>
    %c1_305 = arith.constant 1 : index
    %c11_306 = arith.constant 11 : index
    %c0_307 = arith.constant 0 : index
    %c0_308 = arith.constant 0 : index
    %404 = vector.load %arg1[%c1_305, %c11_306, %c0_307, %c0_308] : memref<4x25x2x160xbf16, #tpu.memory_space<vmem>>, vector<1x1x2x160xbf16>
    %405 = vector.shape_cast %404 : vector<1x1x2x160xbf16> to vector<2x160xbf16>
    %cst_309 = arith.constant dense<0.000000e+00> : vector<2x128xf32>
    %406 = tpu.matmul %405, %0, %cst_309 {dimension_numbers = #tpu.dot_dimension_numbers<[1], [0], [0], [1], [0, 0, 1, 1], [], []>} : vector<2x160xbf16>, vector<160x128xbf16>, vector<2x128xf32> -> vector<2x128xf32>
    %407 = vector.broadcast %1 : vector<1x128xf32> to vector<2x128xf32>
    %408 = arith.addf %406, %407 : vector<2x128xf32>
    %cst_310 = arith.constant 0.000000e+00 : f32
    %409 = vector.broadcast %cst_310 : f32 to vector<2x128xf32>
    %410 = arith.maximumf %408, %409 : vector<2x128xf32>
    %411 = arith.maximumf %403, %410 : vector<2x128xf32>
    %c2_311 = arith.constant 2 : index
    %c11_312 = arith.constant 11 : index
    %c0_313 = arith.constant 0 : index
    %c0_314 = arith.constant 0 : index
    %412 = vector.load %arg1[%c2_311, %c11_312, %c0_313, %c0_314] : memref<4x25x2x160xbf16, #tpu.memory_space<vmem>>, vector<1x1x2x160xbf16>
    %413 = vector.shape_cast %412 : vector<1x1x2x160xbf16> to vector<2x160xbf16>
    %cst_315 = arith.constant dense<0.000000e+00> : vector<2x128xf32>
    %414 = tpu.matmul %413, %0, %cst_315 {dimension_numbers = #tpu.dot_dimension_numbers<[1], [0], [0], [1], [0, 0, 1, 1], [], []>} : vector<2x160xbf16>, vector<160x128xbf16>, vector<2x128xf32> -> vector<2x128xf32>
    %415 = vector.broadcast %1 : vector<1x128xf32> to vector<2x128xf32>
    %416 = arith.addf %414, %415 : vector<2x128xf32>
    %cst_316 = arith.constant 0.000000e+00 : f32
    %417 = vector.broadcast %cst_316 : f32 to vector<2x128xf32>
    %418 = arith.maximumf %416, %417 : vector<2x128xf32>
    %419 = arith.maximumf %411, %418 : vector<2x128xf32>
    %c3_317 = arith.constant 3 : index
    %c11_318 = arith.constant 11 : index
    %c0_319 = arith.constant 0 : index
    %c0_320 = arith.constant 0 : index
    %420 = vector.load %arg1[%c3_317, %c11_318, %c0_319, %c0_320] : memref<4x25x2x160xbf16, #tpu.memory_space<vmem>>, vector<1x1x2x160xbf16>
    %421 = vector.shape_cast %420 : vector<1x1x2x160xbf16> to vector<2x160xbf16>
    %cst_321 = arith.constant dense<0.000000e+00> : vector<2x128xf32>
    %422 = tpu.matmul %421, %0, %cst_321 {dimension_numbers = #tpu.dot_dimension_numbers<[1], [0], [0], [1], [0, 0, 1, 1], [], []>} : vector<2x160xbf16>, vector<160x128xbf16>, vector<2x128xf32> -> vector<2x128xf32>
    %423 = vector.broadcast %1 : vector<1x128xf32> to vector<2x128xf32>
    %424 = arith.addf %422, %423 : vector<2x128xf32>
    %cst_322 = arith.constant 0.000000e+00 : f32
    %425 = vector.broadcast %cst_322 : f32 to vector<2x128xf32>
    %426 = arith.maximumf %424, %425 : vector<2x128xf32>
    %427 = arith.maximumf %419, %426 : vector<2x128xf32>
    %428 = arith.truncf %427 : vector<2x128xf32> to vector<2x128xbf16>
    %c11_323 = arith.constant 11 : index
    %c0_324 = arith.constant 0 : index
    %c0_325 = arith.constant 0 : index
    %429 = vector.load %arg4[%c11_323, %c0_324, %c0_325] : memref<25x128x128xbf16, #tpu.memory_space<vmem>>, vector<1x128x128xbf16>
    %430 = vector.shape_cast %429 : vector<1x128x128xbf16> to vector<128x128xbf16>
    %cst_326 = arith.constant dense<0.000000e+00> : vector<2x128xf32>
    %431 = tpu.matmul %428, %430, %cst_326 {dimension_numbers = #tpu.dot_dimension_numbers<[1], [0], [0], [1], [0, 0, 1, 1], [], []>} : vector<2x128xbf16>, vector<128x128xbf16>, vector<2x128xf32> -> vector<2x128xf32>
    %432 = arith.addf %396, %431 : vector<2x128xf32>
    %c0_327 = arith.constant 0 : index
    %c12 = arith.constant 12 : index
    %c0_328 = arith.constant 0 : index
    %c0_329 = arith.constant 0 : index
    %433 = vector.load %arg1[%c0_327, %c12, %c0_328, %c0_329] : memref<4x25x2x160xbf16, #tpu.memory_space<vmem>>, vector<1x1x2x160xbf16>
    %434 = vector.shape_cast %433 : vector<1x1x2x160xbf16> to vector<2x160xbf16>
    %cst_330 = arith.constant dense<0.000000e+00> : vector<2x128xf32>
    %435 = tpu.matmul %434, %0, %cst_330 {dimension_numbers = #tpu.dot_dimension_numbers<[1], [0], [0], [1], [0, 0, 1, 1], [], []>} : vector<2x160xbf16>, vector<160x128xbf16>, vector<2x128xf32> -> vector<2x128xf32>
    %436 = vector.broadcast %1 : vector<1x128xf32> to vector<2x128xf32>
    %437 = arith.addf %435, %436 : vector<2x128xf32>
    %cst_331 = arith.constant 0.000000e+00 : f32
    %438 = vector.broadcast %cst_331 : f32 to vector<2x128xf32>
    %439 = arith.maximumf %437, %438 : vector<2x128xf32>
    %c1_332 = arith.constant 1 : index
    %c12_333 = arith.constant 12 : index
    %c0_334 = arith.constant 0 : index
    %c0_335 = arith.constant 0 : index
    %440 = vector.load %arg1[%c1_332, %c12_333, %c0_334, %c0_335] : memref<4x25x2x160xbf16, #tpu.memory_space<vmem>>, vector<1x1x2x160xbf16>
    %441 = vector.shape_cast %440 : vector<1x1x2x160xbf16> to vector<2x160xbf16>
    %cst_336 = arith.constant dense<0.000000e+00> : vector<2x128xf32>
    %442 = tpu.matmul %441, %0, %cst_336 {dimension_numbers = #tpu.dot_dimension_numbers<[1], [0], [0], [1], [0, 0, 1, 1], [], []>} : vector<2x160xbf16>, vector<160x128xbf16>, vector<2x128xf32> -> vector<2x128xf32>
    %443 = vector.broadcast %1 : vector<1x128xf32> to vector<2x128xf32>
    %444 = arith.addf %442, %443 : vector<2x128xf32>
    %cst_337 = arith.constant 0.000000e+00 : f32
    %445 = vector.broadcast %cst_337 : f32 to vector<2x128xf32>
    %446 = arith.maximumf %444, %445 : vector<2x128xf32>
    %447 = arith.maximumf %439, %446 : vector<2x128xf32>
    %c2_338 = arith.constant 2 : index
    %c12_339 = arith.constant 12 : index
    %c0_340 = arith.constant 0 : index
    %c0_341 = arith.constant 0 : index
    %448 = vector.load %arg1[%c2_338, %c12_339, %c0_340, %c0_341] : memref<4x25x2x160xbf16, #tpu.memory_space<vmem>>, vector<1x1x2x160xbf16>
    %449 = vector.shape_cast %448 : vector<1x1x2x160xbf16> to vector<2x160xbf16>
    %cst_342 = arith.constant dense<0.000000e+00> : vector<2x128xf32>
    %450 = tpu.matmul %449, %0, %cst_342 {dimension_numbers = #tpu.dot_dimension_numbers<[1], [0], [0], [1], [0, 0, 1, 1], [], []>} : vector<2x160xbf16>, vector<160x128xbf16>, vector<2x128xf32> -> vector<2x128xf32>
    %451 = vector.broadcast %1 : vector<1x128xf32> to vector<2x128xf32>
    %452 = arith.addf %450, %451 : vector<2x128xf32>
    %cst_343 = arith.constant 0.000000e+00 : f32
    %453 = vector.broadcast %cst_343 : f32 to vector<2x128xf32>
    %454 = arith.maximumf %452, %453 : vector<2x128xf32>
    %455 = arith.maximumf %447, %454 : vector<2x128xf32>
    %c3_344 = arith.constant 3 : index
    %c12_345 = arith.constant 12 : index
    %c0_346 = arith.constant 0 : index
    %c0_347 = arith.constant 0 : index
    %456 = vector.load %arg1[%c3_344, %c12_345, %c0_346, %c0_347] : memref<4x25x2x160xbf16, #tpu.memory_space<vmem>>, vector<1x1x2x160xbf16>
    %457 = vector.shape_cast %456 : vector<1x1x2x160xbf16> to vector<2x160xbf16>
    %cst_348 = arith.constant dense<0.000000e+00> : vector<2x128xf32>
    %458 = tpu.matmul %457, %0, %cst_348 {dimension_numbers = #tpu.dot_dimension_numbers<[1], [0], [0], [1], [0, 0, 1, 1], [], []>} : vector<2x160xbf16>, vector<160x128xbf16>, vector<2x128xf32> -> vector<2x128xf32>
    %459 = vector.broadcast %1 : vector<1x128xf32> to vector<2x128xf32>
    %460 = arith.addf %458, %459 : vector<2x128xf32>
    %cst_349 = arith.constant 0.000000e+00 : f32
    %461 = vector.broadcast %cst_349 : f32 to vector<2x128xf32>
    %462 = arith.maximumf %460, %461 : vector<2x128xf32>
    %463 = arith.maximumf %455, %462 : vector<2x128xf32>
    %464 = arith.truncf %463 : vector<2x128xf32> to vector<2x128xbf16>
    %c12_350 = arith.constant 12 : index
    %c0_351 = arith.constant 0 : index
    %c0_352 = arith.constant 0 : index
    %465 = vector.load %arg4[%c12_350, %c0_351, %c0_352] : memref<25x128x128xbf16, #tpu.memory_space<vmem>>, vector<1x128x128xbf16>
    %466 = vector.shape_cast %465 : vector<1x128x128xbf16> to vector<128x128xbf16>
    %cst_353 = arith.constant dense<0.000000e+00> : vector<2x128xf32>
    %467 = tpu.matmul %464, %466, %cst_353 {dimension_numbers = #tpu.dot_dimension_numbers<[1], [0], [0], [1], [0, 0, 1, 1], [], []>} : vector<2x128xbf16>, vector<128x128xbf16>, vector<2x128xf32> -> vector<2x128xf32>
    %468 = arith.addf %432, %467 : vector<2x128xf32>
    %c0_354 = arith.constant 0 : index
    %c13 = arith.constant 13 : index
    %c0_355 = arith.constant 0 : index
    %c0_356 = arith.constant 0 : index
    %469 = vector.load %arg1[%c0_354, %c13, %c0_355, %c0_356] : memref<4x25x2x160xbf16, #tpu.memory_space<vmem>>, vector<1x1x2x160xbf16>
    %470 = vector.shape_cast %469 : vector<1x1x2x160xbf16> to vector<2x160xbf16>
    %cst_357 = arith.constant dense<0.000000e+00> : vector<2x128xf32>
    %471 = tpu.matmul %470, %0, %cst_357 {dimension_numbers = #tpu.dot_dimension_numbers<[1], [0], [0], [1], [0, 0, 1, 1], [], []>} : vector<2x160xbf16>, vector<160x128xbf16>, vector<2x128xf32> -> vector<2x128xf32>
    %472 = vector.broadcast %1 : vector<1x128xf32> to vector<2x128xf32>
    %473 = arith.addf %471, %472 : vector<2x128xf32>
    %cst_358 = arith.constant 0.000000e+00 : f32
    %474 = vector.broadcast %cst_358 : f32 to vector<2x128xf32>
    %475 = arith.maximumf %473, %474 : vector<2x128xf32>
    %c1_359 = arith.constant 1 : index
    %c13_360 = arith.constant 13 : index
    %c0_361 = arith.constant 0 : index
    %c0_362 = arith.constant 0 : index
    %476 = vector.load %arg1[%c1_359, %c13_360, %c0_361, %c0_362] : memref<4x25x2x160xbf16, #tpu.memory_space<vmem>>, vector<1x1x2x160xbf16>
    %477 = vector.shape_cast %476 : vector<1x1x2x160xbf16> to vector<2x160xbf16>
    %cst_363 = arith.constant dense<0.000000e+00> : vector<2x128xf32>
    %478 = tpu.matmul %477, %0, %cst_363 {dimension_numbers = #tpu.dot_dimension_numbers<[1], [0], [0], [1], [0, 0, 1, 1], [], []>} : vector<2x160xbf16>, vector<160x128xbf16>, vector<2x128xf32> -> vector<2x128xf32>
    %479 = vector.broadcast %1 : vector<1x128xf32> to vector<2x128xf32>
    %480 = arith.addf %478, %479 : vector<2x128xf32>
    %cst_364 = arith.constant 0.000000e+00 : f32
    %481 = vector.broadcast %cst_364 : f32 to vector<2x128xf32>
    %482 = arith.maximumf %480, %481 : vector<2x128xf32>
    %483 = arith.maximumf %475, %482 : vector<2x128xf32>
    %c2_365 = arith.constant 2 : index
    %c13_366 = arith.constant 13 : index
    %c0_367 = arith.constant 0 : index
    %c0_368 = arith.constant 0 : index
    %484 = vector.load %arg1[%c2_365, %c13_366, %c0_367, %c0_368] : memref<4x25x2x160xbf16, #tpu.memory_space<vmem>>, vector<1x1x2x160xbf16>
    %485 = vector.shape_cast %484 : vector<1x1x2x160xbf16> to vector<2x160xbf16>
    %cst_369 = arith.constant dense<0.000000e+00> : vector<2x128xf32>
    %486 = tpu.matmul %485, %0, %cst_369 {dimension_numbers = #tpu.dot_dimension_numbers<[1], [0], [0], [1], [0, 0, 1, 1], [], []>} : vector<2x160xbf16>, vector<160x128xbf16>, vector<2x128xf32> -> vector<2x128xf32>
    %487 = vector.broadcast %1 : vector<1x128xf32> to vector<2x128xf32>
    %488 = arith.addf %486, %487 : vector<2x128xf32>
    %cst_370 = arith.constant 0.000000e+00 : f32
    %489 = vector.broadcast %cst_370 : f32 to vector<2x128xf32>
    %490 = arith.maximumf %488, %489 : vector<2x128xf32>
    %491 = arith.maximumf %483, %490 : vector<2x128xf32>
    %c3_371 = arith.constant 3 : index
    %c13_372 = arith.constant 13 : index
    %c0_373 = arith.constant 0 : index
    %c0_374 = arith.constant 0 : index
    %492 = vector.load %arg1[%c3_371, %c13_372, %c0_373, %c0_374] : memref<4x25x2x160xbf16, #tpu.memory_space<vmem>>, vector<1x1x2x160xbf16>
    %493 = vector.shape_cast %492 : vector<1x1x2x160xbf16> to vector<2x160xbf16>
    %cst_375 = arith.constant dense<0.000000e+00> : vector<2x128xf32>
    %494 = tpu.matmul %493, %0, %cst_375 {dimension_numbers = #tpu.dot_dimension_numbers<[1], [0], [0], [1], [0, 0, 1, 1], [], []>} : vector<2x160xbf16>, vector<160x128xbf16>, vector<2x128xf32> -> vector<2x128xf32>
    %495 = vector.broadcast %1 : vector<1x128xf32> to vector<2x128xf32>
    %496 = arith.addf %494, %495 : vector<2x128xf32>
    %cst_376 = arith.constant 0.000000e+00 : f32
    %497 = vector.broadcast %cst_376 : f32 to vector<2x128xf32>
    %498 = arith.maximumf %496, %497 : vector<2x128xf32>
    %499 = arith.maximumf %491, %498 : vector<2x128xf32>
    %500 = arith.truncf %499 : vector<2x128xf32> to vector<2x128xbf16>
    %c13_377 = arith.constant 13 : index
    %c0_378 = arith.constant 0 : index
    %c0_379 = arith.constant 0 : index
    %501 = vector.load %arg4[%c13_377, %c0_378, %c0_379] : memref<25x128x128xbf16, #tpu.memory_space<vmem>>, vector<1x128x128xbf16>
    %502 = vector.shape_cast %501 : vector<1x128x128xbf16> to vector<128x128xbf16>
    %cst_380 = arith.constant dense<0.000000e+00> : vector<2x128xf32>
    %503 = tpu.matmul %500, %502, %cst_380 {dimension_numbers = #tpu.dot_dimension_numbers<[1], [0], [0], [1], [0, 0, 1, 1], [], []>} : vector<2x128xbf16>, vector<128x128xbf16>, vector<2x128xf32> -> vector<2x128xf32>
    %504 = arith.addf %468, %503 : vector<2x128xf32>
    %c0_381 = arith.constant 0 : index
    %c14 = arith.constant 14 : index
    %c0_382 = arith.constant 0 : index
    %c0_383 = arith.constant 0 : index
    %505 = vector.load %arg1[%c0_381, %c14, %c0_382, %c0_383] : memref<4x25x2x160xbf16, #tpu.memory_space<vmem>>, vector<1x1x2x160xbf16>
    %506 = vector.shape_cast %505 : vector<1x1x2x160xbf16> to vector<2x160xbf16>
    %cst_384 = arith.constant dense<0.000000e+00> : vector<2x128xf32>
    %507 = tpu.matmul %506, %0, %cst_384 {dimension_numbers = #tpu.dot_dimension_numbers<[1], [0], [0], [1], [0, 0, 1, 1], [], []>} : vector<2x160xbf16>, vector<160x128xbf16>, vector<2x128xf32> -> vector<2x128xf32>
    %508 = vector.broadcast %1 : vector<1x128xf32> to vector<2x128xf32>
    %509 = arith.addf %507, %508 : vector<2x128xf32>
    %cst_385 = arith.constant 0.000000e+00 : f32
    %510 = vector.broadcast %cst_385 : f32 to vector<2x128xf32>
    %511 = arith.maximumf %509, %510 : vector<2x128xf32>
    %c1_386 = arith.constant 1 : index
    %c14_387 = arith.constant 14 : index
    %c0_388 = arith.constant 0 : index
    %c0_389 = arith.constant 0 : index
    %512 = vector.load %arg1[%c1_386, %c14_387, %c0_388, %c0_389] : memref<4x25x2x160xbf16, #tpu.memory_space<vmem>>, vector<1x1x2x160xbf16>
    %513 = vector.shape_cast %512 : vector<1x1x2x160xbf16> to vector<2x160xbf16>
    %cst_390 = arith.constant dense<0.000000e+00> : vector<2x128xf32>
    %514 = tpu.matmul %513, %0, %cst_390 {dimension_numbers = #tpu.dot_dimension_numbers<[1], [0], [0], [1], [0, 0, 1, 1], [], []>} : vector<2x160xbf16>, vector<160x128xbf16>, vector<2x128xf32> -> vector<2x128xf32>
    %515 = vector.broadcast %1 : vector<1x128xf32> to vector<2x128xf32>
    %516 = arith.addf %514, %515 : vector<2x128xf32>
    %cst_391 = arith.constant 0.000000e+00 : f32
    %517 = vector.broadcast %cst_391 : f32 to vector<2x128xf32>
    %518 = arith.maximumf %516, %517 : vector<2x128xf32>
    %519 = arith.maximumf %511, %518 : vector<2x128xf32>
    %c2_392 = arith.constant 2 : index
    %c14_393 = arith.constant 14 : index
    %c0_394 = arith.constant 0 : index
    %c0_395 = arith.constant 0 : index
    %520 = vector.load %arg1[%c2_392, %c14_393, %c0_394, %c0_395] : memref<4x25x2x160xbf16, #tpu.memory_space<vmem>>, vector<1x1x2x160xbf16>
    %521 = vector.shape_cast %520 : vector<1x1x2x160xbf16> to vector<2x160xbf16>
    %cst_396 = arith.constant dense<0.000000e+00> : vector<2x128xf32>
    %522 = tpu.matmul %521, %0, %cst_396 {dimension_numbers = #tpu.dot_dimension_numbers<[1], [0], [0], [1], [0, 0, 1, 1], [], []>} : vector<2x160xbf16>, vector<160x128xbf16>, vector<2x128xf32> -> vector<2x128xf32>
    %523 = vector.broadcast %1 : vector<1x128xf32> to vector<2x128xf32>
    %524 = arith.addf %522, %523 : vector<2x128xf32>
    %cst_397 = arith.constant 0.000000e+00 : f32
    %525 = vector.broadcast %cst_397 : f32 to vector<2x128xf32>
    %526 = arith.maximumf %524, %525 : vector<2x128xf32>
    %527 = arith.maximumf %519, %526 : vector<2x128xf32>
    %c3_398 = arith.constant 3 : index
    %c14_399 = arith.constant 14 : index
    %c0_400 = arith.constant 0 : index
    %c0_401 = arith.constant 0 : index
    %528 = vector.load %arg1[%c3_398, %c14_399, %c0_400, %c0_401] : memref<4x25x2x160xbf16, #tpu.memory_space<vmem>>, vector<1x1x2x160xbf16>
    %529 = vector.shape_cast %528 : vector<1x1x2x160xbf16> to vector<2x160xbf16>
    %cst_402 = arith.constant dense<0.000000e+00> : vector<2x128xf32>
    %530 = tpu.matmul %529, %0, %cst_402 {dimension_numbers = #tpu.dot_dimension_numbers<[1], [0], [0], [1], [0, 0, 1, 1], [], []>} : vector<2x160xbf16>, vector<160x128xbf16>, vector<2x128xf32> -> vector<2x128xf32>
    %531 = vector.broadcast %1 : vector<1x128xf32> to vector<2x128xf32>
    %532 = arith.addf %530, %531 : vector<2x128xf32>
    %cst_403 = arith.constant 0.000000e+00 : f32
    %533 = vector.broadcast %cst_403 : f32 to vector<2x128xf32>
    %534 = arith.maximumf %532, %533 : vector<2x128xf32>
    %535 = arith.maximumf %527, %534 : vector<2x128xf32>
    %536 = arith.truncf %535 : vector<2x128xf32> to vector<2x128xbf16>
    %c14_404 = arith.constant 14 : index
    %c0_405 = arith.constant 0 : index
    %c0_406 = arith.constant 0 : index
    %537 = vector.load %arg4[%c14_404, %c0_405, %c0_406] : memref<25x128x128xbf16, #tpu.memory_space<vmem>>, vector<1x128x128xbf16>
    %538 = vector.shape_cast %537 : vector<1x128x128xbf16> to vector<128x128xbf16>
    %cst_407 = arith.constant dense<0.000000e+00> : vector<2x128xf32>
    %539 = tpu.matmul %536, %538, %cst_407 {dimension_numbers = #tpu.dot_dimension_numbers<[1], [0], [0], [1], [0, 0, 1, 1], [], []>} : vector<2x128xbf16>, vector<128x128xbf16>, vector<2x128xf32> -> vector<2x128xf32>
    %540 = arith.addf %504, %539 : vector<2x128xf32>
    %c0_408 = arith.constant 0 : index
    %c15 = arith.constant 15 : index
    %c0_409 = arith.constant 0 : index
    %c0_410 = arith.constant 0 : index
    %541 = vector.load %arg1[%c0_408, %c15, %c0_409, %c0_410] : memref<4x25x2x160xbf16, #tpu.memory_space<vmem>>, vector<1x1x2x160xbf16>
    %542 = vector.shape_cast %541 : vector<1x1x2x160xbf16> to vector<2x160xbf16>
    %cst_411 = arith.constant dense<0.000000e+00> : vector<2x128xf32>
    %543 = tpu.matmul %542, %0, %cst_411 {dimension_numbers = #tpu.dot_dimension_numbers<[1], [0], [0], [1], [0, 0, 1, 1], [], []>} : vector<2x160xbf16>, vector<160x128xbf16>, vector<2x128xf32> -> vector<2x128xf32>
    %544 = vector.broadcast %1 : vector<1x128xf32> to vector<2x128xf32>
    %545 = arith.addf %543, %544 : vector<2x128xf32>
    %cst_412 = arith.constant 0.000000e+00 : f32
    %546 = vector.broadcast %cst_412 : f32 to vector<2x128xf32>
    %547 = arith.maximumf %545, %546 : vector<2x128xf32>
    %c1_413 = arith.constant 1 : index
    %c15_414 = arith.constant 15 : index
    %c0_415 = arith.constant 0 : index
    %c0_416 = arith.constant 0 : index
    %548 = vector.load %arg1[%c1_413, %c15_414, %c0_415, %c0_416] : memref<4x25x2x160xbf16, #tpu.memory_space<vmem>>, vector<1x1x2x160xbf16>
    %549 = vector.shape_cast %548 : vector<1x1x2x160xbf16> to vector<2x160xbf16>
    %cst_417 = arith.constant dense<0.000000e+00> : vector<2x128xf32>
    %550 = tpu.matmul %549, %0, %cst_417 {dimension_numbers = #tpu.dot_dimension_numbers<[1], [0], [0], [1], [0, 0, 1, 1], [], []>} : vector<2x160xbf16>, vector<160x128xbf16>, vector<2x128xf32> -> vector<2x128xf32>
    %551 = vector.broadcast %1 : vector<1x128xf32> to vector<2x128xf32>
    %552 = arith.addf %550, %551 : vector<2x128xf32>
    %cst_418 = arith.constant 0.000000e+00 : f32
    %553 = vector.broadcast %cst_418 : f32 to vector<2x128xf32>
    %554 = arith.maximumf %552, %553 : vector<2x128xf32>
    %555 = arith.maximumf %547, %554 : vector<2x128xf32>
    %c2_419 = arith.constant 2 : index
    %c15_420 = arith.constant 15 : index
    %c0_421 = arith.constant 0 : index
    %c0_422 = arith.constant 0 : index
    %556 = vector.load %arg1[%c2_419, %c15_420, %c0_421, %c0_422] : memref<4x25x2x160xbf16, #tpu.memory_space<vmem>>, vector<1x1x2x160xbf16>
    %557 = vector.shape_cast %556 : vector<1x1x2x160xbf16> to vector<2x160xbf16>
    %cst_423 = arith.constant dense<0.000000e+00> : vector<2x128xf32>
    %558 = tpu.matmul %557, %0, %cst_423 {dimension_numbers = #tpu.dot_dimension_numbers<[1], [0], [0], [1], [0, 0, 1, 1], [], []>} : vector<2x160xbf16>, vector<160x128xbf16>, vector<2x128xf32> -> vector<2x128xf32>
    %559 = vector.broadcast %1 : vector<1x128xf32> to vector<2x128xf32>
    %560 = arith.addf %558, %559 : vector<2x128xf32>
    %cst_424 = arith.constant 0.000000e+00 : f32
    %561 = vector.broadcast %cst_424 : f32 to vector<2x128xf32>
    %562 = arith.maximumf %560, %561 : vector<2x128xf32>
    %563 = arith.maximumf %555, %562 : vector<2x128xf32>
    %c3_425 = arith.constant 3 : index
    %c15_426 = arith.constant 15 : index
    %c0_427 = arith.constant 0 : index
    %c0_428 = arith.constant 0 : index
    %564 = vector.load %arg1[%c3_425, %c15_426, %c0_427, %c0_428] : memref<4x25x2x160xbf16, #tpu.memory_space<vmem>>, vector<1x1x2x160xbf16>
    %565 = vector.shape_cast %564 : vector<1x1x2x160xbf16> to vector<2x160xbf16>
    %cst_429 = arith.constant dense<0.000000e+00> : vector<2x128xf32>
    %566 = tpu.matmul %565, %0, %cst_429 {dimension_numbers = #tpu.dot_dimension_numbers<[1], [0], [0], [1], [0, 0, 1, 1], [], []>} : vector<2x160xbf16>, vector<160x128xbf16>, vector<2x128xf32> -> vector<2x128xf32>
    %567 = vector.broadcast %1 : vector<1x128xf32> to vector<2x128xf32>
    %568 = arith.addf %566, %567 : vector<2x128xf32>
    %cst_430 = arith.constant 0.000000e+00 : f32
    %569 = vector.broadcast %cst_430 : f32 to vector<2x128xf32>
    %570 = arith.maximumf %568, %569 : vector<2x128xf32>
    %571 = arith.maximumf %563, %570 : vector<2x128xf32>
    %572 = arith.truncf %571 : vector<2x128xf32> to vector<2x128xbf16>
    %c15_431 = arith.constant 15 : index
    %c0_432 = arith.constant 0 : index
    %c0_433 = arith.constant 0 : index
    %573 = vector.load %arg4[%c15_431, %c0_432, %c0_433] : memref<25x128x128xbf16, #tpu.memory_space<vmem>>, vector<1x128x128xbf16>
    %574 = vector.shape_cast %573 : vector<1x128x128xbf16> to vector<128x128xbf16>
    %cst_434 = arith.constant dense<0.000000e+00> : vector<2x128xf32>
    %575 = tpu.matmul %572, %574, %cst_434 {dimension_numbers = #tpu.dot_dimension_numbers<[1], [0], [0], [1], [0, 0, 1, 1], [], []>} : vector<2x128xbf16>, vector<128x128xbf16>, vector<2x128xf32> -> vector<2x128xf32>
    %576 = arith.addf %540, %575 : vector<2x128xf32>
    %c0_435 = arith.constant 0 : index
    %c16 = arith.constant 16 : index
    %c0_436 = arith.constant 0 : index
    %c0_437 = arith.constant 0 : index
    %577 = vector.load %arg1[%c0_435, %c16, %c0_436, %c0_437] : memref<4x25x2x160xbf16, #tpu.memory_space<vmem>>, vector<1x1x2x160xbf16>
    %578 = vector.shape_cast %577 : vector<1x1x2x160xbf16> to vector<2x160xbf16>
    %cst_438 = arith.constant dense<0.000000e+00> : vector<2x128xf32>
    %579 = tpu.matmul %578, %0, %cst_438 {dimension_numbers = #tpu.dot_dimension_numbers<[1], [0], [0], [1], [0, 0, 1, 1], [], []>} : vector<2x160xbf16>, vector<160x128xbf16>, vector<2x128xf32> -> vector<2x128xf32>
    %580 = vector.broadcast %1 : vector<1x128xf32> to vector<2x128xf32>
    %581 = arith.addf %579, %580 : vector<2x128xf32>
    %cst_439 = arith.constant 0.000000e+00 : f32
    %582 = vector.broadcast %cst_439 : f32 to vector<2x128xf32>
    %583 = arith.maximumf %581, %582 : vector<2x128xf32>
    %c1_440 = arith.constant 1 : index
    %c16_441 = arith.constant 16 : index
    %c0_442 = arith.constant 0 : index
    %c0_443 = arith.constant 0 : index
    %584 = vector.load %arg1[%c1_440, %c16_441, %c0_442, %c0_443] : memref<4x25x2x160xbf16, #tpu.memory_space<vmem>>, vector<1x1x2x160xbf16>
    %585 = vector.shape_cast %584 : vector<1x1x2x160xbf16> to vector<2x160xbf16>
    %cst_444 = arith.constant dense<0.000000e+00> : vector<2x128xf32>
    %586 = tpu.matmul %585, %0, %cst_444 {dimension_numbers = #tpu.dot_dimension_numbers<[1], [0], [0], [1], [0, 0, 1, 1], [], []>} : vector<2x160xbf16>, vector<160x128xbf16>, vector<2x128xf32> -> vector<2x128xf32>
    %587 = vector.broadcast %1 : vector<1x128xf32> to vector<2x128xf32>
    %588 = arith.addf %586, %587 : vector<2x128xf32>
    %cst_445 = arith.constant 0.000000e+00 : f32
    %589 = vector.broadcast %cst_445 : f32 to vector<2x128xf32>
    %590 = arith.maximumf %588, %589 : vector<2x128xf32>
    %591 = arith.maximumf %583, %590 : vector<2x128xf32>
    %c2_446 = arith.constant 2 : index
    %c16_447 = arith.constant 16 : index
    %c0_448 = arith.constant 0 : index
    %c0_449 = arith.constant 0 : index
    %592 = vector.load %arg1[%c2_446, %c16_447, %c0_448, %c0_449] : memref<4x25x2x160xbf16, #tpu.memory_space<vmem>>, vector<1x1x2x160xbf16>
    %593 = vector.shape_cast %592 : vector<1x1x2x160xbf16> to vector<2x160xbf16>
    %cst_450 = arith.constant dense<0.000000e+00> : vector<2x128xf32>
    %594 = tpu.matmul %593, %0, %cst_450 {dimension_numbers = #tpu.dot_dimension_numbers<[1], [0], [0], [1], [0, 0, 1, 1], [], []>} : vector<2x160xbf16>, vector<160x128xbf16>, vector<2x128xf32> -> vector<2x128xf32>
    %595 = vector.broadcast %1 : vector<1x128xf32> to vector<2x128xf32>
    %596 = arith.addf %594, %595 : vector<2x128xf32>
    %cst_451 = arith.constant 0.000000e+00 : f32
    %597 = vector.broadcast %cst_451 : f32 to vector<2x128xf32>
    %598 = arith.maximumf %596, %597 : vector<2x128xf32>
    %599 = arith.maximumf %591, %598 : vector<2x128xf32>
    %c3_452 = arith.constant 3 : index
    %c16_453 = arith.constant 16 : index
    %c0_454 = arith.constant 0 : index
    %c0_455 = arith.constant 0 : index
    %600 = vector.load %arg1[%c3_452, %c16_453, %c0_454, %c0_455] : memref<4x25x2x160xbf16, #tpu.memory_space<vmem>>, vector<1x1x2x160xbf16>
    %601 = vector.shape_cast %600 : vector<1x1x2x160xbf16> to vector<2x160xbf16>
    %cst_456 = arith.constant dense<0.000000e+00> : vector<2x128xf32>
    %602 = tpu.matmul %601, %0, %cst_456 {dimension_numbers = #tpu.dot_dimension_numbers<[1], [0], [0], [1], [0, 0, 1, 1], [], []>} : vector<2x160xbf16>, vector<160x128xbf16>, vector<2x128xf32> -> vector<2x128xf32>
    %603 = vector.broadcast %1 : vector<1x128xf32> to vector<2x128xf32>
    %604 = arith.addf %602, %603 : vector<2x128xf32>
    %cst_457 = arith.constant 0.000000e+00 : f32
    %605 = vector.broadcast %cst_457 : f32 to vector<2x128xf32>
    %606 = arith.maximumf %604, %605 : vector<2x128xf32>
    %607 = arith.maximumf %599, %606 : vector<2x128xf32>
    %608 = arith.truncf %607 : vector<2x128xf32> to vector<2x128xbf16>
    %c16_458 = arith.constant 16 : index
    %c0_459 = arith.constant 0 : index
    %c0_460 = arith.constant 0 : index
    %609 = vector.load %arg4[%c16_458, %c0_459, %c0_460] : memref<25x128x128xbf16, #tpu.memory_space<vmem>>, vector<1x128x128xbf16>
    %610 = vector.shape_cast %609 : vector<1x128x128xbf16> to vector<128x128xbf16>
    %cst_461 = arith.constant dense<0.000000e+00> : vector<2x128xf32>
    %611 = tpu.matmul %608, %610, %cst_461 {dimension_numbers = #tpu.dot_dimension_numbers<[1], [0], [0], [1], [0, 0, 1, 1], [], []>} : vector<2x128xbf16>, vector<128x128xbf16>, vector<2x128xf32> -> vector<2x128xf32>
    %612 = arith.addf %576, %611 : vector<2x128xf32>
    %c0_462 = arith.constant 0 : index
    %c17 = arith.constant 17 : index
    %c0_463 = arith.constant 0 : index
    %c0_464 = arith.constant 0 : index
    %613 = vector.load %arg1[%c0_462, %c17, %c0_463, %c0_464] : memref<4x25x2x160xbf16, #tpu.memory_space<vmem>>, vector<1x1x2x160xbf16>
    %614 = vector.shape_cast %613 : vector<1x1x2x160xbf16> to vector<2x160xbf16>
    %cst_465 = arith.constant dense<0.000000e+00> : vector<2x128xf32>
    %615 = tpu.matmul %614, %0, %cst_465 {dimension_numbers = #tpu.dot_dimension_numbers<[1], [0], [0], [1], [0, 0, 1, 1], [], []>} : vector<2x160xbf16>, vector<160x128xbf16>, vector<2x128xf32> -> vector<2x128xf32>
    %616 = vector.broadcast %1 : vector<1x128xf32> to vector<2x128xf32>
    %617 = arith.addf %615, %616 : vector<2x128xf32>
    %cst_466 = arith.constant 0.000000e+00 : f32
    %618 = vector.broadcast %cst_466 : f32 to vector<2x128xf32>
    %619 = arith.maximumf %617, %618 : vector<2x128xf32>
    %c1_467 = arith.constant 1 : index
    %c17_468 = arith.constant 17 : index
    %c0_469 = arith.constant 0 : index
    %c0_470 = arith.constant 0 : index
    %620 = vector.load %arg1[%c1_467, %c17_468, %c0_469, %c0_470] : memref<4x25x2x160xbf16, #tpu.memory_space<vmem>>, vector<1x1x2x160xbf16>
    %621 = vector.shape_cast %620 : vector<1x1x2x160xbf16> to vector<2x160xbf16>
    %cst_471 = arith.constant dense<0.000000e+00> : vector<2x128xf32>
    %622 = tpu.matmul %621, %0, %cst_471 {dimension_numbers = #tpu.dot_dimension_numbers<[1], [0], [0], [1], [0, 0, 1, 1], [], []>} : vector<2x160xbf16>, vector<160x128xbf16>, vector<2x128xf32> -> vector<2x128xf32>
    %623 = vector.broadcast %1 : vector<1x128xf32> to vector<2x128xf32>
    %624 = arith.addf %622, %623 : vector<2x128xf32>
    %cst_472 = arith.constant 0.000000e+00 : f32
    %625 = vector.broadcast %cst_472 : f32 to vector<2x128xf32>
    %626 = arith.maximumf %624, %625 : vector<2x128xf32>
    %627 = arith.maximumf %619, %626 : vector<2x128xf32>
    %c2_473 = arith.constant 2 : index
    %c17_474 = arith.constant 17 : index
    %c0_475 = arith.constant 0 : index
    %c0_476 = arith.constant 0 : index
    %628 = vector.load %arg1[%c2_473, %c17_474, %c0_475, %c0_476] : memref<4x25x2x160xbf16, #tpu.memory_space<vmem>>, vector<1x1x2x160xbf16>
    %629 = vector.shape_cast %628 : vector<1x1x2x160xbf16> to vector<2x160xbf16>
    %cst_477 = arith.constant dense<0.000000e+00> : vector<2x128xf32>
    %630 = tpu.matmul %629, %0, %cst_477 {dimension_numbers = #tpu.dot_dimension_numbers<[1], [0], [0], [1], [0, 0, 1, 1], [], []>} : vector<2x160xbf16>, vector<160x128xbf16>, vector<2x128xf32> -> vector<2x128xf32>
    %631 = vector.broadcast %1 : vector<1x128xf32> to vector<2x128xf32>
    %632 = arith.addf %630, %631 : vector<2x128xf32>
    %cst_478 = arith.constant 0.000000e+00 : f32
    %633 = vector.broadcast %cst_478 : f32 to vector<2x128xf32>
    %634 = arith.maximumf %632, %633 : vector<2x128xf32>
    %635 = arith.maximumf %627, %634 : vector<2x128xf32>
    %c3_479 = arith.constant 3 : index
    %c17_480 = arith.constant 17 : index
    %c0_481 = arith.constant 0 : index
    %c0_482 = arith.constant 0 : index
    %636 = vector.load %arg1[%c3_479, %c17_480, %c0_481, %c0_482] : memref<4x25x2x160xbf16, #tpu.memory_space<vmem>>, vector<1x1x2x160xbf16>
    %637 = vector.shape_cast %636 : vector<1x1x2x160xbf16> to vector<2x160xbf16>
    %cst_483 = arith.constant dense<0.000000e+00> : vector<2x128xf32>
    %638 = tpu.matmul %637, %0, %cst_483 {dimension_numbers = #tpu.dot_dimension_numbers<[1], [0], [0], [1], [0, 0, 1, 1], [], []>} : vector<2x160xbf16>, vector<160x128xbf16>, vector<2x128xf32> -> vector<2x128xf32>
    %639 = vector.broadcast %1 : vector<1x128xf32> to vector<2x128xf32>
    %640 = arith.addf %638, %639 : vector<2x128xf32>
    %cst_484 = arith.constant 0.000000e+00 : f32
    %641 = vector.broadcast %cst_484 : f32 to vector<2x128xf32>
    %642 = arith.maximumf %640, %641 : vector<2x128xf32>
    %643 = arith.maximumf %635, %642 : vector<2x128xf32>
    %644 = arith.truncf %643 : vector<2x128xf32> to vector<2x128xbf16>
    %c17_485 = arith.constant 17 : index
    %c0_486 = arith.constant 0 : index
    %c0_487 = arith.constant 0 : index
    %645 = vector.load %arg4[%c17_485, %c0_486, %c0_487] : memref<25x128x128xbf16, #tpu.memory_space<vmem>>, vector<1x128x128xbf16>
    %646 = vector.shape_cast %645 : vector<1x128x128xbf16> to vector<128x128xbf16>
    %cst_488 = arith.constant dense<0.000000e+00> : vector<2x128xf32>
    %647 = tpu.matmul %644, %646, %cst_488 {dimension_numbers = #tpu.dot_dimension_numbers<[1], [0], [0], [1], [0, 0, 1, 1], [], []>} : vector<2x128xbf16>, vector<128x128xbf16>, vector<2x128xf32> -> vector<2x128xf32>
    %648 = arith.addf %612, %647 : vector<2x128xf32>
    %c0_489 = arith.constant 0 : index
    %c18 = arith.constant 18 : index
    %c0_490 = arith.constant 0 : index
    %c0_491 = arith.constant 0 : index
    %649 = vector.load %arg1[%c0_489, %c18, %c0_490, %c0_491] : memref<4x25x2x160xbf16, #tpu.memory_space<vmem>>, vector<1x1x2x160xbf16>
    %650 = vector.shape_cast %649 : vector<1x1x2x160xbf16> to vector<2x160xbf16>
    %cst_492 = arith.constant dense<0.000000e+00> : vector<2x128xf32>
    %651 = tpu.matmul %650, %0, %cst_492 {dimension_numbers = #tpu.dot_dimension_numbers<[1], [0], [0], [1], [0, 0, 1, 1], [], []>} : vector<2x160xbf16>, vector<160x128xbf16>, vector<2x128xf32> -> vector<2x128xf32>
    %652 = vector.broadcast %1 : vector<1x128xf32> to vector<2x128xf32>
    %653 = arith.addf %651, %652 : vector<2x128xf32>
    %cst_493 = arith.constant 0.000000e+00 : f32
    %654 = vector.broadcast %cst_493 : f32 to vector<2x128xf32>
    %655 = arith.maximumf %653, %654 : vector<2x128xf32>
    %c1_494 = arith.constant 1 : index
    %c18_495 = arith.constant 18 : index
    %c0_496 = arith.constant 0 : index
    %c0_497 = arith.constant 0 : index
    %656 = vector.load %arg1[%c1_494, %c18_495, %c0_496, %c0_497] : memref<4x25x2x160xbf16, #tpu.memory_space<vmem>>, vector<1x1x2x160xbf16>
    %657 = vector.shape_cast %656 : vector<1x1x2x160xbf16> to vector<2x160xbf16>
    %cst_498 = arith.constant dense<0.000000e+00> : vector<2x128xf32>
    %658 = tpu.matmul %657, %0, %cst_498 {dimension_numbers = #tpu.dot_dimension_numbers<[1], [0], [0], [1], [0, 0, 1, 1], [], []>} : vector<2x160xbf16>, vector<160x128xbf16>, vector<2x128xf32> -> vector<2x128xf32>
    %659 = vector.broadcast %1 : vector<1x128xf32> to vector<2x128xf32>
    %660 = arith.addf %658, %659 : vector<2x128xf32>
    %cst_499 = arith.constant 0.000000e+00 : f32
    %661 = vector.broadcast %cst_499 : f32 to vector<2x128xf32>
    %662 = arith.maximumf %660, %661 : vector<2x128xf32>
    %663 = arith.maximumf %655, %662 : vector<2x128xf32>
    %c2_500 = arith.constant 2 : index
    %c18_501 = arith.constant 18 : index
    %c0_502 = arith.constant 0 : index
    %c0_503 = arith.constant 0 : index
    %664 = vector.load %arg1[%c2_500, %c18_501, %c0_502, %c0_503] : memref<4x25x2x160xbf16, #tpu.memory_space<vmem>>, vector<1x1x2x160xbf16>
    %665 = vector.shape_cast %664 : vector<1x1x2x160xbf16> to vector<2x160xbf16>
    %cst_504 = arith.constant dense<0.000000e+00> : vector<2x128xf32>
    %666 = tpu.matmul %665, %0, %cst_504 {dimension_numbers = #tpu.dot_dimension_numbers<[1], [0], [0], [1], [0, 0, 1, 1], [], []>} : vector<2x160xbf16>, vector<160x128xbf16>, vector<2x128xf32> -> vector<2x128xf32>
    %667 = vector.broadcast %1 : vector<1x128xf32> to vector<2x128xf32>
    %668 = arith.addf %666, %667 : vector<2x128xf32>
    %cst_505 = arith.constant 0.000000e+00 : f32
    %669 = vector.broadcast %cst_505 : f32 to vector<2x128xf32>
    %670 = arith.maximumf %668, %669 : vector<2x128xf32>
    %671 = arith.maximumf %663, %670 : vector<2x128xf32>
    %c3_506 = arith.constant 3 : index
    %c18_507 = arith.constant 18 : index
    %c0_508 = arith.constant 0 : index
    %c0_509 = arith.constant 0 : index
    %672 = vector.load %arg1[%c3_506, %c18_507, %c0_508, %c0_509] : memref<4x25x2x160xbf16, #tpu.memory_space<vmem>>, vector<1x1x2x160xbf16>
    %673 = vector.shape_cast %672 : vector<1x1x2x160xbf16> to vector<2x160xbf16>
    %cst_510 = arith.constant dense<0.000000e+00> : vector<2x128xf32>
    %674 = tpu.matmul %673, %0, %cst_510 {dimension_numbers = #tpu.dot_dimension_numbers<[1], [0], [0], [1], [0, 0, 1, 1], [], []>} : vector<2x160xbf16>, vector<160x128xbf16>, vector<2x128xf32> -> vector<2x128xf32>
    %675 = vector.broadcast %1 : vector<1x128xf32> to vector<2x128xf32>
    %676 = arith.addf %674, %675 : vector<2x128xf32>
    %cst_511 = arith.constant 0.000000e+00 : f32
    %677 = vector.broadcast %cst_511 : f32 to vector<2x128xf32>
    %678 = arith.maximumf %676, %677 : vector<2x128xf32>
    %679 = arith.maximumf %671, %678 : vector<2x128xf32>
    %680 = arith.truncf %679 : vector<2x128xf32> to vector<2x128xbf16>
    %c18_512 = arith.constant 18 : index
    %c0_513 = arith.constant 0 : index
    %c0_514 = arith.constant 0 : index
    %681 = vector.load %arg4[%c18_512, %c0_513, %c0_514] : memref<25x128x128xbf16, #tpu.memory_space<vmem>>, vector<1x128x128xbf16>
    %682 = vector.shape_cast %681 : vector<1x128x128xbf16> to vector<128x128xbf16>
    %cst_515 = arith.constant dense<0.000000e+00> : vector<2x128xf32>
    %683 = tpu.matmul %680, %682, %cst_515 {dimension_numbers = #tpu.dot_dimension_numbers<[1], [0], [0], [1], [0, 0, 1, 1], [], []>} : vector<2x128xbf16>, vector<128x128xbf16>, vector<2x128xf32> -> vector<2x128xf32>
    %684 = arith.addf %648, %683 : vector<2x128xf32>
    %c0_516 = arith.constant 0 : index
    %c19 = arith.constant 19 : index
    %c0_517 = arith.constant 0 : index
    %c0_518 = arith.constant 0 : index
    %685 = vector.load %arg1[%c0_516, %c19, %c0_517, %c0_518] : memref<4x25x2x160xbf16, #tpu.memory_space<vmem>>, vector<1x1x2x160xbf16>
    %686 = vector.shape_cast %685 : vector<1x1x2x160xbf16> to vector<2x160xbf16>
    %cst_519 = arith.constant dense<0.000000e+00> : vector<2x128xf32>
    %687 = tpu.matmul %686, %0, %cst_519 {dimension_numbers = #tpu.dot_dimension_numbers<[1], [0], [0], [1], [0, 0, 1, 1], [], []>} : vector<2x160xbf16>, vector<160x128xbf16>, vector<2x128xf32> -> vector<2x128xf32>
    %688 = vector.broadcast %1 : vector<1x128xf32> to vector<2x128xf32>
    %689 = arith.addf %687, %688 : vector<2x128xf32>
    %cst_520 = arith.constant 0.000000e+00 : f32
    %690 = vector.broadcast %cst_520 : f32 to vector<2x128xf32>
    %691 = arith.maximumf %689, %690 : vector<2x128xf32>
    %c1_521 = arith.constant 1 : index
    %c19_522 = arith.constant 19 : index
    %c0_523 = arith.constant 0 : index
    %c0_524 = arith.constant 0 : index
    %692 = vector.load %arg1[%c1_521, %c19_522, %c0_523, %c0_524] : memref<4x25x2x160xbf16, #tpu.memory_space<vmem>>, vector<1x1x2x160xbf16>
    %693 = vector.shape_cast %692 : vector<1x1x2x160xbf16> to vector<2x160xbf16>
    %cst_525 = arith.constant dense<0.000000e+00> : vector<2x128xf32>
    %694 = tpu.matmul %693, %0, %cst_525 {dimension_numbers = #tpu.dot_dimension_numbers<[1], [0], [0], [1], [0, 0, 1, 1], [], []>} : vector<2x160xbf16>, vector<160x128xbf16>, vector<2x128xf32> -> vector<2x128xf32>
    %695 = vector.broadcast %1 : vector<1x128xf32> to vector<2x128xf32>
    %696 = arith.addf %694, %695 : vector<2x128xf32>
    %cst_526 = arith.constant 0.000000e+00 : f32
    %697 = vector.broadcast %cst_526 : f32 to vector<2x128xf32>
    %698 = arith.maximumf %696, %697 : vector<2x128xf32>
    %699 = arith.maximumf %691, %698 : vector<2x128xf32>
    %c2_527 = arith.constant 2 : index
    %c19_528 = arith.constant 19 : index
    %c0_529 = arith.constant 0 : index
    %c0_530 = arith.constant 0 : index
    %700 = vector.load %arg1[%c2_527, %c19_528, %c0_529, %c0_530] : memref<4x25x2x160xbf16, #tpu.memory_space<vmem>>, vector<1x1x2x160xbf16>
    %701 = vector.shape_cast %700 : vector<1x1x2x160xbf16> to vector<2x160xbf16>
    %cst_531 = arith.constant dense<0.000000e+00> : vector<2x128xf32>
    %702 = tpu.matmul %701, %0, %cst_531 {dimension_numbers = #tpu.dot_dimension_numbers<[1], [0], [0], [1], [0, 0, 1, 1], [], []>} : vector<2x160xbf16>, vector<160x128xbf16>, vector<2x128xf32> -> vector<2x128xf32>
    %703 = vector.broadcast %1 : vector<1x128xf32> to vector<2x128xf32>
    %704 = arith.addf %702, %703 : vector<2x128xf32>
    %cst_532 = arith.constant 0.000000e+00 : f32
    %705 = vector.broadcast %cst_532 : f32 to vector<2x128xf32>
    %706 = arith.maximumf %704, %705 : vector<2x128xf32>
    %707 = arith.maximumf %699, %706 : vector<2x128xf32>
    %c3_533 = arith.constant 3 : index
    %c19_534 = arith.constant 19 : index
    %c0_535 = arith.constant 0 : index
    %c0_536 = arith.constant 0 : index
    %708 = vector.load %arg1[%c3_533, %c19_534, %c0_535, %c0_536] : memref<4x25x2x160xbf16, #tpu.memory_space<vmem>>, vector<1x1x2x160xbf16>
    %709 = vector.shape_cast %708 : vector<1x1x2x160xbf16> to vector<2x160xbf16>
    %cst_537 = arith.constant dense<0.000000e+00> : vector<2x128xf32>
    %710 = tpu.matmul %709, %0, %cst_537 {dimension_numbers = #tpu.dot_dimension_numbers<[1], [0], [0], [1], [0, 0, 1, 1], [], []>} : vector<2x160xbf16>, vector<160x128xbf16>, vector<2x128xf32> -> vector<2x128xf32>
    %711 = vector.broadcast %1 : vector<1x128xf32> to vector<2x128xf32>
    %712 = arith.addf %710, %711 : vector<2x128xf32>
    %cst_538 = arith.constant 0.000000e+00 : f32
    %713 = vector.broadcast %cst_538 : f32 to vector<2x128xf32>
    %714 = arith.maximumf %712, %713 : vector<2x128xf32>
    %715 = arith.maximumf %707, %714 : vector<2x128xf32>
    %716 = arith.truncf %715 : vector<2x128xf32> to vector<2x128xbf16>
    %c19_539 = arith.constant 19 : index
    %c0_540 = arith.constant 0 : index
    %c0_541 = arith.constant 0 : index
    %717 = vector.load %arg4[%c19_539, %c0_540, %c0_541] : memref<25x128x128xbf16, #tpu.memory_space<vmem>>, vector<1x128x128xbf16>
    %718 = vector.shape_cast %717 : vector<1x128x128xbf16> to vector<128x128xbf16>
    %cst_542 = arith.constant dense<0.000000e+00> : vector<2x128xf32>
    %719 = tpu.matmul %716, %718, %cst_542 {dimension_numbers = #tpu.dot_dimension_numbers<[1], [0], [0], [1], [0, 0, 1, 1], [], []>} : vector<2x128xbf16>, vector<128x128xbf16>, vector<2x128xf32> -> vector<2x128xf32>
    %720 = arith.addf %684, %719 : vector<2x128xf32>
    %c0_543 = arith.constant 0 : index
    %c20 = arith.constant 20 : index
    %c0_544 = arith.constant 0 : index
    %c0_545 = arith.constant 0 : index
    %721 = vector.load %arg1[%c0_543, %c20, %c0_544, %c0_545] : memref<4x25x2x160xbf16, #tpu.memory_space<vmem>>, vector<1x1x2x160xbf16>
    %722 = vector.shape_cast %721 : vector<1x1x2x160xbf16> to vector<2x160xbf16>
    %cst_546 = arith.constant dense<0.000000e+00> : vector<2x128xf32>
    %723 = tpu.matmul %722, %0, %cst_546 {dimension_numbers = #tpu.dot_dimension_numbers<[1], [0], [0], [1], [0, 0, 1, 1], [], []>} : vector<2x160xbf16>, vector<160x128xbf16>, vector<2x128xf32> -> vector<2x128xf32>
    %724 = vector.broadcast %1 : vector<1x128xf32> to vector<2x128xf32>
    %725 = arith.addf %723, %724 : vector<2x128xf32>
    %cst_547 = arith.constant 0.000000e+00 : f32
    %726 = vector.broadcast %cst_547 : f32 to vector<2x128xf32>
    %727 = arith.maximumf %725, %726 : vector<2x128xf32>
    %c1_548 = arith.constant 1 : index
    %c20_549 = arith.constant 20 : index
    %c0_550 = arith.constant 0 : index
    %c0_551 = arith.constant 0 : index
    %728 = vector.load %arg1[%c1_548, %c20_549, %c0_550, %c0_551] : memref<4x25x2x160xbf16, #tpu.memory_space<vmem>>, vector<1x1x2x160xbf16>
    %729 = vector.shape_cast %728 : vector<1x1x2x160xbf16> to vector<2x160xbf16>
    %cst_552 = arith.constant dense<0.000000e+00> : vector<2x128xf32>
    %730 = tpu.matmul %729, %0, %cst_552 {dimension_numbers = #tpu.dot_dimension_numbers<[1], [0], [0], [1], [0, 0, 1, 1], [], []>} : vector<2x160xbf16>, vector<160x128xbf16>, vector<2x128xf32> -> vector<2x128xf32>
    %731 = vector.broadcast %1 : vector<1x128xf32> to vector<2x128xf32>
    %732 = arith.addf %730, %731 : vector<2x128xf32>
    %cst_553 = arith.constant 0.000000e+00 : f32
    %733 = vector.broadcast %cst_553 : f32 to vector<2x128xf32>
    %734 = arith.maximumf %732, %733 : vector<2x128xf32>
    %735 = arith.maximumf %727, %734 : vector<2x128xf32>
    %c2_554 = arith.constant 2 : index
    %c20_555 = arith.constant 20 : index
    %c0_556 = arith.constant 0 : index
    %c0_557 = arith.constant 0 : index
    %736 = vector.load %arg1[%c2_554, %c20_555, %c0_556, %c0_557] : memref<4x25x2x160xbf16, #tpu.memory_space<vmem>>, vector<1x1x2x160xbf16>
    %737 = vector.shape_cast %736 : vector<1x1x2x160xbf16> to vector<2x160xbf16>
    %cst_558 = arith.constant dense<0.000000e+00> : vector<2x128xf32>
    %738 = tpu.matmul %737, %0, %cst_558 {dimension_numbers = #tpu.dot_dimension_numbers<[1], [0], [0], [1], [0, 0, 1, 1], [], []>} : vector<2x160xbf16>, vector<160x128xbf16>, vector<2x128xf32> -> vector<2x128xf32>
    %739 = vector.broadcast %1 : vector<1x128xf32> to vector<2x128xf32>
    %740 = arith.addf %738, %739 : vector<2x128xf32>
    %cst_559 = arith.constant 0.000000e+00 : f32
    %741 = vector.broadcast %cst_559 : f32 to vector<2x128xf32>
    %742 = arith.maximumf %740, %741 : vector<2x128xf32>
    %743 = arith.maximumf %735, %742 : vector<2x128xf32>
    %c3_560 = arith.constant 3 : index
    %c20_561 = arith.constant 20 : index
    %c0_562 = arith.constant 0 : index
    %c0_563 = arith.constant 0 : index
    %744 = vector.load %arg1[%c3_560, %c20_561, %c0_562, %c0_563] : memref<4x25x2x160xbf16, #tpu.memory_space<vmem>>, vector<1x1x2x160xbf16>
    %745 = vector.shape_cast %744 : vector<1x1x2x160xbf16> to vector<2x160xbf16>
    %cst_564 = arith.constant dense<0.000000e+00> : vector<2x128xf32>
    %746 = tpu.matmul %745, %0, %cst_564 {dimension_numbers = #tpu.dot_dimension_numbers<[1], [0], [0], [1], [0, 0, 1, 1], [], []>} : vector<2x160xbf16>, vector<160x128xbf16>, vector<2x128xf32> -> vector<2x128xf32>
    %747 = vector.broadcast %1 : vector<1x128xf32> to vector<2x128xf32>
    %748 = arith.addf %746, %747 : vector<2x128xf32>
    %cst_565 = arith.constant 0.000000e+00 : f32
    %749 = vector.broadcast %cst_565 : f32 to vector<2x128xf32>
    %750 = arith.maximumf %748, %749 : vector<2x128xf32>
    %751 = arith.maximumf %743, %750 : vector<2x128xf32>
    %752 = arith.truncf %751 : vector<2x128xf32> to vector<2x128xbf16>
    %c20_566 = arith.constant 20 : index
    %c0_567 = arith.constant 0 : index
    %c0_568 = arith.constant 0 : index
    %753 = vector.load %arg4[%c20_566, %c0_567, %c0_568] : memref<25x128x128xbf16, #tpu.memory_space<vmem>>, vector<1x128x128xbf16>
    %754 = vector.shape_cast %753 : vector<1x128x128xbf16> to vector<128x128xbf16>
    %cst_569 = arith.constant dense<0.000000e+00> : vector<2x128xf32>
    %755 = tpu.matmul %752, %754, %cst_569 {dimension_numbers = #tpu.dot_dimension_numbers<[1], [0], [0], [1], [0, 0, 1, 1], [], []>} : vector<2x128xbf16>, vector<128x128xbf16>, vector<2x128xf32> -> vector<2x128xf32>
    %756 = arith.addf %720, %755 : vector<2x128xf32>
    %c0_570 = arith.constant 0 : index
    %c21 = arith.constant 21 : index
    %c0_571 = arith.constant 0 : index
    %c0_572 = arith.constant 0 : index
    %757 = vector.load %arg1[%c0_570, %c21, %c0_571, %c0_572] : memref<4x25x2x160xbf16, #tpu.memory_space<vmem>>, vector<1x1x2x160xbf16>
    %758 = vector.shape_cast %757 : vector<1x1x2x160xbf16> to vector<2x160xbf16>
    %cst_573 = arith.constant dense<0.000000e+00> : vector<2x128xf32>
    %759 = tpu.matmul %758, %0, %cst_573 {dimension_numbers = #tpu.dot_dimension_numbers<[1], [0], [0], [1], [0, 0, 1, 1], [], []>} : vector<2x160xbf16>, vector<160x128xbf16>, vector<2x128xf32> -> vector<2x128xf32>
    %760 = vector.broadcast %1 : vector<1x128xf32> to vector<2x128xf32>
    %761 = arith.addf %759, %760 : vector<2x128xf32>
    %cst_574 = arith.constant 0.000000e+00 : f32
    %762 = vector.broadcast %cst_574 : f32 to vector<2x128xf32>
    %763 = arith.maximumf %761, %762 : vector<2x128xf32>
    %c1_575 = arith.constant 1 : index
    %c21_576 = arith.constant 21 : index
    %c0_577 = arith.constant 0 : index
    %c0_578 = arith.constant 0 : index
    %764 = vector.load %arg1[%c1_575, %c21_576, %c0_577, %c0_578] : memref<4x25x2x160xbf16, #tpu.memory_space<vmem>>, vector<1x1x2x160xbf16>
    %765 = vector.shape_cast %764 : vector<1x1x2x160xbf16> to vector<2x160xbf16>
    %cst_579 = arith.constant dense<0.000000e+00> : vector<2x128xf32>
    %766 = tpu.matmul %765, %0, %cst_579 {dimension_numbers = #tpu.dot_dimension_numbers<[1], [0], [0], [1], [0, 0, 1, 1], [], []>} : vector<2x160xbf16>, vector<160x128xbf16>, vector<2x128xf32> -> vector<2x128xf32>
    %767 = vector.broadcast %1 : vector<1x128xf32> to vector<2x128xf32>
    %768 = arith.addf %766, %767 : vector<2x128xf32>
    %cst_580 = arith.constant 0.000000e+00 : f32
    %769 = vector.broadcast %cst_580 : f32 to vector<2x128xf32>
    %770 = arith.maximumf %768, %769 : vector<2x128xf32>
    %771 = arith.maximumf %763, %770 : vector<2x128xf32>
    %c2_581 = arith.constant 2 : index
    %c21_582 = arith.constant 21 : index
    %c0_583 = arith.constant 0 : index
    %c0_584 = arith.constant 0 : index
    %772 = vector.load %arg1[%c2_581, %c21_582, %c0_583, %c0_584] : memref<4x25x2x160xbf16, #tpu.memory_space<vmem>>, vector<1x1x2x160xbf16>
    %773 = vector.shape_cast %772 : vector<1x1x2x160xbf16> to vector<2x160xbf16>
    %cst_585 = arith.constant dense<0.000000e+00> : vector<2x128xf32>
    %774 = tpu.matmul %773, %0, %cst_585 {dimension_numbers = #tpu.dot_dimension_numbers<[1], [0], [0], [1], [0, 0, 1, 1], [], []>} : vector<2x160xbf16>, vector<160x128xbf16>, vector<2x128xf32> -> vector<2x128xf32>
    %775 = vector.broadcast %1 : vector<1x128xf32> to vector<2x128xf32>
    %776 = arith.addf %774, %775 : vector<2x128xf32>
    %cst_586 = arith.constant 0.000000e+00 : f32
    %777 = vector.broadcast %cst_586 : f32 to vector<2x128xf32>
    %778 = arith.maximumf %776, %777 : vector<2x128xf32>
    %779 = arith.maximumf %771, %778 : vector<2x128xf32>
    %c3_587 = arith.constant 3 : index
    %c21_588 = arith.constant 21 : index
    %c0_589 = arith.constant 0 : index
    %c0_590 = arith.constant 0 : index
    %780 = vector.load %arg1[%c3_587, %c21_588, %c0_589, %c0_590] : memref<4x25x2x160xbf16, #tpu.memory_space<vmem>>, vector<1x1x2x160xbf16>
    %781 = vector.shape_cast %780 : vector<1x1x2x160xbf16> to vector<2x160xbf16>
    %cst_591 = arith.constant dense<0.000000e+00> : vector<2x128xf32>
    %782 = tpu.matmul %781, %0, %cst_591 {dimension_numbers = #tpu.dot_dimension_numbers<[1], [0], [0], [1], [0, 0, 1, 1], [], []>} : vector<2x160xbf16>, vector<160x128xbf16>, vector<2x128xf32> -> vector<2x128xf32>
    %783 = vector.broadcast %1 : vector<1x128xf32> to vector<2x128xf32>
    %784 = arith.addf %782, %783 : vector<2x128xf32>
    %cst_592 = arith.constant 0.000000e+00 : f32
    %785 = vector.broadcast %cst_592 : f32 to vector<2x128xf32>
    %786 = arith.maximumf %784, %785 : vector<2x128xf32>
    %787 = arith.maximumf %779, %786 : vector<2x128xf32>
    %788 = arith.truncf %787 : vector<2x128xf32> to vector<2x128xbf16>
    %c21_593 = arith.constant 21 : index
    %c0_594 = arith.constant 0 : index
    %c0_595 = arith.constant 0 : index
    %789 = vector.load %arg4[%c21_593, %c0_594, %c0_595] : memref<25x128x128xbf16, #tpu.memory_space<vmem>>, vector<1x128x128xbf16>
    %790 = vector.shape_cast %789 : vector<1x128x128xbf16> to vector<128x128xbf16>
    %cst_596 = arith.constant dense<0.000000e+00> : vector<2x128xf32>
    %791 = tpu.matmul %788, %790, %cst_596 {dimension_numbers = #tpu.dot_dimension_numbers<[1], [0], [0], [1], [0, 0, 1, 1], [], []>} : vector<2x128xbf16>, vector<128x128xbf16>, vector<2x128xf32> -> vector<2x128xf32>
    %792 = arith.addf %756, %791 : vector<2x128xf32>
    %c0_597 = arith.constant 0 : index
    %c22 = arith.constant 22 : index
    %c0_598 = arith.constant 0 : index
    %c0_599 = arith.constant 0 : index
    %793 = vector.load %arg1[%c0_597, %c22, %c0_598, %c0_599] : memref<4x25x2x160xbf16, #tpu.memory_space<vmem>>, vector<1x1x2x160xbf16>
    %794 = vector.shape_cast %793 : vector<1x1x2x160xbf16> to vector<2x160xbf16>
    %cst_600 = arith.constant dense<0.000000e+00> : vector<2x128xf32>
    %795 = tpu.matmul %794, %0, %cst_600 {dimension_numbers = #tpu.dot_dimension_numbers<[1], [0], [0], [1], [0, 0, 1, 1], [], []>} : vector<2x160xbf16>, vector<160x128xbf16>, vector<2x128xf32> -> vector<2x128xf32>
    %796 = vector.broadcast %1 : vector<1x128xf32> to vector<2x128xf32>
    %797 = arith.addf %795, %796 : vector<2x128xf32>
    %cst_601 = arith.constant 0.000000e+00 : f32
    %798 = vector.broadcast %cst_601 : f32 to vector<2x128xf32>
    %799 = arith.maximumf %797, %798 : vector<2x128xf32>
    %c1_602 = arith.constant 1 : index
    %c22_603 = arith.constant 22 : index
    %c0_604 = arith.constant 0 : index
    %c0_605 = arith.constant 0 : index
    %800 = vector.load %arg1[%c1_602, %c22_603, %c0_604, %c0_605] : memref<4x25x2x160xbf16, #tpu.memory_space<vmem>>, vector<1x1x2x160xbf16>
    %801 = vector.shape_cast %800 : vector<1x1x2x160xbf16> to vector<2x160xbf16>
    %cst_606 = arith.constant dense<0.000000e+00> : vector<2x128xf32>
    %802 = tpu.matmul %801, %0, %cst_606 {dimension_numbers = #tpu.dot_dimension_numbers<[1], [0], [0], [1], [0, 0, 1, 1], [], []>} : vector<2x160xbf16>, vector<160x128xbf16>, vector<2x128xf32> -> vector<2x128xf32>
    %803 = vector.broadcast %1 : vector<1x128xf32> to vector<2x128xf32>
    %804 = arith.addf %802, %803 : vector<2x128xf32>
    %cst_607 = arith.constant 0.000000e+00 : f32
    %805 = vector.broadcast %cst_607 : f32 to vector<2x128xf32>
    %806 = arith.maximumf %804, %805 : vector<2x128xf32>
    %807 = arith.maximumf %799, %806 : vector<2x128xf32>
    %c2_608 = arith.constant 2 : index
    %c22_609 = arith.constant 22 : index
    %c0_610 = arith.constant 0 : index
    %c0_611 = arith.constant 0 : index
    %808 = vector.load %arg1[%c2_608, %c22_609, %c0_610, %c0_611] : memref<4x25x2x160xbf16, #tpu.memory_space<vmem>>, vector<1x1x2x160xbf16>
    %809 = vector.shape_cast %808 : vector<1x1x2x160xbf16> to vector<2x160xbf16>
    %cst_612 = arith.constant dense<0.000000e+00> : vector<2x128xf32>
    %810 = tpu.matmul %809, %0, %cst_612 {dimension_numbers = #tpu.dot_dimension_numbers<[1], [0], [0], [1], [0, 0, 1, 1], [], []>} : vector<2x160xbf16>, vector<160x128xbf16>, vector<2x128xf32> -> vector<2x128xf32>
    %811 = vector.broadcast %1 : vector<1x128xf32> to vector<2x128xf32>
    %812 = arith.addf %810, %811 : vector<2x128xf32>
    %cst_613 = arith.constant 0.000000e+00 : f32
    %813 = vector.broadcast %cst_613 : f32 to vector<2x128xf32>
    %814 = arith.maximumf %812, %813 : vector<2x128xf32>
    %815 = arith.maximumf %807, %814 : vector<2x128xf32>
    %c3_614 = arith.constant 3 : index
    %c22_615 = arith.constant 22 : index
    %c0_616 = arith.constant 0 : index
    %c0_617 = arith.constant 0 : index
    %816 = vector.load %arg1[%c3_614, %c22_615, %c0_616, %c0_617] : memref<4x25x2x160xbf16, #tpu.memory_space<vmem>>, vector<1x1x2x160xbf16>
    %817 = vector.shape_cast %816 : vector<1x1x2x160xbf16> to vector<2x160xbf16>
    %cst_618 = arith.constant dense<0.000000e+00> : vector<2x128xf32>
    %818 = tpu.matmul %817, %0, %cst_618 {dimension_numbers = #tpu.dot_dimension_numbers<[1], [0], [0], [1], [0, 0, 1, 1], [], []>} : vector<2x160xbf16>, vector<160x128xbf16>, vector<2x128xf32> -> vector<2x128xf32>
    %819 = vector.broadcast %1 : vector<1x128xf32> to vector<2x128xf32>
    %820 = arith.addf %818, %819 : vector<2x128xf32>
    %cst_619 = arith.constant 0.000000e+00 : f32
    %821 = vector.broadcast %cst_619 : f32 to vector<2x128xf32>
    %822 = arith.maximumf %820, %821 : vector<2x128xf32>
    %823 = arith.maximumf %815, %822 : vector<2x128xf32>
    %824 = arith.truncf %823 : vector<2x128xf32> to vector<2x128xbf16>
    %c22_620 = arith.constant 22 : index
    %c0_621 = arith.constant 0 : index
    %c0_622 = arith.constant 0 : index
    %825 = vector.load %arg4[%c22_620, %c0_621, %c0_622] : memref<25x128x128xbf16, #tpu.memory_space<vmem>>, vector<1x128x128xbf16>
    %826 = vector.shape_cast %825 : vector<1x128x128xbf16> to vector<128x128xbf16>
    %cst_623 = arith.constant dense<0.000000e+00> : vector<2x128xf32>
    %827 = tpu.matmul %824, %826, %cst_623 {dimension_numbers = #tpu.dot_dimension_numbers<[1], [0], [0], [1], [0, 0, 1, 1], [], []>} : vector<2x128xbf16>, vector<128x128xbf16>, vector<2x128xf32> -> vector<2x128xf32>
    %828 = arith.addf %792, %827 : vector<2x128xf32>
    %c0_624 = arith.constant 0 : index
    %c23 = arith.constant 23 : index
    %c0_625 = arith.constant 0 : index
    %c0_626 = arith.constant 0 : index
    %829 = vector.load %arg1[%c0_624, %c23, %c0_625, %c0_626] : memref<4x25x2x160xbf16, #tpu.memory_space<vmem>>, vector<1x1x2x160xbf16>
    %830 = vector.shape_cast %829 : vector<1x1x2x160xbf16> to vector<2x160xbf16>
    %cst_627 = arith.constant dense<0.000000e+00> : vector<2x128xf32>
    %831 = tpu.matmul %830, %0, %cst_627 {dimension_numbers = #tpu.dot_dimension_numbers<[1], [0], [0], [1], [0, 0, 1, 1], [], []>} : vector<2x160xbf16>, vector<160x128xbf16>, vector<2x128xf32> -> vector<2x128xf32>
    %832 = vector.broadcast %1 : vector<1x128xf32> to vector<2x128xf32>
    %833 = arith.addf %831, %832 : vector<2x128xf32>
    %cst_628 = arith.constant 0.000000e+00 : f32
    %834 = vector.broadcast %cst_628 : f32 to vector<2x128xf32>
    %835 = arith.maximumf %833, %834 : vector<2x128xf32>
    %c1_629 = arith.constant 1 : index
    %c23_630 = arith.constant 23 : index
    %c0_631 = arith.constant 0 : index
    %c0_632 = arith.constant 0 : index
    %836 = vector.load %arg1[%c1_629, %c23_630, %c0_631, %c0_632] : memref<4x25x2x160xbf16, #tpu.memory_space<vmem>>, vector<1x1x2x160xbf16>
    %837 = vector.shape_cast %836 : vector<1x1x2x160xbf16> to vector<2x160xbf16>
    %cst_633 = arith.constant dense<0.000000e+00> : vector<2x128xf32>
    %838 = tpu.matmul %837, %0, %cst_633 {dimension_numbers = #tpu.dot_dimension_numbers<[1], [0], [0], [1], [0, 0, 1, 1], [], []>} : vector<2x160xbf16>, vector<160x128xbf16>, vector<2x128xf32> -> vector<2x128xf32>
    %839 = vector.broadcast %1 : vector<1x128xf32> to vector<2x128xf32>
    %840 = arith.addf %838, %839 : vector<2x128xf32>
    %cst_634 = arith.constant 0.000000e+00 : f32
    %841 = vector.broadcast %cst_634 : f32 to vector<2x128xf32>
    %842 = arith.maximumf %840, %841 : vector<2x128xf32>
    %843 = arith.maximumf %835, %842 : vector<2x128xf32>
    %c2_635 = arith.constant 2 : index
    %c23_636 = arith.constant 23 : index
    %c0_637 = arith.constant 0 : index
    %c0_638 = arith.constant 0 : index
    %844 = vector.load %arg1[%c2_635, %c23_636, %c0_637, %c0_638] : memref<4x25x2x160xbf16, #tpu.memory_space<vmem>>, vector<1x1x2x160xbf16>
    %845 = vector.shape_cast %844 : vector<1x1x2x160xbf16> to vector<2x160xbf16>
    %cst_639 = arith.constant dense<0.000000e+00> : vector<2x128xf32>
    %846 = tpu.matmul %845, %0, %cst_639 {dimension_numbers = #tpu.dot_dimension_numbers<[1], [0], [0], [1], [0, 0, 1, 1], [], []>} : vector<2x160xbf16>, vector<160x128xbf16>, vector<2x128xf32> -> vector<2x128xf32>
    %847 = vector.broadcast %1 : vector<1x128xf32> to vector<2x128xf32>
    %848 = arith.addf %846, %847 : vector<2x128xf32>
    %cst_640 = arith.constant 0.000000e+00 : f32
    %849 = vector.broadcast %cst_640 : f32 to vector<2x128xf32>
    %850 = arith.maximumf %848, %849 : vector<2x128xf32>
    %851 = arith.maximumf %843, %850 : vector<2x128xf32>
    %c3_641 = arith.constant 3 : index
    %c23_642 = arith.constant 23 : index
    %c0_643 = arith.constant 0 : index
    %c0_644 = arith.constant 0 : index
    %852 = vector.load %arg1[%c3_641, %c23_642, %c0_643, %c0_644] : memref<4x25x2x160xbf16, #tpu.memory_space<vmem>>, vector<1x1x2x160xbf16>
    %853 = vector.shape_cast %852 : vector<1x1x2x160xbf16> to vector<2x160xbf16>
    %cst_645 = arith.constant dense<0.000000e+00> : vector<2x128xf32>
    %854 = tpu.matmul %853, %0, %cst_645 {dimension_numbers = #tpu.dot_dimension_numbers<[1], [0], [0], [1], [0, 0, 1, 1], [], []>} : vector<2x160xbf16>, vector<160x128xbf16>, vector<2x128xf32> -> vector<2x128xf32>
    %855 = vector.broadcast %1 : vector<1x128xf32> to vector<2x128xf32>
    %856 = arith.addf %854, %855 : vector<2x128xf32>
    %cst_646 = arith.constant 0.000000e+00 : f32
    %857 = vector.broadcast %cst_646 : f32 to vector<2x128xf32>
    %858 = arith.maximumf %856, %857 : vector<2x128xf32>
    %859 = arith.maximumf %851, %858 : vector<2x128xf32>
    %860 = arith.truncf %859 : vector<2x128xf32> to vector<2x128xbf16>
    %c23_647 = arith.constant 23 : index
    %c0_648 = arith.constant 0 : index
    %c0_649 = arith.constant 0 : index
    %861 = vector.load %arg4[%c23_647, %c0_648, %c0_649] : memref<25x128x128xbf16, #tpu.memory_space<vmem>>, vector<1x128x128xbf16>
    %862 = vector.shape_cast %861 : vector<1x128x128xbf16> to vector<128x128xbf16>
    %cst_650 = arith.constant dense<0.000000e+00> : vector<2x128xf32>
    %863 = tpu.matmul %860, %862, %cst_650 {dimension_numbers = #tpu.dot_dimension_numbers<[1], [0], [0], [1], [0, 0, 1, 1], [], []>} : vector<2x128xbf16>, vector<128x128xbf16>, vector<2x128xf32> -> vector<2x128xf32>
    %864 = arith.addf %828, %863 : vector<2x128xf32>
    %c0_651 = arith.constant 0 : index
    %c24 = arith.constant 24 : index
    %c0_652 = arith.constant 0 : index
    %c0_653 = arith.constant 0 : index
    %865 = vector.load %arg1[%c0_651, %c24, %c0_652, %c0_653] : memref<4x25x2x160xbf16, #tpu.memory_space<vmem>>, vector<1x1x2x160xbf16>
    %866 = vector.shape_cast %865 : vector<1x1x2x160xbf16> to vector<2x160xbf16>
    %cst_654 = arith.constant dense<0.000000e+00> : vector<2x128xf32>
    %867 = tpu.matmul %866, %0, %cst_654 {dimension_numbers = #tpu.dot_dimension_numbers<[1], [0], [0], [1], [0, 0, 1, 1], [], []>} : vector<2x160xbf16>, vector<160x128xbf16>, vector<2x128xf32> -> vector<2x128xf32>
    %868 = vector.broadcast %1 : vector<1x128xf32> to vector<2x128xf32>
    %869 = arith.addf %867, %868 : vector<2x128xf32>
    %cst_655 = arith.constant 0.000000e+00 : f32
    %870 = vector.broadcast %cst_655 : f32 to vector<2x128xf32>
    %871 = arith.maximumf %869, %870 : vector<2x128xf32>
    %c1_656 = arith.constant 1 : index
    %c24_657 = arith.constant 24 : index
    %c0_658 = arith.constant 0 : index
    %c0_659 = arith.constant 0 : index
    %872 = vector.load %arg1[%c1_656, %c24_657, %c0_658, %c0_659] : memref<4x25x2x160xbf16, #tpu.memory_space<vmem>>, vector<1x1x2x160xbf16>
    %873 = vector.shape_cast %872 : vector<1x1x2x160xbf16> to vector<2x160xbf16>
    %cst_660 = arith.constant dense<0.000000e+00> : vector<2x128xf32>
    %874 = tpu.matmul %873, %0, %cst_660 {dimension_numbers = #tpu.dot_dimension_numbers<[1], [0], [0], [1], [0, 0, 1, 1], [], []>} : vector<2x160xbf16>, vector<160x128xbf16>, vector<2x128xf32> -> vector<2x128xf32>
    %875 = vector.broadcast %1 : vector<1x128xf32> to vector<2x128xf32>
    %876 = arith.addf %874, %875 : vector<2x128xf32>
    %cst_661 = arith.constant 0.000000e+00 : f32
    %877 = vector.broadcast %cst_661 : f32 to vector<2x128xf32>
    %878 = arith.maximumf %876, %877 : vector<2x128xf32>
    %879 = arith.maximumf %871, %878 : vector<2x128xf32>
    %c2_662 = arith.constant 2 : index
    %c24_663 = arith.constant 24 : index
    %c0_664 = arith.constant 0 : index
    %c0_665 = arith.constant 0 : index
    %880 = vector.load %arg1[%c2_662, %c24_663, %c0_664, %c0_665] : memref<4x25x2x160xbf16, #tpu.memory_space<vmem>>, vector<1x1x2x160xbf16>
    %881 = vector.shape_cast %880 : vector<1x1x2x160xbf16> to vector<2x160xbf16>
    %cst_666 = arith.constant dense<0.000000e+00> : vector<2x128xf32>
    %882 = tpu.matmul %881, %0, %cst_666 {dimension_numbers = #tpu.dot_dimension_numbers<[1], [0], [0], [1], [0, 0, 1, 1], [], []>} : vector<2x160xbf16>, vector<160x128xbf16>, vector<2x128xf32> -> vector<2x128xf32>
    %883 = vector.broadcast %1 : vector<1x128xf32> to vector<2x128xf32>
    %884 = arith.addf %882, %883 : vector<2x128xf32>
    %cst_667 = arith.constant 0.000000e+00 : f32
    %885 = vector.broadcast %cst_667 : f32 to vector<2x128xf32>
    %886 = arith.maximumf %884, %885 : vector<2x128xf32>
    %887 = arith.maximumf %879, %886 : vector<2x128xf32>
    %c3_668 = arith.constant 3 : index
    %c24_669 = arith.constant 24 : index
    %c0_670 = arith.constant 0 : index
    %c0_671 = arith.constant 0 : index
    %888 = vector.load %arg1[%c3_668, %c24_669, %c0_670, %c0_671] : memref<4x25x2x160xbf16, #tpu.memory_space<vmem>>, vector<1x1x2x160xbf16>
    %889 = vector.shape_cast %888 : vector<1x1x2x160xbf16> to vector<2x160xbf16>
    %cst_672 = arith.constant dense<0.000000e+00> : vector<2x128xf32>
    %890 = tpu.matmul %889, %0, %cst_672 {dimension_numbers = #tpu.dot_dimension_numbers<[1], [0], [0], [1], [0, 0, 1, 1], [], []>} : vector<2x160xbf16>, vector<160x128xbf16>, vector<2x128xf32> -> vector<2x128xf32>
    %891 = vector.broadcast %1 : vector<1x128xf32> to vector<2x128xf32>
    %892 = arith.addf %890, %891 : vector<2x128xf32>
    %cst_673 = arith.constant 0.000000e+00 : f32
    %893 = vector.broadcast %cst_673 : f32 to vector<2x128xf32>
    %894 = arith.maximumf %892, %893 : vector<2x128xf32>
    %895 = arith.maximumf %887, %894 : vector<2x128xf32>
    %896 = arith.truncf %895 : vector<2x128xf32> to vector<2x128xbf16>
    %c24_674 = arith.constant 24 : index
    %c0_675 = arith.constant 0 : index
    %c0_676 = arith.constant 0 : index
    %897 = vector.load %arg4[%c24_674, %c0_675, %c0_676] : memref<25x128x128xbf16, #tpu.memory_space<vmem>>, vector<1x128x128xbf16>
    %898 = vector.shape_cast %897 : vector<1x128x128xbf16> to vector<128x128xbf16>
    %cst_677 = arith.constant dense<0.000000e+00> : vector<2x128xf32>
    %899 = tpu.matmul %896, %898, %cst_677 {dimension_numbers = #tpu.dot_dimension_numbers<[1], [0], [0], [1], [0, 0, 1, 1], [], []>} : vector<2x128xbf16>, vector<128x128xbf16>, vector<2x128xf32> -> vector<2x128xf32>
    %900 = arith.addf %864, %899 : vector<2x128xf32>
    %c0_678 = arith.constant 0 : index
    %c0_679 = arith.constant 0 : index
    %901 = vector.load %arg5[%c0_678, %c0_679] : memref<1x128xf32, #tpu.memory_space<vmem>>, vector<1x128xf32>
    %902 = vector.broadcast %901 : vector<1x128xf32> to vector<2x128xf32>
    %903 = arith.addf %900, %902 : vector<2x128xf32>
    %cst_680 = arith.constant 0.000000e+00 : f32
    %904 = vector.broadcast %cst_680 : f32 to vector<2x128xf32>
    %905 = arith.maximumf %903, %904 : vector<2x128xf32>
    %906 = arith.truncf %905 : vector<2x128xf32> to vector<2x128xbf16>
    %c0_681 = arith.constant 0 : index
    %c0_682 = arith.constant 0 : index
    %907 = vector.load %arg6[%c0_681, %c0_682] : memref<128x128xbf16, #tpu.memory_space<vmem>>, vector<128x128xbf16>
    %cst_683 = arith.constant dense<0.000000e+00> : vector<2x128xf32>
    %908 = tpu.matmul %906, %907, %cst_683 {dimension_numbers = #tpu.dot_dimension_numbers<[1], [0], [0], [1], [0, 0, 1, 1], [], []>} : vector<2x128xbf16>, vector<128x128xbf16>, vector<2x128xf32> -> vector<2x128xf32>
    %c0_684 = arith.constant 0 : index
    %c0_685 = arith.constant 0 : index
    %909 = vector.load %arg7[%c0_684, %c0_685] : memref<1x128xf32, #tpu.memory_space<vmem>>, vector<1x128xf32>
    %910 = vector.broadcast %909 : vector<1x128xf32> to vector<2x128xf32>
    %911 = arith.addf %908, %910 : vector<2x128xf32>
    %cst_686 = arith.constant 0.000000e+00 : f32
    %912 = vector.broadcast %cst_686 : f32 to vector<2x128xf32>
    %913 = arith.maximumf %911, %912 : vector<2x128xf32>
    %914 = arith.truncf %913 : vector<2x128xf32> to vector<2x128xbf16>
    %c0_687 = arith.constant 0 : index
    %c0_688 = arith.constant 0 : index
    %915 = vector.load %arg8[%c0_687, %c0_688] : memref<128x128xbf16, #tpu.memory_space<vmem>>, vector<128x128xbf16>
    %cst_689 = arith.constant dense<0.000000e+00> : vector<2x128xf32>
    %916 = tpu.matmul %914, %915, %cst_689 {dimension_numbers = #tpu.dot_dimension_numbers<[1], [0], [0], [1], [0, 0, 1, 1], [], []>} : vector<2x128xbf16>, vector<128x128xbf16>, vector<2x128xf32> -> vector<2x128xf32>
    %c0_690 = arith.constant 0 : index
    %c0_691 = arith.constant 0 : index
    %917 = vector.load %arg9[%c0_690, %c0_691] : memref<1x128xf32, #tpu.memory_space<vmem>>, vector<1x128xf32>
    %918 = vector.broadcast %917 : vector<1x128xf32> to vector<2x128xf32>
    %919 = arith.addf %916, %918 : vector<2x128xf32>
    %c0_692 = arith.constant 0 : index
    %c0_693 = arith.constant 0 : index
    %920 = vector.load %arg10[%c0_692, %c0_693] : memref<2x128xf32, #tpu.memory_space<vmem>>, vector<2x128xf32>
    tpu.vector_store %arg10[%c0_692, %c0_693], %919 {strides = array<i32>} : memref<2x128xf32, #tpu.memory_space<vmem>>, vector<2x128xf32>,
    return
  }
  func.func @transform_0(%arg0: i32) -> (i32, i32, i32, i32) {
    %c0_i32 = arith.constant 0 : i32
    %c0_i32_0 = arith.constant 0 : i32
    %c0_i32_1 = arith.constant 0 : i32
    %c0_i32_2 = arith.constant 0 : i32
    return %c0_i32, %c0_i32_0, %arg0, %c0_i32_1 : i32, i32, i32, i32
  }
  func.func @transform_1(%arg0: i32) -> (i32, i32) {
    %c0_i32 = arith.constant 0 : i32
    %c0_i32_0 = arith.constant 0 : i32
    %c0_i32_1 = arith.constant 0 : i32
    return %c0_i32, %c0_i32_0 : i32, i32
  }
  func.func @transform_2(%arg0: i32) -> (i32, i32) {
    %c0_i32 = arith.constant 0 : i32
    %c0_i32_0 = arith.constant 0 : i32
    %c0_i32_1 = arith.constant 0 : i32
    return %c0_i32, %c0_i32_0 : i32, i32
  }
  func.func @transform_3(%arg0: i32) -> (i32, i32, i32) {
    %c0_i32 = arith.constant 0 : i32
    %c0_i32_0 = arith.constant 0 : i32
    %c0_i32_1 = arith.constant 0 : i32
    %c0_i32_2 = arith.constant 0 : i32
    return %c0_i32, %c0_i32_0, %c0_i32_1 : i32, i32, i32
  }
  func.func @transform_4(%arg0: i32) -> (i32, i32) {
    %c0_i32 = arith.constant 0 : i32
    %c0_i32_0 = arith.constant 0 : i32
    %c0_i32_1 = arith.constant 0 : i32
    return %c0_i32, %c0_i32_0 : i32, i32
  }
  func.func @transform_5(%arg0: i32) -> (i32, i32) {
    %c0_i32 = arith.constant 0 : i32
    %c0_i32_0 = arith.constant 0 : i32
    %c0_i32_1 = arith.constant 0 : i32
    return %c0_i32, %c0_i32_0 : i32, i32
  }
  func.func @transform_6(%arg0: i32) -> (i32, i32) {
    %c0_i32 = arith.constant 0 : i32
    %c0_i32_0 = arith.constant 0 : i32
    %c0_i32_1 = arith.constant 0 : i32
    return %c0_i32, %c0_i32_0 : i32, i32
  }
  func.func @transform_7(%arg0: i32) -> (i32, i32) {
    %c0_i32 = arith.constant 0 : i32
    %c0_i32_0 = arith.constant 0 : i32
    %c0_i32_1 = arith.constant 0 : i32
    return %c0_i32, %c0_i32_0 : i32, i32
  }
  func.func @transform_8(%arg0: i32) -> (i32, i32) {
    %c0_i32 = arith.constant 0 : i32
    %c0_i32_0 = arith.constant 0 : i32
    %c0_i32_1 = arith.constant 0 : i32
    return %c0_i32, %c0_i32_0 : i32, i32
  }
  func.func @transform_9(%arg0: i32) -> (i32, i32) {
    %c0_i32 = arith.constant 0 : i32
    %c0_i32_0 = arith.constant 0 : i32
    return %arg0, %c0_i32 : i32, i32
  }
}

</mosaic_0001>

<llo_original>
// kernel: net_forward.2
$region0: #{net_forward.2}
  #allocation0 [shape = 'u32[]', space=smem, size = 0x4, offset = 0x4, fixed_abs, tag = 'smem constant byte address 0x4 - core index']
  #allocation1 [shape = 'u32[72,128]{1,0:T(1,128)}', space=vmem, size = 0x9000, scoped, tag = 'internal scratch']
  %s0 = inlined_call_operand.vmem [shape: bf16[4,392,32], index: 0, kind: input, shape index: {}]
  %s1 = inlined_call_operand.vmem [shape: bf16[32,128], index: 1, kind: input, shape index: {}]
  %s2 = inlined_call_operand.vmem [shape: f32[1,128], index: 2, kind: input, shape index: {}]
  %s3 = inlined_call_operand.vmem [shape: bf16[392,128], index: 3, kind: output, shape index: {}]
  %s4 = sld [smem:[#allocation0]]
  $region151: #{net_forward.2} parent=0
    _
  %s6 = ssub.s32 1, %s4
  %s7 = scalar_select 0, %s6, %s4
  $region1: #{net_forward.2} parent=0
    #allocation2 [shape = 'u8[409600]{0}', space=vmem, size = 0x64000, scoped, tag = 'input window, operand 0']
    #allocation3 [shape = 'u8[102400]{0}', space=vmem, size = 0x19000, scoped, tag = 'output window, operand 0']
    loop: start=0, step=1, limit=4
    $region2: #{net_forward.2} parent=1 // loop_pre_header
      _
    $region3: #{net_forward.2} parent=1 // loop_header
      %s9 = sphi 0, %s13
      %p10 = scmp.ge.s32.totalorder %s9, 4
      %s19 = sphi 0, %s21
      %s22 = sphi 0, %s19
      %s23 = sphi 0, %s22
      %s39 = sphi 0, %s23
      %s43 = sphi 0, %s43
      %s45 = sphi 0, %s43
      %s46 = sphi 0, %s45
      %s60 = sphi 0, %s46
      %s64 = sphi 0, %s64
      %s66 = sphi 0, %s64
      %s67 = sphi 0, %s66
      %s81 = sphi 0, %s67
      %s87 = sphi 0, %s89
      %s90 = sphi 0, %s87
      %s91 = sphi 0, %s90
      %s107 = sphi 0, %s91
    $region4: #{net_forward.2} parent=1 // loop_header_branch
      %12 = sbr.rel (%p10) target = $region8
    $region5: #{net_forward.2} parent=1 // loop_body
      %s14 = ssub.s32 %s9, 1
      %s15 = ssub.s32 %s9, 2
      %s16 = sadd.s32 %s9, 1
      %s17 = ssub.s32 %s9, %s16
      %p18 = scmp.eq.s32.totalorder %s17, 0
      %s20 = sadd.s32 %s19, 1
      %s21 = scalar_select %p18, %s19, %s20
      %p24 = pneg %p18
      %p25 = scmp.eq.s32.totalorder %s9, 1
      %p26 = por %p24, %p25
      %p27 = scmp.ne.s32.totalorder %s19, %s22
      %p28 = scmp.eq.s32.totalorder %s9, 0
      %p29 = por %p27, %p28
      %p30 = scmp.ne.s32.totalorder %s19, %s22
      %p31 = scmp.eq.s32.totalorder %s14, 1
      %p32 = por %p30, %p31
      %p33 = scmp.ne.s32.totalorder %s22, %s23
      %p34 = scmp.eq.s32.totalorder %s14, 0
      %p35 = por %p33, %p34
      %p36 = scmp.ne.s32.totalorder %s22, %s23
      %p37 = scmp.eq.s32.totalorder %s15, 1
      %p38 = por %p36, %p37
      %p40 = scmp.ne.s32.totalorder %s23, %s39
      %p41 = scmp.eq.s32.totalorder %s15, 0
      %p42 = por %p40, %p41
      %s44 = sadd.s32 %s43, 1
      %p47 = scmp.eq.s32.totalorder %s9, 1
      %p48 = scmp.ne.s32.totalorder %s43, %s45
      %p49 = scmp.eq.s32.totalorder %s9, 0
      %p50 = por %p48, %p49
      %p51 = scmp.ne.s32.totalorder %s43, %s45
      %p52 = scmp.eq.s32.totalorder %s14, 1
      %p53 = por %p51, %p52
      %p54 = scmp.ne.s32.totalorder %s45, %s46
      %p55 = scmp.eq.s32.totalorder %s14, 0
      %p56 = por %p54, %p55
      %p57 = scmp.ne.s32.totalorder %s45, %s46
      %p58 = scmp.eq.s32.totalorder %s15, 1
      %p59 = por %p57, %p58
      %p61 = scmp.ne.s32.totalorder %s46, %s60
      %p62 = scmp.eq.s32.totalorder %s15, 0
      %p63 = por %p61, %p62
      %s65 = sadd.s32 %s64, 1
      %p68 = scmp.eq.s32.totalorder %s9, 1
      %p69 = scmp.ne.s32.totalorder %s64, %s66
      %p70 = scmp.eq.s32.totalorder %s9, 0
      %p71 = por %p69, %p70
      %p72 = scmp.ne.s32.totalorder %s64, %s66
      %p73 = scmp.eq.s32.totalorder %s14, 1
      %p74 = por %p72, %p73
      %p75 = scmp.ne.s32.totalorder %s66, %s67
      %p76 = scmp.eq.s32.totalorder %s14, 0
      %p77 = por %p75, %p76
      %p78 = scmp.ne.s32.totalorder %s66, %s67
      %p79 = scmp.eq.s32.totalorder %s15, 1
      %p80 = por %p78, %p79
      %p82 = scmp.ne.s32.totalorder %s67, %s81
      %p83 = scmp.eq.s32.totalorder %s15, 0
      %p84 = por %p82, %p83
      %s85 = ssub.s32 %s9, %s16
      %p86 = scmp.eq.s32.totalorder %s85, 0
      %s88 = sadd.s32 %s87, 1
      %s89 = scalar_select %p86, %s87, %s88
      %p92 = pneg %p86
      %p93 = scmp.eq.s32.totalorder %s9, 1
      %p94 = por %p92, %p93
      %p95 = scmp.ne.s32.totalorder %s87, %s90
      %p96 = scmp.eq.s32.totalorder %s9, 0
      %p97 = por %p95, %p96
      %p98 = scmp.ne.s32.totalorder %s87, %s90
      %p99 = scmp.eq.s32.totalorder %s14, 1
      %p100 = por %p98, %p99
      %p101 = scmp.ne.s32.totalorder %s90, %s91
      %p102 = scmp.eq.s32.totalorder %s14, 0
      %p103 = por %p101, %p102
      %p104 = scmp.ne.s32.totalorder %s90, %s91
      %p105 = scmp.eq.s32.totalorder %s15, 1
      %p106 = por %p104, %p105
      %p108 = scmp.ne.s32.totalorder %s91, %s107
      %p109 = scmp.eq.s32.totalorder %s15, 0
      %p110 = por %p108, %p109
      %p111 = scmp.le.s32.totalorder 1, %s9
      %p112 = scmp.lt.s32.totalorder %s9, 3
      %p113 = pnand %p111, %p112
      %p114 = pneg %p113
      // Predicated region
      $region9: #{net_forward.2} parent=5 // pred_check
        _
      $region10: #{net_forward.2} parent=5 // pred_check_branch
        %116 = sbr.rel (%p113) target = $region12
      $region11: #{net_forward.2} parent=5 // pred_region
        %s117 = ssub.s32 %s9, 1
        // Predicated region
        $region13: #{net_forward.2} parent=11 // pred_check
          %p118 = pneg %p56
        $region14: #{net_forward.2} parent=11 // pred_check_branch
          %120 = sbr.rel (%p118) target = $region16
        $region15: #{net_forward.2} parent=11 // pred_region
          _
        $region16: #{net_forward.2} parent=11 // pred_fallthru
          _
        // Predicated region
        $region17: #{net_forward.2} parent=11 // pred_check
          %p121 = pneg %p77
        $region18: #{net_forward.2} parent=11 // pred_check_branch
          %123 = sbr.rel (%p121) target = $region20
        $region19: #{net_forward.2} parent=11 // pred_region
          _
        $region20: #{net_forward.2} parent=11 // pred_fallthru
          _
      $region12: #{net_forward.2} parent=5 // pred_fallthru
        _
      %p124 = scmp.lt.s32.totalorder %s9, 2
      // Predicated region
      $region21: #{net_forward.2} parent=5 // pred_check
        %p125 = pneg %p124
      $region22: #{net_forward.2} parent=5 // pred_check_branch
        %127 = sbr.rel (%p125) target = $region24
      $region23: #{net_forward.2} parent=5 // pred_region
        // Predicated region
        $region25: #{net_forward.2} parent=23 // pred_check
          %p128 = pneg %p29
        $region26: #{net_forward.2} parent=23 // pred_check_branch
          %130 = sbr.rel (%p128) target = $region28
        $region27: #{net_forward.2} parent=23 // pred_region
          %s131 = sand.u32 %s19, 1
          %s132 = sand.u32 %s19, 1
          %s133 = smul.addr %s132, 400
          %s134 = scalar_lea.vmem [#allocation2], %s133
          %s135 = smul.u32 25, %s9
          %s136 = ssub.s32 49, %s135
          %p137 = scmp.lt.s32.totalorder %s136, 25
          %s138 = scalar_select %p137, %s136, 25
          %s139 = smul.u32 16, %s138
          %p140 = scmp.ne.s32.totalorder 0, %s139
          %s141 = smul.addr %s135, 4
          %s142 = scalar_lea.vmem %s0, %s141
          // Predicated region
          $region29: #{net_forward.2} parent=27 // pred_check
            %p143 = pneg %p140
          $region30: #{net_forward.2} parent=27 // pred_check_branch
            %145 = sbr.rel (%p143) target = $region32
          $region31: #{net_forward.2} parent=27 // pred_region
            // Predicated region
            $region33: #{net_forward.2} parent=31 // pred_check
              _
            $region34: #{net_forward.2} parent=31 // pred_check_branch
              %147 = sbr.rel target = $region36
            $region35: #{net_forward.2} parent=31 // pred_region
              // Predicated region
              $region55: #{net_forward.2} parent=35 // pred_check
                _
              $region56: #{net_forward.2} parent=35 // pred_check_branch
                %265 = sbr.rel (0) target = $region58
              $region57: #{net_forward.2} parent=35 // pred_region
                %s266 = sshrl.u32 %s138, 4
                // While loop
                $region59: #{net_forward.2} parent=57 // loop_pre_header
                  _
                $region60: #{net_forward.2} parent=57 // loop_header
                  %s268 = sphi 0, %s270
                  %p269 = scmp.ge.s32.totalorder %s268, %s266
                  %s273 = sphi 0, %s278
                  %s274 = sphi %s142, %s281
                  %s275 = sphi %s134, %s282
                $region61: #{net_forward.2} parent=57 // loop_header_branch
                  %272 = sbr.rel (%p269) target = $region65
                $region62: #{net_forward.2} parent=57 // loop_body
                  %s276 = sadd.s32 1, %s273
                  %p277 = scmp.ge.s32.totalorder %s276, %s266
                  %s278 = scalar_select %p277, 0, %s276
                  %s279 = smul.u32 %s278, 64
                  %s280 = smul.u32 %s278, 64
                  %s281 = scalar_lea.vmem %s142, %s279
                  %s282 = scalar_lea.vmem %s134, %s280 [#allocation2]
                $region63: #{net_forward.2} parent=57 // loop_footer
                  %s270 = sadd.s32 %s268, 1
                $region64: #{net_forward.2} parent=57 // loop_footer_branch
                  %267 = sbr.rel target = $region60
                $region65: #{net_forward.2} parent=57 // loop_exit
                  _
                %s283 = sshrl.u32 %s138, 4
                %s284 = sand.u32 %s138, 15
                %s285 = smul.u32 %s283, 16
                %s286 = smul.u32 4, %s285
                %s287 = scalar_lea.vmem %s142, %s286
                %s288 = smul.u32 4, %s285
                %s289 = scalar_lea.vmem %s134, %s288 [#allocation2]
                // While loop
                $region66: #{net_forward.2} parent=57 // loop_pre_header
                  _
                $region67: #{net_forward.2} parent=57 // loop_header
                  %s291 = sphi 0, %s293
                  %p292 = scmp.ge.s32.totalorder %s291, %s284
                  %s296 = sphi 0, %s301
                  %s297 = sphi %s287, %s304
                  %s298 = sphi %s289, %s305
                $region68: #{net_forward.2} parent=57 // loop_header_branch
                  %295 = sbr.rel (%p292) target = $region72
                $region69: #{net_forward.2} parent=57 // loop_body
                  %s299 = sadd.s32 1, %s296
                  %p300 = scmp.ge.s32.totalorder %s299, %s284
                  %s301 = scalar_select %p300, 0, %s299
                  %s302 = smul.u32 %s301, 4
                  %s303 = smul.u32 %s301, 4
                  %s304 = scalar_lea.vmem %s287, %s302
                  %s305 = scalar_lea.vmem %s289, %s303 [#allocation2]
                $region70: #{net_forward.2} parent=57 // loop_footer
                  %s293 = sadd.s32 %s291, 1
                $region71: #{net_forward.2} parent=57 // loop_footer_branch
                  %290 = sbr.rel target = $region67
                $region72: #{net_forward.2} parent=57 // loop_exit
                  _
                %s307 = ssub.s32 16, 1
                %s308 = sshrl.u32 %s138, 3
                // While loop
                $region73: #{net_forward.2} parent=57 // loop_pre_header
                  _
                $region74: #{net_forward.2} parent=57 // loop_header
                  %s310 = sphi 0, %s312
                  %p311 = scmp.ge.s32.totalorder %s310, %s308
                  %s315 = sphi 0, %s384
                  %s316 = sphi %s142, %s387
                  %s317 = sphi %s134, %s388
                $region75: #{net_forward.2} parent=57 // loop_header_branch
                  %314 = sbr.rel (%p311) target = $region79
                $region76: #{net_forward.2} parent=57 // loop_body
                  %v318 = vld [vmem:[%s316] sm:%s307]
                  %319 = vst [vmem:[%s317] sm:%s307] %v318
                  %v320 = vld [vmem:[%s316 + $0x4] sm:%s307]
                  %321 = vst [vmem:[%s317 + $0x4] sm:%s307] %v320
                  %v322 = vld [vmem:[%s316 + $0x8] sm:%s307]
                  %323 = vst [vmem:[%s317 + $0x8] sm:%s307] %v322
                  %v324 = vld [vmem:[%s316 + $0xc] sm:%s307]
                  %325 = vst [vmem:[%s317 + $0xc] sm:%s307] %v324
                  %v326 = vld [vmem:[%s316 + $0x10] sm:%s307]
                  %327 = vst [vmem:[%s317 + $0x10] sm:%s307] %v326
                  %v328 = vld [vmem:[%s316 + $0x14] sm:%s307]
                  %329 = vst [vmem:[%s317 + $0x14] sm:%s307] %v328
                  %v330 = vld [vmem:[%s316 + $0x18] sm:%s307]
                  %331 = vst [vmem:[%s317 + $0x18] sm:%s307] %v330
                  %v332 = vld [vmem:[%s316 + $0x1c] sm:%s307]
                  %333 = vst [vmem:[%s317 + $0x1c] sm:%s307] %v332
                  %v334 = vld [vmem:[%s316 + $0xc4] sm:%s307]
                  %335 = vst [vmem:[%s317 + $0x64] sm:%s307] %v334
                  %v336 = vld [vmem:[%s316 + $0xc8] sm:%s307]
                  %337 = vst [vmem:[%s317 + $0x68] sm:%s307] %v336
                  %v338 = vld [vmem:[%s316 + $0xcc] sm:%s307]
                  %339 = vst [vmem:[%s317 + $0x6c] sm:%s307] %v338
                  %v340 = vld [vmem:[%s316 + $0xd0] sm:%s307]
                  %341 = vst [vmem:[%s317 + $0x70] sm:%s307] %v340
                  %v342 = vld [vmem:[%s316 + $0xd4] sm:%s307]
                  %343 = vst [vmem:[%s317 + $0x74] sm:%s307] %v342
                  %v344 = vld [vmem:[%s316 + $0xd8] sm:%s307]
                  %345 = vst [vmem:[%s317 + $0x78] sm:%s307] %v344
                  %v346 = vld [vmem:[%s316 + $0xdc] sm:%s307]
                  %347 = vst [vmem:[%s317 + $0x7c] sm:%s307] %v346
                  %v348 = vld [vmem:[%s316 + $0xe0] sm:%s307]
                  %349 = vst [vmem:[%s317 + $0x80] sm:%s307] %v348
                  %v350 = vld [vmem:[%s316 + $0x188] sm:%s307]
                  %351 = vst [vmem:[%s317 + $0xc8] sm:%s307] %v350
                  %v352 = vld [vmem:[%s316 + $0x18c] sm:%s307]
                  %353 = vst [vmem:[%s317 + $0xcc] sm:%s307] %v352
                  %v354 = vld [vmem:[%s316 + $0x190] sm:%s307]
                  %355 = vst [vmem:[%s317 + $0xd0] sm:%s307] %v354
                  %v356 = vld [vmem:[%s316 + $0x194] sm:%s307]
                  %357 = vst [vmem:[%s317 + $0xd4] sm:%s307] %v356
                  %v358 = vld [vmem:[%s316 + $0x198] sm:%s307]
                  %359 = vst [vmem:[%s317 + $0xd8] sm:%s307] %v358
                  %v360 = vld [vmem:[%s316 + $0x19c] sm:%s307]
                  %361 = vst [vmem:[%s317 + $0xdc] sm:%s307] %v360
                  %v362 = vld [vmem:[%s316 + $0x1a0] sm:%s307]
                  %363 = vst [vmem:[%s317 + $0xe0] sm:%s307] %v362
                  %v364 = vld [vmem:[%s316 + $0x1a4] sm:%s307]
                  %365 = vst [vmem:[%s317 + $0xe4] sm:%s307] %v364
                  %v366 = vld [vmem:[%s316 + $0x24c] sm:%s307]
                  %367 = vst [vmem:[%s317 + $0x12c] sm:%s307] %v366
                  %v368 = vld [vmem:[%s316 + $0x250] sm:%s307]
                  %369 = vst [vmem:[%s317 + $0x130] sm:%s307] %v368
                  %v370 = vld [vmem:[%s316 + $0x254] sm:%s307]
                  %371 = vst [vmem:[%s317 + $0x134] sm:%s307] %v370
                  %v372 = vld [vmem:[%s316 + $0x258] sm:%s307]
                  %373 = vst [vmem:[%s317 + $0x138] sm:%s307] %v372
                  %v374 = vld [vmem:[%s316 + $0x25c] sm:%s307]
                  %375 = vst [vmem:[%s317 + $0x13c] sm:%s307] %v374
                  %v376 = vld [vmem:[%s316 + $0x260] sm:%s307]
                  %377 = vst [vmem:[%s317 + $0x140] sm:%s307] %v376
                  %v378 = vld [vmem:[%s316 + $0x264] sm:%s307]
                  %379 = vst [vmem:[%s317 + $0x144] sm:%s307] %v378
                  %v380 = vld [vmem:[%s316 + $0x268] sm:%s307]
                  %381 = vst [vmem:[%s317 + $0x148] sm:%s307] %v380
                  %s382 = sadd.s32 1, %s315
                  %p383 = scmp.ge.s32.totalorder %s382, %s308
                  %s384 = scalar_select %p383, 0, %s382
                  %s385 = smul.u32 %s384, 32
                  %s386 = smul.u32 %s384, 32
                  %s387 = scalar_lea.vmem %s142, %s385
                  %s388 = scalar_lea.vmem %s134, %s386 [#allocation2]
                $region77: #{net_forward.2} parent=57 // loop_footer
                  %s312 = sadd.s32 %s310, 1
                $region78: #{net_forward.2} parent=57 // loop_footer_branch
                  %309 = sbr.rel target = $region74
                $region79: #{net_forward.2} parent=57 // loop_exit
                  _
                %s389 = sshrl.u32 %s138, 3
                %s390 = sand.u32 %s138, 7
                %s391 = smul.u32 %s389, 8
                %s392 = smul.u32 4, %s391
                %s393 = scalar_lea.vmem %s142, %s392
                %s394 = smul.u32 4, %s391
                %s395 = scalar_lea.vmem %s134, %s394 [#allocation2]
                // While loop
                $region80: #{net_forward.2} parent=57 // loop_pre_header
                  _
                $region81: #{net_forward.2} parent=57 // loop_header
                  %s397 = sphi 0, %s399
                  %p398 = scmp.ge.s32.totalorder %s397, %s390
                  %s402 = sphi 0, %s415
                  %s403 = sphi %s393, %s418
                  %s404 = sphi %s395, %s419
                $region82: #{net_forward.2} parent=57 // loop_header_branch
                  %401 = sbr.rel (%p398) target = $region86
                $region83: #{net_forward.2} parent=57 // loop_body
                  %v405 = vld [vmem:[%s403] sm:%s307]
                  %406 = vst [vmem:[%s404] sm:%s307] %v405
                  %v407 = vld [vmem:[%s403 + $0xc4] sm:%s307]
                  %408 = vst [vmem:[%s404 + $0x64] sm:%s307] %v407
                  %v409 = vld [vmem:[%s403 + $0x188] sm:%s307]
                  %410 = vst [vmem:[%s404 + $0xc8] sm:%s307] %v409
                  %v411 = vld [vmem:[%s403 + $0x24c] sm:%s307]
                  %412 = vst [vmem:[%s404 + $0x12c] sm:%s307] %v411
                  %s413 = sadd.s32 1, %s402
                  %p414 = scmp.ge.s32.totalorder %s413, %s390
                  %s415 = scalar_select %p414, 0, %s413
                  %s416 = smul.u32 %s415, 4
                  %s417 = smul.u32 %s415, 4
                  %s418 = scalar_lea.vmem %s393, %s416
                  %s419 = scalar_lea.vmem %s395, %s417 [#allocation2]
                $region84: #{net_forward.2} parent=57 // loop_footer
                  %s399 = sadd.s32 %s397, 1
                $region85: #{net_forward.2} parent=57 // loop_footer_branch
                  %396 = sbr.rel target = $region81
                $region86: #{net_forward.2} parent=57 // loop_exit
                  _
              $region58: #{net_forward.2} parent=35 // pred_fallthru
                _
            $region36: #{net_forward.2} parent=31 // pred_fallthru
              _
            // Predicated region
            $region37: #{net_forward.2} parent=31 // pred_check
              _
            $region38: #{net_forward.2} parent=31 // pred_check_branch
              %149 = sbr.rel (0) target = $region40
            $region39: #{net_forward.2} parent=31 // pred_region
              %s151 = ssub.s32 16, 1
              %s152 = sshrl.u32 %s138, 3
              // While loop
              $region41: #{net_forward.2} parent=39 // loop_pre_header
                _
              $region42: #{net_forward.2} parent=39 // loop_header
                %s154 = sphi 0, %s156
                %p155 = scmp.ge.s32.totalorder %s154, %s152
                %s159 = sphi 0, %s228
                %s160 = sphi %s142, %s231
                %s161 = sphi %s134, %s232
              $region43: #{net_forward.2} parent=39 // loop_header_branch
                %158 = sbr.rel (%p155) target = $region47
              $region44: #{net_forward.2} parent=39 // loop_body
                %v162 = vld [vmem:[%s160] sm:%s151]
                %163 = vst [vmem:[%s161] sm:%s151] %v162
                %v164 = vld [vmem:[%s160 + $0x4] sm:%s151]
                %165 = vst [vmem:[%s161 + $0x4] sm:%s151] %v164
                %v166 = vld [vmem:[%s160 + $0x8] sm:%s151]
                %167 = vst [vmem:[%s161 + $0x8] sm:%s151] %v166
                %v168 = vld [vmem:[%s160 + $0xc] sm:%s151]
                %169 = vst [vmem:[%s161 + $0xc] sm:%s151] %v168
                %v170 = vld [vmem:[%s160 + $0x10] sm:%s151]
                %171 = vst [vmem:[%s161 + $0x10] sm:%s151] %v170
                %v172 = vld [vmem:[%s160 + $0x14] sm:%s151]
                %173 = vst [vmem:[%s161 + $0x14] sm:%s151] %v172
                %v174 = vld [vmem:[%s160 + $0x18] sm:%s151]
                %175 = vst [vmem:[%s161 + $0x18] sm:%s151] %v174
                %v176 = vld [vmem:[%s160 + $0x1c] sm:%s151]
                %177 = vst [vmem:[%s161 + $0x1c] sm:%s151] %v176
                %v178 = vld [vmem:[%s160 + $0xc4] sm:%s151]
                %179 = vst [vmem:[%s161 + $0x64] sm:%s151] %v178
                %v180 = vld [vmem:[%s160 + $0xc8] sm:%s151]
                %181 = vst [vmem:[%s161 + $0x68] sm:%s151] %v180
                %v182 = vld [vmem:[%s160 + $0xcc] sm:%s151]
                %183 = vst [vmem:[%s161 + $0x6c] sm:%s151] %v182
                %v184 = vld [vmem:[%s160 + $0xd0] sm:%s151]
                %185 = vst [vmem:[%s161 + $0x70] sm:%s151] %v184
                %v186 = vld [vmem:[%s160 + $0xd4] sm:%s151]
                %187 = vst [vmem:[%s161 + $0x74] sm:%s151] %v186
                %v188 = vld [vmem:[%s160 + $0xd8] sm:%s151]
                %189 = vst [vmem:[%s161 + $0x78] sm:%s151] %v188
                %v190 = vld [vmem:[%s160 + $0xdc] sm:%s151]
                %191 = vst [vmem:[%s161 + $0x7c] sm:%s151] %v190
                %v192 = vld [vmem:[%s160 + $0xe0] sm:%s151]
                %193 = vst [vmem:[%s161 + $0x80] sm:%s151] %v192
                %v194 = vld [vmem:[%s160 + $0x188] sm:%s151]
                %195 = vst [vmem:[%s161 + $0xc8] sm:%s151] %v194
                %v196 = vld [vmem:[%s160 + $0x18c] sm:%s151]
                %197 = vst [vmem:[%s161 + $0xcc] sm:%s151] %v196
                %v198 = vld [vmem:[%s160 + $0x190] sm:%s151]
                %199 = vst [vmem:[%s161 + $0xd0] sm:%s151] %v198
                %v200 = vld [vmem:[%s160 + $0x194] sm:%s151]
                %201 = vst [vmem:[%s161 + $0xd4] sm:%s151] %v200
                %v202 = vld [vmem:[%s160 + $0x198] sm:%s151]
                %203 = vst [vmem:[%s161 + $0xd8] sm:%s151] %v202
                %v204 = vld [vmem:[%s160 + $0x19c] sm:%s151]
                %205 = vst [vmem:[%s161 + $0xdc] sm:%s151] %v204
                %v206 = vld [vmem:[%s160 + $0x1a0] sm:%s151]
                %207 = vst [vmem:[%s161 + $0xe0] sm:%s151] %v206
                %v208 = vld [vmem:[%s160 + $0x1a4] sm:%s151]
                %209 = vst [vmem:[%s161 + $0xe4] sm:%s151] %v208
                %v210 = vld [vmem:[%s160 + $0x24c] sm:%s151]
                %211 = vst [vmem:[%s161 + $0x12c] sm:%s151] %v210
                %v212 = vld [vmem:[%s160 + $0x250] sm:%s151]
                %213 = vst [vmem:[%s161 + $0x130] sm:%s151] %v212
                %v214 = vld [vmem:[%s160 + $0x254] sm:%s151]
                %215 = vst [vmem:[%s161 + $0x134] sm:%s151] %v214
                %v216 = vld [vmem:[%s160 + $0x258] sm:%s151]
                %217 = vst [vmem:[%s161 + $0x138] sm:%s151] %v216
                %v218 = vld [vmem:[%s160 + $0x25c] sm:%s151]
                %219 = vst [vmem:[%s161 + $0x13c] sm:%s151] %v218
                %v220 = vld [vmem:[%s160 + $0x260] sm:%s151]
                %221 = vst [vmem:[%s161 + $0x140] sm:%s151] %v220
                %v222 = vld [vmem:[%s160 + $0x264] sm:%s151]
                %223 = vst [vmem:[%s161 + $0x144] sm:%s151] %v222
                %v224 = vld [vmem:[%s160 + $0x268] sm:%s151]
                %225 = vst [vmem:[%s161 + $0x148] sm:%s151] %v224
                %s226 = sadd.s32 1, %s159
                %p227 = scmp.ge.s32.totalorder %s226, %s152
                %s228 = scalar_select %p227, 0, %s226
                %s229 = smul.u32 %s228, 32
                %s230 = smul.u32 %s228, 32
                %s231 = scalar_lea.vmem %s142, %s229
                %s232 = scalar_lea.vmem %s134, %s230 [#allocation2]
              $region45: #{net_forward.2} parent=39 // loop_footer
                %s156 = sadd.s32 %s154, 1
              $region46: #{net_forward.2} parent=39 // loop_footer_branch
                %153 = sbr.rel target = $region42
              $region47: #{net_forward.2} parent=39 // loop_exit
                _
              %s233 = sshrl.u32 %s138, 3
              %s234 = sand.u32 %s138, 7
              %s235 = smul.u32 %s233, 8
              %s236 = smul.u32 4, %s235
              %s237 = scalar_lea.vmem %s142, %s236
              %s238 = smul.u32 4, %s235
              %s239 = scalar_lea.vmem %s134, %s238 [#allocation2]
              // While loop
              $region48: #{net_forward.2} parent=39 // loop_pre_header
                _
              $region49: #{net_forward.2} parent=39 // loop_header
                %s241 = sphi 0, %s243
                %p242 = scmp.ge.s32.totalorder %s241, %s234
                %s246 = sphi 0, %s259
                %s247 = sphi %s237, %s262
                %s248 = sphi %s239, %s263
              $region50: #{net_forward.2} parent=39 // loop_header_branch
                %245 = sbr.rel (%p242) target = $region54
              $region51: #{net_forward.2} parent=39 // loop_body
                %v249 = vld [vmem:[%s247] sm:%s151]
                %250 = vst [vmem:[%s248] sm:%s151] %v249
                %v251 = vld [vmem:[%s247 + $0xc4] sm:%s151]
                %252 = vst [vmem:[%s248 + $0x64] sm:%s151] %v251
                %v253 = vld [vmem:[%s247 + $0x188] sm:%s151]
                %254 = vst [vmem:[%s248 + $0xc8] sm:%s151] %v253
                %v255 = vld [vmem:[%s247 + $0x24c] sm:%s151]
                %256 = vst [vmem:[%s248 + $0x12c] sm:%s151] %v255
                %s257 = sadd.s32 1, %s246
                %p258 = scmp.ge.s32.totalorder %s257, %s234
                %s259 = scalar_select %p258, 0, %s257
                %s260 = smul.u32 %s259, 4
                %s261 = smul.u32 %s259, 4
                %s262 = scalar_lea.vmem %s237, %s260
                %s263 = scalar_lea.vmem %s239, %s261 [#allocation2]
              $region52: #{net_forward.2} parent=39 // loop_footer
                %s243 = sadd.s32 %s241, 1
              $region53: #{net_forward.2} parent=39 // loop_footer_branch
                %240 = sbr.rel target = $region49
              $region54: #{net_forward.2} parent=39 // loop_exit
                _
            $region40: #{net_forward.2} parent=31 // pred_fallthru
              _
          $region32: #{net_forward.2} parent=27 // pred_fallthru
            _
          %420 = vnop
        $region28: #{net_forward.2} parent=23 // pred_fallthru
          _
      $region24: #{net_forward.2} parent=5 // pred_fallthru
        _
      %p421 = scmp.le.s32.totalorder 1, %s9
      %p422 = scmp.lt.s32.totalorder %s9, 3
      %p423 = pnand %p421, %p422
      %p424 = pneg %p423
      // Predicated region
      $region87: #{net_forward.2} parent=5 // pred_check
        _
      $region88: #{net_forward.2} parent=5 // pred_check_branch
        %426 = sbr.rel (%p423) target = $region90
      $region89: #{net_forward.2} parent=5 // pred_region
        %s427 = ssub.s32 %s9, 1
        %s428 = sand.u32 %s22, 1
        %s429 = sand.u32 %s22, 1
        %s430 = smul.addr %s429, 400
        %s431 = scalar_lea.vmem [#allocation2], %s430
        // Predicated region
        $region91: #{net_forward.2} parent=89 // pred_check
          %p432 = pneg %p35
        $region92: #{net_forward.2} parent=89 // pred_check_branch
          %434 = sbr.rel (%p432) target = $region94
        $region93: #{net_forward.2} parent=89 // pred_region
          _
        $region94: #{net_forward.2} parent=89 // pred_fallthru
          _
        %s435 = sand.u32 %s22, 1
        %s436 = sand.u32 %s22, 1
        %s437 = smul.addr %s436, 400
        %s438 = scalar_lea.vmem [#allocation2], %s437
        %p439 = pneg %p35
        %p440 = pneg %p32
        %p441 = pneg %p56
        %p442 = pneg %p53
        %p443 = pneg %p77
        %p444 = pneg %p74
        %p445 = pneg %p103
        %p446 = pneg %p100
        %s447 = sand.u32 %s90, 1
        %s448 = sand.u32 %s90, 1
        %s449 = smul.addr %s448, 100
        %s450 = scalar_lea.vmem [#allocation3], %s449
        %s451 = smul.u32 25, %s14
        %s452 = ssub.s32 49, %s451
        %p453 = scmp.lt.s32.totalorder %s452, 25
        %s454 = scalar_select %p453, %s452, 25
        %s455 = smul.u32 16, %s454
        %s456 = smul.u32 25, %s14
        %s457 = ssub.s32 49, %s456
        %p458 = scmp.lt.s32.totalorder %s457, 25
        %s459 = scalar_select %p458, %s457, 25
        %s460 = smul.u32 4, %s459
        %v462 = vld [vmem:[%s1] sm:$0xf]
        %v463 = vld [vmem:[%s1 + $0x4] sm:$0xf]
        %v464 = vld [vmem:[%s1 + $0x8] sm:$0xf]
        %v465 = vld [vmem:[%s1 + $0xc] sm:$0xf]
        %v466 = vld [vmem:[%s2] sm:$0x1]
        %v467 = vld [vmem:[%s431] sm:$0xf]
        %v468 = vld [vmem:[%s431 + $0x4] sm:$0xf]
        %v469 = vld [vmem:[%s431 + $0x8] sm:$0xf]
        %v470 = vld [vmem:[%s431 + $0xc] sm:$0xf]
        %v471 = vld [vmem:[%s431 + $0x10] sm:$0xf]
        %v472 = vld [vmem:[%s431 + $0x14] sm:$0xf]
        %v473 = vld [vmem:[%s431 + $0x18] sm:$0xf]
        %v474 = vld [vmem:[%s431 + $0x1c] sm:$0xf]
        %v475 = vld [vmem:[%s431 + $0x20] sm:$0xf]
        %v476 = vld [vmem:[%s431 + $0x24] sm:$0xf]
        %v477 = vld [vmem:[%s431 + $0x28] sm:$0xf]
        %v478 = vld [vmem:[%s431 + $0x2c] sm:$0xf]
        %v479 = vld [vmem:[%s431 + $0x30] sm:$0xf]
        %v480 = vld [vmem:[%s431 + $0x34] sm:$0xf]
        %v481 = vld [vmem:[%s431 + $0x38] sm:$0xf]
        %v482 = vld [vmem:[%s431 + $0x3c] sm:$0xf]
        %v483 = vld [vmem:[%s431 + $0x40] sm:$0xf]
        %v484 = vld [vmem:[%s431 + $0x44] sm:$0xf]
        %v485 = vld [vmem:[%s431 + $0x48] sm:$0xf]
        %v486 = vld [vmem:[%s431 + $0x4c] sm:$0xf]
        %v487 = vld [vmem:[%s431 + $0x50] sm:$0xf]
        %v488 = vld [vmem:[%s431 + $0x54] sm:$0xf]
        %v489 = vld [vmem:[%s431 + $0x58] sm:$0xf]
        %v490 = vld [vmem:[%s431 + $0x5c] sm:$0xf]
        %v491 = vld [vmem:[%s431 + $0x60] sm:$0xf]
        %v493 = vperm.slane %v466, 0
        %v520 = vunpack.c.l.b16 %v467
        %v521 = vunpack.c.l.b16 %v468
        %v522 = vunpack.c.l.b16 %v469
        %v523 = vunpack.c.l.b16 %v470
        %v524 = vunpack.c.l.b16 %v471
        %v525 = vunpack.c.l.b16 %v472
        %v526 = vunpack.c.l.b16 %v473
        %v527 = vunpack.c.l.b16 %v474
        %v528 = vunpack.c.l.b16 %v475
        %v529 = vunpack.c.l.b16 %v476
        %v530 = vunpack.c.l.b16 %v477
        %v531 = vunpack.c.l.b16 %v478
        %v532 = vunpack.c.l.b16 %v479
        %v533 = vunpack.c.l.b16 %v480
        %v534 = vunpack.c.l.b16 %v481
        %v535 = vunpack.c.l.b16 %v482
        %v536 = vunpack.c.l.b16 %v483
        %v537 = vunpack.c.l.b16 %v484
        %v538 = vunpack.c.l.b16 %v485
        %v539 = vunpack.c.l.b16 %v486
        %v540 = vunpack.c.l.b16 %v487
        %v541 = vunpack.c.l.b16 %v488
        %v542 = vunpack.c.l.b16 %v489
        %v543 = vunpack.c.l.b16 %v490
        %v544 = vunpack.c.l.b16 %v491
        %v545 = vpack.c.b16 %v521, %v520
        %v546 = vpack.c.b16 %v523, %v522
        %v547 = vpack.c.b16 %v525, %v524
        %v548 = vpack.c.b16 %v527, %v526
        %v549 = vpack.c.b16 %v529, %v528
        %v550 = vpack.c.b16 %v531, %v530
        %v551 = vpack.c.b16 %v533, %v532
        %v552 = vpack.c.b16 %v535, %v534
        %v553 = vpack.c.b16 %v537, %v536
        %v554 = vpack.c.b16 %v539, %v538
        %v555 = vpack.c.b16 %v541, %v540
        %v556 = vpack.c.b16 %v543, %v542
        %v557 = vpack.c.b16 %v544, %v544
        %v562 = vunpack.c.l.b16 %v462
        %v563 = vunpack.c.l.b16 %v463
        %v564 = vunpack.c.l.b16 %v464
        %v565 = vunpack.c.l.b16 %v465
        %v566 = vpack.c.b16 %v563, %v562
        %v567 = vpack.c.b16 %v565, %v564
        %vm570 = vcmask 261120
        %v572 = vsel %vm570, %v545, 0
        %v575 = vsel %vm570, %v546, 0
        %v578 = vsel %vm570, %v547, 0
        %v581 = vsel %vm570, %v548, 0
        %v584 = vsel %vm570, %v549, 0
        %v587 = vsel %vm570, %v550, 0
        %v590 = vsel %vm570, %v551, 0
        %v593 = vsel %vm570, %v552, 0
        %v596 = vsel %vm570, %v553, 0
        %v599 = vsel %vm570, %v554, 0
        %v602 = vsel %vm570, %v555, 0
        %v605 = vsel %vm570, %v556, 0
        %v608 = vsel %vm570, %v557, 0
        %610 = vmatpush.bf16.msra.mxu0 0
        %611 = vmatpush.bf16.msra.mxu0 0
        %612 = vmatpush.bf16.msra.mxu0 0
        %613 = vmatpush.bf16.msra.mxu0 0
        %614 = vmatpush.bf16.msra.mxu0 0
        %615 = vmatpush.bf16.msra.mxu0 0
        %616 = vmatpush.bf16.msra.mxu0 %v567
        %617 = vmatpush.bf16.msra.mxu0 %v566
        %618 = vmatmul.bf16.gmra.mxu0 %v572
        %v619 = vpop.f32.mrf.mxu0
        %v620 = vadd.f32 %v493, %v619
        %v621 = vpop.f32.mrf.mxu0
        %v622 = vadd.f32 %v493, %v621
        %623 = vmatmul.bf16.gmra.mxu0 %v575
        %v624 = vpop.f32.mrf.mxu0
        %v625 = vadd.f32 %v493, %v624
        %v626 = vpop.f32.mrf.mxu0
        %v627 = vadd.f32 %v493, %v626
        %628 = vmatmul.bf16.gmra.mxu0 %v578
        %v629 = vpop.f32.mrf.mxu0
        %v630 = vadd.f32 %v493, %v629
        %v631 = vpop.f32.mrf.mxu0
        %v632 = vadd.f32 %v493, %v631
        %633 = vmatmul.bf16.gmra.mxu0 %v581
        %v634 = vpop.f32.mrf.mxu0
        %v635 = vadd.f32 %v493, %v634
        %v636 = vpop.f32.mrf.mxu0
        %v637 = vadd.f32 %v493, %v636
        %638 = vmatmul.bf16.gmra.mxu0 %v584
        %v639 = vpop.f32.mrf.mxu0
        %v640 = vadd.f32 %v493, %v639
        %v641 = vpop.f32.mrf.mxu0
        %v642 = vadd.f32 %v493, %v641
        %643 = vmatmul.bf16.gmra.mxu0 %v587
        %v644 = vpop.f32.mrf.mxu0
        %v645 = vadd.f32 %v493, %v644
        %v646 = vpop.f32.mrf.mxu0
        %v647 = vadd.f32 %v493, %v646
        %648 = vmatmul.bf16.gmra.mxu0 %v590
        %v649 = vpop.f32.mrf.mxu0
        %v650 = vadd.f32 %v493, %v649
        %v651 = vpop.f32.mrf.mxu0
        %v652 = vadd.f32 %v493, %v651
        %653 = vmatmul.bf16.gmra.mxu0 %v593
        %v654 = vpop.f32.mrf.mxu0
        %v655 = vadd.f32 %v493, %v654
        %v656 = vpop.f32.mrf.mxu0
        %v657 = vadd.f32 %v493, %v656
        %658 = vmatmul.bf16.gmra.mxu0 %v596
        %v659 = vpop.f32.mrf.mxu0
        %v660 = vadd.f32 %v493, %v659
        %v661 = vpop.f32.mrf.mxu0
        %v662 = vadd.f32 %v493, %v661
        %663 = vmatmul.bf16.gmra.mxu0 %v599
        %v664 = vpop.f32.mrf.mxu0
        %v665 = vadd.f32 %v493, %v664
        %v666 = vpop.f32.mrf.mxu0
        %v667 = vadd.f32 %v493, %v666
        %668 = vmatmul.bf16.gmra.mxu0 %v602
        %v669 = vpop.f32.mrf.mxu0
        %v670 = vadd.f32 %v493, %v669
        %v671 = vpop.f32.mrf.mxu0
        %v672 = vadd.f32 %v493, %v671
        %673 = vmatmul.bf16.gmra.mxu0 %v605
        %v674 = vpop.f32.mrf.mxu0
        %v675 = vadd.f32 %v493, %v674
        %v676 = vpop.f32.mrf.mxu0
        %v677 = vadd.f32 %v493, %v676
        %678 = vmatmul.bf16.gmra.mxu0 %v608
        %v679 = vpop.f32.mrf.mxu0
        %v680 = vadd.f32 %v493, %v679
        %v681 = vpop.f32.mrf.mxu0
        %682 = vdwg.mxu0
        %v683 = vmax.f32 %v620, 0.0
        %v684 = vmax.f32 %v622, 0.0
        %v685 = vmax.f32 %v625, 0.0
        %v686 = vmax.f32 %v627, 0.0
        %v687 = vmax.f32 %v630, 0.0
        %v688 = vmax.f32 %v632, 0.0
        %v689 = vmax.f32 %v635, 0.0
        %v690 = vmax.f32 %v637, 0.0
        %v691 = vmax.f32 %v640, 0.0
        %v692 = vmax.f32 %v642, 0.0
        %v693 = vmax.f32 %v645, 0.0
        %v694 = vmax.f32 %v647, 0.0
        %v695 = vmax.f32 %v650, 0.0
        %v696 = vmax.f32 %v652, 0.0
        %v697 = vmax.f32 %v655, 0.0
        %v698 = vmax.f32 %v657, 0.0
        %v699 = vmax.f32 %v660, 0.0
        %v700 = vmax.f32 %v662, 0.0
        %v701 = vmax.f32 %v665, 0.0
        %v702 = vmax.f32 %v667, 0.0
        %v703 = vmax.f32 %v670, 0.0
        %v704 = vmax.f32 %v672, 0.0
        %v705 = vmax.f32 %v675, 0.0
        %v706 = vmax.f32 %v677, 0.0
        %v707 = vmax.f32 %v680, 0.0
        %s708 = scalar_lea.vmem %s431, 100 [#allocation2]
        %v709 = vld [vmem:[%s708] sm:$0xf]
        %v710 = vld [vmem:[%s708 + $0x4] sm:$0xf]
        %v711 = vld [vmem:[%s708 + $0x8] sm:$0xf]
        %v712 = vld [vmem:[%s708 + $0xc] sm:$0xf]
        %v713 = vld [vmem:[%s708 + $0x10] sm:$0xf]
        %v714 = vld [vmem:[%s708 + $0x14] sm:$0xf]
        %v715 = vld [vmem:[%s708 + $0x18] sm:$0xf]
        %v716 = vld [vmem:[%s708 + $0x1c] sm:$0xf]
        %v717 = vld [vmem:[%s708 + $0x20] sm:$0xf]
        %v718 = vld [vmem:[%s708 + $0x24] sm:$0xf]
        %v719 = vld [vmem:[%s708 + $0x28] sm:$0xf]
        %v720 = vld [vmem:[%s708 + $0x2c] sm:$0xf]
        %v721 = vld [vmem:[%s708 + $0x30] sm:$0xf]
        %v722 = vld [vmem:[%s708 + $0x34] sm:$0xf]
        %v723 = vld [vmem:[%s708 + $0x38] sm:$0xf]
        %v724 = vld [vmem:[%s708 + $0x3c] sm:$0xf]
        %v725 = vld [vmem:[%s708 + $0x40] sm:$0xf]
        %v726 = vld [vmem:[%s708 + $0x44] sm:$0xf]
        %v727 = vld [vmem:[%s708 + $0x48] sm:$0xf]
        %v728 = vld [vmem:[%s708 + $0x4c] sm:$0xf]
        %v729 = vld [vmem:[%s708 + $0x50] sm:$0xf]
        %v730 = vld [vmem:[%s708 + $0x54] sm:$0xf]
        %v731 = vld [vmem:[%s708 + $0x58] sm:$0xf]
        %v732 = vld [vmem:[%s708 + $0x5c] sm:$0xf]
        %v733 = vld [vmem:[%s708 + $0x60] sm:$0xf]
        %v759 = vunpack.c.l.b16 %v709
        %v760 = vunpack.c.l.b16 %v710
        %v761 = vunpack.c.l.b16 %v711
        %v762 = vunpack.c.l.b16 %v712
        %v763 = vunpack.c.l.b16 %v713
        %v764 = vunpack.c.l.b16 %v714
        %v765 = vunpack.c.l.b16 %v715
        %v766 = vunpack.c.l.b16 %v716
        %v767 = vunpack.c.l.b16 %v717
        %v768 = vunpack.c.l.b16 %v718
        %v769 = vunpack.c.l.b16 %v719
        %v770 = vunpack.c.l.b16 %v720
        %v771 = vunpack.c.l.b16 %v721
        %v772 = vunpack.c.l.b16 %v722
        %v773 = vunpack.c.l.b16 %v723
        %v774 = vunpack.c.l.b16 %v724
        %v775 = vunpack.c.l.b16 %v725
        %v776 = vunpack.c.l.b16 %v726
        %v777 = vunpack.c.l.b16 %v727
        %v778 = vunpack.c.l.b16 %v728
        %v779 = vunpack.c.l.b16 %v729
        %v780 = vunpack.c.l.b16 %v730
        %v781 = vunpack.c.l.b16 %v731
        %v782 = vunpack.c.l.b16 %v732
        %v783 = vunpack.c.l.b16 %v733
        %v784 = vpack.c.b16 %v760, %v759
        %v785 = vpack.c.b16 %v762, %v761
        %v786 = vpack.c.b16 %v764, %v763
        %v787 = vpack.c.b16 %v766, %v765
        %v788 = vpack.c.b16 %v768, %v767
        %v789 = vpack.c.b16 %v770, %v769
        %v790 = vpack.c.b16 %v772, %v771
        %v791 = vpack.c.b16 %v774, %v773
        %v792 = vpack.c.b16 %v776, %v775
        %v793 = vpack.c.b16 %v778, %v777
        %v794 = vpack.c.b16 %v780, %v779
        %v795 = vpack.c.b16 %v782, %v781
        %v796 = vpack.c.b16 %v783, %v783
        %v798 = vsel %vm570, %v784, 0
        %v801 = vsel %vm570, %v785, 0
        %v804 = vsel %vm570, %v786, 0
        %v807 = vsel %vm570, %v787, 0
        %v810 = vsel %vm570, %v788, 0
        %v813 = vsel %vm570, %v789, 0
        %v816 = vsel %vm570, %v790, 0
        %v819 = vsel %vm570, %v791, 0
        %v822 = vsel %vm570, %v792, 0
        %v825 = vsel %vm570, %v793, 0
        %v828 = vsel %vm570, %v794, 0
        %v831 = vsel %vm570, %v795, 0
        %v834 = vsel %vm570, %v796, 0
        %836 = vmatpush.bf16.msra.mxu0 0
        %837 = vmatpush.bf16.msra.mxu0 0
        %838 = vmatpush.bf16.msra.mxu0 0
        %839 = vmatpush.bf16.msra.mxu0 0
        %840 = vmatpush.bf16.msra.mxu0 0
        %841 = vmatpush.bf16.msra.mxu0 0
        %842 = vmatpush.bf16.msra.mxu0 %v567
        %843 = vmatpush.bf16.msra.mxu0 %v566
        %844 = vmatmul.bf16.gmra.mxu0 %v798
        %v845 = vpop.f32.mrf.mxu0
        %v846 = vadd.f32 %v493, %v845
        %v847 = vpop.f32.mrf.mxu0
        %v848 = vadd.f32 %v493, %v847
        %849 = vmatmul.bf16.gmra.mxu0 %v801
        %v850 = vpop.f32.mrf.mxu0
        %v851 = vadd.f32 %v493, %v850
        %v852 = vpop.f32.mrf.mxu0
        %v853 = vadd.f32 %v493, %v852
        %854 = vmatmul.bf16.gmra.mxu0 %v804
        %v855 = vpop.f32.mrf.mxu0
        %v856 = vadd.f32 %v493, %v855
        %v857 = vpop.f32.mrf.mxu0
        %v858 = vadd.f32 %v493, %v857
        %859 = vmatmul.bf16.gmra.mxu0 %v807
        %v860 = vpop.f32.mrf.mxu0
        %v861 = vadd.f32 %v493, %v860
        %v862 = vpop.f32.mrf.mxu0
        %v863 = vadd.f32 %v493, %v862
        %864 = vmatmul.bf16.gmra.mxu0 %v810
        %v865 = vpop.f32.mrf.mxu0
        %v866 = vadd.f32 %v493, %v865
        %v867 = vpop.f32.mrf.mxu0
        %v868 = vadd.f32 %v493, %v867
        %869 = vmatmul.bf16.gmra.mxu0 %v813
        %v870 = vpop.f32.mrf.mxu0
        %v871 = vadd.f32 %v493, %v870
        %v872 = vpop.f32.mrf.mxu0
        %v873 = vadd.f32 %v493, %v872
        %874 = vmatmul.bf16.gmra.mxu0 %v816
        %v875 = vpop.f32.mrf.mxu0
        %v876 = vadd.f32 %v493, %v875
        %v877 = vpop.f32.mrf.mxu0
        %v878 = vadd.f32 %v493, %v877
        %879 = vmatmul.bf16.gmra.mxu0 %v819
        %v880 = vpop.f32.mrf.mxu0
        %v881 = vadd.f32 %v493, %v880
        %v882 = vpop.f32.mrf.mxu0
        %v883 = vadd.f32 %v493, %v882
        %884 = vmatmul.bf16.gmra.mxu0 %v822
        %v885 = vpop.f32.mrf.mxu0
        %v886 = vadd.f32 %v493, %v885
        %v887 = vpop.f32.mrf.mxu0
        %v888 = vadd.f32 %v493, %v887
        %889 = vmatmul.bf16.gmra.mxu0 %v825
        %v890 = vpop.f32.mrf.mxu0
        %v891 = vadd.f32 %v493, %v890
        %v892 = vpop.f32.mrf.mxu0
        %v893 = vadd.f32 %v493, %v892
        %894 = vmatmul.bf16.gmra.mxu0 %v828
        %v895 = vpop.f32.mrf.mxu0
        %v896 = vadd.f32 %v493, %v895
        %v897 = vpop.f32.mrf.mxu0
        %v898 = vadd.f32 %v493, %v897
        %899 = vmatmul.bf16.gmra.mxu0 %v831
        %v900 = vpop.f32.mrf.mxu0
        %v901 = vadd.f32 %v493, %v900
        %v902 = vpop.f32.mrf.mxu0
        %v903 = vadd.f32 %v493, %v902
        %904 = vmatmul.bf16.gmra.mxu0 %v834
        %v905 = vpop.f32.mrf.mxu0
        %v906 = vadd.f32 %v493, %v905
        %v907 = vpop.f32.mrf.mxu0
        %908 = vdwg.mxu0
        %v909 = vmax.f32 %v846, 0.0
        %v910 = vmax.f32 %v848, 0.0
        %v911 = vmax.f32 %v851, 0.0
        %v912 = vmax.f32 %v853, 0.0
        %v913 = vmax.f32 %v856, 0.0
        %v914 = vmax.f32 %v858, 0.0
        %v915 = vmax.f32 %v861, 0.0
        %v916 = vmax.f32 %v863, 0.0
        %v917 = vmax.f32 %v866, 0.0
        %v918 = vmax.f32 %v868, 0.0
        %v919 = vmax.f32 %v871, 0.0
        %v920 = vmax.f32 %v873, 0.0
        %v921 = vmax.f32 %v876, 0.0
        %v922 = vmax.f32 %v878, 0.0
        %v923 = vmax.f32 %v881, 0.0
        %v924 = vmax.f32 %v883, 0.0
        %v925 = vmax.f32 %v886, 0.0
        %v926 = vmax.f32 %v888, 0.0
        %v927 = vmax.f32 %v891, 0.0
        %v928 = vmax.f32 %v893, 0.0
        %v929 = vmax.f32 %v896, 0.0
        %v930 = vmax.f32 %v898, 0.0
        %v931 = vmax.f32 %v901, 0.0
        %v932 = vmax.f32 %v903, 0.0
        %v933 = vmax.f32 %v906, 0.0
        %v934 = vmax.f32 %v683, %v909
        %v935 = vmax.f32 %v684, %v910
        %v936 = vmax.f32 %v685, %v911
        %v937 = vmax.f32 %v686, %v912
        %v938 = vmax.f32 %v687, %v913
        %v939 = vmax.f32 %v688, %v914
        %v940 = vmax.f32 %v689, %v915
        %v941 = vmax.f32 %v690, %v916
        %v942 = vmax.f32 %v691, %v917
        %v943 = vmax.f32 %v692, %v918
        %v944 = vmax.f32 %v693, %v919
        %v945 = vmax.f32 %v694, %v920
        %v946 = vmax.f32 %v695, %v921
        %v947 = vmax.f32 %v696, %v922
        %v948 = vmax.f32 %v697, %v923
        %v949 = vmax.f32 %v698, %v924
        %v950 = vmax.f32 %v699, %v925
        %v951 = vmax.f32 %v700, %v926
        %v952 = vmax.f32 %v701, %v927
        %v953 = vmax.f32 %v702, %v928
        %v954 = vmax.f32 %v703, %v929
        %v955 = vmax.f32 %v704, %v930
        %v956 = vmax.f32 %v705, %v931
        %v957 = vmax.f32 %v706, %v932
        %v958 = vmax.f32 %v707, %v933
        %s959 = scalar_lea.vmem %s431, 200 [#allocation2]
        %v960 = vld [vmem:[%s959] sm:$0xf]
        %v961 = vld [vmem:[%s959 + $0x4] sm:$0xf]
        %v962 = vld [vmem:[%s959 + $0x8] sm:$0xf]
        %v963 = vld [vmem:[%s959 + $0xc] sm:$0xf]
        %v964 = vld [vmem:[%s959 + $0x10] sm:$0xf]
        %v965 = vld [vmem:[%s959 + $0x14] sm:$0xf]
        %v966 = vld [vmem:[%s959 + $0x18] sm:$0xf]
        %v967 = vld [vmem:[%s959 + $0x1c] sm:$0xf]
        %v968 = vld [vmem:[%s959 + $0x20] sm:$0xf]
        %v969 = vld [vmem:[%s959 + $0x24] sm:$0xf]
        %v970 = vld [vmem:[%s959 + $0x28] sm:$0xf]
        %v971 = vld [vmem:[%s959 + $0x2c] sm:$0xf]
        %v972 = vld [vmem:[%s959 + $0x30] sm:$0xf]
        %v973 = vld [vmem:[%s959 + $0x34] sm:$0xf]
        %v974 = vld [vmem:[%s959 + $0x38] sm:$0xf]
        %v975 = vld [vmem:[%s959 + $0x3c] sm:$0xf]
        %v976 = vld [vmem:[%s959 + $0x40] sm:$0xf]
        %v977 = vld [vmem:[%s959 + $0x44] sm:$0xf]
        %v978 = vld [vmem:[%s959 + $0x48] sm:$0xf]
        %v979 = vld [vmem:[%s959 + $0x4c] sm:$0xf]
        %v980 = vld [vmem:[%s959 + $0x50] sm:$0xf]
        %v981 = vld [vmem:[%s959 + $0x54] sm:$0xf]
        %v982 = vld [vmem:[%s959 + $0x58] sm:$0xf]
        %v983 = vld [vmem:[%s959 + $0x5c] sm:$0xf]
        %v984 = vld [vmem:[%s959 + $0x60] sm:$0xf]
        %v1010 = vunpack.c.l.b16 %v960
        %v1011 = vunpack.c.l.b16 %v961
        %v1012 = vunpack.c.l.b16 %v962
        %v1013 = vunpack.c.l.b16 %v963
        %v1014 = vunpack.c.l.b16 %v964
        %v1015 = vunpack.c.l.b16 %v965
        %v1016 = vunpack.c.l.b16 %v966
        %v1017 = vunpack.c.l.b16 %v967
        %v1018 = vunpack.c.l.b16 %v968
        %v1019 = vunpack.c.l.b16 %v969
        %v1020 = vunpack.c.l.b16 %v970
        %v1021 = vunpack.c.l.b16 %v971
        %v1022 = vunpack.c.l.b16 %v972
        %v1023 = vunpack.c.l.b16 %v973
        %v1024 = vunpack.c.l.b16 %v974
        %v1025 = vunpack.c.l.b16 %v975
        %v1026 = vunpack.c.l.b16 %v976
        %v1027 = vunpack.c.l.b16 %v977
        %v1028 = vunpack.c.l.b16 %v978
        %v1029 = vunpack.c.l.b16 %v979
        %v1030 = vunpack.c.l.b16 %v980
        %v1031 = vunpack.c.l.b16 %v981
        %v1032 = vunpack.c.l.b16 %v982
        %v1033 = vunpack.c.l.b16 %v983
        %v1034 = vunpack.c.l.b16 %v984
        %v1035 = vpack.c.b16 %v1011, %v1010
        %v1036 = vpack.c.b16 %v1013, %v1012
        %v1037 = vpack.c.b16 %v1015, %v1014
        %v1038 = vpack.c.b16 %v1017, %v1016
        %v1039 = vpack.c.b16 %v1019, %v1018
        %v1040 = vpack.c.b16 %v1021, %v1020
        %v1041 = vpack.c.b16 %v1023, %v1022
        %v1042 = vpack.c.b16 %v1025, %v1024
        %v1043 = vpack.c.b16 %v1027, %v1026
        %v1044 = vpack.c.b16 %v1029, %v1028
        %v1045 = vpack.c.b16 %v1031, %v1030
        %v1046 = vpack.c.b16 %v1033, %v1032
        %v1047 = vpack.c.b16 %v1034, %v1034
        %v1049 = vsel %vm570, %v1035, 0
        %v1052 = vsel %vm570, %v1036, 0
        %v1055 = vsel %vm570, %v1037, 0
        %v1058 = vsel %vm570, %v1038, 0
        %v1061 = vsel %vm570, %v1039, 0
        %v1064 = vsel %vm570, %v1040, 0
        %v1067 = vsel %vm570, %v1041, 0
        %v1070 = vsel %vm570, %v1042, 0
        %v1073 = vsel %vm570, %v1043, 0
        %v1076 = vsel %vm570, %v1044, 0
        %v1079 = vsel %vm570, %v1045, 0
        %v1082 = vsel %vm570, %v1046, 0
        %v1085 = vsel %vm570, %v1047, 0
        %1087 = vmatpush.bf16.msra.mxu0 0
        %1088 = vmatpush.bf16.msra.mxu0 0
        %1089 = vmatpush.bf16.msra.mxu0 0
        %1090 = vmatpush.bf16.msra.mxu0 0
        %1091 = vmatpush.bf16.msra.mxu0 0
        %1092 = vmatpush.bf16.msra.mxu0 0
        %1093 = vmatpush.bf16.msra.mxu0 %v567
        %1094 = vmatpush.bf16.msra.mxu0 %v566
        %1095 = vmatmul.bf16.gmra.mxu0 %v1049
        %v1096 = vpop.f32.mrf.mxu0
        %v1097 = vadd.f32 %v493, %v1096
        %v1098 = vpop.f32.mrf.mxu0
        %v1099 = vadd.f32 %v493, %v1098
        %1100 = vmatmul.bf16.gmra.mxu0 %v1052
        %v1101 = vpop.f32.mrf.mxu0
        %v1102 = vadd.f32 %v493, %v1101
        %v1103 = vpop.f32.mrf.mxu0
        %v1104 = vadd.f32 %v493, %v1103
        %1105 = vmatmul.bf16.gmra.mxu0 %v1055
        %v1106 = vpop.f32.mrf.mxu0
        %v1107 = vadd.f32 %v493, %v1106
        %v1108 = vpop.f32.mrf.mxu0
        %v1109 = vadd.f32 %v493, %v1108
        %1110 = vmatmul.bf16.gmra.mxu0 %v1058
        %v1111 = vpop.f32.mrf.mxu0
        %v1112 = vadd.f32 %v493, %v1111
        %v1113 = vpop.f32.mrf.mxu0
        %v1114 = vadd.f32 %v493, %v1113
        %1115 = vmatmul.bf16.gmra.mxu0 %v1061
        %v1116 = vpop.f32.mrf.mxu0
        %v1117 = vadd.f32 %v493, %v1116
        %v1118 = vpop.f32.mrf.mxu0
        %v1119 = vadd.f32 %v493, %v1118
        %1120 = vmatmul.bf16.gmra.mxu0 %v1064
        %v1121 = vpop.f32.mrf.mxu0
        %v1122 = vadd.f32 %v493, %v1121
        %v1123 = vpop.f32.mrf.mxu0
        %v1124 = vadd.f32 %v493, %v1123
        %1125 = vmatmul.bf16.gmra.mxu0 %v1067
        %v1126 = vpop.f32.mrf.mxu0
        %v1127 = vadd.f32 %v493, %v1126
        %v1128 = vpop.f32.mrf.mxu0
        %v1129 = vadd.f32 %v493, %v1128
        %1130 = vmatmul.bf16.gmra.mxu0 %v1070
        %v1131 = vpop.f32.mrf.mxu0
        %v1132 = vadd.f32 %v493, %v1131
        %v1133 = vpop.f32.mrf.mxu0
        %v1134 = vadd.f32 %v493, %v1133
        %1135 = vmatmul.bf16.gmra.mxu0 %v1073
        %v1136 = vpop.f32.mrf.mxu0
        %v1137 = vadd.f32 %v493, %v1136
        %v1138 = vpop.f32.mrf.mxu0
        %v1139 = vadd.f32 %v493, %v1138
        %1140 = vmatmul.bf16.gmra.mxu0 %v1076
        %v1141 = vpop.f32.mrf.mxu0
        %v1142 = vadd.f32 %v493, %v1141
        %v1143 = vpop.f32.mrf.mxu0
        %v1144 = vadd.f32 %v493, %v1143
        %1145 = vmatmul.bf16.gmra.mxu0 %v1079
        %v1146 = vpop.f32.mrf.mxu0
        %v1147 = vadd.f32 %v493, %v1146
        %v1148 = vpop.f32.mrf.mxu0
        %v1149 = vadd.f32 %v493, %v1148
        %1150 = vmatmul.bf16.gmra.mxu0 %v1082
        %v1151 = vpop.f32.mrf.mxu0
        %v1152 = vadd.f32 %v493, %v1151
        %v1153 = vpop.f32.mrf.mxu0
        %v1154 = vadd.f32 %v493, %v1153
        %1155 = vmatmul.bf16.gmra.mxu0 %v1085
        %v1156 = vpop.f32.mrf.mxu0
        %v1157 = vadd.f32 %v493, %v1156
        %v1158 = vpop.f32.mrf.mxu0
        %1159 = vdwg.mxu0
        %v1160 = vmax.f32 %v1097, 0.0
        %v1161 = vmax.f32 %v1099, 0.0
        %v1162 = vmax.f32 %v1102, 0.0
        %v1163 = vmax.f32 %v1104, 0.0
        %v1164 = vmax.f32 %v1107, 0.0
        %v1165 = vmax.f32 %v1109, 0.0
        %v1166 = vmax.f32 %v1112, 0.0
        %v1167 = vmax.f32 %v1114, 0.0
        %v1168 = vmax.f32 %v1117, 0.0
        %v1169 = vmax.f32 %v1119, 0.0
        %v1170 = vmax.f32 %v1122, 0.0
        %v1171 = vmax.f32 %v1124, 0.0
        %v1172 = vmax.f32 %v1127, 0.0
        %v1173 = vmax.f32 %v1129, 0.0
        %v1174 = vmax.f32 %v1132, 0.0
        %v1175 = vmax.f32 %v1134, 0.0
        %v1176 = vmax.f32 %v1137, 0.0
        %v1177 = vmax.f32 %v1139, 0.0
        %v1178 = vmax.f32 %v1142, 0.0
        %v1179 = vmax.f32 %v1144, 0.0
        %v1180 = vmax.f32 %v1147, 0.0
        %v1181 = vmax.f32 %v1149, 0.0
        %v1182 = vmax.f32 %v1152, 0.0
        %v1183 = vmax.f32 %v1154, 0.0
        %v1184 = vmax.f32 %v1157, 0.0
        %v1185 = vmax.f32 %v934, %v1160
        %v1186 = vmax.f32 %v935, %v1161
        %v1187 = vmax.f32 %v936, %v1162
        %v1188 = vmax.f32 %v937, %v1163
        %v1189 = vmax.f32 %v938, %v1164
        %v1190 = vmax.f32 %v939, %v1165
        %v1191 = vmax.f32 %v940, %v1166
        %v1192 = vmax.f32 %v941, %v1167
        %v1193 = vmax.f32 %v942, %v1168
        %v1194 = vmax.f32 %v943, %v1169
        %v1195 = vmax.f32 %v944, %v1170
        %v1196 = vmax.f32 %v945, %v1171
        %v1197 = vmax.f32 %v946, %v1172
        %v1198 = vmax.f32 %v947, %v1173
        %v1199 = vmax.f32 %v948, %v1174
        %v1200 = vmax.f32 %v949, %v1175
        %v1201 = vmax.f32 %v950, %v1176
        %v1202 = vmax.f32 %v951, %v1177
        %v1203 = vmax.f32 %v952, %v1178
        %v1204 = vmax.f32 %v953, %v1179
        %v1205 = vmax.f32 %v954, %v1180
        %v1206 = vmax.f32 %v955, %v1181
        %v1207 = vmax.f32 %v956, %v1182
        %v1208 = vmax.f32 %v957, %v1183
        %v1209 = vmax.f32 %v958, %v1184
        %s1210 = scalar_lea.vmem %s431, 300 [#allocation2]
        %v1211 = vld [vmem:[%s1210] sm:$0xf]
        %v1212 = vld [vmem:[%s1210 + $0x4] sm:$0xf]
        %v1213 = vld [vmem:[%s1210 + $0x8] sm:$0xf]
        %v1214 = vld [vmem:[%s1210 + $0xc] sm:$0xf]
        %v1215 = vld [vmem:[%s1210 + $0x10] sm:$0xf]
        %v1216 = vld [vmem:[%s1210 + $0x14] sm:$0xf]
        %v1217 = vld [vmem:[%s1210 + $0x18] sm:$0xf]
        %v1218 = vld [vmem:[%s1210 + $0x1c] sm:$0xf]
        %v1219 = vld [vmem:[%s1210 + $0x20] sm:$0xf]
        %v1220 = vld [vmem:[%s1210 + $0x24] sm:$0xf]
        %v1221 = vld [vmem:[%s1210 + $0x28] sm:$0xf]
        %v1222 = vld [vmem:[%s1210 + $0x2c] sm:$0xf]
        %v1223 = vld [vmem:[%s1210 + $0x30] sm:$0xf]
        %v1224 = vld [vmem:[%s1210 + $0x34] sm:$0xf]
        %v1225 = vld [vmem:[%s1210 + $0x38] sm:$0xf]
        %v1226 = vld [vmem:[%s1210 + $0x3c] sm:$0xf]
        %v1227 = vld [vmem:[%s1210 + $0x40] sm:$0xf]
        %v1228 = vld [vmem:[%s1210 + $0x44] sm:$0xf]
        %v1229 = vld [vmem:[%s1210 + $0x48] sm:$0xf]
        %v1230 = vld [vmem:[%s1210 + $0x4c] sm:$0xf]
        %v1231 = vld [vmem:[%s1210 + $0x50] sm:$0xf]
        %v1232 = vld [vmem:[%s1210 + $0x54] sm:$0xf]
        %v1233 = vld [vmem:[%s1210 + $0x58] sm:$0xf]
        %v1234 = vld [vmem:[%s1210 + $0x5c] sm:$0xf]
        %v1235 = vld [vmem:[%s1210 + $0x60] sm:$0xf]
        %v1261 = vunpack.c.l.b16 %v1211
        %v1262 = vunpack.c.l.b16 %v1212
        %v1263 = vunpack.c.l.b16 %v1213
        %v1264 = vunpack.c.l.b16 %v1214
        %v1265 = vunpack.c.l.b16 %v1215
        %v1266 = vunpack.c.l.b16 %v1216
        %v1267 = vunpack.c.l.b16 %v1217
        %v1268 = vunpack.c.l.b16 %v1218
        %v1269 = vunpack.c.l.b16 %v1219
        %v1270 = vunpack.c.l.b16 %v1220
        %v1271 = vunpack.c.l.b16 %v1221
        %v1272 = vunpack.c.l.b16 %v1222
        %v1273 = vunpack.c.l.b16 %v1223
        %v1274 = vunpack.c.l.b16 %v1224
        %v1275 = vunpack.c.l.b16 %v1225
        %v1276 = vunpack.c.l.b16 %v1226
        %v1277 = vunpack.c.l.b16 %v1227
        %v1278 = vunpack.c.l.b16 %v1228
        %v1279 = vunpack.c.l.b16 %v1229
        %v1280 = vunpack.c.l.b16 %v1230
        %v1281 = vunpack.c.l.b16 %v1231
        %v1282 = vunpack.c.l.b16 %v1232
        %v1283 = vunpack.c.l.b16 %v1233
        %v1284 = vunpack.c.l.b16 %v1234
        %v1285 = vunpack.c.l.b16 %v1235
        %v1286 = vpack.c.b16 %v1262, %v1261
        %v1287 = vpack.c.b16 %v1264, %v1263
        %v1288 = vpack.c.b16 %v1266, %v1265
        %v1289 = vpack.c.b16 %v1268, %v1267
        %v1290 = vpack.c.b16 %v1270, %v1269
        %v1291 = vpack.c.b16 %v1272, %v1271
        %v1292 = vpack.c.b16 %v1274, %v1273
        %v1293 = vpack.c.b16 %v1276, %v1275
        %v1294 = vpack.c.b16 %v1278, %v1277
        %v1295 = vpack.c.b16 %v1280, %v1279
        %v1296 = vpack.c.b16 %v1282, %v1281
        %v1297 = vpack.c.b16 %v1284, %v1283
        %v1298 = vpack.c.b16 %v1285, %v1285
        %v1300 = vsel %vm570, %v1286, 0
        %v1303 = vsel %vm570, %v1287, 0
        %v1306 = vsel %vm570, %v1288, 0
        %v1309 = vsel %vm570, %v1289, 0
        %v1312 = vsel %vm570, %v1290, 0
        %v1315 = vsel %vm570, %v1291, 0
        %v1318 = vsel %vm570, %v1292, 0
        %v1321 = vsel %vm570, %v1293, 0
        %v1324 = vsel %vm570, %v1294, 0
        %v1327 = vsel %vm570, %v1295, 0
        %v1330 = vsel %vm570, %v1296, 0
        %v1333 = vsel %vm570, %v1297, 0
        %v1336 = vsel %vm570, %v1298, 0
        %1338 = vmatpush.bf16.msra.mxu0 0
        %1339 = vmatpush.bf16.msra.mxu0 0
        %1340 = vmatpush.bf16.msra.mxu0 0
        %1341 = vmatpush.bf16.msra.mxu0 0
        %1342 = vmatpush.bf16.msra.mxu0 0
        %1343 = vmatpush.bf16.msra.mxu0 0
        %1344 = vmatpush.bf16.msra.mxu0 %v567
        %1345 = vmatpush.bf16.msra.mxu0 %v566
        %1346 = vmatmul.bf16.gmra.mxu0 %v1300
        %v1347 = vpop.f32.mrf.mxu0
        %v1348 = vadd.f32 %v493, %v1347
        %v1349 = vpop.f32.mrf.mxu0
        %v1350 = vadd.f32 %v493, %v1349
        %1351 = vmatmul.bf16.gmra.mxu0 %v1303
        %v1352 = vpop.f32.mrf.mxu0
        %v1353 = vadd.f32 %v493, %v1352
        %v1354 = vpop.f32.mrf.mxu0
        %v1355 = vadd.f32 %v493, %v1354
        %1356 = vmatmul.bf16.gmra.mxu0 %v1306
        %v1357 = vpop.f32.mrf.mxu0
        %v1358 = vadd.f32 %v493, %v1357
        %v1359 = vpop.f32.mrf.mxu0
        %v1360 = vadd.f32 %v493, %v1359
        %1361 = vmatmul.bf16.gmra.mxu0 %v1309
        %v1362 = vpop.f32.mrf.mxu0
        %v1363 = vadd.f32 %v493, %v1362
        %v1364 = vpop.f32.mrf.mxu0
        %v1365 = vadd.f32 %v493, %v1364
        %1366 = vmatmul.bf16.gmra.mxu0 %v1312
        %v1367 = vpop.f32.mrf.mxu0
        %v1368 = vadd.f32 %v493, %v1367
        %v1369 = vpop.f32.mrf.mxu0
        %v1370 = vadd.f32 %v493, %v1369
        %1371 = vmatmul.bf16.gmra.mxu0 %v1315
        %v1372 = vpop.f32.mrf.mxu0
        %v1373 = vadd.f32 %v493, %v1372
        %v1374 = vpop.f32.mrf.mxu0
        %v1375 = vadd.f32 %v493, %v1374
        %1376 = vmatmul.bf16.gmra.mxu0 %v1318
        %v1377 = vpop.f32.mrf.mxu0
        %v1378 = vadd.f32 %v493, %v1377
        %v1379 = vpop.f32.mrf.mxu0
        %v1380 = vadd.f32 %v493, %v1379
        %1381 = vmatmul.bf16.gmra.mxu0 %v1321
        %v1382 = vpop.f32.mrf.mxu0
        %v1383 = vadd.f32 %v493, %v1382
        %v1384 = vpop.f32.mrf.mxu0
        %v1385 = vadd.f32 %v493, %v1384
        %1386 = vmatmul.bf16.gmra.mxu0 %v1324
        %v1387 = vpop.f32.mrf.mxu0
        %v1388 = vadd.f32 %v493, %v1387
        %v1389 = vpop.f32.mrf.mxu0
        %v1390 = vadd.f32 %v493, %v1389
        %1391 = vmatmul.bf16.gmra.mxu0 %v1327
        %v1392 = vpop.f32.mrf.mxu0
        %v1393 = vadd.f32 %v493, %v1392
        %v1394 = vpop.f32.mrf.mxu0
        %v1395 = vadd.f32 %v493, %v1394
        %1396 = vmatmul.bf16.gmra.mxu0 %v1330
        %v1397 = vpop.f32.mrf.mxu0
        %v1398 = vadd.f32 %v493, %v1397
        %v1399 = vpop.f32.mrf.mxu0
        %v1400 = vadd.f32 %v493, %v1399
        %1401 = vmatmul.bf16.gmra.mxu0 %v1333
        %v1402 = vpop.f32.mrf.mxu0
        %v1403 = vadd.f32 %v493, %v1402
        %v1404 = vpop.f32.mrf.mxu0
        %v1405 = vadd.f32 %v493, %v1404
        %1406 = vmatmul.bf16.gmra.mxu0 %v1336
        %v1407 = vpop.f32.mrf.mxu0
        %v1408 = vadd.f32 %v493, %v1407
        %v1409 = vpop.f32.mrf.mxu0
        %1410 = vdwg.mxu0
        %v1411 = vmax.f32 %v1348, 0.0
        %v1412 = vmax.f32 %v1350, 0.0
        %v1413 = vmax.f32 %v1353, 0.0
        %v1414 = vmax.f32 %v1355, 0.0
        %v1415 = vmax.f32 %v1358, 0.0
        %v1416 = vmax.f32 %v1360, 0.0
        %v1417 = vmax.f32 %v1363, 0.0
        %v1418 = vmax.f32 %v1365, 0.0
        %v1419 = vmax.f32 %v1368, 0.0
        %v1420 = vmax.f32 %v1370, 0.0
        %v1421 = vmax.f32 %v1373, 0.0
        %v1422 = vmax.f32 %v1375, 0.0
        %v1423 = vmax.f32 %v1378, 0.0
        %v1424 = vmax.f32 %v1380, 0.0
        %v1425 = vmax.f32 %v1383, 0.0
        %v1426 = vmax.f32 %v1385, 0.0
        %v1427 = vmax.f32 %v1388, 0.0
        %v1428 = vmax.f32 %v1390, 0.0
        %v1429 = vmax.f32 %v1393, 0.0
        %v1430 = vmax.f32 %v1395, 0.0
        %v1431 = vmax.f32 %v1398, 0.0
        %v1432 = vmax.f32 %v1400, 0.0
        %v1433 = vmax.f32 %v1403, 0.0
        %v1434 = vmax.f32 %v1405, 0.0
        %v1435 = vmax.f32 %v1408, 0.0
        %v1436 = vmax.f32 %v1185, %v1411
        %v1437 = vmax.f32 %v1186, %v1412
        %v1438 = vmax.f32 %v1187, %v1413
        %v1439 = vmax.f32 %v1188, %v1414
        %v1440 = vmax.f32 %v1189, %v1415
        %v1441 = vmax.f32 %v1190, %v1416
        %v1442 = vmax.f32 %v1191, %v1417
        %v1443 = vmax.f32 %v1192, %v1418
        %v1444 = vmax.f32 %v1193, %v1419
        %v1445 = vmax.f32 %v1194, %v1420
        %v1446 = vmax.f32 %v1195, %v1421
        %v1447 = vmax.f32 %v1196, %v1422
        %v1448 = vmax.f32 %v1197, %v1423
        %v1449 = vmax.f32 %v1198, %v1424
        %v1450 = vmax.f32 %v1199, %v1425
        %v1451 = vmax.f32 %v1200, %v1426
        %v1452 = vmax.f32 %v1201, %v1427
        %v1453 = vmax.f32 %v1202, %v1428
        %v1454 = vmax.f32 %v1203, %v1429
        %v1455 = vmax.f32 %v1204, %v1430
        %v1456 = vmax.f32 %v1205, %v1431
        %v1457 = vmax.f32 %v1206, %v1432
        %v1458 = vmax.f32 %v1207, %v1433
        %v1459 = vmax.f32 %v1208, %v1434
        %v1460 = vmax.f32 %v1209, %v1435
        %v1461 = vpack.c.bf16 %v1436, %v1436
        %v1462 = vpack.c.bf16 %v1437, %v1437
        %v1463 = vpack.c.bf16 %v1438, %v1438
        %v1464 = vpack.c.bf16 %v1439, %v1439
        %v1465 = vpack.c.bf16 %v1440, %v1440
        %v1466 = vpack.c.bf16 %v1441, %v1441
        %v1467 = vpack.c.bf16 %v1442, %v1442
        %v1468 = vpack.c.bf16 %v1443, %v1443
        %v1469 = vpack.c.bf16 %v1444, %v1444
        %v1470 = vpack.c.bf16 %v1445, %v1445
        %v1471 = vpack.c.bf16 %v1446, %v1446
        %v1472 = vpack.c.bf16 %v1447, %v1447
        %v1473 = vpack.c.bf16 %v1448, %v1448
        %v1474 = vpack.c.bf16 %v1449, %v1449
        %v1475 = vpack.c.bf16 %v1450, %v1450
        %v1476 = vpack.c.bf16 %v1451, %v1451
        %v1477 = vpack.c.bf16 %v1452, %v1452
        %v1478 = vpack.c.bf16 %v1453, %v1453
        %v1479 = vpack.c.bf16 %v1454, %v1454
        %v1480 = vpack.c.bf16 %v1455, %v1455
        %v1481 = vpack.c.bf16 %v1456, %v1456
        %v1482 = vpack.c.bf16 %v1457, %v1457
        %v1483 = vpack.c.bf16 %v1458, %v1458
        %v1484 = vpack.c.bf16 %v1459, %v1459
        %v1485 = vpack.c.bf16 %v1460, %v1460
        %1486 = vst [vmem:[%s450] sm:$0xf] %v1461
        %1487 = vst [vmem:[%s450 + $0x4] sm:$0xf] %v1462
        %1488 = vst [vmem:[%s450 + $0x8] sm:$0xf] %v1463
        %1489 = vst [vmem:[%s450 + $0xc] sm:$0xf] %v1464
        %1490 = vst [vmem:[%s450 + $0x10] sm:$0xf] %v1465
        %1491 = vst [vmem:[%s450 + $0x14] sm:$0xf] %v1466
        %1492 = vst [vmem:[%s450 + $0x18] sm:$0xf] %v1467
        %1493 = vst [vmem:[%s450 + $0x1c] sm:$0xf] %v1468
        %1494 = vst [vmem:[%s450 + $0x20] sm:$0xf] %v1469
        %1495 = vst [vmem:[%s450 + $0x24] sm:$0xf] %v1470
        %1496 = vst [vmem:[%s450 + $0x28] sm:$0xf] %v1471
        %1497 = vst [vmem:[%s450 + $0x2c] sm:$0xf] %v1472
        %1498 = vst [vmem:[%s450 + $0x30] sm:$0xf] %v1473
        %1499 = vst [vmem:[%s450 + $0x34] sm:$0xf] %v1474
        %1500 = vst [vmem:[%s450 + $0x38] sm:$0xf] %v1475
        %1501 = vst [vmem:[%s450 + $0x3c] sm:$0xf] %v1476
        %1502 = vst [vmem:[%s450 + $0x40] sm:$0xf] %v1477
        %1503 = vst [vmem:[%s450 + $0x44] sm:$0xf] %v1478
        %1504 = vst [vmem:[%s450 + $0x48] sm:$0xf] %v1479
        %1505 = vst [vmem:[%s450 + $0x4c] sm:$0xf] %v1480
        %1506 = vst [vmem:[%s450 + $0x50] sm:$0xf] %v1481
        %1507 = vst [vmem:[%s450 + $0x54] sm:$0xf] %v1482
        %1508 = vst [vmem:[%s450 + $0x58] sm:$0xf] %v1483
        %1509 = vst [vmem:[%s450 + $0x5c] sm:$0xf] %v1484
        %1510 = vst [vmem:[%s450 + $0x60] sm:$0xf] %v1485
        %s1511 = sand.u32 %s90, 1
        %s1512 = sand.u32 %s90, 1
        %s1513 = smul.addr %s1512, 100
        %s1514 = scalar_lea.vmem [#allocation3], %s1513
        // Predicated region
        $region95: #{net_forward.2} parent=89 // pred_check
          %p1515 = pneg %p100
        $region96: #{net_forward.2} parent=89 // pred_check_branch
          %1517 = sbr.rel (%p1515) target = $region98
        $region97: #{net_forward.2} parent=89 // pred_region
          %s1518 = smul.u32 25, %s14
          %s1519 = ssub.s32 49, %s1518
          %p1520 = scmp.lt.s32.totalorder %s1519, 25
          %s1521 = scalar_select %p1520, %s1519, 25
          %s1522 = smul.u32 4, %s1521
          %p1523 = scmp.ne.s32.totalorder 0, %s1522
          %s1524 = smul.addr %s1518, 4
          %s1525 = scalar_lea.vmem %s3, %s1524
          // Predicated region
          $region99: #{net_forward.2} parent=97 // pred_check
            %p1526 = pneg %p1523
          $region100: #{net_forward.2} parent=97 // pred_check_branch
            %1528 = sbr.rel (%p1526) target = $region102
          $region101: #{net_forward.2} parent=97 // pred_region
            // Predicated region
            $region103: #{net_forward.2} parent=101 // pred_check
              _
            $region104: #{net_forward.2} parent=101 // pred_check_branch
              %1530 = sbr.rel target = $region106
            $region105: #{net_forward.2} parent=101 // pred_region
              // Predicated region
              $region125: #{net_forward.2} parent=105 // pred_check
                _
              $region126: #{net_forward.2} parent=105 // pred_check_branch
                %1629 = sbr.rel (0) target = $region128
              $region127: #{net_forward.2} parent=105 // pred_region
                %s1631 = ssub.s32 16, 1
                %s1632 = sdiv.u32.pop %s1521, 25
                %s1633 = srem.u32.pop %s1521, 25
                // While loop
                $region129: #{net_forward.2} parent=127 // loop_pre_header
                  _
                $region130: #{net_forward.2} parent=127 // loop_header
                  %s1635 = sphi 0, %s1637
                  %p1636 = scmp.ge.s32.totalorder %s1635, %s1632
                  %s1640 = sphi 0, %s1695
                  %s1641 = sphi %s1514, %s1698
                  %s1642 = sphi %s1525, %s1699
                $region131: #{net_forward.2} parent=127 // loop_header_branch
                  %1639 = sbr.rel (%p1636) target = $region135
                $region132: #{net_forward.2} parent=127 // loop_body
                  %v1643 = vld [vmem:[%s1641] sm:%s1631]
                  %1644 = vst [vmem:[%s1642] sm:%s1631] %v1643
                  %v1645 = vld [vmem:[%s1641 + $0x4] sm:%s1631]
                  %1646 = vst [vmem:[%s1642 + $0x4] sm:%s1631] %v1645
                  %v1647 = vld [vmem:[%s1641 + $0x8] sm:%s1631]
                  %1648 = vst [vmem:[%s1642 + $0x8] sm:%s1631] %v1647
                  %v1649 = vld [vmem:[%s1641 + $0xc] sm:%s1631]
                  %1650 = vst [vmem:[%s1642 + $0xc] sm:%s1631] %v1649
                  %v1651 = vld [vmem:[%s1641 + $0x10] sm:%s1631]
                  %1652 = vst [vmem:[%s1642 + $0x10] sm:%s1631] %v1651
                  %v1653 = vld [vmem:[%s1641 + $0x14] sm:%s1631]
                  %1654 = vst [vmem:[%s1642 + $0x14] sm:%s1631] %v1653
                  %v1655 = vld [vmem:[%s1641 + $0x18] sm:%s1631]
                  %1656 = vst [vmem:[%s1642 + $0x18] sm:%s1631] %v1655
                  %v1657 = vld [vmem:[%s1641 + $0x1c] sm:%s1631]
                  %1658 = vst [vmem:[%s1642 + $0x1c] sm:%s1631] %v1657
                  %v1659 = vld [vmem:[%s1641 + $0x20] sm:%s1631]
                  %1660 = vst [vmem:[%s1642 + $0x20] sm:%s1631] %v1659
                  %v1661 = vld [vmem:[%s1641 + $0x24] sm:%s1631]
                  %1662 = vst [vmem:[%s1642 + $0x24] sm:%s1631] %v1661
                  %v1663 = vld [vmem:[%s1641 + $0x28] sm:%s1631]
                  %1664 = vst [vmem:[%s1642 + $0x28] sm:%s1631] %v1663
                  %v1665 = vld [vmem:[%s1641 + $0x2c] sm:%s1631]
                  %1666 = vst [vmem:[%s1642 + $0x2c] sm:%s1631] %v1665
                  %v1667 = vld [vmem:[%s1641 + $0x30] sm:%s1631]
                  %1668 = vst [vmem:[%s1642 + $0x30] sm:%s1631] %v1667
                  %v1669 = vld [vmem:[%s1641 + $0x34] sm:%s1631]
                  %1670 = vst [vmem:[%s1642 + $0x34] sm:%s1631] %v1669
                  %v1671 = vld [vmem:[%s1641 + $0x38] sm:%s1631]
                  %1672 = vst [vmem:[%s1642 + $0x38] sm:%s1631] %v1671
                  %v1673 = vld [vmem:[%s1641 + $0x3c] sm:%s1631]
                  %1674 = vst [vmem:[%s1642 + $0x3c] sm:%s1631] %v1673
                  %v1675 = vld [vmem:[%s1641 + $0x40] sm:%s1631]
                  %1676 = vst [vmem:[%s1642 + $0x40] sm:%s1631] %v1675
                  %v1677 = vld [vmem:[%s1641 + $0x44] sm:%s1631]
                  %1678 = vst [vmem:[%s1642 + $0x44] sm:%s1631] %v1677
                  %v1679 = vld [vmem:[%s1641 + $0x48] sm:%s1631]
                  %1680 = vst [vmem:[%s1642 + $0x48] sm:%s1631] %v1679
                  %v1681 = vld [vmem:[%s1641 + $0x4c] sm:%s1631]
                  %1682 = vst [vmem:[%s1642 + $0x4c] sm:%s1631] %v1681
                  %v1683 = vld [vmem:[%s1641 + $0x50] sm:%s1631]
                  %1684 = vst [vmem:[%s1642 + $0x50] sm:%s1631] %v1683
                  %v1685 = vld [vmem:[%s1641 + $0x54] sm:%s1631]
                  %1686 = vst [vmem:[%s1642 + $0x54] sm:%s1631] %v1685
                  %v1687 = vld [vmem:[%s1641 + $0x58] sm:%s1631]
                  %1688 = vst [vmem:[%s1642 + $0x58] sm:%s1631] %v1687
                  %v1689 = vld [vmem:[%s1641 + $0x5c] sm:%s1631]
                  %1690 = vst [vmem:[%s1642 + $0x5c] sm:%s1631] %v1689
                  %v1691 = vld [vmem:[%s1641 + $0x60] sm:%s1631]
                  %1692 = vst [vmem:[%s1642 + $0x60] sm:%s1631] %v1691
                  %s1693 = sadd.s32 1, %s1640
                  %p1694 = scmp.ge.s32.totalorder %s1693, %s1632
                  %s1695 = scalar_select %p1694, 0, %s1693
                  %s1696 = smul.u32 %s1695, 100
                  %s1697 = smul.u32 %s1695, 100
                  %s1698 = scalar_lea.vmem %s1514, %s1696 [#allocation3]
                  %s1699 = scalar_lea.vmem %s1525, %s1697
                $region133: #{net_forward.2} parent=127 // loop_footer
                  %s1637 = sadd.s32 %s1635, 1
                $region134: #{net_forward.2} parent=127 // loop_footer_branch
                  %1634 = sbr.rel target = $region130
                $region135: #{net_forward.2} parent=127 // loop_exit
                  _
                %s1700 = sdiv.u32.pop %s1521, 25
                %s1701 = srem.u32.pop %s1521, 25
                %s1702 = smul.u32 %s1700, 25
                %s1703 = smul.u32 4, %s1702
                %s1704 = scalar_lea.vmem %s1514, %s1703 [#allocation3]
                %s1705 = smul.u32 4, %s1702
                %s1706 = scalar_lea.vmem %s1525, %s1705
                // While loop
                $region136: #{net_forward.2} parent=127 // loop_pre_header
                  _
                $region137: #{net_forward.2} parent=127 // loop_header
                  %s1708 = sphi 0, %s1710
                  %p1709 = scmp.ge.s32.totalorder %s1708, %s1701
                  %s1713 = sphi 0, %s1720
                  %s1714 = sphi %s1704, %s1723
                  %s1715 = sphi %s1706, %s1724
                $region138: #{net_forward.2} parent=127 // loop_header_branch
                  %1712 = sbr.rel (%p1709) target = $region142
                $region139: #{net_forward.2} parent=127 // loop_body
                  %v1716 = vld [vmem:[%s1714] sm:%s1631]
                  %1717 = vst [vmem:[%s1715] sm:%s1631] %v1716
                  %s1718 = sadd.s32 1, %s1713
                  %p1719 = scmp.ge.s32.totalorder %s1718, %s1701
                  %s1720 = scalar_select %p1719, 0, %s1718
                  %s1721 = smul.u32 %s1720, 4
                  %s1722 = smul.u32 %s1720, 4
                  %s1723 = scalar_lea.vmem %s1704, %s1721 [#allocation3]
                  %s1724 = scalar_lea.vmem %s1706, %s1722
                $region140: #{net_forward.2} parent=127 // loop_footer
                  %s1710 = sadd.s32 %s1708, 1
                $region141: #{net_forward.2} parent=127 // loop_footer_branch
                  %1707 = sbr.rel target = $region137
                $region142: #{net_forward.2} parent=127 // loop_exit
                  _
              $region128: #{net_forward.2} parent=105 // pred_fallthru
                _
            $region106: #{net_forward.2} parent=101 // pred_fallthru
              _
            // Predicated region
            $region107: #{net_forward.2} parent=101 // pred_check
              _
            $region108: #{net_forward.2} parent=101 // pred_check_branch
              %1532 = sbr.rel (0) target = $region110
            $region109: #{net_forward.2} parent=101 // pred_region
              %s1534 = ssub.s32 16, 1
              %s1535 = sdiv.u32.pop %s1521, 25
              %s1536 = srem.u32.pop %s1521, 25
              // While loop
              $region111: #{net_forward.2} parent=109 // loop_pre_header
                _
              $region112: #{net_forward.2} parent=109 // loop_header
                %s1538 = sphi 0, %s1540
                %p1539 = scmp.ge.s32.totalorder %s1538, %s1535
                %s1543 = sphi 0, %s1598
                %s1544 = sphi %s1514, %s1601
                %s1545 = sphi %s1525, %s1602
              $region113: #{net_forward.2} parent=109 // loop_header_branch
                %1542 = sbr.rel (%p1539) target = $region117
              $region114: #{net_forward.2} parent=109 // loop_body
                %v1546 = vld [vmem:[%s1544] sm:%s1534]
                %1547 = vst [vmem:[%s1545] sm:%s1534] %v1546
                %v1548 = vld [vmem:[%s1544 + $0x4] sm:%s1534]
                %1549 = vst [vmem:[%s1545 + $0x4] sm:%s1534] %v1548
                %v1550 = vld [vmem:[%s1544 + $0x8] sm:%s1534]
                %1551 = vst [vmem:[%s1545 + $0x8] sm:%s1534] %v1550
                %v1552 = vld [vmem:[%s1544 + $0xc] sm:%s1534]
                %1553 = vst [vmem:[%s1545 + $0xc] sm:%s1534] %v1552
                %v1554 = vld [vmem:[%s1544 + $0x10] sm:%s1534]
                %1555 = vst [vmem:[%s1545 + $0x10] sm:%s1534] %v1554
                %v1556 = vld [vmem:[%s1544 + $0x14] sm:%s1534]
                %1557 = vst [vmem:[%s1545 + $0x14] sm:%s1534] %v1556
                %v1558 = vld [vmem:[%s1544 + $0x18] sm:%s1534]
                %1559 = vst [vmem:[%s1545 + $0x18] sm:%s1534] %v1558
                %v1560 = vld [vmem:[%s1544 + $0x1c] sm:%s1534]
                %1561 = vst [vmem:[%s1545 + $0x1c] sm:%s1534] %v1560
                %v1562 = vld [vmem:[%s1544 + $0x20] sm:%s1534]
                %1563 = vst [vmem:[%s1545 + $0x20] sm:%s1534] %v1562
                %v1564 = vld [vmem:[%s1544 + $0x24] sm:%s1534]
                %1565 = vst [vmem:[%s1545 + $0x24] sm:%s1534] %v1564
                %v1566 = vld [vmem:[%s1544 + $0x28] sm:%s1534]
                %1567 = vst [vmem:[%s1545 + $0x28] sm:%s1534] %v1566
                %v1568 = vld [vmem:[%s1544 + $0x2c] sm:%s1534]
                %1569 = vst [vmem:[%s1545 + $0x2c] sm:%s1534] %v1568
                %v1570 = vld [vmem:[%s1544 + $0x30] sm:%s1534]
                %1571 = vst [vmem:[%s1545 + $0x30] sm:%s1534] %v1570
                %v1572 = vld [vmem:[%s1544 + $0x34] sm:%s1534]
                %1573 = vst [vmem:[%s1545 + $0x34] sm:%s1534] %v1572
                %v1574 = vld [vmem:[%s1544 + $0x38] sm:%s1534]
                %1575 = vst [vmem:[%s1545 + $0x38] sm:%s1534] %v1574
                %v1576 = vld [vmem:[%s1544 + $0x3c] sm:%s1534]
                %1577 = vst [vmem:[%s1545 + $0x3c] sm:%s1534] %v1576
                %v1578 = vld [vmem:[%s1544 + $0x40] sm:%s1534]
                %1579 = vst [vmem:[%s1545 + $0x40] sm:%s1534] %v1578
                %v1580 = vld [vmem:[%s1544 + $0x44] sm:%s1534]
                %1581 = vst [vmem:[%s1545 + $0x44] sm:%s1534] %v1580
                %v1582 = vld [vmem:[%s1544 + $0x48] sm:%s1534]
                %1583 = vst [vmem:[%s1545 + $0x48] sm:%s1534] %v1582
                %v1584 = vld [vmem:[%s1544 + $0x4c] sm:%s1534]
                %1585 = vst [vmem:[%s1545 + $0x4c] sm:%s1534] %v1584
                %v1586 = vld [vmem:[%s1544 + $0x50] sm:%s1534]
                %1587 = vst [vmem:[%s1545 + $0x50] sm:%s1534] %v1586
                %v1588 = vld [vmem:[%s1544 + $0x54] sm:%s1534]
                %1589 = vst [vmem:[%s1545 + $0x54] sm:%s1534] %v1588
                %v1590 = vld [vmem:[%s1544 + $0x58] sm:%s1534]
                %1591 = vst [vmem:[%s1545 + $0x58] sm:%s1534] %v1590
                %v1592 = vld [vmem:[%s1544 + $0x5c] sm:%s1534]
                %1593 = vst [vmem:[%s1545 + $0x5c] sm:%s1534] %v1592
                %v1594 = vld [vmem:[%s1544 + $0x60] sm:%s1534]
                %1595 = vst [vmem:[%s1545 + $0x60] sm:%s1534] %v1594
                %s1596 = sadd.s32 1, %s1543
                %p1597 = scmp.ge.s32.totalorder %s1596, %s1535
                %s1598 = scalar_select %p1597, 0, %s1596
                %s1599 = smul.u32 %s1598, 100
                %s1600 = smul.u32 %s1598, 100
                %s1601 = scalar_lea.vmem %s1514, %s1599 [#allocation3]
                %s1602 = scalar_lea.vmem %s1525, %s1600
              $region115: #{net_forward.2} parent=109 // loop_footer
                %s1540 = sadd.s32 %s1538, 1
              $region116: #{net_forward.2} parent=109 // loop_footer_branch
                %1537 = sbr.rel target = $region112
              $region117: #{net_forward.2} parent=109 // loop_exit
                _
              %s1603 = sdiv.u32.pop %s1521, 25
              %s1604 = srem.u32.pop %s1521, 25
              %s1605 = smul.u32 %s1603, 25
              %s1606 = smul.u32 4, %s1605
              %s1607 = scalar_lea.vmem %s1514, %s1606 [#allocation3]
              %s1608 = smul.u32 4, %s1605
              %s1609 = scalar_lea.vmem %s1525, %s1608
              // While loop
              $region118: #{net_forward.2} parent=109 // loop_pre_header
                _
              $region119: #{net_forward.2} parent=109 // loop_header
                %s1611 = sphi 0, %s1613
                %p1612 = scmp.ge.s32.totalorder %s1611, %s1604
                %s1616 = sphi 0, %s1623
                %s1617 = sphi %s1607, %s1626
                %s1618 = sphi %s1609, %s1627
              $region120: #{net_forward.2} parent=109 // loop_header_branch
                %1615 = sbr.rel (%p1612) target = $region124
              $region121: #{net_forward.2} parent=109 // loop_body
                %v1619 = vld [vmem:[%s1617] sm:%s1534]
                %1620 = vst [vmem:[%s1618] sm:%s1534] %v1619
                %s1621 = sadd.s32 1, %s1616
                %p1622 = scmp.ge.s32.totalorder %s1621, %s1604
                %s1623 = scalar_select %p1622, 0, %s1621
                %s1624 = smul.u32 %s1623, 4
                %s1625 = smul.u32 %s1623, 4
                %s1626 = scalar_lea.vmem %s1607, %s1624 [#allocation3]
                %s1627 = scalar_lea.vmem %s1609, %s1625
              $region122: #{net_forward.2} parent=109 // loop_footer
                %s1613 = sadd.s32 %s1611, 1
              $region123: #{net_forward.2} parent=109 // loop_footer_branch
                %1610 = sbr.rel target = $region119
              $region124: #{net_forward.2} parent=109 // loop_exit
                _
            $region110: #{net_forward.2} parent=101 // pred_fallthru
              _
          $region102: #{net_forward.2} parent=97 // pred_fallthru
            _
          %1725 = vnop
        $region98: #{net_forward.2} parent=89 // pred_fallthru
          _
      $region90: #{net_forward.2} parent=5 // pred_fallthru
        _
      %p1726 = scmp.le.s32.totalorder 2, %s9
      // Predicated region
      $region143: #{net_forward.2} parent=5 // pred_check
        %p1727 = pneg %p1726
      $region144: #{net_forward.2} parent=5 // pred_check_branch
        %1729 = sbr.rel (%p1727) target = $region146
      $region145: #{net_forward.2} parent=5 // pred_region
        %s1730 = ssub.s32 %s9, 2
        // Predicated region
        $region147: #{net_forward.2} parent=145 // pred_check
          %p1731 = pneg %p106
        $region148: #{net_forward.2} parent=145 // pred_check_branch
          %1733 = sbr.rel (%p1731) target = $region150
        $region149: #{net_forward.2} parent=145 // pred_region
          %s1734 = sand.u32 %s91, 1
          %s1735 = sand.u32 %s91, 1
          %s1736 = smul.addr %s1735, 100
          %s1737 = scalar_lea.vmem [#allocation3], %s1736
        $region150: #{net_forward.2} parent=145 // pred_fallthru
          _
      $region146: #{net_forward.2} parent=5 // pred_fallthru
        _
    $region6: #{net_forward.2} parent=1 // loop_footer
      %s13 = sadd.s32 1, %s9
    $region7: #{net_forward.2} parent=1 // loop_footer_branch
      %8 = sbr.rel target = $region3
    $region8: #{net_forward.2} parent=1 // loop_exit
      _

// kernel: net_forward.3
$region0: #{net_forward.3}
  #allocation0 [shape = 'u32[]', space=smem, size = 0x4, offset = 0x4, fixed_abs, tag = 'smem constant byte address 0x4 - core index']
  #allocation1 [shape = 'u32[72,128]{1,0:T(1,128)}', space=vmem, size = 0x9000, scoped, tag = 'internal scratch']
  %s0 = inlined_call_operand.vmem [shape: bf16[4,25,2,160], index: 0, kind: input, shape index: {}]
  %s1 = inlined_call_operand.vmem [shape: bf16[160,128], index: 1, kind: input, shape index: {}]
  %s2 = inlined_call_operand.vmem [shape: f32[1,128], index: 2, kind: input, shape index: {}]
  %s3 = inlined_call_operand.vmem [shape: bf16[25,128,128], index: 3, kind: input, shape index: {}]
  %s4 = inlined_call_operand.vmem [shape: f32[1,128], index: 4, kind: input, shape index: {}]
  %s5 = inlined_call_operand.vmem [shape: bf16[128,128], index: 5, kind: input, shape index: {}]
  %s6 = inlined_call_operand.vmem [shape: f32[1,128], index: 6, kind: input, shape index: {}]
  %s7 = inlined_call_operand.vmem [shape: bf16[128,128], index: 7, kind: input, shape index: {}]
  %s8 = inlined_call_operand.vmem [shape: f32[1,128], index: 8, kind: input, shape index: {}]
  %s9 = inlined_call_operand.hbm [shape: f32[2,128], index: 9, kind: output, shape index: {}]
  %s10 = sld [smem:[#allocation0]]
  $region46: #{net_forward.3} parent=0
    _
  %s12 = ssub.s32 1, %s10
  %s13 = scalar_select 0, %s12, %s10
  $region1: #{net_forward.3} parent=0
    #allocation2 [shape = 'u8[1024]{0}', space=vmem, size = 0x400, scoped, tag = 'output window, operand 0, single buffered']
    #allocation3 [shape = 's32[1]{0}', space=sflag, size = 0x4, scoped, tag = 'scoped memory for net_forward.3']
    %14 = vsyncpa [#allocation3], 0
    // Predicated region
    $region2: #{net_forward.3} parent=1 // pred_check
      _
    $region3: #{net_forward.3} parent=1 // pred_check_branch
      %16 = sbr.rel (0) target = $region5
    $region4: #{net_forward.3} parent=1 // pred_region
      _
    $region5: #{net_forward.3} parent=1 // pred_fallthru
      _
    // Predicated region
    $region6: #{net_forward.3} parent=1 // pred_check
      _
    $region7: #{net_forward.3} parent=1 // pred_check_branch
      %18 = sbr.rel (0) target = $region9
    $region8: #{net_forward.3} parent=1 // pred_region
      _
    $region9: #{net_forward.3} parent=1 // pred_fallthru
      _
    // Predicated region
    $region10: #{net_forward.3} parent=1 // pred_check
      _
    $region11: #{net_forward.3} parent=1 // pred_check_branch
      %20 = sbr.rel (0) target = $region13
    $region12: #{net_forward.3} parent=1 // pred_region
      _
    $region13: #{net_forward.3} parent=1 // pred_fallthru
      _
    // Predicated region
    $region14: #{net_forward.3} parent=1 // pred_check
      _
    $region15: #{net_forward.3} parent=1 // pred_check_branch
      %22 = sbr.rel (0) target = $region17
    $region16: #{net_forward.3} parent=1 // pred_region
      _
    $region17: #{net_forward.3} parent=1 // pred_fallthru
      _
    // Predicated region
    $region18: #{net_forward.3} parent=1 // pred_check
      _
    $region19: #{net_forward.3} parent=1 // pred_check_branch
      %24 = sbr.rel (0) target = $region21
    $region20: #{net_forward.3} parent=1 // pred_region
      _
    $region21: #{net_forward.3} parent=1 // pred_fallthru
      _
    // Predicated region
    $region22: #{net_forward.3} parent=1 // pred_check
      _
    $region23: #{net_forward.3} parent=1 // pred_check_branch
      %26 = sbr.rel (0) target = $region25
    $region24: #{net_forward.3} parent=1 // pred_region
      _
    $region25: #{net_forward.3} parent=1 // pred_fallthru
      _
    // Predicated region
    $region26: #{net_forward.3} parent=1 // pred_check
      _
    $region27: #{net_forward.3} parent=1 // pred_check_branch
      %28 = sbr.rel (0) target = $region29
    $region28: #{net_forward.3} parent=1 // pred_region
      _
    $region29: #{net_forward.3} parent=1 // pred_fallthru
      _
    // Predicated region
    $region30: #{net_forward.3} parent=1 // pred_check
      _
    $region31: #{net_forward.3} parent=1 // pred_check_branch
      %30 = sbr.rel (0) target = $region33
    $region32: #{net_forward.3} parent=1 // pred_region
      _
    $region33: #{net_forward.3} parent=1 // pred_fallthru
      _
    // Predicated region
    $region34: #{net_forward.3} parent=1 // pred_check
      _
    $region35: #{net_forward.3} parent=1 // pred_check_branch
      %32 = sbr.rel (0) target = $region37
    $region36: #{net_forward.3} parent=1 // pred_region
      _
    $region37: #{net_forward.3} parent=1 // pred_fallthru
      _
    %v34 = vld [vmem:[%s1] sm:$0xf]
    %v35 = vld [vmem:[%s1 + $0x4] sm:$0xf]
    %v36 = vld [vmem:[%s1 + $0x8] sm:$0xf]
    %v37 = vld [vmem:[%s1 + $0xc] sm:$0xf]
    %v38 = vld [vmem:[%s1 + $0x10] sm:$0xf]
    %v39 = vld [vmem:[%s1 + $0x14] sm:$0xf]
    %v40 = vld [vmem:[%s1 + $0x18] sm:$0xf]
    %v41 = vld [vmem:[%s1 + $0x1c] sm:$0xf]
    %v42 = vld [vmem:[%s1 + $0x20] sm:$0xf]
    %v43 = vld [vmem:[%s1 + $0x24] sm:$0xf]
    %v44 = vld [vmem:[%s1 + $0x28] sm:$0xf]
    %v45 = vld [vmem:[%s1 + $0x2c] sm:$0xf]
    %v46 = vld [vmem:[%s1 + $0x30] sm:$0xf]
    %v47 = vld [vmem:[%s1 + $0x34] sm:$0xf]
    %v48 = vld [vmem:[%s1 + $0x38] sm:$0xf]
    %v49 = vld [vmem:[%s1 + $0x3c] sm:$0xf]
    %v50 = vld [vmem:[%s1 + $0x40] sm:$0xf]
    %v51 = vld [vmem:[%s1 + $0x44] sm:$0xf]
    %v52 = vld [vmem:[%s1 + $0x48] sm:$0xf]
    %v53 = vld [vmem:[%s1 + $0x4c] sm:$0xf]
    %v54 = vld [vmem:[%s2] sm:$0x1]
    %v55 = vld [vmem:[%s0] sm:$0x3]
    %v57 = vperm.slane %v54, 0
    %60 = vst [vmem:[#allocation1] ss:$9 sm:$0xff] %v55
    %v61 = vld [vmem:[#allocation1] sm:$0xff]
    %v62 = vld [vmem:[#allocation1 + $0x9] sm:$0xff]
    %v84 = vunpack.c.l.b16 %v34
    %v85 = vunpack.c.l.b16 %v35
    %v86 = vunpack.c.l.b16 %v36
    %v87 = vunpack.c.l.b16 %v37
    %v88 = vunpack.c.l.b16 %v38
    %v89 = vunpack.c.l.b16 %v39
    %v90 = vunpack.c.l.b16 %v40
    %v91 = vunpack.c.l.b16 %v41
    %v92 = vunpack.c.l.b16 %v42
    %v93 = vunpack.c.l.b16 %v43
    %v94 = vunpack.c.l.b16 %v44
    %v95 = vunpack.c.l.b16 %v45
    %v96 = vunpack.c.l.b16 %v46
    %v97 = vunpack.c.l.b16 %v47
    %v98 = vunpack.c.l.b16 %v48
    %v99 = vunpack.c.l.b16 %v49
    %v100 = vunpack.c.l.b16 %v50
    %v101 = vunpack.c.l.b16 %v51
    %v102 = vunpack.c.l.b16 %v52
    %v103 = vunpack.c.l.b16 %v53
    %v104 = vpack.c.b16 %v85, %v84
    %v105 = vpack.c.b16 %v87, %v86
    %v106 = vpack.c.b16 %v89, %v88
    %v107 = vpack.c.b16 %v91, %v90
    %v108 = vpack.c.b16 %v93, %v92
    %v109 = vpack.c.b16 %v95, %v94
    %v110 = vpack.c.b16 %v97, %v96
    %v111 = vpack.c.b16 %v99, %v98
    %v112 = vpack.c.b16 %v101, %v100
    %v113 = vpack.c.b16 %v103, %v102
    %vm124 = vcmask 261120
    %v125 = vsel %vm124, %v62, 0
    %127 = vmatpush.bf16.msra.mxu0 %v111
    %128 = vmatpush.bf16.msra.mxu0 %v110
    %129 = vmatpush.bf16.msra.mxu0 %v109
    %130 = vmatpush.bf16.msra.mxu0 %v108
    %131 = vmatpush.bf16.msra.mxu0 %v107
    %132 = vmatpush.bf16.msra.mxu0 %v106
    %133 = vmatpush.bf16.msra.mxu0 %v105
    %134 = vmatpush.bf16.msra.mxu0 %v104
    %135 = vmatmul.bf16.gmra.mxu0 %v61
    %v136 = vpop.f32.mrf.mxu0
    %v137 = vadd.f32 %v57, %v136
    %v138 = vpop.f32.mrf.mxu0
    %139 = vdwg.mxu0
    %140 = vmatpush.bf16.msra.mxu0 0
    %141 = vmatpush.bf16.msra.mxu0 0
    %142 = vmatpush.bf16.msra.mxu0 0
    %143 = vmatpush.bf16.msra.mxu0 0
    %144 = vmatpush.bf16.msra.mxu0 0
    %145 = vmatpush.bf16.msra.mxu0 0
    %146 = vmatpush.bf16.msra.mxu0 %v113
    %147 = vmatpush.bf16.msra.mxu0 %v112
    %148 = vmatmul.bf16.gmra.mxu0 %v125
    %v149 = vpop.f32.mrf.mxu0
    %v150 = vadd.f32 %v137, %v149
    %v151 = vpop.f32.mrf.mxu0
    %152 = vdwg.mxu0
    %v153 = vmax.f32 %v150, 0.0
    %s154 = scalar_lea.vmem %s0, 50
    %v155 = vld [vmem:[%s154] sm:$0x3]
    %157 = vst [vmem:[#allocation1] ss:$9 sm:$0xff] %v155
    %v158 = vld [vmem:[#allocation1] sm:$0xff]
    %v159 = vld [vmem:[#allocation1 + $0x9] sm:$0xff]
    %v161 = vsel %vm124, %v159, 0
    %163 = vmatpush.bf16.msra.mxu0 %v111
    %164 = vmatpush.bf16.msra.mxu0 %v110
    %165 = vmatpush.bf16.msra.mxu0 %v109
    %166 = vmatpush.bf16.msra.mxu0 %v108
    %167 = vmatpush.bf16.msra.mxu0 %v107
    %168 = vmatpush.bf16.msra.mxu0 %v106
    %169 = vmatpush.bf16.msra.mxu0 %v105
    %170 = vmatpush.bf16.msra.mxu0 %v104
    %171 = vmatmul.bf16.gmra.mxu0 %v158
    %v172 = vpop.f32.mrf.mxu0
    %v173 = vadd.f32 %v57, %v172
    %v174 = vpop.f32.mrf.mxu0
    %175 = vdwg.mxu0
    %176 = vmatpush.bf16.msra.mxu0 0
    %177 = vmatpush.bf16.msra.mxu0 0
    %178 = vmatpush.bf16.msra.mxu0 0
    %179 = vmatpush.bf16.msra.mxu0 0
    %180 = vmatpush.bf16.msra.mxu0 0
    %181 = vmatpush.bf16.msra.mxu0 0
    %182 = vmatpush.bf16.msra.mxu0 %v113
    %183 = vmatpush.bf16.msra.mxu0 %v112
    %184 = vmatmul.bf16.gmra.mxu0 %v161
    %v185 = vpop.f32.mrf.mxu0
    %v186 = vadd.f32 %v173, %v185
    %v187 = vpop.f32.mrf.mxu0
    %188 = vdwg.mxu0
    %v189 = vmax.f32 %v186, 0.0
    %v190 = vmax.f32 %v153, %v189
    %s191 = scalar_lea.vmem %s0, 100
    %v192 = vld [vmem:[%s191] sm:$0x3]
    %194 = vst [vmem:[#allocation1] ss:$9 sm:$0xff] %v192
    %v195 = vld [vmem:[#allocation1] sm:$0xff]
    %v196 = vld [vmem:[#allocation1 + $0x9] sm:$0xff]
    %v198 = vsel %vm124, %v196, 0
    %200 = vmatpush.bf16.msra.mxu0 %v111
    %201 = vmatpush.bf16.msra.mxu0 %v110
    %202 = vmatpush.bf16.msra.mxu0 %v109
    %203 = vmatpush.bf16.msra.mxu0 %v108
    %204 = vmatpush.bf16.msra.mxu0 %v107
    %205 = vmatpush.bf16.msra.mxu0 %v106
    %206 = vmatpush.bf16.msra.mxu0 %v105
    %207 = vmatpush.bf16.msra.mxu0 %v104
    %208 = vmatmul.bf16.gmra.mxu0 %v195
    %v209 = vpop.f32.mrf.mxu0
    %v210 = vadd.f32 %v57, %v209
    %v211 = vpop.f32.mrf.mxu0
    %212 = vdwg.mxu0
    %213 = vmatpush.bf16.msra.mxu0 0
    %214 = vmatpush.bf16.msra.mxu0 0
    %215 = vmatpush.bf16.msra.mxu0 0
    %216 = vmatpush.bf16.msra.mxu0 0
    %217 = vmatpush.bf16.msra.mxu0 0
    %218 = vmatpush.bf16.msra.mxu0 0
    %219 = vmatpush.bf16.msra.mxu0 %v113
    %220 = vmatpush.bf16.msra.mxu0 %v112
    %221 = vmatmul.bf16.gmra.mxu0 %v198
    %v222 = vpop.f32.mrf.mxu0
    %v223 = vadd.f32 %v210, %v222
    %v224 = vpop.f32.mrf.mxu0
    %225 = vdwg.mxu0
    %v226 = vmax.f32 %v223, 0.0
    %v227 = vmax.f32 %v190, %v226
    %s228 = scalar_lea.vmem %s0, 150
    %v229 = vld [vmem:[%s228] sm:$0x3]
    %231 = vst [vmem:[#allocation1] ss:$9 sm:$0xff] %v229
    %v232 = vld [vmem:[#allocation1] sm:$0xff]
    %v233 = vld [vmem:[#allocation1 + $0x9] sm:$0xff]
    %v235 = vsel %vm124, %v233, 0
    %237 = vmatpush.bf16.msra.mxu0 %v111
    %238 = vmatpush.bf16.msra.mxu0 %v110
    %239 = vmatpush.bf16.msra.mxu0 %v109
    %240 = vmatpush.bf16.msra.mxu0 %v108
    %241 = vmatpush.bf16.msra.mxu0 %v107
    %242 = vmatpush.bf16.msra.mxu0 %v106
    %243 = vmatpush.bf16.msra.mxu0 %v105
    %244 = vmatpush.bf16.msra.mxu0 %v104
    %245 = vmatmul.bf16.gmra.mxu0 %v232
    %v246 = vpop.f32.mrf.mxu0
    %v247 = vadd.f32 %v57, %v246
    %v248 = vpop.f32.mrf.mxu0
    %249 = vdwg.mxu0
    %250 = vmatpush.bf16.msra.mxu0 0
    %251 = vmatpush.bf16.msra.mxu0 0
    %252 = vmatpush.bf16.msra.mxu0 0
    %253 = vmatpush.bf16.msra.mxu0 0
    %254 = vmatpush.bf16.msra.mxu0 0
    %255 = vmatpush.bf16.msra.mxu0 0
    %256 = vmatpush.bf16.msra.mxu0 %v113
    %257 = vmatpush.bf16.msra.mxu0 %v112
    %258 = vmatmul.bf16.gmra.mxu0 %v235
    %v259 = vpop.f32.mrf.mxu0
    %v260 = vadd.f32 %v247, %v259
    %v261 = vpop.f32.mrf.mxu0
    %262 = vdwg.mxu0
    %v263 = vmax.f32 %v260, 0.0
    %v264 = vmax.f32 %v227, %v263
    %v265 = vpack.c.bf16 %v264, %v264
    %v266 = vld [vmem:[%s3] sm:$0xf]
    %v267 = vld [vmem:[%s3 + $0x4] sm:$0xf]
    %v268 = vld [vmem:[%s3 + $0x8] sm:$0xf]
    %v269 = vld [vmem:[%s3 + $0xc] sm:$0xf]
    %v270 = vld [vmem:[%s3 + $0x10] sm:$0xf]
    %v271 = vld [vmem:[%s3 + $0x14] sm:$0xf]
    %v272 = vld [vmem:[%s3 + $0x18] sm:$0xf]
    %v273 = vld [vmem:[%s3 + $0x1c] sm:$0xf]
    %v274 = vld [vmem:[%s3 + $0x20] sm:$0xf]
    %v275 = vld [vmem:[%s3 + $0x24] sm:$0xf]
    %v276 = vld [vmem:[%s3 + $0x28] sm:$0xf]
    %v277 = vld [vmem:[%s3 + $0x2c] sm:$0xf]
    %v278 = vld [vmem:[%s3 + $0x30] sm:$0xf]
    %v279 = vld [vmem:[%s3 + $0x34] sm:$0xf]
    %v280 = vld [vmem:[%s3 + $0x38] sm:$0xf]
    %v281 = vld [vmem:[%s3 + $0x3c] sm:$0xf]
    %s282 = scalar_lea.vmem %s0, 2
    %v283 = vld [vmem:[%s282] sm:$0x3]
    %285 = vst [vmem:[#allocation1] ss:$9 sm:$0xff] %v283
    %v286 = vld [vmem:[#allocation1] sm:$0xff]
    %v287 = vld [vmem:[#allocation1 + $0x9] sm:$0xff]
    %v289 = vsel %vm124, %v287, 0
    %291 = vmatpush.bf16.msra.mxu0 %v111
    %292 = vmatpush.bf16.msra.mxu0 %v110
    %293 = vmatpush.bf16.msra.mxu0 %v109
    %294 = vmatpush.bf16.msra.mxu0 %v108
    %295 = vmatpush.bf16.msra.mxu0 %v107
    %296 = vmatpush.bf16.msra.mxu0 %v106
    %297 = vmatpush.bf16.msra.mxu0 %v105
    %298 = vmatpush.bf16.msra.mxu0 %v104
    %299 = vmatmul.bf16.gmra.mxu0 %v286
    %v300 = vpop.f32.mrf.mxu0
    %v301 = vadd.f32 %v57, %v300
    %v302 = vpop.f32.mrf.mxu0
    %303 = vdwg.mxu0
    %304 = vmatpush.bf16.msra.mxu0 0
    %305 = vmatpush.bf16.msra.mxu0 0
    %306 = vmatpush.bf16.msra.mxu0 0
    %307 = vmatpush.bf16.msra.mxu0 0
    %308 = vmatpush.bf16.msra.mxu0 0
    %309 = vmatpush.bf16.msra.mxu0 0
    %310 = vmatpush.bf16.msra.mxu0 %v113
    %311 = vmatpush.bf16.msra.mxu0 %v112
    %312 = vmatmul.bf16.gmra.mxu0 %v289
    %v313 = vpop.f32.mrf.mxu0
    %v314 = vadd.f32 %v301, %v313
    %v315 = vpop.f32.mrf.mxu0
    %316 = vdwg.mxu0
    %v317 = vmax.f32 %v314, 0.0
    %s318 = scalar_lea.vmem %s0, 52
    %v319 = vld [vmem:[%s318] sm:$0x3]
    %321 = vst [vmem:[#allocation1] ss:$9 sm:$0xff] %v319
    %v322 = vld [vmem:[#allocation1] sm:$0xff]
    %v323 = vld [vmem:[#allocation1 + $0x9] sm:$0xff]
    %v325 = vsel %vm124, %v323, 0
    %327 = vmatpush.bf16.msra.mxu0 %v111
    %328 = vmatpush.bf16.msra.mxu0 %v110
    %329 = vmatpush.bf16.msra.mxu0 %v109
    %330 = vmatpush.bf16.msra.mxu0 %v108
    %331 = vmatpush.bf16.msra.mxu0 %v107
    %332 = vmatpush.bf16.msra.mxu0 %v106
    %333 = vmatpush.bf16.msra.mxu0 %v105
    %334 = vmatpush.bf16.msra.mxu0 %v104
    %335 = vmatmul.bf16.gmra.mxu0 %v322
    %v336 = vpop.f32.mrf.mxu0
    %v337 = vadd.f32 %v57, %v336
    %v338 = vpop.f32.mrf.mxu0
    %339 = vdwg.mxu0
    %340 = vmatpush.bf16.msra.mxu0 0
    %341 = vmatpush.bf16.msra.mxu0 0
    %342 = vmatpush.bf16.msra.mxu0 0
    %343 = vmatpush.bf16.msra.mxu0 0
    %344 = vmatpush.bf16.msra.mxu0 0
    %345 = vmatpush.bf16.msra.mxu0 0
    %346 = vmatpush.bf16.msra.mxu0 %v113
    %347 = vmatpush.bf16.msra.mxu0 %v112
    %348 = vmatmul.bf16.gmra.mxu0 %v325
    %v349 = vpop.f32.mrf.mxu0
    %v350 = vadd.f32 %v337, %v349
    %v351 = vpop.f32.mrf.mxu0
    %352 = vdwg.mxu0
    %v353 = vmax.f32 %v350, 0.0
    %v354 = vmax.f32 %v317, %v353
    %s355 = scalar_lea.vmem %s0, 102
    %v356 = vld [vmem:[%s355] sm:$0x3]
    %358 = vst [vmem:[#allocation1] ss:$9 sm:$0xff] %v356
    %v359 = vld [vmem:[#allocation1] sm:$0xff]
    %v360 = vld [vmem:[#allocation1 + $0x9] sm:$0xff]
    %v362 = vsel %vm124, %v360, 0
    %364 = vmatpush.bf16.msra.mxu0 %v111
    %365 = vmatpush.bf16.msra.mxu0 %v110
    %366 = vmatpush.bf16.msra.mxu0 %v109
    %367 = vmatpush.bf16.msra.mxu0 %v108
    %368 = vmatpush.bf16.msra.mxu0 %v107
    %369 = vmatpush.bf16.msra.mxu0 %v106
    %370 = vmatpush.bf16.msra.mxu0 %v105
    %371 = vmatpush.bf16.msra.mxu0 %v104
    %372 = vmatmul.bf16.gmra.mxu0 %v359
    %v373 = vpop.f32.mrf.mxu0
    %v374 = vadd.f32 %v57, %v373
    %v375 = vpop.f32.mrf.mxu0
    %376 = vdwg.mxu0
    %377 = vmatpush.bf16.msra.mxu0 0
    %378 = vmatpush.bf16.msra.mxu0 0
    %379 = vmatpush.bf16.msra.mxu0 0
    %380 = vmatpush.bf16.msra.mxu0 0
    %381 = vmatpush.bf16.msra.mxu0 0
    %382 = vmatpush.bf16.msra.mxu0 0
    %383 = vmatpush.bf16.msra.mxu0 %v113
    %384 = vmatpush.bf16.msra.mxu0 %v112
    %385 = vmatmul.bf16.gmra.mxu0 %v362
    %v386 = vpop.f32.mrf.mxu0
    %v387 = vadd.f32 %v374, %v386
    %v388 = vpop.f32.mrf.mxu0
    %389 = vdwg.mxu0
    %v390 = vmax.f32 %v387, 0.0
    %v391 = vmax.f32 %v354, %v390
    %s392 = scalar_lea.vmem %s0, 152
    %v393 = vld [vmem:[%s392] sm:$0x3]
    %395 = vst [vmem:[#allocation1] ss:$9 sm:$0xff] %v393
    %v396 = vld [vmem:[#allocation1] sm:$0xff]
    %v397 = vld [vmem:[#allocation1 + $0x9] sm:$0xff]
    %v399 = vsel %vm124, %v397, 0
    %401 = vmatpush.bf16.msra.mxu0 %v111
    %402 = vmatpush.bf16.msra.mxu0 %v110
    %403 = vmatpush.bf16.msra.mxu0 %v109
    %404 = vmatpush.bf16.msra.mxu0 %v108
    %405 = vmatpush.bf16.msra.mxu0 %v107
    %406 = vmatpush.bf16.msra.mxu0 %v106
    %407 = vmatpush.bf16.msra.mxu0 %v105
    %408 = vmatpush.bf16.msra.mxu0 %v104
    %409 = vmatmul.bf16.gmra.mxu0 %v396
    %v410 = vpop.f32.mrf.mxu0
    %v411 = vadd.f32 %v57, %v410
    %v412 = vpop.f32.mrf.mxu0
    %413 = vdwg.mxu0
    %414 = vmatpush.bf16.msra.mxu0 0
    %415 = vmatpush.bf16.msra.mxu0 0
    %416 = vmatpush.bf16.msra.mxu0 0
    %417 = vmatpush.bf16.msra.mxu0 0
    %418 = vmatpush.bf16.msra.mxu0 0
    %419 = vmatpush.bf16.msra.mxu0 0
    %420 = vmatpush.bf16.msra.mxu0 %v113
    %421 = vmatpush.bf16.msra.mxu0 %v112
    %422 = vmatmul.bf16.gmra.mxu0 %v399
    %v423 = vpop.f32.mrf.mxu0
    %v424 = vadd.f32 %v411, %v423
    %v425 = vpop.f32.mrf.mxu0
    %426 = vdwg.mxu0
    %v427 = vmax.f32 %v424, 0.0
    %v428 = vmax.f32 %v391, %v427
    %v429 = vpack.c.bf16 %v428, %v428
    %s430 = scalar_lea.vmem %s3, 64
    %v431 = vld [vmem:[%s430] sm:$0xf]
    %v432 = vld [vmem:[%s430 + $0x4] sm:$0xf]
    %v433 = vld [vmem:[%s430 + $0x8] sm:$0xf]
    %v434 = vld [vmem:[%s430 + $0xc] sm:$0xf]
    %v435 = vld [vmem:[%s430 + $0x10] sm:$0xf]
    %v436 = vld [vmem:[%s430 + $0x14] sm:$0xf]
    %v437 = vld [vmem:[%s430 + $0x18] sm:$0xf]
    %v438 = vld [vmem:[%s430 + $0x1c] sm:$0xf]
    %v439 = vld [vmem:[%s430 + $0x20] sm:$0xf]
    %v440 = vld [vmem:[%s430 + $0x24] sm:$0xf]
    %v441 = vld [vmem:[%s430 + $0x28] sm:$0xf]
    %v442 = vld [vmem:[%s430 + $0x2c] sm:$0xf]
    %v443 = vld [vmem:[%s430 + $0x30] sm:$0xf]
    %v444 = vld [vmem:[%s430 + $0x34] sm:$0xf]
    %v445 = vld [vmem:[%s430 + $0x38] sm:$0xf]
    %v446 = vld [vmem:[%s430 + $0x3c] sm:$0xf]
    %v463 = vunpack.c.l.b16 %v431
    %v464 = vunpack.c.l.b16 %v432
    %v465 = vunpack.c.l.b16 %v433
    %v466 = vunpack.c.l.b16 %v434
    %v467 = vunpack.c.l.b16 %v435
    %v468 = vunpack.c.l.b16 %v436
    %v469 = vunpack.c.l.b16 %v437
    %v470 = vunpack.c.l.b16 %v438
    %v471 = vunpack.c.l.b16 %v439
    %v472 = vunpack.c.l.b16 %v440
    %v473 = vunpack.c.l.b16 %v441
    %v474 = vunpack.c.l.b16 %v442
    %v475 = vunpack.c.l.b16 %v443
    %v476 = vunpack.c.l.b16 %v444
    %v477 = vunpack.c.l.b16 %v445
    %v478 = vunpack.c.l.b16 %v446
    %v479 = vpack.c.b16 %v464, %v463
    %v480 = vpack.c.b16 %v466, %v465
    %v481 = vpack.c.b16 %v468, %v467
    %v482 = vpack.c.b16 %v470, %v469
    %v483 = vpack.c.b16 %v472, %v471
    %v484 = vpack.c.b16 %v474, %v473
    %v485 = vpack.c.b16 %v476, %v475
    %v486 = vpack.c.b16 %v478, %v477
    %495 = vmatpush.bf16.msra.mxu0 %v486
    %496 = vmatpush.bf16.msra.mxu0 %v485
    %497 = vmatpush.bf16.msra.mxu0 %v484
    %498 = vmatpush.bf16.msra.mxu0 %v483
    %499 = vmatpush.bf16.msra.mxu0 %v482
    %500 = vmatpush.bf16.msra.mxu0 %v481
    %501 = vmatpush.bf16.msra.mxu0 %v480
    %502 = vmatpush.bf16.msra.mxu0 %v479
    %503 = vmatmul.bf16.gmra.mxu0 %v429
    %v504 = vpop.f32.mrf.mxu0
    %v505 = vadd.f32 0.0, %v504
    %v506 = vpop.f32.mrf.mxu0
    %507 = vdwg.mxu0
    %v524 = vunpack.c.l.b16 %v266
    %v525 = vunpack.c.l.b16 %v267
    %v526 = vunpack.c.l.b16 %v268
    %v527 = vunpack.c.l.b16 %v269
    %v528 = vunpack.c.l.b16 %v270
    %v529 = vunpack.c.l.b16 %v271
    %v530 = vunpack.c.l.b16 %v272
    %v531 = vunpack.c.l.b16 %v273
    %v532 = vunpack.c.l.b16 %v274
    %v533 = vunpack.c.l.b16 %v275
    %v534 = vunpack.c.l.b16 %v276
    %v535 = vunpack.c.l.b16 %v277
    %v536 = vunpack.c.l.b16 %v278
    %v537 = vunpack.c.l.b16 %v279
    %v538 = vunpack.c.l.b16 %v280
    %v539 = vunpack.c.l.b16 %v281
    %v540 = vpack.c.b16 %v525, %v524
    %v541 = vpack.c.b16 %v527, %v526
    %v542 = vpack.c.b16 %v529, %v528
    %v543 = vpack.c.b16 %v531, %v530
    %v544 = vpack.c.b16 %v533, %v532
    %v545 = vpack.c.b16 %v535, %v534
    %v546 = vpack.c.b16 %v537, %v536
    %v547 = vpack.c.b16 %v539, %v538
    %556 = vmatpush.bf16.msra.mxu0 %v547
    %557 = vmatpush.bf16.msra.mxu0 %v546
    %558 = vmatpush.bf16.msra.mxu0 %v545
    %559 = vmatpush.bf16.msra.mxu0 %v544
    %560 = vmatpush.bf16.msra.mxu0 %v543
    %561 = vmatpush.bf16.msra.mxu0 %v542
    %562 = vmatpush.bf16.msra.mxu0 %v541
    %563 = vmatpush.bf16.msra.mxu0 %v540
    %564 = vmatmul.bf16.gmra.mxu0 %v265
    %v565 = vpop.f32.mrf.mxu0
    %v566 = vadd.f32 %v505, %v565
    %v567 = vpop.f32.mrf.mxu0
    %568 = vdwg.mxu0
    %s569 = scalar_lea.vmem %s0, 4
    %v570 = vld [vmem:[%s569] sm:$0x3]
    %572 = vst [vmem:[#allocation1] ss:$9 sm:$0xff] %v570
    %v573 = vld [vmem:[#allocation1] sm:$0xff]
    %v574 = vld [vmem:[#allocation1 + $0x9] sm:$0xff]
    %v576 = vsel %vm124, %v574, 0
    %578 = vmatpush.bf16.msra.mxu0 %v111
    %579 = vmatpush.bf16.msra.mxu0 %v110
    %580 = vmatpush.bf16.msra.mxu0 %v109
    %581 = vmatpush.bf16.msra.mxu0 %v108
    %582 = vmatpush.bf16.msra.mxu0 %v107
    %583 = vmatpush.bf16.msra.mxu0 %v106
    %584 = vmatpush.bf16.msra.mxu0 %v105
    %585 = vmatpush.bf16.msra.mxu0 %v104
    %586 = vmatmul.bf16.gmra.mxu0 %v573
    %v587 = vpop.f32.mrf.mxu0
    %v588 = vadd.f32 %v57, %v587
    %v589 = vpop.f32.mrf.mxu0
    %590 = vdwg.mxu0
    %591 = vmatpush.bf16.msra.mxu0 0
    %592 = vmatpush.bf16.msra.mxu0 0
    %593 = vmatpush.bf16.msra.mxu0 0
    %594 = vmatpush.bf16.msra.mxu0 0
    %595 = vmatpush.bf16.msra.mxu0 0
    %596 = vmatpush.bf16.msra.mxu0 0
    %597 = vmatpush.bf16.msra.mxu0 %v113
    %598 = vmatpush.bf16.msra.mxu0 %v112
    %599 = vmatmul.bf16.gmra.mxu0 %v576
    %v600 = vpop.f32.mrf.mxu0
    %v601 = vadd.f32 %v588, %v600
    %v602 = vpop.f32.mrf.mxu0
    %603 = vdwg.mxu0
    %v604 = vmax.f32 %v601, 0.0
    %s605 = scalar_lea.vmem %s0, 54
    %v606 = vld [vmem:[%s605] sm:$0x3]
    %608 = vst [vmem:[#allocation1] ss:$9 sm:$0xff] %v606
    %v609 = vld [vmem:[#allocation1] sm:$0xff]
    %v610 = vld [vmem:[#allocation1 + $0x9] sm:$0xff]
    %v612 = vsel %vm124, %v610, 0
    %614 = vmatpush.bf16.msra.mxu0 %v111
    %615 = vmatpush.bf16.msra.mxu0 %v110
    %616 = vmatpush.bf16.msra.mxu0 %v109
    %617 = vmatpush.bf16.msra.mxu0 %v108
    %618 = vmatpush.bf16.msra.mxu0 %v107
    %619 = vmatpush.bf16.msra.mxu0 %v106
    %620 = vmatpush.bf16.msra.mxu0 %v105
    %621 = vmatpush.bf16.msra.mxu0 %v104
    %622 = vmatmul.bf16.gmra.mxu0 %v609
    %v623 = vpop.f32.mrf.mxu0
    %v624 = vadd.f32 %v57, %v623
    %v625 = vpop.f32.mrf.mxu0
    %626 = vdwg.mxu0
    %627 = vmatpush.bf16.msra.mxu0 0
    %628 = vmatpush.bf16.msra.mxu0 0
    %629 = vmatpush.bf16.msra.mxu0 0
    %630 = vmatpush.bf16.msra.mxu0 0
    %631 = vmatpush.bf16.msra.mxu0 0
    %632 = vmatpush.bf16.msra.mxu0 0
    %633 = vmatpush.bf16.msra.mxu0 %v113
    %634 = vmatpush.bf16.msra.mxu0 %v112
    %635 = vmatmul.bf16.gmra.mxu0 %v612
    %v636 = vpop.f32.mrf.mxu0
    %v637 = vadd.f32 %v624, %v636
    %v638 = vpop.f32.mrf.mxu0
    %639 = vdwg.mxu0
    %v640 = vmax.f32 %v637, 0.0
    %v641 = vmax.f32 %v604, %v640
    %s642 = scalar_lea.vmem %s0, 104
    %v643 = vld [vmem:[%s642] sm:$0x3]
    %645 = vst [vmem:[#allocation1] ss:$9 sm:$0xff] %v643
    %v646 = vld [vmem:[#allocation1] sm:$0xff]
    %v647 = vld [vmem:[#allocation1 + $0x9] sm:$0xff]
    %v649 = vsel %vm124, %v647, 0
    %651 = vmatpush.bf16.msra.mxu0 %v111
    %652 = vmatpush.bf16.msra.mxu0 %v110
    %653 = vmatpush.bf16.msra.mxu0 %v109
    %654 = vmatpush.bf16.msra.mxu0 %v108
    %655 = vmatpush.bf16.msra.mxu0 %v107
    %656 = vmatpush.bf16.msra.mxu0 %v106
    %657 = vmatpush.bf16.msra.mxu0 %v105
    %658 = vmatpush.bf16.msra.mxu0 %v104
    %659 = vmatmul.bf16.gmra.mxu0 %v646
    %v660 = vpop.f32.mrf.mxu0
    %v661 = vadd.f32 %v57, %v660
    %v662 = vpop.f32.mrf.mxu0
    %663 = vdwg.mxu0
    %664 = vmatpush.bf16.msra.mxu0 0
    %665 = vmatpush.bf16.msra.mxu0 0
    %666 = vmatpush.bf16.msra.mxu0 0
    %667 = vmatpush.bf16.msra.mxu0 0
    %668 = vmatpush.bf16.msra.mxu0 0
    %669 = vmatpush.bf16.msra.mxu0 0
    %670 = vmatpush.bf16.msra.mxu0 %v113
    %671 = vmatpush.bf16.msra.mxu0 %v112
    %672 = vmatmul.bf16.gmra.mxu0 %v649
    %v673 = vpop.f32.mrf.mxu0
    %v674 = vadd.f32 %v661, %v673
    %v675 = vpop.f32.mrf.mxu0
    %676 = vdwg.mxu0
    %v677 = vmax.f32 %v674, 0.0
    %v678 = vmax.f32 %v641, %v677
    %s679 = scalar_lea.vmem %s0, 154
    %v680 = vld [vmem:[%s679] sm:$0x3]
    %682 = vst [vmem:[#allocation1] ss:$9 sm:$0xff] %v680
    %v683 = vld [vmem:[#allocation1] sm:$0xff]
    %v684 = vld [vmem:[#allocation1 + $0x9] sm:$0xff]
    %v686 = vsel %vm124, %v684, 0
    %688 = vmatpush.bf16.msra.mxu0 %v111
    %689 = vmatpush.bf16.msra.mxu0 %v110
    %690 = vmatpush.bf16.msra.mxu0 %v109
    %691 = vmatpush.bf16.msra.mxu0 %v108
    %692 = vmatpush.bf16.msra.mxu0 %v107
    %693 = vmatpush.bf16.msra.mxu0 %v106
    %694 = vmatpush.bf16.msra.mxu0 %v105
    %695 = vmatpush.bf16.msra.mxu0 %v104
    %696 = vmatmul.bf16.gmra.mxu0 %v683
    %v697 = vpop.f32.mrf.mxu0
    %v698 = vadd.f32 %v57, %v697
    %v699 = vpop.f32.mrf.mxu0
    %700 = vdwg.mxu0
    %701 = vmatpush.bf16.msra.mxu0 0
    %702 = vmatpush.bf16.msra.mxu0 0
    %703 = vmatpush.bf16.msra.mxu0 0
    %704 = vmatpush.bf16.msra.mxu0 0
    %705 = vmatpush.bf16.msra.mxu0 0
    %706 = vmatpush.bf16.msra.mxu0 0
    %707 = vmatpush.bf16.msra.mxu0 %v113
    %708 = vmatpush.bf16.msra.mxu0 %v112
    %709 = vmatmul.bf16.gmra.mxu0 %v686
    %v710 = vpop.f32.mrf.mxu0
    %v711 = vadd.f32 %v698, %v710
    %v712 = vpop.f32.mrf.mxu0
    %713 = vdwg.mxu0
    %v714 = vmax.f32 %v711, 0.0
    %v715 = vmax.f32 %v678, %v714
    %v716 = vpack.c.bf16 %v715, %v715
    %s717 = scalar_lea.vmem %s3, 128
    %v718 = vld [vmem:[%s717] sm:$0xf]
    %v719 = vld [vmem:[%s717 + $0x4] sm:$0xf]
    %v720 = vld [vmem:[%s717 + $0x8] sm:$0xf]
    %v721 = vld [vmem:[%s717 + $0xc] sm:$0xf]
    %v722 = vld [vmem:[%s717 + $0x10] sm:$0xf]
    %v723 = vld [vmem:[%s717 + $0x14] sm:$0xf]
    %v724 = vld [vmem:[%s717 + $0x18] sm:$0xf]
    %v725 = vld [vmem:[%s717 + $0x1c] sm:$0xf]
    %v726 = vld [vmem:[%s717 + $0x20] sm:$0xf]
    %v727 = vld [vmem:[%s717 + $0x24] sm:$0xf]
    %v728 = vld [vmem:[%s717 + $0x28] sm:$0xf]
    %v729 = vld [vmem:[%s717 + $0x2c] sm:$0xf]
    %v730 = vld [vmem:[%s717 + $0x30] sm:$0xf]
    %v731 = vld [vmem:[%s717 + $0x34] sm:$0xf]
    %v732 = vld [vmem:[%s717 + $0x38] sm:$0xf]
    %v733 = vld [vmem:[%s717 + $0x3c] sm:$0xf]
    %v750 = vunpack.c.l.b16 %v718
    %v751 = vunpack.c.l.b16 %v719
    %v752 = vunpack.c.l.b16 %v720
    %v753 = vunpack.c.l.b16 %v721
    %v754 = vunpack.c.l.b16 %v722
    %v755 = vunpack.c.l.b16 %v723
    %v756 = vunpack.c.l.b16 %v724
    %v757 = vunpack.c.l.b16 %v725
    %v758 = vunpack.c.l.b16 %v726
    %v759 = vunpack.c.l.b16 %v727
    %v760 = vunpack.c.l.b16 %v728
    %v761 = vunpack.c.l.b16 %v729
    %v762 = vunpack.c.l.b16 %v730
    %v763 = vunpack.c.l.b16 %v731
    %v764 = vunpack.c.l.b16 %v732
    %v765 = vunpack.c.l.b16 %v733
    %v766 = vpack.c.b16 %v751, %v750
    %v767 = vpack.c.b16 %v753, %v752
    %v768 = vpack.c.b16 %v755, %v754
    %v769 = vpack.c.b16 %v757, %v756
    %v770 = vpack.c.b16 %v759, %v758
    %v771 = vpack.c.b16 %v761, %v760
    %v772 = vpack.c.b16 %v763, %v762
    %v773 = vpack.c.b16 %v765, %v764
    %782 = vmatpush.bf16.msra.mxu0 %v773
    %783 = vmatpush.bf16.msra.mxu0 %v772
    %784 = vmatpush.bf16.msra.mxu0 %v771
    %785 = vmatpush.bf16.msra.mxu0 %v770
    %786 = vmatpush.bf16.msra.mxu0 %v769
    %787 = vmatpush.bf16.msra.mxu0 %v768
    %788 = vmatpush.bf16.msra.mxu0 %v767
    %789 = vmatpush.bf16.msra.mxu0 %v766
    %790 = vmatmul.bf16.gmra.mxu0 %v716
    %v791 = vpop.f32.mrf.mxu0
    %v792 = vadd.f32 0.0, %v791
    %v793 = vpop.f32.mrf.mxu0
    %794 = vdwg.mxu0
    %v795 = vadd.f32 %v566, %v792
    %s796 = scalar_lea.vmem %s0, 6
    %v797 = vld [vmem:[%s796] sm:$0x3]
    %799 = vst [vmem:[#allocation1] ss:$9 sm:$0xff] %v797
    %v800 = vld [vmem:[#allocation1] sm:$0xff]
    %v801 = vld [vmem:[#allocation1 + $0x9] sm:$0xff]
    %v803 = vsel %vm124, %v801, 0
    %805 = vmatpush.bf16.msra.mxu0 %v111
    %806 = vmatpush.bf16.msra.mxu0 %v110
    %807 = vmatpush.bf16.msra.mxu0 %v109
    %808 = vmatpush.bf16.msra.mxu0 %v108
    %809 = vmatpush.bf16.msra.mxu0 %v107
    %810 = vmatpush.bf16.msra.mxu0 %v106
    %811 = vmatpush.bf16.msra.mxu0 %v105
    %812 = vmatpush.bf16.msra.mxu0 %v104
    %813 = vmatmul.bf16.gmra.mxu0 %v800
    %v814 = vpop.f32.mrf.mxu0
    %v815 = vadd.f32 %v57, %v814
    %v816 = vpop.f32.mrf.mxu0
    %817 = vdwg.mxu0
    %818 = vmatpush.bf16.msra.mxu0 0
    %819 = vmatpush.bf16.msra.mxu0 0
    %820 = vmatpush.bf16.msra.mxu0 0
    %821 = vmatpush.bf16.msra.mxu0 0
    %822 = vmatpush.bf16.msra.mxu0 0
    %823 = vmatpush.bf16.msra.mxu0 0
    %824 = vmatpush.bf16.msra.mxu0 %v113
    %825 = vmatpush.bf16.msra.mxu0 %v112
    %826 = vmatmul.bf16.gmra.mxu0 %v803
    %v827 = vpop.f32.mrf.mxu0
    %v828 = vadd.f32 %v815, %v827
    %v829 = vpop.f32.mrf.mxu0
    %830 = vdwg.mxu0
    %v831 = vmax.f32 %v828, 0.0
    %s832 = scalar_lea.vmem %s0, 56
    %v833 = vld [vmem:[%s832] sm:$0x3]
    %835 = vst [vmem:[#allocation1] ss:$9 sm:$0xff] %v833
    %v836 = vld [vmem:[#allocation1] sm:$0xff]
    %v837 = vld [vmem:[#allocation1 + $0x9] sm:$0xff]
    %v839 = vsel %vm124, %v837, 0
    %841 = vmatpush.bf16.msra.mxu0 %v111
    %842 = vmatpush.bf16.msra.mxu0 %v110
    %843 = vmatpush.bf16.msra.mxu0 %v109
    %844 = vmatpush.bf16.msra.mxu0 %v108
    %845 = vmatpush.bf16.msra.mxu0 %v107
    %846 = vmatpush.bf16.msra.mxu0 %v106
    %847 = vmatpush.bf16.msra.mxu0 %v105
    %848 = vmatpush.bf16.msra.mxu0 %v104
    %849 = vmatmul.bf16.gmra.mxu0 %v836
    %v850 = vpop.f32.mrf.mxu0
    %v851 = vadd.f32 %v57, %v850
    %v852 = vpop.f32.mrf.mxu0
    %853 = vdwg.mxu0
    %854 = vmatpush.bf16.msra.mxu0 0
    %855 = vmatpush.bf16.msra.mxu0 0
    %856 = vmatpush.bf16.msra.mxu0 0
    %857 = vmatpush.bf16.msra.mxu0 0
    %858 = vmatpush.bf16.msra.mxu0 0
    %859 = vmatpush.bf16.msra.mxu0 0
    %860 = vmatpush.bf16.msra.mxu0 %v113
    %861 = vmatpush.bf16.msra.mxu0 %v112
    %862 = vmatmul.bf16.gmra.mxu0 %v839
    %v863 = vpop.f32.mrf.mxu0
    %v864 = vadd.f32 %v851, %v863
    %v865 = vpop.f32.mrf.mxu0
    %866 = vdwg.mxu0
    %v867 = vmax.f32 %v864, 0.0
    %v868 = vmax.f32 %v831, %v867
    %s869 = scalar_lea.vmem %s0, 106
    %v870 = vld [vmem:[%s869] sm:$0x3]
    %872 = vst [vmem:[#allocation1] ss:$9 sm:$0xff] %v870
    %v873 = vld [vmem:[#allocation1] sm:$0xff]
    %v874 = vld [vmem:[#allocation1 + $0x9] sm:$0xff]
    %v876 = vsel %vm124, %v874, 0
    %878 = vmatpush.bf16.msra.mxu0 %v111
    %879 = vmatpush.bf16.msra.mxu0 %v110
    %880 = vmatpush.bf16.msra.mxu0 %v109
    %881 = vmatpush.bf16.msra.mxu0 %v108
    %882 = vmatpush.bf16.msra.mxu0 %v107
    %883 = vmatpush.bf16.msra.mxu0 %v106
    %884 = vmatpush.bf16.msra.mxu0 %v105
    %885 = vmatpush.bf16.msra.mxu0 %v104
    %886 = vmatmul.bf16.gmra.mxu0 %v873
    %v887 = vpop.f32.mrf.mxu0
    %v888 = vadd.f32 %v57, %v887
    %v889 = vpop.f32.mrf.mxu0
    %890 = vdwg.mxu0
    %891 = vmatpush.bf16.msra.mxu0 0
    %892 = vmatpush.bf16.msra.mxu0 0
    %893 = vmatpush.bf16.msra.mxu0 0
    %894 = vmatpush.bf16.msra.mxu0 0
    %895 = vmatpush.bf16.msra.mxu0 0
    %896 = vmatpush.bf16.msra.mxu0 0
    %897 = vmatpush.bf16.msra.mxu0 %v113
    %898 = vmatpush.bf16.msra.mxu0 %v112
    %899 = vmatmul.bf16.gmra.mxu0 %v876
    %v900 = vpop.f32.mrf.mxu0
    %v901 = vadd.f32 %v888, %v900
    %v902 = vpop.f32.mrf.mxu0
    %903 = vdwg.mxu0
    %v904 = vmax.f32 %v901, 0.0
    %v905 = vmax.f32 %v868, %v904
    %s906 = scalar_lea.vmem %s0, 156
    %v907 = vld [vmem:[%s906] sm:$0x3]
    %909 = vst [vmem:[#allocation1] ss:$9 sm:$0xff] %v907
    %v910 = vld [vmem:[#allocation1] sm:$0xff]
    %v911 = vld [vmem:[#allocation1 + $0x9] sm:$0xff]
    %v913 = vsel %vm124, %v911, 0
    %915 = vmatpush.bf16.msra.mxu0 %v111
    %916 = vmatpush.bf16.msra.mxu0 %v110
    %917 = vmatpush.bf16.msra.mxu0 %v109
    %918 = vmatpush.bf16.msra.mxu0 %v108
    %919 = vmatpush.bf16.msra.mxu0 %v107
    %920 = vmatpush.bf16.msra.mxu0 %v106
    %921 = vmatpush.bf16.msra.mxu0 %v105
    %922 = vmatpush.bf16.msra.mxu0 %v104
    %923 = vmatmul.bf16.gmra.mxu0 %v910
    %v924 = vpop.f32.mrf.mxu0
    %v925 = vadd.f32 %v57, %v924
    %v926 = vpop.f32.mrf.mxu0
    %927 = vdwg.mxu0
    %928 = vmatpush.bf16.msra.mxu0 0
    %929 = vmatpush.bf16.msra.mxu0 0
    %930 = vmatpush.bf16.msra.mxu0 0
    %931 = vmatpush.bf16.msra.mxu0 0
    %932 = vmatpush.bf16.msra.mxu0 0
    %933 = vmatpush.bf16.msra.mxu0 0
    %934 = vmatpush.bf16.msra.mxu0 %v113
    %935 = vmatpush.bf16.msra.mxu0 %v112
    %936 = vmatmul.bf16.gmra.mxu0 %v913
    %v937 = vpop.f32.mrf.mxu0
    %v938 = vadd.f32 %v925, %v937
    %v939 = vpop.f32.mrf.mxu0
    %940 = vdwg.mxu0
    %v941 = vmax.f32 %v938, 0.0
    %v942 = vmax.f32 %v905, %v941
    %v943 = vpack.c.bf16 %v942, %v942
    %s944 = scalar_lea.vmem %s3, 192
    %v945 = vld [vmem:[%s944] sm:$0xf]
    %v946 = vld [vmem:[%s944 + $0x4] sm:$0xf]
    %v947 = vld [vmem:[%s944 + $0x8] sm:$0xf]
    %v948 = vld [vmem:[%s944 + $0xc] sm:$0xf]
    %v949 = vld [vmem:[%s944 + $0x10] sm:$0xf]
    %v950 = vld [vmem:[%s944 + $0x14] sm:$0xf]
    %v951 = vld [vmem:[%s944 + $0x18] sm:$0xf]
    %v952 = vld [vmem:[%s944 + $0x1c] sm:$0xf]
    %v953 = vld [vmem:[%s944 + $0x20] sm:$0xf]
    %v954 = vld [vmem:[%s944 + $0x24] sm:$0xf]
    %v955 = vld [vmem:[%s944 + $0x28] sm:$0xf]
    %v956 = vld [vmem:[%s944 + $0x2c] sm:$0xf]
    %v957 = vld [vmem:[%s944 + $0x30] sm:$0xf]
    %v958 = vld [vmem:[%s944 + $0x34] sm:$0xf]
    %v959 = vld [vmem:[%s944 + $0x38] sm:$0xf]
    %v960 = vld [vmem:[%s944 + $0x3c] sm:$0xf]
    %v977 = vunpack.c.l.b16 %v945
    %v978 = vunpack.c.l.b16 %v946
    %v979 = vunpack.c.l.b16 %v947
    %v980 = vunpack.c.l.b16 %v948
    %v981 = vunpack.c.l.b16 %v949
    %v982 = vunpack.c.l.b16 %v950
    %v983 = vunpack.c.l.b16 %v951
    %v984 = vunpack.c.l.b16 %v952
    %v985 = vunpack.c.l.b16 %v953
    %v986 = vunpack.c.l.b16 %v954
    %v987 = vunpack.c.l.b16 %v955
    %v988 = vunpack.c.l.b16 %v956
    %v989 = vunpack.c.l.b16 %v957
    %v990 = vunpack.c.l.b16 %v958
    %v991 = vunpack.c.l.b16 %v959
    %v992 = vunpack.c.l.b16 %v960
    %v993 = vpack.c.b16 %v978, %v977
    %v994 = vpack.c.b16 %v980, %v979
    %v995 = vpack.c.b16 %v982, %v981
    %v996 = vpack.c.b16 %v984, %v983
    %v997 = vpack.c.b16 %v986, %v985
    %v998 = vpack.c.b16 %v988, %v987
    %v999 = vpack.c.b16 %v990, %v989
    %v1000 = vpack.c.b16 %v992, %v991
    %1009 = vmatpush.bf16.msra.mxu0 %v1000
    %1010 = vmatpush.bf16.msra.mxu0 %v999
    %1011 = vmatpush.bf16.msra.mxu0 %v998
    %1012 = vmatpush.bf16.msra.mxu0 %v997
    %1013 = vmatpush.bf16.msra.mxu0 %v996
    %1014 = vmatpush.bf16.msra.mxu0 %v995
    %1015 = vmatpush.bf16.msra.mxu0 %v994
    %1016 = vmatpush.bf16.msra.mxu0 %v993
    %1017 = vmatmul.bf16.gmra.mxu0 %v943
    %v1018 = vpop.f32.mrf.mxu0
    %v1019 = vadd.f32 0.0, %v1018
    %v1020 = vpop.f32.mrf.mxu0
    %1021 = vdwg.mxu0
    %v1022 = vadd.f32 %v795, %v1019
    %s1023 = scalar_lea.vmem %s0, 8
    %v1024 = vld [vmem:[%s1023] sm:$0x3]
    %1026 = vst [vmem:[#allocation1] ss:$9 sm:$0xff] %v1024
    %v1027 = vld [vmem:[#allocation1] sm:$0xff]
    %v1028 = vld [vmem:[#allocation1 + $0x9] sm:$0xff]
    %v1030 = vsel %vm124, %v1028, 0
    %1032 = vmatpush.bf16.msra.mxu0 %v111
    %1033 = vmatpush.bf16.msra.mxu0 %v110
    %1034 = vmatpush.bf16.msra.mxu0 %v109
    %1035 = vmatpush.bf16.msra.mxu0 %v108
    %1036 = vmatpush.bf16.msra.mxu0 %v107
    %1037 = vmatpush.bf16.msra.mxu0 %v106
    %1038 = vmatpush.bf16.msra.mxu0 %v105
    %1039 = vmatpush.bf16.msra.mxu0 %v104
    %1040 = vmatmul.bf16.gmra.mxu0 %v1027
    %v1041 = vpop.f32.mrf.mxu0
    %v1042 = vadd.f32 %v57, %v1041
    %v1043 = vpop.f32.mrf.mxu0
    %1044 = vdwg.mxu0
    %1045 = vmatpush.bf16.msra.mxu0 0
    %1046 = vmatpush.bf16.msra.mxu0 0
    %1047 = vmatpush.bf16.msra.mxu0 0
    %1048 = vmatpush.bf16.msra.mxu0 0
    %1049 = vmatpush.bf16.msra.mxu0 0
    %1050 = vmatpush.bf16.msra.mxu0 0
    %1051 = vmatpush.bf16.msra.mxu0 %v113
    %1052 = vmatpush.bf16.msra.mxu0 %v112
    %1053 = vmatmul.bf16.gmra.mxu0 %v1030
    %v1054 = vpop.f32.mrf.mxu0
    %v1055 = vadd.f32 %v1042, %v1054
    %v1056 = vpop.f32.mrf.mxu0
    %1057 = vdwg.mxu0
    %v1058 = vmax.f32 %v1055, 0.0
    %s1059 = scalar_lea.vmem %s0, 58
    %v1060 = vld [vmem:[%s1059] sm:$0x3]
    %1062 = vst [vmem:[#allocation1] ss:$9 sm:$0xff] %v1060
    %v1063 = vld [vmem:[#allocation1] sm:$0xff]
    %v1064 = vld [vmem:[#allocation1 + $0x9] sm:$0xff]
    %v1066 = vsel %vm124, %v1064, 0
    %1068 = vmatpush.bf16.msra.mxu0 %v111
    %1069 = vmatpush.bf16.msra.mxu0 %v110
    %1070 = vmatpush.bf16.msra.mxu0 %v109
    %1071 = vmatpush.bf16.msra.mxu0 %v108
    %1072 = vmatpush.bf16.msra.mxu0 %v107
    %1073 = vmatpush.bf16.msra.mxu0 %v106
    %1074 = vmatpush.bf16.msra.mxu0 %v105
    %1075 = vmatpush.bf16.msra.mxu0 %v104
    %1076 = vmatmul.bf16.gmra.mxu0 %v1063
    %v1077 = vpop.f32.mrf.mxu0
    %v1078 = vadd.f32 %v57, %v1077
    %v1079 = vpop.f32.mrf.mxu0
    %1080 = vdwg.mxu0
    %1081 = vmatpush.bf16.msra.mxu0 0
    %1082 = vmatpush.bf16.msra.mxu0 0
    %1083 = vmatpush.bf16.msra.mxu0 0
    %1084 = vmatpush.bf16.msra.mxu0 0
    %1085 = vmatpush.bf16.msra.mxu0 0
    %1086 = vmatpush.bf16.msra.mxu0 0
    %1087 = vmatpush.bf16.msra.mxu0 %v113
    %1088 = vmatpush.bf16.msra.mxu0 %v112
    %1089 = vmatmul.bf16.gmra.mxu0 %v1066
    %v1090 = vpop.f32.mrf.mxu0
    %v1091 = vadd.f32 %v1078, %v1090
    %v1092 = vpop.f32.mrf.mxu0
    %1093 = vdwg.mxu0
    %v1094 = vmax.f32 %v1091, 0.0
    %v1095 = vmax.f32 %v1058, %v1094
    %s1096 = scalar_lea.vmem %s0, 108
    %v1097 = vld [vmem:[%s1096] sm:$0x3]
    %1099 = vst [vmem:[#allocation1] ss:$9 sm:$0xff] %v1097
    %v1100 = vld [vmem:[#allocation1] sm:$0xff]
    %v1101 = vld [vmem:[#allocation1 + $0x9] sm:$0xff]
    %v1103 = vsel %vm124, %v1101, 0
    %1105 = vmatpush.bf16.msra.mxu0 %v111
    %1106 = vmatpush.bf16.msra.mxu0 %v110
    %1107 = vmatpush.bf16.msra.mxu0 %v109
    %1108 = vmatpush.bf16.msra.mxu0 %v108
    %1109 = vmatpush.bf16.msra.mxu0 %v107
    %1110 = vmatpush.bf16.msra.mxu0 %v106
    %1111 = vmatpush.bf16.msra.mxu0 %v105
    %1112 = vmatpush.bf16.msra.mxu0 %v104
    %1113 = vmatmul.bf16.gmra.mxu0 %v1100
    %v1114 = vpop.f32.mrf.mxu0
    %v1115 = vadd.f32 %v57, %v1114
    %v1116 = vpop.f32.mrf.mxu0
    %1117 = vdwg.mxu0
    %1118 = vmatpush.bf16.msra.mxu0 0
    %1119 = vmatpush.bf16.msra.mxu0 0
    %1120 = vmatpush.bf16.msra.mxu0 0
    %1121 = vmatpush.bf16.msra.mxu0 0
    %1122 = vmatpush.bf16.msra.mxu0 0
    %1123 = vmatpush.bf16.msra.mxu0 0
    %1124 = vmatpush.bf16.msra.mxu0 %v113
    %1125 = vmatpush.bf16.msra.mxu0 %v112
    %1126 = vmatmul.bf16.gmra.mxu0 %v1103
    %v1127 = vpop.f32.mrf.mxu0
    %v1128 = vadd.f32 %v1115, %v1127
    %v1129 = vpop.f32.mrf.mxu0
    %1130 = vdwg.mxu0
    %v1131 = vmax.f32 %v1128, 0.0
    %v1132 = vmax.f32 %v1095, %v1131
    %s1133 = scalar_lea.vmem %s0, 158
    %v1134 = vld [vmem:[%s1133] sm:$0x3]
    %1136 = vst [vmem:[#allocation1] ss:$9 sm:$0xff] %v1134
    %v1137 = vld [vmem:[#allocation1] sm:$0xff]
    %v1138 = vld [vmem:[#allocation1 + $0x9] sm:$0xff]
    %v1140 = vsel %vm124, %v1138, 0
    %1142 = vmatpush.bf16.msra.mxu0 %v111
    %1143 = vmatpush.bf16.msra.mxu0 %v110
    %1144 = vmatpush.bf16.msra.mxu0 %v109
    %1145 = vmatpush.bf16.msra.mxu0 %v108
    %1146 = vmatpush.bf16.msra.mxu0 %v107
    %1147 = vmatpush.bf16.msra.mxu0 %v106
    %1148 = vmatpush.bf16.msra.mxu0 %v105
    %1149 = vmatpush.bf16.msra.mxu0 %v104
    %1150 = vmatmul.bf16.gmra.mxu0 %v1137
    %v1151 = vpop.f32.mrf.mxu0
    %v1152 = vadd.f32 %v57, %v1151
    %v1153 = vpop.f32.mrf.mxu0
    %1154 = vdwg.mxu0
    %1155 = vmatpush.bf16.msra.mxu0 0
    %1156 = vmatpush.bf16.msra.mxu0 0
    %1157 = vmatpush.bf16.msra.mxu0 0
    %1158 = vmatpush.bf16.msra.mxu0 0
    %1159 = vmatpush.bf16.msra.mxu0 0
    %1160 = vmatpush.bf16.msra.mxu0 0
    %1161 = vmatpush.bf16.msra.mxu0 %v113
    %1162 = vmatpush.bf16.msra.mxu0 %v112
    %1163 = vmatmul.bf16.gmra.mxu0 %v1140
    %v1164 = vpop.f32.mrf.mxu0
    %v1165 = vadd.f32 %v1152, %v1164
    %v1166 = vpop.f32.mrf.mxu0
    %1167 = vdwg.mxu0
    %v1168 = vmax.f32 %v1165, 0.0
    %v1169 = vmax.f32 %v1132, %v1168
    %v1170 = vpack.c.bf16 %v1169, %v1169
    %s1171 = scalar_lea.vmem %s3, 256
    %v1172 = vld [vmem:[%s1171] sm:$0xf]
    %v1173 = vld [vmem:[%s1171 + $0x4] sm:$0xf]
    %v1174 = vld [vmem:[%s1171 + $0x8] sm:$0xf]
    %v1175 = vld [vmem:[%s1171 + $0xc] sm:$0xf]
    %v1176 = vld [vmem:[%s1171 + $0x10] sm:$0xf]
    %v1177 = vld [vmem:[%s1171 + $0x14] sm:$0xf]
    %v1178 = vld [vmem:[%s1171 + $0x18] sm:$0xf]
    %v1179 = vld [vmem:[%s1171 + $0x1c] sm:$0xf]
    %v1180 = vld [vmem:[%s1171 + $0x20] sm:$0xf]
    %v1181 = vld [vmem:[%s1171 + $0x24] sm:$0xf]
    %v1182 = vld [vmem:[%s1171 + $0x28] sm:$0xf]
    %v1183 = vld [vmem:[%s1171 + $0x2c] sm:$0xf]
    %v1184 = vld [vmem:[%s1171 + $0x30] sm:$0xf]
    %v1185 = vld [vmem:[%s1171 + $0x34] sm:$0xf]
    %v1186 = vld [vmem:[%s1171 + $0x38] sm:$0xf]
    %v1187 = vld [vmem:[%s1171 + $0x3c] sm:$0xf]
    %v1204 = vunpack.c.l.b16 %v1172
    %v1205 = vunpack.c.l.b16 %v1173
    %v1206 = vunpack.c.l.b16 %v1174
    %v1207 = vunpack.c.l.b16 %v1175
    %v1208 = vunpack.c.l.b16 %v1176
    %v1209 = vunpack.c.l.b16 %v1177
    %v1210 = vunpack.c.l.b16 %v1178
    %v1211 = vunpack.c.l.b16 %v1179
    %v1212 = vunpack.c.l.b16 %v1180
    %v1213 = vunpack.c.l.b16 %v1181
    %v1214 = vunpack.c.l.b16 %v1182
    %v1215 = vunpack.c.l.b16 %v1183
    %v1216 = vunpack.c.l.b16 %v1184
    %v1217 = vunpack.c.l.b16 %v1185
    %v1218 = vunpack.c.l.b16 %v1186
    %v1219 = vunpack.c.l.b16 %v1187
    %v1220 = vpack.c.b16 %v1205, %v1204
    %v1221 = vpack.c.b16 %v1207, %v1206
    %v1222 = vpack.c.b16 %v1209, %v1208
    %v1223 = vpack.c.b16 %v1211, %v1210
    %v1224 = vpack.c.b16 %v1213, %v1212
    %v1225 = vpack.c.b16 %v1215, %v1214
    %v1226 = vpack.c.b16 %v1217, %v1216
    %v1227 = vpack.c.b16 %v1219, %v1218
    %1236 = vmatpush.bf16.msra.mxu0 %v1227
    %1237 = vmatpush.bf16.msra.mxu0 %v1226
    %1238 = vmatpush.bf16.msra.mxu0 %v1225
    %1239 = vmatpush.bf16.msra.mxu0 %v1224
    %1240 = vmatpush.bf16.msra.mxu0 %v1223
    %1241 = vmatpush.bf16.msra.mxu0 %v1222
    %1242 = vmatpush.bf16.msra.mxu0 %v1221
    %1243 = vmatpush.bf16.msra.mxu0 %v1220
    %1244 = vmatmul.bf16.gmra.mxu0 %v1170
    %v1245 = vpop.f32.mrf.mxu0
    %v1246 = vadd.f32 0.0, %v1245
    %v1247 = vpop.f32.mrf.mxu0
    %1248 = vdwg.mxu0
    %v1249 = vadd.f32 %v1022, %v1246
    %s1250 = scalar_lea.vmem %s0, 10
    %v1251 = vld [vmem:[%s1250] sm:$0x3]
    %1253 = vst [vmem:[#allocation1] ss:$9 sm:$0xff] %v1251
    %v1254 = vld [vmem:[#allocation1] sm:$0xff]
    %v1255 = vld [vmem:[#allocation1 + $0x9] sm:$0xff]
    %v1257 = vsel %vm124, %v1255, 0
    %1259 = vmatpush.bf16.msra.mxu0 %v111
    %1260 = vmatpush.bf16.msra.mxu0 %v110
    %1261 = vmatpush.bf16.msra.mxu0 %v109
    %1262 = vmatpush.bf16.msra.mxu0 %v108
    %1263 = vmatpush.bf16.msra.mxu0 %v107
    %1264 = vmatpush.bf16.msra.mxu0 %v106
    %1265 = vmatpush.bf16.msra.mxu0 %v105
    %1266 = vmatpush.bf16.msra.mxu0 %v104
    %1267 = vmatmul.bf16.gmra.mxu0 %v1254
    %v1268 = vpop.f32.mrf.mxu0
    %v1269 = vadd.f32 %v57, %v1268
    %v1270 = vpop.f32.mrf.mxu0
    %1271 = vdwg.mxu0
    %1272 = vmatpush.bf16.msra.mxu0 0
    %1273 = vmatpush.bf16.msra.mxu0 0
    %1274 = vmatpush.bf16.msra.mxu0 0
    %1275 = vmatpush.bf16.msra.mxu0 0
    %1276 = vmatpush.bf16.msra.mxu0 0
    %1277 = vmatpush.bf16.msra.mxu0 0
    %1278 = vmatpush.bf16.msra.mxu0 %v113
    %1279 = vmatpush.bf16.msra.mxu0 %v112
    %1280 = vmatmul.bf16.gmra.mxu0 %v1257
    %v1281 = vpop.f32.mrf.mxu0
    %v1282 = vadd.f32 %v1269, %v1281
    %v1283 = vpop.f32.mrf.mxu0
    %1284 = vdwg.mxu0
    %v1285 = vmax.f32 %v1282, 0.0
    %s1286 = scalar_lea.vmem %s0, 60
    %v1287 = vld [vmem:[%s1286] sm:$0x3]
    %1289 = vst [vmem:[#allocation1] ss:$9 sm:$0xff] %v1287
    %v1290 = vld [vmem:[#allocation1] sm:$0xff]
    %v1291 = vld [vmem:[#allocation1 + $0x9] sm:$0xff]
    %v1293 = vsel %vm124, %v1291, 0
    %1295 = vmatpush.bf16.msra.mxu0 %v111
    %1296 = vmatpush.bf16.msra.mxu0 %v110
    %1297 = vmatpush.bf16.msra.mxu0 %v109
    %1298 = vmatpush.bf16.msra.mxu0 %v108
    %1299 = vmatpush.bf16.msra.mxu0 %v107
    %1300 = vmatpush.bf16.msra.mxu0 %v106
    %1301 = vmatpush.bf16.msra.mxu0 %v105
    %1302 = vmatpush.bf16.msra.mxu0 %v104
    %1303 = vmatmul.bf16.gmra.mxu0 %v1290
    %v1304 = vpop.f32.mrf.mxu0
    %v1305 = vadd.f32 %v57, %v1304
    %v1306 = vpop.f32.mrf.mxu0
    %1307 = vdwg.mxu0
    %1308 = vmatpush.bf16.msra.mxu0 0
    %1309 = vmatpush.bf16.msra.mxu0 0
    %1310 = vmatpush.bf16.msra.mxu0 0
    %1311 = vmatpush.bf16.msra.mxu0 0
    %1312 = vmatpush.bf16.msra.mxu0 0
    %1313 = vmatpush.bf16.msra.mxu0 0
    %1314 = vmatpush.bf16.msra.mxu0 %v113
    %1315 = vmatpush.bf16.msra.mxu0 %v112
    %1316 = vmatmul.bf16.gmra.mxu0 %v1293
    %v1317 = vpop.f32.mrf.mxu0
    %v1318 = vadd.f32 %v1305, %v1317
    %v1319 = vpop.f32.mrf.mxu0
    %1320 = vdwg.mxu0
    %v1321 = vmax.f32 %v1318, 0.0
    %v1322 = vmax.f32 %v1285, %v1321
    %s1323 = scalar_lea.vmem %s0, 110
    %v1324 = vld [vmem:[%s1323] sm:$0x3]
    %1326 = vst [vmem:[#allocation1] ss:$9 sm:$0xff] %v1324
    %v1327 = vld [vmem:[#allocation1] sm:$0xff]
    %v1328 = vld [vmem:[#allocation1 + $0x9] sm:$0xff]
    %v1330 = vsel %vm124, %v1328, 0
    %1332 = vmatpush.bf16.msra.mxu0 %v111
    %1333 = vmatpush.bf16.msra.mxu0 %v110
    %1334 = vmatpush.bf16.msra.mxu0 %v109
    %1335 = vmatpush.bf16.msra.mxu0 %v108
    %1336 = vmatpush.bf16.msra.mxu0 %v107
    %1337 = vmatpush.bf16.msra.mxu0 %v106
    %1338 = vmatpush.bf16.msra.mxu0 %v105
    %1339 = vmatpush.bf16.msra.mxu0 %v104
    %1340 = vmatmul.bf16.gmra.mxu0 %v1327
    %v1341 = vpop.f32.mrf.mxu0
    %v1342 = vadd.f32 %v57, %v1341
    %v1343 = vpop.f32.mrf.mxu0
    %1344 = vdwg.mxu0
    %1345 = vmatpush.bf16.msra.mxu0 0
    %1346 = vmatpush.bf16.msra.mxu0 0
    %1347 = vmatpush.bf16.msra.mxu0 0
    %1348 = vmatpush.bf16.msra.mxu0 0
    %1349 = vmatpush.bf16.msra.mxu0 0
    %1350 = vmatpush.bf16.msra.mxu0 0
    %1351 = vmatpush.bf16.msra.mxu0 %v113
    %1352 = vmatpush.bf16.msra.mxu0 %v112
    %1353 = vmatmul.bf16.gmra.mxu0 %v1330
    %v1354 = vpop.f32.mrf.mxu0
    %v1355 = vadd.f32 %v1342, %v1354
    %v1356 = vpop.f32.mrf.mxu0
    %1357 = vdwg.mxu0
    %v1358 = vmax.f32 %v1355, 0.0
    %v1359 = vmax.f32 %v1322, %v1358
    %s1360 = scalar_lea.vmem %s0, 160
    %v1361 = vld [vmem:[%s1360] sm:$0x3]
    %1363 = vst [vmem:[#allocation1] ss:$9 sm:$0xff] %v1361
    %v1364 = vld [vmem:[#allocation1] sm:$0xff]
    %v1365 = vld [vmem:[#allocation1 + $0x9] sm:$0xff]
    %v1367 = vsel %vm124, %v1365, 0
    %1369 = vmatpush.bf16.msra.mxu0 %v111
    %1370 = vmatpush.bf16.msra.mxu0 %v110
    %1371 = vmatpush.bf16.msra.mxu0 %v109
    %1372 = vmatpush.bf16.msra.mxu0 %v108
    %1373 = vmatpush.bf16.msra.mxu0 %v107
    %1374 = vmatpush.bf16.msra.mxu0 %v106
    %1375 = vmatpush.bf16.msra.mxu0 %v105
    %1376 = vmatpush.bf16.msra.mxu0 %v104
    %1377 = vmatmul.bf16.gmra.mxu0 %v1364
    %v1378 = vpop.f32.mrf.mxu0
    %v1379 = vadd.f32 %v57, %v1378
    %v1380 = vpop.f32.mrf.mxu0
    %1381 = vdwg.mxu0
    %1382 = vmatpush.bf16.msra.mxu0 0
    %1383 = vmatpush.bf16.msra.mxu0 0
    %1384 = vmatpush.bf16.msra.mxu0 0
    %1385 = vmatpush.bf16.msra.mxu0 0
    %1386 = vmatpush.bf16.msra.mxu0 0
    %1387 = vmatpush.bf16.msra.mxu0 0
    %1388 = vmatpush.bf16.msra.mxu0 %v113
    %1389 = vmatpush.bf16.msra.mxu0 %v112
    %1390 = vmatmul.bf16.gmra.mxu0 %v1367
    %v1391 = vpop.f32.mrf.mxu0
    %v1392 = vadd.f32 %v1379, %v1391
    %v1393 = vpop.f32.mrf.mxu0
    %1394 = vdwg.mxu0
    %v1395 = vmax.f32 %v1392, 0.0
    %v1396 = vmax.f32 %v1359, %v1395
    %v1397 = vpack.c.bf16 %v1396, %v1396
    %s1398 = scalar_lea.vmem %s3, 320
    %v1399 = vld [vmem:[%s1398] sm:$0xf]
    %v1400 = vld [vmem:[%s1398 + $0x4] sm:$0xf]
    %v1401 = vld [vmem:[%s1398 + $0x8] sm:$0xf]
    %v1402 = vld [vmem:[%s1398 + $0xc] sm:$0xf]
    %v1403 = vld [vmem:[%s1398 + $0x10] sm:$0xf]
    %v1404 = vld [vmem:[%s1398 + $0x14] sm:$0xf]
    %v1405 = vld [vmem:[%s1398 + $0x18] sm:$0xf]
    %v1406 = vld [vmem:[%s1398 + $0x1c] sm:$0xf]
    %v1407 = vld [vmem:[%s1398 + $0x20] sm:$0xf]
    %v1408 = vld [vmem:[%s1398 + $0x24] sm:$0xf]
    %v1409 = vld [vmem:[%s1398 + $0x28] sm:$0xf]
    %v1410 = vld [vmem:[%s1398 + $0x2c] sm:$0xf]
    %v1411 = vld [vmem:[%s1398 + $0x30] sm:$0xf]
    %v1412 = vld [vmem:[%s1398 + $0x34] sm:$0xf]
    %v1413 = vld [vmem:[%s1398 + $0x38] sm:$0xf]
    %v1414 = vld [vmem:[%s1398 + $0x3c] sm:$0xf]
    %v1431 = vunpack.c.l.b16 %v1399
    %v1432 = vunpack.c.l.b16 %v1400
    %v1433 = vunpack.c.l.b16 %v1401
    %v1434 = vunpack.c.l.b16 %v1402
    %v1435 = vunpack.c.l.b16 %v1403
    %v1436 = vunpack.c.l.b16 %v1404
    %v1437 = vunpack.c.l.b16 %v1405
    %v1438 = vunpack.c.l.b16 %v1406
    %v1439 = vunpack.c.l.b16 %v1407
    %v1440 = vunpack.c.l.b16 %v1408
    %v1441 = vunpack.c.l.b16 %v1409
    %v1442 = vunpack.c.l.b16 %v1410
    %v1443 = vunpack.c.l.b16 %v1411
    %v1444 = vunpack.c.l.b16 %v1412
    %v1445 = vunpack.c.l.b16 %v1413
    %v1446 = vunpack.c.l.b16 %v1414
    %v1447 = vpack.c.b16 %v1432, %v1431
    %v1448 = vpack.c.b16 %v1434, %v1433
    %v1449 = vpack.c.b16 %v1436, %v1435
    %v1450 = vpack.c.b16 %v1438, %v1437
    %v1451 = vpack.c.b16 %v1440, %v1439
    %v1452 = vpack.c.b16 %v1442, %v1441
    %v1453 = vpack.c.b16 %v1444, %v1443
    %v1454 = vpack.c.b16 %v1446, %v1445
    %1463 = vmatpush.bf16.msra.mxu0 %v1454
    %1464 = vmatpush.bf16.msra.mxu0 %v1453
    %1465 = vmatpush.bf16.msra.mxu0 %v1452
    %1466 = vmatpush.bf16.msra.mxu0 %v1451
    %1467 = vmatpush.bf16.msra.mxu0 %v1450
    %1468 = vmatpush.bf16.msra.mxu0 %v1449
    %1469 = vmatpush.bf16.msra.mxu0 %v1448
    %1470 = vmatpush.bf16.msra.mxu0 %v1447
    %1471 = vmatmul.bf16.gmra.mxu0 %v1397
    %v1472 = vpop.f32.mrf.mxu0
    %v1473 = vadd.f32 0.0, %v1472
    %v1474 = vpop.f32.mrf.mxu0
    %1475 = vdwg.mxu0
    %v1476 = vadd.f32 %v1249, %v1473
    %s1477 = scalar_lea.vmem %s0, 12
    %v1478 = vld [vmem:[%s1477] sm:$0x3]
    %1480 = vst [vmem:[#allocation1] ss:$9 sm:$0xff] %v1478
    %v1481 = vld [vmem:[#allocation1] sm:$0xff]
    %v1482 = vld [vmem:[#allocation1 + $0x9] sm:$0xff]
    %v1484 = vsel %vm124, %v1482, 0
    %1486 = vmatpush.bf16.msra.mxu0 %v111
    %1487 = vmatpush.bf16.msra.mxu0 %v110
    %1488 = vmatpush.bf16.msra.mxu0 %v109
    %1489 = vmatpush.bf16.msra.mxu0 %v108
    %1490 = vmatpush.bf16.msra.mxu0 %v107
    %1491 = vmatpush.bf16.msra.mxu0 %v106
    %1492 = vmatpush.bf16.msra.mxu0 %v105
    %1493 = vmatpush.bf16.msra.mxu0 %v104
    %1494 = vmatmul.bf16.gmra.mxu0 %v1481
    %v1495 = vpop.f32.mrf.mxu0
    %v1496 = vadd.f32 %v57, %v1495
    %v1497 = vpop.f32.mrf.mxu0
    %1498 = vdwg.mxu0
    %1499 = vmatpush.bf16.msra.mxu0 0
    %1500 = vmatpush.bf16.msra.mxu0 0
    %1501 = vmatpush.bf16.msra.mxu0 0
    %1502 = vmatpush.bf16.msra.mxu0 0
    %1503 = vmatpush.bf16.msra.mxu0 0
    %1504 = vmatpush.bf16.msra.mxu0 0
    %1505 = vmatpush.bf16.msra.mxu0 %v113
    %1506 = vmatpush.bf16.msra.mxu0 %v112
    %1507 = vmatmul.bf16.gmra.mxu0 %v1484
    %v1508 = vpop.f32.mrf.mxu0
    %v1509 = vadd.f32 %v1496, %v1508
    %v1510 = vpop.f32.mrf.mxu0
    %1511 = vdwg.mxu0
    %v1512 = vmax.f32 %v1509, 0.0
    %s1513 = scalar_lea.vmem %s0, 62
    %v1514 = vld [vmem:[%s1513] sm:$0x3]
    %1516 = vst [vmem:[#allocation1] ss:$9 sm:$0xff] %v1514
    %v1517 = vld [vmem:[#allocation1] sm:$0xff]
    %v1518 = vld [vmem:[#allocation1 + $0x9] sm:$0xff]
    %v1520 = vsel %vm124, %v1518, 0
    %1522 = vmatpush.bf16.msra.mxu0 %v111
    %1523 = vmatpush.bf16.msra.mxu0 %v110
    %1524 = vmatpush.bf16.msra.mxu0 %v109
    %1525 = vmatpush.bf16.msra.mxu0 %v108
    %1526 = vmatpush.bf16.msra.mxu0 %v107
    %1527 = vmatpush.bf16.msra.mxu0 %v106
    %1528 = vmatpush.bf16.msra.mxu0 %v105
    %1529 = vmatpush.bf16.msra.mxu0 %v104
    %1530 = vmatmul.bf16.gmra.mxu0 %v1517
    %v1531 = vpop.f32.mrf.mxu0
    %v1532 = vadd.f32 %v57, %v1531
    %v1533 = vpop.f32.mrf.mxu0
    %1534 = vdwg.mxu0
    %1535 = vmatpush.bf16.msra.mxu0 0
    %1536 = vmatpush.bf16.msra.mxu0 0
    %1537 = vmatpush.bf16.msra.mxu0 0
    %1538 = vmatpush.bf16.msra.mxu0 0
    %1539 = vmatpush.bf16.msra.mxu0 0
    %1540 = vmatpush.bf16.msra.mxu0 0
    %1541 = vmatpush.bf16.msra.mxu0 %v113
    %1542 = vmatpush.bf16.msra.mxu0 %v112
    %1543 = vmatmul.bf16.gmra.mxu0 %v1520
    %v1544 = vpop.f32.mrf.mxu0
    %v1545 = vadd.f32 %v1532, %v1544
    %v1546 = vpop.f32.mrf.mxu0
    %1547 = vdwg.mxu0
    %v1548 = vmax.f32 %v1545, 0.0
    %v1549 = vmax.f32 %v1512, %v1548
    %s1550 = scalar_lea.vmem %s0, 112
    %v1551 = vld [vmem:[%s1550] sm:$0x3]
    %1553 = vst [vmem:[#allocation1] ss:$9 sm:$0xff] %v1551
    %v1554 = vld [vmem:[#allocation1] sm:$0xff]
    %v1555 = vld [vmem:[#allocation1 + $0x9] sm:$0xff]
    %v1557 = vsel %vm124, %v1555, 0
    %1559 = vmatpush.bf16.msra.mxu0 %v111
    %1560 = vmatpush.bf16.msra.mxu0 %v110
    %1561 = vmatpush.bf16.msra.mxu0 %v109
    %1562 = vmatpush.bf16.msra.mxu0 %v108
    %1563 = vmatpush.bf16.msra.mxu0 %v107
    %1564 = vmatpush.bf16.msra.mxu0 %v106
    %1565 = vmatpush.bf16.msra.mxu0 %v105
    %1566 = vmatpush.bf16.msra.mxu0 %v104
    %1567 = vmatmul.bf16.gmra.mxu0 %v1554
    %v1568 = vpop.f32.mrf.mxu0
    %v1569 = vadd.f32 %v57, %v1568
    %v1570 = vpop.f32.mrf.mxu0
    %1571 = vdwg.mxu0
    %1572 = vmatpush.bf16.msra.mxu0 0
    %1573 = vmatpush.bf16.msra.mxu0 0
    %1574 = vmatpush.bf16.msra.mxu0 0
    %1575 = vmatpush.bf16.msra.mxu0 0
    %1576 = vmatpush.bf16.msra.mxu0 0
    %1577 = vmatpush.bf16.msra.mxu0 0
    %1578 = vmatpush.bf16.msra.mxu0 %v113
    %1579 = vmatpush.bf16.msra.mxu0 %v112
    %1580 = vmatmul.bf16.gmra.mxu0 %v1557
    %v1581 = vpop.f32.mrf.mxu0
    %v1582 = vadd.f32 %v1569, %v1581
    %v1583 = vpop.f32.mrf.mxu0
    %1584 = vdwg.mxu0
    %v1585 = vmax.f32 %v1582, 0.0
    %v1586 = vmax.f32 %v1549, %v1585
    %s1587 = scalar_lea.vmem %s0, 162
    %v1588 = vld [vmem:[%s1587] sm:$0x3]
    %1590 = vst [vmem:[#allocation1] ss:$9 sm:$0xff] %v1588
    %v1591 = vld [vmem:[#allocation1] sm:$0xff]
    %v1592 = vld [vmem:[#allocation1 + $0x9] sm:$0xff]
    %v1594 = vsel %vm124, %v1592, 0
    %1596 = vmatpush.bf16.msra.mxu0 %v111
    %1597 = vmatpush.bf16.msra.mxu0 %v110
    %1598 = vmatpush.bf16.msra.mxu0 %v109
    %1599 = vmatpush.bf16.msra.mxu0 %v108
    %1600 = vmatpush.bf16.msra.mxu0 %v107
    %1601 = vmatpush.bf16.msra.mxu0 %v106
    %1602 = vmatpush.bf16.msra.mxu0 %v105
    %1603 = vmatpush.bf16.msra.mxu0 %v104
    %1604 = vmatmul.bf16.gmra.mxu0 %v1591
    %v1605 = vpop.f32.mrf.mxu0
    %v1606 = vadd.f32 %v57, %v1605
    %v1607 = vpop.f32.mrf.mxu0
    %1608 = vdwg.mxu0
    %1609 = vmatpush.bf16.msra.mxu0 0
    %1610 = vmatpush.bf16.msra.mxu0 0
    %1611 = vmatpush.bf16.msra.mxu0 0
    %1612 = vmatpush.bf16.msra.mxu0 0
    %1613 = vmatpush.bf16.msra.mxu0 0
    %1614 = vmatpush.bf16.msra.mxu0 0
    %1615 = vmatpush.bf16.msra.mxu0 %v113
    %1616 = vmatpush.bf16.msra.mxu0 %v112
    %1617 = vmatmul.bf16.gmra.mxu0 %v1594
    %v1618 = vpop.f32.mrf.mxu0
    %v1619 = vadd.f32 %v1606, %v1618
    %v1620 = vpop.f32.mrf.mxu0
    %1621 = vdwg.mxu0
    %v1622 = vmax.f32 %v1619, 0.0
    %v1623 = vmax.f32 %v1586, %v1622
    %v1624 = vpack.c.bf16 %v1623, %v1623
    %s1625 = scalar_lea.vmem %s3, 384
    %v1626 = vld [vmem:[%s1625] sm:$0xf]
    %v1627 = vld [vmem:[%s1625 + $0x4] sm:$0xf]
    %v1628 = vld [vmem:[%s1625 + $0x8] sm:$0xf]
    %v1629 = vld [vmem:[%s1625 + $0xc] sm:$0xf]
    %v1630 = vld [vmem:[%s1625 + $0x10] sm:$0xf]
    %v1631 = vld [vmem:[%s1625 + $0x14] sm:$0xf]
    %v1632 = vld [vmem:[%s1625 + $0x18] sm:$0xf]
    %v1633 = vld [vmem:[%s1625 + $0x1c] sm:$0xf]
    %v1634 = vld [vmem:[%s1625 + $0x20] sm:$0xf]
    %v1635 = vld [vmem:[%s1625 + $0x24] sm:$0xf]
    %v1636 = vld [vmem:[%s1625 + $0x28] sm:$0xf]
    %v1637 = vld [vmem:[%s1625 + $0x2c] sm:$0xf]
    %v1638 = vld [vmem:[%s1625 + $0x30] sm:$0xf]
    %v1639 = vld [vmem:[%s1625 + $0x34] sm:$0xf]
    %v1640 = vld [vmem:[%s1625 + $0x38] sm:$0xf]
    %v1641 = vld [vmem:[%s1625 + $0x3c] sm:$0xf]
    %v1658 = vunpack.c.l.b16 %v1626
    %v1659 = vunpack.c.l.b16 %v1627
    %v1660 = vunpack.c.l.b16 %v1628
    %v1661 = vunpack.c.l.b16 %v1629
    %v1662 = vunpack.c.l.b16 %v1630
    %v1663 = vunpack.c.l.b16 %v1631
    %v1664 = vunpack.c.l.b16 %v1632
    %v1665 = vunpack.c.l.b16 %v1633
    %v1666 = vunpack.c.l.b16 %v1634
    %v1667 = vunpack.c.l.b16 %v1635
    %v1668 = vunpack.c.l.b16 %v1636
    %v1669 = vunpack.c.l.b16 %v1637
    %v1670 = vunpack.c.l.b16 %v1638
    %v1671 = vunpack.c.l.b16 %v1639
    %v1672 = vunpack.c.l.b16 %v1640
    %v1673 = vunpack.c.l.b16 %v1641
    %v1674 = vpack.c.b16 %v1659, %v1658
    %v1675 = vpack.c.b16 %v1661, %v1660
    %v1676 = vpack.c.b16 %v1663, %v1662
    %v1677 = vpack.c.b16 %v1665, %v1664
    %v1678 = vpack.c.b16 %v1667, %v1666
    %v1679 = vpack.c.b16 %v1669, %v1668
    %v1680 = vpack.c.b16 %v1671, %v1670
    %v1681 = vpack.c.b16 %v1673, %v1672
    %1690 = vmatpush.bf16.msra.mxu0 %v1681
    %1691 = vmatpush.bf16.msra.mxu0 %v1680
    %1692 = vmatpush.bf16.msra.mxu0 %v1679
    %1693 = vmatpush.bf16.msra.mxu0 %v1678
    %1694 = vmatpush.bf16.msra.mxu0 %v1677
    %1695 = vmatpush.bf16.msra.mxu0 %v1676
    %1696 = vmatpush.bf16.msra.mxu0 %v1675
    %1697 = vmatpush.bf16.msra.mxu0 %v1674
    %1698 = vmatmul.bf16.gmra.mxu0 %v1624
    %v1699 = vpop.f32.mrf.mxu0
    %v1700 = vadd.f32 0.0, %v1699
    %v1701 = vpop.f32.mrf.mxu0
    %1702 = vdwg.mxu0
    %v1703 = vadd.f32 %v1476, %v1700
    %s1704 = scalar_lea.vmem %s0, 14
    %v1705 = vld [vmem:[%s1704] sm:$0x3]
    %1707 = vst [vmem:[#allocation1] ss:$9 sm:$0xff] %v1705
    %v1708 = vld [vmem:[#allocation1] sm:$0xff]
    %v1709 = vld [vmem:[#allocation1 + $0x9] sm:$0xff]
    %v1711 = vsel %vm124, %v1709, 0
    %1713 = vmatpush.bf16.msra.mxu0 %v111
    %1714 = vmatpush.bf16.msra.mxu0 %v110
    %1715 = vmatpush.bf16.msra.mxu0 %v109
    %1716 = vmatpush.bf16.msra.mxu0 %v108
    %1717 = vmatpush.bf16.msra.mxu0 %v107
    %1718 = vmatpush.bf16.msra.mxu0 %v106
    %1719 = vmatpush.bf16.msra.mxu0 %v105
    %1720 = vmatpush.bf16.msra.mxu0 %v104
    %1721 = vmatmul.bf16.gmra.mxu0 %v1708
    %v1722 = vpop.f32.mrf.mxu0
    %v1723 = vadd.f32 %v57, %v1722
    %v1724 = vpop.f32.mrf.mxu0
    %1725 = vdwg.mxu0
    %1726 = vmatpush.bf16.msra.mxu0 0
    %1727 = vmatpush.bf16.msra.mxu0 0
    %1728 = vmatpush.bf16.msra.mxu0 0
    %1729 = vmatpush.bf16.msra.mxu0 0
    %1730 = vmatpush.bf16.msra.mxu0 0
    %1731 = vmatpush.bf16.msra.mxu0 0
    %1732 = vmatpush.bf16.msra.mxu0 %v113
    %1733 = vmatpush.bf16.msra.mxu0 %v112
    %1734 = vmatmul.bf16.gmra.mxu0 %v1711
    %v1735 = vpop.f32.mrf.mxu0
    %v1736 = vadd.f32 %v1723, %v1735
    %v1737 = vpop.f32.mrf.mxu0
    %1738 = vdwg.mxu0
    %v1739 = vmax.f32 %v1736, 0.0
    %s1740 = scalar_lea.vmem %s0, 64
    %v1741 = vld [vmem:[%s1740] sm:$0x3]
    %1743 = vst [vmem:[#allocation1] ss:$9 sm:$0xff] %v1741
    %v1744 = vld [vmem:[#allocation1] sm:$0xff]
    %v1745 = vld [vmem:[#allocation1 + $0x9] sm:$0xff]
    %v1747 = vsel %vm124, %v1745, 0
    %1749 = vmatpush.bf16.msra.mxu0 %v111
    %1750 = vmatpush.bf16.msra.mxu0 %v110
    %1751 = vmatpush.bf16.msra.mxu0 %v109
    %1752 = vmatpush.bf16.msra.mxu0 %v108
    %1753 = vmatpush.bf16.msra.mxu0 %v107
    %1754 = vmatpush.bf16.msra.mxu0 %v106
    %1755 = vmatpush.bf16.msra.mxu0 %v105
    %1756 = vmatpush.bf16.msra.mxu0 %v104
    %1757 = vmatmul.bf16.gmra.mxu0 %v1744
    %v1758 = vpop.f32.mrf.mxu0
    %v1759 = vadd.f32 %v57, %v1758
    %v1760 = vpop.f32.mrf.mxu0
    %1761 = vdwg.mxu0
    %1762 = vmatpush.bf16.msra.mxu0 0
    %1763 = vmatpush.bf16.msra.mxu0 0
    %1764 = vmatpush.bf16.msra.mxu0 0
    %1765 = vmatpush.bf16.msra.mxu0 0
    %1766 = vmatpush.bf16.msra.mxu0 0
    %1767 = vmatpush.bf16.msra.mxu0 0
    %1768 = vmatpush.bf16.msra.mxu0 %v113
    %1769 = vmatpush.bf16.msra.mxu0 %v112
    %1770 = vmatmul.bf16.gmra.mxu0 %v1747
    %v1771 = vpop.f32.mrf.mxu0
    %v1772 = vadd.f32 %v1759, %v1771
    %v1773 = vpop.f32.mrf.mxu0
    %1774 = vdwg.mxu0
    %v1775 = vmax.f32 %v1772, 0.0
    %v1776 = vmax.f32 %v1739, %v1775
    %s1777 = scalar_lea.vmem %s0, 114
    %v1778 = vld [vmem:[%s1777] sm:$0x3]
    %1780 = vst [vmem:[#allocation1] ss:$9 sm:$0xff] %v1778
    %v1781 = vld [vmem:[#allocation1] sm:$0xff]
    %v1782 = vld [vmem:[#allocation1 + $0x9] sm:$0xff]
    %v1784 = vsel %vm124, %v1782, 0
    %1786 = vmatpush.bf16.msra.mxu0 %v111
    %1787 = vmatpush.bf16.msra.mxu0 %v110
    %1788 = vmatpush.bf16.msra.mxu0 %v109
    %1789 = vmatpush.bf16.msra.mxu0 %v108
    %1790 = vmatpush.bf16.msra.mxu0 %v107
    %1791 = vmatpush.bf16.msra.mxu0 %v106
    %1792 = vmatpush.bf16.msra.mxu0 %v105
    %1793 = vmatpush.bf16.msra.mxu0 %v104
    %1794 = vmatmul.bf16.gmra.mxu0 %v1781
    %v1795 = vpop.f32.mrf.mxu0
    %v1796 = vadd.f32 %v57, %v1795
    %v1797 = vpop.f32.mrf.mxu0
    %1798 = vdwg.mxu0
    %1799 = vmatpush.bf16.msra.mxu0 0
    %1800 = vmatpush.bf16.msra.mxu0 0
    %1801 = vmatpush.bf16.msra.mxu0 0
    %1802 = vmatpush.bf16.msra.mxu0 0
    %1803 = vmatpush.bf16.msra.mxu0 0
    %1804 = vmatpush.bf16.msra.mxu0 0
    %1805 = vmatpush.bf16.msra.mxu0 %v113
    %1806 = vmatpush.bf16.msra.mxu0 %v112
    %1807 = vmatmul.bf16.gmra.mxu0 %v1784
    %v1808 = vpop.f32.mrf.mxu0
    %v1809 = vadd.f32 %v1796, %v1808
    %v1810 = vpop.f32.mrf.mxu0
    %1811 = vdwg.mxu0
    %v1812 = vmax.f32 %v1809, 0.0
    %v1813 = vmax.f32 %v1776, %v1812
    %s1814 = scalar_lea.vmem %s0, 164
    %v1815 = vld [vmem:[%s1814] sm:$0x3]
    %1817 = vst [vmem:[#allocation1] ss:$9 sm:$0xff] %v1815
    %v1818 = vld [vmem:[#allocation1] sm:$0xff]
    %v1819 = vld [vmem:[#allocation1 + $0x9] sm:$0xff]
    %v1821 = vsel %vm124, %v1819, 0
    %1823 = vmatpush.bf16.msra.mxu0 %v111
    %1824 = vmatpush.bf16.msra.mxu0 %v110
    %1825 = vmatpush.bf16.msra.mxu0 %v109
    %1826 = vmatpush.bf16.msra.mxu0 %v108
    %1827 = vmatpush.bf16.msra.mxu0 %v107
    %1828 = vmatpush.bf16.msra.mxu0 %v106
    %1829 = vmatpush.bf16.msra.mxu0 %v105
    %1830 = vmatpush.bf16.msra.mxu0 %v104
    %1831 = vmatmul.bf16.gmra.mxu0 %v1818
    %v1832 = vpop.f32.mrf.mxu0
    %v1833 = vadd.f32 %v57, %v1832
    %v1834 = vpop.f32.mrf.mxu0
    %1835 = vdwg.mxu0
    %1836 = vmatpush.bf16.msra.mxu0 0
    %1837 = vmatpush.bf16.msra.mxu0 0
    %1838 = vmatpush.bf16.msra.mxu0 0
    %1839 = vmatpush.bf16.msra.mxu0 0
    %1840 = vmatpush.bf16.msra.mxu0 0
    %1841 = vmatpush.bf16.msra.mxu0 0
    %1842 = vmatpush.bf16.msra.mxu0 %v113
    %1843 = vmatpush.bf16.msra.mxu0 %v112
    %1844 = vmatmul.bf16.gmra.mxu0 %v1821
    %v1845 = vpop.f32.mrf.mxu0
    %v1846 = vadd.f32 %v1833, %v1845
    %v1847 = vpop.f32.mrf.mxu0
    %1848 = vdwg.mxu0
    %v1849 = vmax.f32 %v1846, 0.0
    %v1850 = vmax.f32 %v1813, %v1849
    %v1851 = vpack.c.bf16 %v1850, %v1850
    %s1852 = scalar_lea.vmem %s3, 448
    %v1853 = vld [vmem:[%s1852] sm:$0xf]
    %v1854 = vld [vmem:[%s1852 + $0x4] sm:$0xf]
    %v1855 = vld [vmem:[%s1852 + $0x8] sm:$0xf]
    %v1856 = vld [vmem:[%s1852 + $0xc] sm:$0xf]
    %v1857 = vld [vmem:[%s1852 + $0x10] sm:$0xf]
    %v1858 = vld [vmem:[%s1852 + $0x14] sm:$0xf]
    %v1859 = vld [vmem:[%s1852 + $0x18] sm:$0xf]
    %v1860 = vld [vmem:[%s1852 + $0x1c] sm:$0xf]
    %v1861 = vld [vmem:[%s1852 + $0x20] sm:$0xf]
    %v1862 = vld [vmem:[%s1852 + $0x24] sm:$0xf]
    %v1863 = vld [vmem:[%s1852 + $0x28] sm:$0xf]
    %v1864 = vld [vmem:[%s1852 + $0x2c] sm:$0xf]
    %v1865 = vld [vmem:[%s1852 + $0x30] sm:$0xf]
    %v1866 = vld [vmem:[%s1852 + $0x34] sm:$0xf]
    %v1867 = vld [vmem:[%s1852 + $0x38] sm:$0xf]
    %v1868 = vld [vmem:[%s1852 + $0x3c] sm:$0xf]
    %v1885 = vunpack.c.l.b16 %v1853
    %v1886 = vunpack.c.l.b16 %v1854
    %v1887 = vunpack.c.l.b16 %v1855
    %v1888 = vunpack.c.l.b16 %v1856
    %v1889 = vunpack.c.l.b16 %v1857
    %v1890 = vunpack.c.l.b16 %v1858
    %v1891 = vunpack.c.l.b16 %v1859
    %v1892 = vunpack.c.l.b16 %v1860
    %v1893 = vunpack.c.l.b16 %v1861
    %v1894 = vunpack.c.l.b16 %v1862
    %v1895 = vunpack.c.l.b16 %v1863
    %v1896 = vunpack.c.l.b16 %v1864
    %v1897 = vunpack.c.l.b16 %v1865
    %v1898 = vunpack.c.l.b16 %v1866
    %v1899 = vunpack.c.l.b16 %v1867
    %v1900 = vunpack.c.l.b16 %v1868
    %v1901 = vpack.c.b16 %v1886, %v1885
    %v1902 = vpack.c.b16 %v1888, %v1887
    %v1903 = vpack.c.b16 %v1890, %v1889
    %v1904 = vpack.c.b16 %v1892, %v1891
    %v1905 = vpack.c.b16 %v1894, %v1893
    %v1906 = vpack.c.b16 %v1896, %v1895
    %v1907 = vpack.c.b16 %v1898, %v1897
    %v1908 = vpack.c.b16 %v1900, %v1899
    %1917 = vmatpush.bf16.msra.mxu0 %v1908
    %1918 = vmatpush.bf16.msra.mxu0 %v1907
    %1919 = vmatpush.bf16.msra.mxu0 %v1906
    %1920 = vmatpush.bf16.msra.mxu0 %v1905
    %1921 = vmatpush.bf16.msra.mxu0 %v1904
    %1922 = vmatpush.bf16.msra.mxu0 %v1903
    %1923 = vmatpush.bf16.msra.mxu0 %v1902
    %1924 = vmatpush.bf16.msra.mxu0 %v1901
    %1925 = vmatmul.bf16.gmra.mxu0 %v1851
    %v1926 = vpop.f32.mrf.mxu0
    %v1927 = vadd.f32 0.0, %v1926
    %v1928 = vpop.f32.mrf.mxu0
    %1929 = vdwg.mxu0
    %v1930 = vadd.f32 %v1703, %v1927
    %s1931 = scalar_lea.vmem %s0, 16
    %v1932 = vld [vmem:[%s1931] sm:$0x3]
    %1934 = vst [vmem:[#allocation1] ss:$9 sm:$0xff] %v1932
    %v1935 = vld [vmem:[#allocation1] sm:$0xff]
    %v1936 = vld [vmem:[#allocation1 + $0x9] sm:$0xff]
    %v1938 = vsel %vm124, %v1936, 0
    %1940 = vmatpush.bf16.msra.mxu0 %v111
    %1941 = vmatpush.bf16.msra.mxu0 %v110
    %1942 = vmatpush.bf16.msra.mxu0 %v109
    %1943 = vmatpush.bf16.msra.mxu0 %v108
    %1944 = vmatpush.bf16.msra.mxu0 %v107
    %1945 = vmatpush.bf16.msra.mxu0 %v106
    %1946 = vmatpush.bf16.msra.mxu0 %v105
    %1947 = vmatpush.bf16.msra.mxu0 %v104
    %1948 = vmatmul.bf16.gmra.mxu0 %v1935
    %v1949 = vpop.f32.mrf.mxu0
    %v1950 = vadd.f32 %v57, %v1949
    %v1951 = vpop.f32.mrf.mxu0
    %1952 = vdwg.mxu0
    %1953 = vmatpush.bf16.msra.mxu0 0
    %1954 = vmatpush.bf16.msra.mxu0 0
    %1955 = vmatpush.bf16.msra.mxu0 0
    %1956 = vmatpush.bf16.msra.mxu0 0
    %1957 = vmatpush.bf16.msra.mxu0 0
    %1958 = vmatpush.bf16.msra.mxu0 0
    %1959 = vmatpush.bf16.msra.mxu0 %v113
    %1960 = vmatpush.bf16.msra.mxu0 %v112
    %1961 = vmatmul.bf16.gmra.mxu0 %v1938
    %v1962 = vpop.f32.mrf.mxu0
    %v1963 = vadd.f32 %v1950, %v1962
    %v1964 = vpop.f32.mrf.mxu0
    %1965 = vdwg.mxu0
    %v1966 = vmax.f32 %v1963, 0.0
    %s1967 = scalar_lea.vmem %s0, 66
    %v1968 = vld [vmem:[%s1967] sm:$0x3]
    %1970 = vst [vmem:[#allocation1] ss:$9 sm:$0xff] %v1968
    %v1971 = vld [vmem:[#allocation1] sm:$0xff]
    %v1972 = vld [vmem:[#allocation1 + $0x9] sm:$0xff]
    %v1974 = vsel %vm124, %v1972, 0
    %1976 = vmatpush.bf16.msra.mxu0 %v111
    %1977 = vmatpush.bf16.msra.mxu0 %v110
    %1978 = vmatpush.bf16.msra.mxu0 %v109
    %1979 = vmatpush.bf16.msra.mxu0 %v108
    %1980 = vmatpush.bf16.msra.mxu0 %v107
    %1981 = vmatpush.bf16.msra.mxu0 %v106
    %1982 = vmatpush.bf16.msra.mxu0 %v105
    %1983 = vmatpush.bf16.msra.mxu0 %v104
    %1984 = vmatmul.bf16.gmra.mxu0 %v1971
    %v1985 = vpop.f32.mrf.mxu0
    %v1986 = vadd.f32 %v57, %v1985
    %v1987 = vpop.f32.mrf.mxu0
    %1988 = vdwg.mxu0
    %1989 = vmatpush.bf16.msra.mxu0 0
    %1990 = vmatpush.bf16.msra.mxu0 0
    %1991 = vmatpush.bf16.msra.mxu0 0
    %1992 = vmatpush.bf16.msra.mxu0 0
    %1993 = vmatpush.bf16.msra.mxu0 0
    %1994 = vmatpush.bf16.msra.mxu0 0
    %1995 = vmatpush.bf16.msra.mxu0 %v113
    %1996 = vmatpush.bf16.msra.mxu0 %v112
    %1997 = vmatmul.bf16.gmra.mxu0 %v1974
    %v1998 = vpop.f32.mrf.mxu0
    %v1999 = vadd.f32 %v1986, %v1998
    %v2000 = vpop.f32.mrf.mxu0
    %2001 = vdwg.mxu0
    %v2002 = vmax.f32 %v1999, 0.0
    %v2003 = vmax.f32 %v1966, %v2002
    %s2004 = scalar_lea.vmem %s0, 116
    %v2005 = vld [vmem:[%s2004] sm:$0x3]
    %2007 = vst [vmem:[#allocation1] ss:$9 sm:$0xff] %v2005
    %v2008 = vld [vmem:[#allocation1] sm:$0xff]
    %v2009 = vld [vmem:[#allocation1 + $0x9] sm:$0xff]
    %v2011 = vsel %vm124, %v2009, 0
    %2013 = vmatpush.bf16.msra.mxu0 %v111
    %2014 = vmatpush.bf16.msra.mxu0 %v110
    %2015 = vmatpush.bf16.msra.mxu0 %v109
    %2016 = vmatpush.bf16.msra.mxu0 %v108
    %2017 = vmatpush.bf16.msra.mxu0 %v107
    %2018 = vmatpush.bf16.msra.mxu0 %v106
    %2019 = vmatpush.bf16.msra.mxu0 %v105
    %2020 = vmatpush.bf16.msra.mxu0 %v104
    %2021 = vmatmul.bf16.gmra.mxu0 %v2008
    %v2022 = vpop.f32.mrf.mxu0
    %v2023 = vadd.f32 %v57, %v2022
    %v2024 = vpop.f32.mrf.mxu0
    %2025 = vdwg.mxu0
    %2026 = vmatpush.bf16.msra.mxu0 0
    %2027 = vmatpush.bf16.msra.mxu0 0
    %2028 = vmatpush.bf16.msra.mxu0 0
    %2029 = vmatpush.bf16.msra.mxu0 0
    %2030 = vmatpush.bf16.msra.mxu0 0
    %2031 = vmatpush.bf16.msra.mxu0 0
    %2032 = vmatpush.bf16.msra.mxu0 %v113
    %2033 = vmatpush.bf16.msra.mxu0 %v112
    %2034 = vmatmul.bf16.gmra.mxu0 %v2011
    %v2035 = vpop.f32.mrf.mxu0
    %v2036 = vadd.f32 %v2023, %v2035
    %v2037 = vpop.f32.mrf.mxu0
    %2038 = vdwg.mxu0
    %v2039 = vmax.f32 %v2036, 0.0
    %v2040 = vmax.f32 %v2003, %v2039
    %s2041 = scalar_lea.vmem %s0, 166
    %v2042 = vld [vmem:[%s2041] sm:$0x3]
    %2044 = vst [vmem:[#allocation1] ss:$9 sm:$0xff] %v2042
    %v2045 = vld [vmem:[#allocation1] sm:$0xff]
    %v2046 = vld [vmem:[#allocation1 + $0x9] sm:$0xff]
    %v2048 = vsel %vm124, %v2046, 0
    %2050 = vmatpush.bf16.msra.mxu0 %v111
    %2051 = vmatpush.bf16.msra.mxu0 %v110
    %2052 = vmatpush.bf16.msra.mxu0 %v109
    %2053 = vmatpush.bf16.msra.mxu0 %v108
    %2054 = vmatpush.bf16.msra.mxu0 %v107
    %2055 = vmatpush.bf16.msra.mxu0 %v106
    %2056 = vmatpush.bf16.msra.mxu0 %v105
    %2057 = vmatpush.bf16.msra.mxu0 %v104
    %2058 = vmatmul.bf16.gmra.mxu0 %v2045
    %v2059 = vpop.f32.mrf.mxu0
    %v2060 = vadd.f32 %v57, %v2059
    %v2061 = vpop.f32.mrf.mxu0
    %2062 = vdwg.mxu0
    %2063 = vmatpush.bf16.msra.mxu0 0
    %2064 = vmatpush.bf16.msra.mxu0 0
    %2065 = vmatpush.bf16.msra.mxu0 0
    %2066 = vmatpush.bf16.msra.mxu0 0
    %2067 = vmatpush.bf16.msra.mxu0 0
    %2068 = vmatpush.bf16.msra.mxu0 0
    %2069 = vmatpush.bf16.msra.mxu0 %v113
    %2070 = vmatpush.bf16.msra.mxu0 %v112
    %2071 = vmatmul.bf16.gmra.mxu0 %v2048
    %v2072 = vpop.f32.mrf.mxu0
    %v2073 = vadd.f32 %v2060, %v2072
    %v2074 = vpop.f32.mrf.mxu0
    %2075 = vdwg.mxu0
    %v2076 = vmax.f32 %v2073, 0.0
    %v2077 = vmax.f32 %v2040, %v2076
    %v2078 = vpack.c.bf16 %v2077, %v2077
    %s2079 = scalar_lea.vmem %s3, 512
    %v2080 = vld [vmem:[%s2079] sm:$0xf]
    %v2081 = vld [vmem:[%s2079 + $0x4] sm:$0xf]
    %v2082 = vld [vmem:[%s2079 + $0x8] sm:$0xf]
    %v2083 = vld [vmem:[%s2079 + $0xc] sm:$0xf]
    %v2084 = vld [vmem:[%s2079 + $0x10] sm:$0xf]
    %v2085 = vld [vmem:[%s2079 + $0x14] sm:$0xf]
    %v2086 = vld [vmem:[%s2079 + $0x18] sm:$0xf]
    %v2087 = vld [vmem:[%s2079 + $0x1c] sm:$0xf]
    %v2088 = vld [vmem:[%s2079 + $0x20] sm:$0xf]
    %v2089 = vld [vmem:[%s2079 + $0x24] sm:$0xf]
    %v2090 = vld [vmem:[%s2079 + $0x28] sm:$0xf]
    %v2091 = vld [vmem:[%s2079 + $0x2c] sm:$0xf]
    %v2092 = vld [vmem:[%s2079 + $0x30] sm:$0xf]
    %v2093 = vld [vmem:[%s2079 + $0x34] sm:$0xf]
    %v2094 = vld [vmem:[%s2079 + $0x38] sm:$0xf]
    %v2095 = vld [vmem:[%s2079 + $0x3c] sm:$0xf]
    %v2112 = vunpack.c.l.b16 %v2080
    %v2113 = vunpack.c.l.b16 %v2081
    %v2114 = vunpack.c.l.b16 %v2082
    %v2115 = vunpack.c.l.b16 %v2083
    %v2116 = vunpack.c.l.b16 %v2084
    %v2117 = vunpack.c.l.b16 %v2085
    %v2118 = vunpack.c.l.b16 %v2086
    %v2119 = vunpack.c.l.b16 %v2087
    %v2120 = vunpack.c.l.b16 %v2088
    %v2121 = vunpack.c.l.b16 %v2089
    %v2122 = vunpack.c.l.b16 %v2090
    %v2123 = vunpack.c.l.b16 %v2091
    %v2124 = vunpack.c.l.b16 %v2092
    %v2125 = vunpack.c.l.b16 %v2093
    %v2126 = vunpack.c.l.b16 %v2094
    %v2127 = vunpack.c.l.b16 %v2095
    %v2128 = vpack.c.b16 %v2113, %v2112
    %v2129 = vpack.c.b16 %v2115, %v2114
    %v2130 = vpack.c.b16 %v2117, %v2116
    %v2131 = vpack.c.b16 %v2119, %v2118
    %v2132 = vpack.c.b16 %v2121, %v2120
    %v2133 = vpack.c.b16 %v2123, %v2122
    %v2134 = vpack.c.b16 %v2125, %v2124
    %v2135 = vpack.c.b16 %v2127, %v2126
    %2144 = vmatpush.bf16.msra.mxu0 %v2135
    %2145 = vmatpush.bf16.msra.mxu0 %v2134
    %2146 = vmatpush.bf16.msra.mxu0 %v2133
    %2147 = vmatpush.bf16.msra.mxu0 %v2132
    %2148 = vmatpush.bf16.msra.mxu0 %v2131
    %2149 = vmatpush.bf16.msra.mxu0 %v2130
    %2150 = vmatpush.bf16.msra.mxu0 %v2129
    %2151 = vmatpush.bf16.msra.mxu0 %v2128
    %2152 = vmatmul.bf16.gmra.mxu0 %v2078
    %v2153 = vpop.f32.mrf.mxu0
    %v2154 = vadd.f32 0.0, %v2153
    %v2155 = vpop.f32.mrf.mxu0
    %2156 = vdwg.mxu0
    %v2157 = vadd.f32 %v1930, %v2154
    %s2158 = scalar_lea.vmem %s0, 18
    %v2159 = vld [vmem:[%s2158] sm:$0x3]
    %2161 = vst [vmem:[#allocation1] ss:$9 sm:$0xff] %v2159
    %v2162 = vld [vmem:[#allocation1] sm:$0xff]
    %v2163 = vld [vmem:[#allocation1 + $0x9] sm:$0xff]
    %v2165 = vsel %vm124, %v2163, 0
    %2167 = vmatpush.bf16.msra.mxu0 %v111
    %2168 = vmatpush.bf16.msra.mxu0 %v110
    %2169 = vmatpush.bf16.msra.mxu0 %v109
    %2170 = vmatpush.bf16.msra.mxu0 %v108
    %2171 = vmatpush.bf16.msra.mxu0 %v107
    %2172 = vmatpush.bf16.msra.mxu0 %v106
    %2173 = vmatpush.bf16.msra.mxu0 %v105
    %2174 = vmatpush.bf16.msra.mxu0 %v104
    %2175 = vmatmul.bf16.gmra.mxu0 %v2162
    %v2176 = vpop.f32.mrf.mxu0
    %v2177 = vadd.f32 %v57, %v2176
    %v2178 = vpop.f32.mrf.mxu0
    %2179 = vdwg.mxu0
    %2180 = vmatpush.bf16.msra.mxu0 0
    %2181 = vmatpush.bf16.msra.mxu0 0
    %2182 = vmatpush.bf16.msra.mxu0 0
    %2183 = vmatpush.bf16.msra.mxu0 0
    %2184 = vmatpush.bf16.msra.mxu0 0
    %2185 = vmatpush.bf16.msra.mxu0 0
    %2186 = vmatpush.bf16.msra.mxu0 %v113
    %2187 = vmatpush.bf16.msra.mxu0 %v112
    %2188 = vmatmul.bf16.gmra.mxu0 %v2165
    %v2189 = vpop.f32.mrf.mxu0
    %v2190 = vadd.f32 %v2177, %v2189
    %v2191 = vpop.f32.mrf.mxu0
    %2192 = vdwg.mxu0
    %v2193 = vmax.f32 %v2190, 0.0
    %s2194 = scalar_lea.vmem %s0, 68
    %v2195 = vld [vmem:[%s2194] sm:$0x3]
    %2197 = vst [vmem:[#allocation1] ss:$9 sm:$0xff] %v2195
    %v2198 = vld [vmem:[#allocation1] sm:$0xff]
    %v2199 = vld [vmem:[#allocation1 + $0x9] sm:$0xff]
    %v2201 = vsel %vm124, %v2199, 0
    %2203 = vmatpush.bf16.msra.mxu0 %v111
    %2204 = vmatpush.bf16.msra.mxu0 %v110
    %2205 = vmatpush.bf16.msra.mxu0 %v109
    %2206 = vmatpush.bf16.msra.mxu0 %v108
    %2207 = vmatpush.bf16.msra.mxu0 %v107
    %2208 = vmatpush.bf16.msra.mxu0 %v106
    %2209 = vmatpush.bf16.msra.mxu0 %v105
    %2210 = vmatpush.bf16.msra.mxu0 %v104
    %2211 = vmatmul.bf16.gmra.mxu0 %v2198
    %v2212 = vpop.f32.mrf.mxu0
    %v2213 = vadd.f32 %v57, %v2212
    %v2214 = vpop.f32.mrf.mxu0
    %2215 = vdwg.mxu0
    %2216 = vmatpush.bf16.msra.mxu0 0
    %2217 = vmatpush.bf16.msra.mxu0 0
    %2218 = vmatpush.bf16.msra.mxu0 0
    %2219 = vmatpush.bf16.msra.mxu0 0
    %2220 = vmatpush.bf16.msra.mxu0 0
    %2221 = vmatpush.bf16.msra.mxu0 0
    %2222 = vmatpush.bf16.msra.mxu0 %v113
    %2223 = vmatpush.bf16.msra.mxu0 %v112
    %2224 = vmatmul.bf16.gmra.mxu0 %v2201
    %v2225 = vpop.f32.mrf.mxu0
    %v2226 = vadd.f32 %v2213, %v2225
    %v2227 = vpop.f32.mrf.mxu0
    %2228 = vdwg.mxu0
    %v2229 = vmax.f32 %v2226, 0.0
    %v2230 = vmax.f32 %v2193, %v2229
    %s2231 = scalar_lea.vmem %s0, 118
    %v2232 = vld [vmem:[%s2231] sm:$0x3]
    %2234 = vst [vmem:[#allocation1] ss:$9 sm:$0xff] %v2232
    %v2235 = vld [vmem:[#allocation1] sm:$0xff]
    %v2236 = vld [vmem:[#allocation1 + $0x9] sm:$0xff]
    %v2238 = vsel %vm124, %v2236, 0
    %2240 = vmatpush.bf16.msra.mxu0 %v111
    %2241 = vmatpush.bf16.msra.mxu0 %v110
    %2242 = vmatpush.bf16.msra.mxu0 %v109
    %2243 = vmatpush.bf16.msra.mxu0 %v108
    %2244 = vmatpush.bf16.msra.mxu0 %v107
    %2245 = vmatpush.bf16.msra.mxu0 %v106
    %2246 = vmatpush.bf16.msra.mxu0 %v105
    %2247 = vmatpush.bf16.msra.mxu0 %v104
    %2248 = vmatmul.bf16.gmra.mxu0 %v2235
    %v2249 = vpop.f32.mrf.mxu0
    %v2250 = vadd.f32 %v57, %v2249
    %v2251 = vpop.f32.mrf.mxu0
    %2252 = vdwg.mxu0
    %2253 = vmatpush.bf16.msra.mxu0 0
    %2254 = vmatpush.bf16.msra.mxu0 0
    %2255 = vmatpush.bf16.msra.mxu0 0
    %2256 = vmatpush.bf16.msra.mxu0 0
    %2257 = vmatpush.bf16.msra.mxu0 0
    %2258 = vmatpush.bf16.msra.mxu0 0
    %2259 = vmatpush.bf16.msra.mxu0 %v113
    %2260 = vmatpush.bf16.msra.mxu0 %v112
    %2261 = vmatmul.bf16.gmra.mxu0 %v2238
    %v2262 = vpop.f32.mrf.mxu0
    %v2263 = vadd.f32 %v2250, %v2262
    %v2264 = vpop.f32.mrf.mxu0
    %2265 = vdwg.mxu0
    %v2266 = vmax.f32 %v2263, 0.0
    %v2267 = vmax.f32 %v2230, %v2266
    %s2268 = scalar_lea.vmem %s0, 168
    %v2269 = vld [vmem:[%s2268] sm:$0x3]
    %2271 = vst [vmem:[#allocation1] ss:$9 sm:$0xff] %v2269
    %v2272 = vld [vmem:[#allocation1] sm:$0xff]
    %v2273 = vld [vmem:[#allocation1 + $0x9] sm:$0xff]
    %v2275 = vsel %vm124, %v2273, 0
    %2277 = vmatpush.bf16.msra.mxu0 %v111
    %2278 = vmatpush.bf16.msra.mxu0 %v110
    %2279 = vmatpush.bf16.msra.mxu0 %v109
    %2280 = vmatpush.bf16.msra.mxu0 %v108
    %2281 = vmatpush.bf16.msra.mxu0 %v107
    %2282 = vmatpush.bf16.msra.mxu0 %v106
    %2283 = vmatpush.bf16.msra.mxu0 %v105
    %2284 = vmatpush.bf16.msra.mxu0 %v104
    %2285 = vmatmul.bf16.gmra.mxu0 %v2272
    %v2286 = vpop.f32.mrf.mxu0
    %v2287 = vadd.f32 %v57, %v2286
    %v2288 = vpop.f32.mrf.mxu0
    %2289 = vdwg.mxu0
    %2290 = vmatpush.bf16.msra.mxu0 0
    %2291 = vmatpush.bf16.msra.mxu0 0
    %2292 = vmatpush.bf16.msra.mxu0 0
    %2293 = vmatpush.bf16.msra.mxu0 0
    %2294 = vmatpush.bf16.msra.mxu0 0
    %2295 = vmatpush.bf16.msra.mxu0 0
    %2296 = vmatpush.bf16.msra.mxu0 %v113
    %2297 = vmatpush.bf16.msra.mxu0 %v112
    %2298 = vmatmul.bf16.gmra.mxu0 %v2275
    %v2299 = vpop.f32.mrf.mxu0
    %v2300 = vadd.f32 %v2287, %v2299
    %v2301 = vpop.f32.mrf.mxu0
    %2302 = vdwg.mxu0
    %v2303 = vmax.f32 %v2300, 0.0
    %v2304 = vmax.f32 %v2267, %v2303
    %v2305 = vpack.c.bf16 %v2304, %v2304
    %s2306 = scalar_lea.vmem %s3, 576
    %v2307 = vld [vmem:[%s2306] sm:$0xf]
    %v2308 = vld [vmem:[%s2306 + $0x4] sm:$0xf]
    %v2309 = vld [vmem:[%s2306 + $0x8] sm:$0xf]
    %v2310 = vld [vmem:[%s2306 + $0xc] sm:$0xf]
    %v2311 = vld [vmem:[%s2306 + $0x10] sm:$0xf]
    %v2312 = vld [vmem:[%s2306 + $0x14] sm:$0xf]
    %v2313 = vld [vmem:[%s2306 + $0x18] sm:$0xf]
    %v2314 = vld [vmem:[%s2306 + $0x1c] sm:$0xf]
    %v2315 = vld [vmem:[%s2306 + $0x20] sm:$0xf]
    %v2316 = vld [vmem:[%s2306 + $0x24] sm:$0xf]
    %v2317 = vld [vmem:[%s2306 + $0x28] sm:$0xf]
    %v2318 = vld [vmem:[%s2306 + $0x2c] sm:$0xf]
    %v2319 = vld [vmem:[%s2306 + $0x30] sm:$0xf]
    %v2320 = vld [vmem:[%s2306 + $0x34] sm:$0xf]
    %v2321 = vld [vmem:[%s2306 + $0x38] sm:$0xf]
    %v2322 = vld [vmem:[%s2306 + $0x3c] sm:$0xf]
    %v2339 = vunpack.c.l.b16 %v2307
    %v2340 = vunpack.c.l.b16 %v2308
    %v2341 = vunpack.c.l.b16 %v2309
    %v2342 = vunpack.c.l.b16 %v2310
    %v2343 = vunpack.c.l.b16 %v2311
    %v2344 = vunpack.c.l.b16 %v2312
    %v2345 = vunpack.c.l.b16 %v2313
    %v2346 = vunpack.c.l.b16 %v2314
    %v2347 = vunpack.c.l.b16 %v2315
    %v2348 = vunpack.c.l.b16 %v2316
    %v2349 = vunpack.c.l.b16 %v2317
    %v2350 = vunpack.c.l.b16 %v2318
    %v2351 = vunpack.c.l.b16 %v2319
    %v2352 = vunpack.c.l.b16 %v2320
    %v2353 = vunpack.c.l.b16 %v2321
    %v2354 = vunpack.c.l.b16 %v2322
    %v2355 = vpack.c.b16 %v2340, %v2339
    %v2356 = vpack.c.b16 %v2342, %v2341
    %v2357 = vpack.c.b16 %v2344, %v2343
    %v2358 = vpack.c.b16 %v2346, %v2345
    %v2359 = vpack.c.b16 %v2348, %v2347
    %v2360 = vpack.c.b16 %v2350, %v2349
    %v2361 = vpack.c.b16 %v2352, %v2351
    %v2362 = vpack.c.b16 %v2354, %v2353
    %2371 = vmatpush.bf16.msra.mxu0 %v2362
    %2372 = vmatpush.bf16.msra.mxu0 %v2361
    %2373 = vmatpush.bf16.msra.mxu0 %v2360
    %2374 = vmatpush.bf16.msra.mxu0 %v2359
    %2375 = vmatpush.bf16.msra.mxu0 %v2358
    %2376 = vmatpush.bf16.msra.mxu0 %v2357
    %2377 = vmatpush.bf16.msra.mxu0 %v2356
    %2378 = vmatpush.bf16.msra.mxu0 %v2355
    %2379 = vmatmul.bf16.gmra.mxu0 %v2305
    %v2380 = vpop.f32.mrf.mxu0
    %v2381 = vadd.f32 0.0, %v2380
    %v2382 = vpop.f32.mrf.mxu0
    %2383 = vdwg.mxu0
    %v2384 = vadd.f32 %v2157, %v2381
    %s2385 = scalar_lea.vmem %s0, 20
    %v2386 = vld [vmem:[%s2385] sm:$0x3]
    %2388 = vst [vmem:[#allocation1] ss:$9 sm:$0xff] %v2386
    %v2389 = vld [vmem:[#allocation1] sm:$0xff]
    %v2390 = vld [vmem:[#allocation1 + $0x9] sm:$0xff]
    %v2392 = vsel %vm124, %v2390, 0
    %2394 = vmatpush.bf16.msra.mxu0 %v111
    %2395 = vmatpush.bf16.msra.mxu0 %v110
    %2396 = vmatpush.bf16.msra.mxu0 %v109
    %2397 = vmatpush.bf16.msra.mxu0 %v108
    %2398 = vmatpush.bf16.msra.mxu0 %v107
    %2399 = vmatpush.bf16.msra.mxu0 %v106
    %2400 = vmatpush.bf16.msra.mxu0 %v105
    %2401 = vmatpush.bf16.msra.mxu0 %v104
    %2402 = vmatmul.bf16.gmra.mxu0 %v2389
    %v2403 = vpop.f32.mrf.mxu0
    %v2404 = vadd.f32 %v57, %v2403
    %v2405 = vpop.f32.mrf.mxu0
    %2406 = vdwg.mxu0
    %2407 = vmatpush.bf16.msra.mxu0 0
    %2408 = vmatpush.bf16.msra.mxu0 0
    %2409 = vmatpush.bf16.msra.mxu0 0
    %2410 = vmatpush.bf16.msra.mxu0 0
    %2411 = vmatpush.bf16.msra.mxu0 0
    %2412 = vmatpush.bf16.msra.mxu0 0
    %2413 = vmatpush.bf16.msra.mxu0 %v113
    %2414 = vmatpush.bf16.msra.mxu0 %v112
    %2415 = vmatmul.bf16.gmra.mxu0 %v2392
    %v2416 = vpop.f32.mrf.mxu0
    %v2417 = vadd.f32 %v2404, %v2416
    %v2418 = vpop.f32.mrf.mxu0
    %2419 = vdwg.mxu0
    %v2420 = vmax.f32 %v2417, 0.0
    %s2421 = scalar_lea.vmem %s0, 70
    %v2422 = vld [vmem:[%s2421] sm:$0x3]
    %2424 = vst [vmem:[#allocation1] ss:$9 sm:$0xff] %v2422
    %v2425 = vld [vmem:[#allocation1] sm:$0xff]
    %v2426 = vld [vmem:[#allocation1 + $0x9] sm:$0xff]
    %v2428 = vsel %vm124, %v2426, 0
    %2430 = vmatpush.bf16.msra.mxu0 %v111
    %2431 = vmatpush.bf16.msra.mxu0 %v110
    %2432 = vmatpush.bf16.msra.mxu0 %v109
    %2433 = vmatpush.bf16.msra.mxu0 %v108
    %2434 = vmatpush.bf16.msra.mxu0 %v107
    %2435 = vmatpush.bf16.msra.mxu0 %v106
    %2436 = vmatpush.bf16.msra.mxu0 %v105
    %2437 = vmatpush.bf16.msra.mxu0 %v104
    %2438 = vmatmul.bf16.gmra.mxu0 %v2425
    %v2439 = vpop.f32.mrf.mxu0
    %v2440 = vadd.f32 %v57, %v2439
    %v2441 = vpop.f32.mrf.mxu0
    %2442 = vdwg.mxu0
    %2443 = vmatpush.bf16.msra.mxu0 0
    %2444 = vmatpush.bf16.msra.mxu0 0
    %2445 = vmatpush.bf16.msra.mxu0 0
    %2446 = vmatpush.bf16.msra.mxu0 0
    %2447 = vmatpush.bf16.msra.mxu0 0
    %2448 = vmatpush.bf16.msra.mxu0 0
    %2449 = vmatpush.bf16.msra.mxu0 %v113
    %2450 = vmatpush.bf16.msra.mxu0 %v112
    %2451 = vmatmul.bf16.gmra.mxu0 %v2428
    %v2452 = vpop.f32.mrf.mxu0
    %v2453 = vadd.f32 %v2440, %v2452
    %v2454 = vpop.f32.mrf.mxu0
    %2455 = vdwg.mxu0
    %v2456 = vmax.f32 %v2453, 0.0
    %v2457 = vmax.f32 %v2420, %v2456
    %s2458 = scalar_lea.vmem %s0, 120
    %v2459 = vld [vmem:[%s2458] sm:$0x3]
    %2461 = vst [vmem:[#allocation1] ss:$9 sm:$0xff] %v2459
    %v2462 = vld [vmem:[#allocation1] sm:$0xff]
    %v2463 = vld [vmem:[#allocation1 + $0x9] sm:$0xff]
    %v2465 = vsel %vm124, %v2463, 0
    %2467 = vmatpush.bf16.msra.mxu0 %v111
    %2468 = vmatpush.bf16.msra.mxu0 %v110
    %2469 = vmatpush.bf16.msra.mxu0 %v109
    %2470 = vmatpush.bf16.msra.mxu0 %v108
    %2471 = vmatpush.bf16.msra.mxu0 %v107
    %2472 = vmatpush.bf16.msra.mxu0 %v106
    %2473 = vmatpush.bf16.msra.mxu0 %v105
    %2474 = vmatpush.bf16.msra.mxu0 %v104
    %2475 = vmatmul.bf16.gmra.mxu0 %v2462
    %v2476 = vpop.f32.mrf.mxu0
    %v2477 = vadd.f32 %v57, %v2476
    %v2478 = vpop.f32.mrf.mxu0
    %2479 = vdwg.mxu0
    %2480 = vmatpush.bf16.msra.mxu0 0
    %2481 = vmatpush.bf16.msra.mxu0 0
    %2482 = vmatpush.bf16.msra.mxu0 0
    %2483 = vmatpush.bf16.msra.mxu0 0
    %2484 = vmatpush.bf16.msra.mxu0 0
    %2485 = vmatpush.bf16.msra.mxu0 0
    %2486 = vmatpush.bf16.msra.mxu0 %v113
    %2487 = vmatpush.bf16.msra.mxu0 %v112
    %2488 = vmatmul.bf16.gmra.mxu0 %v2465
    %v2489 = vpop.f32.mrf.mxu0
    %v2490 = vadd.f32 %v2477, %v2489
    %v2491 = vpop.f32.mrf.mxu0
    %2492 = vdwg.mxu0
    %v2493 = vmax.f32 %v2490, 0.0
    %v2494 = vmax.f32 %v2457, %v2493
    %s2495 = scalar_lea.vmem %s0, 170
    %v2496 = vld [vmem:[%s2495] sm:$0x3]
    %2498 = vst [vmem:[#allocation1] ss:$9 sm:$0xff] %v2496
    %v2499 = vld [vmem:[#allocation1] sm:$0xff]
    %v2500 = vld [vmem:[#allocation1 + $0x9] sm:$0xff]
    %v2502 = vsel %vm124, %v2500, 0
    %2504 = vmatpush.bf16.msra.mxu0 %v111
    %2505 = vmatpush.bf16.msra.mxu0 %v110
    %2506 = vmatpush.bf16.msra.mxu0 %v109
    %2507 = vmatpush.bf16.msra.mxu0 %v108
    %2508 = vmatpush.bf16.msra.mxu0 %v107
    %2509 = vmatpush.bf16.msra.mxu0 %v106
    %2510 = vmatpush.bf16.msra.mxu0 %v105
    %2511 = vmatpush.bf16.msra.mxu0 %v104
    %2512 = vmatmul.bf16.gmra.mxu0 %v2499
    %v2513 = vpop.f32.mrf.mxu0
    %v2514 = vadd.f32 %v57, %v2513
    %v2515 = vpop.f32.mrf.mxu0
    %2516 = vdwg.mxu0
    %2517 = vmatpush.bf16.msra.mxu0 0
    %2518 = vmatpush.bf16.msra.mxu0 0
    %2519 = vmatpush.bf16.msra.mxu0 0
    %2520 = vmatpush.bf16.msra.mxu0 0
    %2521 = vmatpush.bf16.msra.mxu0 0
    %2522 = vmatpush.bf16.msra.mxu0 0
    %2523 = vmatpush.bf16.msra.mxu0 %v113
    %2524 = vmatpush.bf16.msra.mxu0 %v112
    %2525 = vmatmul.bf16.gmra.mxu0 %v2502
    %v2526 = vpop.f32.mrf.mxu0
    %v2527 = vadd.f32 %v2514, %v2526
    %v2528 = vpop.f32.mrf.mxu0
    %2529 = vdwg.mxu0
    %v2530 = vmax.f32 %v2527, 0.0
    %v2531 = vmax.f32 %v2494, %v2530
    %v2532 = vpack.c.bf16 %v2531, %v2531
    %s2533 = scalar_lea.vmem %s3, 640
    %v2534 = vld [vmem:[%s2533] sm:$0xf]
    %v2535 = vld [vmem:[%s2533 + $0x4] sm:$0xf]
    %v2536 = vld [vmem:[%s2533 + $0x8] sm:$0xf]
    %v2537 = vld [vmem:[%s2533 + $0xc] sm:$0xf]
    %v2538 = vld [vmem:[%s2533 + $0x10] sm:$0xf]
    %v2539 = vld [vmem:[%s2533 + $0x14] sm:$0xf]
    %v2540 = vld [vmem:[%s2533 + $0x18] sm:$0xf]
    %v2541 = vld [vmem:[%s2533 + $0x1c] sm:$0xf]
    %v2542 = vld [vmem:[%s2533 + $0x20] sm:$0xf]
    %v2543 = vld [vmem:[%s2533 + $0x24] sm:$0xf]
    %v2544 = vld [vmem:[%s2533 + $0x28] sm:$0xf]
    %v2545 = vld [vmem:[%s2533 + $0x2c] sm:$0xf]
    %v2546 = vld [vmem:[%s2533 + $0x30] sm:$0xf]
    %v2547 = vld [vmem:[%s2533 + $0x34] sm:$0xf]
    %v2548 = vld [vmem:[%s2533 + $0x38] sm:$0xf]
    %v2549 = vld [vmem:[%s2533 + $0x3c] sm:$0xf]
    %v2566 = vunpack.c.l.b16 %v2534
    %v2567 = vunpack.c.l.b16 %v2535
    %v2568 = vunpack.c.l.b16 %v2536
    %v2569 = vunpack.c.l.b16 %v2537
    %v2570 = vunpack.c.l.b16 %v2538
    %v2571 = vunpack.c.l.b16 %v2539
    %v2572 = vunpack.c.l.b16 %v2540
    %v2573 = vunpack.c.l.b16 %v2541
    %v2574 = vunpack.c.l.b16 %v2542
    %v2575 = vunpack.c.l.b16 %v2543
    %v2576 = vunpack.c.l.b16 %v2544
    %v2577 = vunpack.c.l.b16 %v2545
    %v2578 = vunpack.c.l.b16 %v2546
    %v2579 = vunpack.c.l.b16 %v2547
    %v2580 = vunpack.c.l.b16 %v2548
    %v2581 = vunpack.c.l.b16 %v2549
    %v2582 = vpack.c.b16 %v2567, %v2566
    %v2583 = vpack.c.b16 %v2569, %v2568
    %v2584 = vpack.c.b16 %v2571, %v2570
    %v2585 = vpack.c.b16 %v2573, %v2572
    %v2586 = vpack.c.b16 %v2575, %v2574
    %v2587 = vpack.c.b16 %v2577, %v2576
    %v2588 = vpack.c.b16 %v2579, %v2578
    %v2589 = vpack.c.b16 %v2581, %v2580
    %2598 = vmatpush.bf16.msra.mxu0 %v2589
    %2599 = vmatpush.bf16.msra.mxu0 %v2588
    %2600 = vmatpush.bf16.msra.mxu0 %v2587
    %2601 = vmatpush.bf16.msra.mxu0 %v2586
    %2602 = vmatpush.bf16.msra.mxu0 %v2585
    %2603 = vmatpush.bf16.msra.mxu0 %v2584
    %2604 = vmatpush.bf16.msra.mxu0 %v2583
    %2605 = vmatpush.bf16.msra.mxu0 %v2582
    %2606 = vmatmul.bf16.gmra.mxu0 %v2532
    %v2607 = vpop.f32.mrf.mxu0
    %v2608 = vadd.f32 0.0, %v2607
    %v2609 = vpop.f32.mrf.mxu0
    %2610 = vdwg.mxu0
    %v2611 = vadd.f32 %v2384, %v2608
    %s2612 = scalar_lea.vmem %s0, 22
    %v2613 = vld [vmem:[%s2612] sm:$0x3]
    %2615 = vst [vmem:[#allocation1] ss:$9 sm:$0xff] %v2613
    %v2616 = vld [vmem:[#allocation1] sm:$0xff]
    %v2617 = vld [vmem:[#allocation1 + $0x9] sm:$0xff]
    %v2619 = vsel %vm124, %v2617, 0
    %2621 = vmatpush.bf16.msra.mxu0 %v111
    %2622 = vmatpush.bf16.msra.mxu0 %v110
    %2623 = vmatpush.bf16.msra.mxu0 %v109
    %2624 = vmatpush.bf16.msra.mxu0 %v108
    %2625 = vmatpush.bf16.msra.mxu0 %v107
    %2626 = vmatpush.bf16.msra.mxu0 %v106
    %2627 = vmatpush.bf16.msra.mxu0 %v105
    %2628 = vmatpush.bf16.msra.mxu0 %v104
    %2629 = vmatmul.bf16.gmra.mxu0 %v2616
    %v2630 = vpop.f32.mrf.mxu0
    %v2631 = vadd.f32 %v57, %v2630
    %v2632 = vpop.f32.mrf.mxu0
    %2633 = vdwg.mxu0
    %2634 = vmatpush.bf16.msra.mxu0 0
    %2635 = vmatpush.bf16.msra.mxu0 0
    %2636 = vmatpush.bf16.msra.mxu0 0
    %2637 = vmatpush.bf16.msra.mxu0 0
    %2638 = vmatpush.bf16.msra.mxu0 0
    %2639 = vmatpush.bf16.msra.mxu0 0
    %2640 = vmatpush.bf16.msra.mxu0 %v113
    %2641 = vmatpush.bf16.msra.mxu0 %v112
    %2642 = vmatmul.bf16.gmra.mxu0 %v2619
    %v2643 = vpop.f32.mrf.mxu0
    %v2644 = vadd.f32 %v2631, %v2643
    %v2645 = vpop.f32.mrf.mxu0
    %2646 = vdwg.mxu0
    %v2647 = vmax.f32 %v2644, 0.0
    %s2648 = scalar_lea.vmem %s0, 72
    %v2649 = vld [vmem:[%s2648] sm:$0x3]
    %2651 = vst [vmem:[#allocation1] ss:$9 sm:$0xff] %v2649
    %v2652 = vld [vmem:[#allocation1] sm:$0xff]
    %v2653 = vld [vmem:[#allocation1 + $0x9] sm:$0xff]
    %v2655 = vsel %vm124, %v2653, 0
    %2657 = vmatpush.bf16.msra.mxu0 %v111
    %2658 = vmatpush.bf16.msra.mxu0 %v110
    %2659 = vmatpush.bf16.msra.mxu0 %v109
    %2660 = vmatpush.bf16.msra.mxu0 %v108
    %2661 = vmatpush.bf16.msra.mxu0 %v107
    %2662 = vmatpush.bf16.msra.mxu0 %v106
    %2663 = vmatpush.bf16.msra.mxu0 %v105
    %2664 = vmatpush.bf16.msra.mxu0 %v104
    %2665 = vmatmul.bf16.gmra.mxu0 %v2652
    %v2666 = vpop.f32.mrf.mxu0
    %v2667 = vadd.f32 %v57, %v2666
    %v2668 = vpop.f32.mrf.mxu0
    %2669 = vdwg.mxu0
    %2670 = vmatpush.bf16.msra.mxu0 0
    %2671 = vmatpush.bf16.msra.mxu0 0
    %2672 = vmatpush.bf16.msra.mxu0 0
    %2673 = vmatpush.bf16.msra.mxu0 0
    %2674 = vmatpush.bf16.msra.mxu0 0
    %2675 = vmatpush.bf16.msra.mxu0 0
    %2676 = vmatpush.bf16.msra.mxu0 %v113
    %2677 = vmatpush.bf16.msra.mxu0 %v112
    %2678 = vmatmul.bf16.gmra.mxu0 %v2655
    %v2679 = vpop.f32.mrf.mxu0
    %v2680 = vadd.f32 %v2667, %v2679
    %v2681 = vpop.f32.mrf.mxu0
    %2682 = vdwg.mxu0
    %v2683 = vmax.f32 %v2680, 0.0
    %v2684 = vmax.f32 %v2647, %v2683
    %s2685 = scalar_lea.vmem %s0, 122
    %v2686 = vld [vmem:[%s2685] sm:$0x3]
    %2688 = vst [vmem:[#allocation1] ss:$9 sm:$0xff] %v2686
    %v2689 = vld [vmem:[#allocation1] sm:$0xff]
    %v2690 = vld [vmem:[#allocation1 + $0x9] sm:$0xff]
    %v2692 = vsel %vm124, %v2690, 0
    %2694 = vmatpush.bf16.msra.mxu0 %v111
    %2695 = vmatpush.bf16.msra.mxu0 %v110
    %2696 = vmatpush.bf16.msra.mxu0 %v109
    %2697 = vmatpush.bf16.msra.mxu0 %v108
    %2698 = vmatpush.bf16.msra.mxu0 %v107
    %2699 = vmatpush.bf16.msra.mxu0 %v106
    %2700 = vmatpush.bf16.msra.mxu0 %v105
    %2701 = vmatpush.bf16.msra.mxu0 %v104
    %2702 = vmatmul.bf16.gmra.mxu0 %v2689
    %v2703 = vpop.f32.mrf.mxu0
    %v2704 = vadd.f32 %v57, %v2703
    %v2705 = vpop.f32.mrf.mxu0
    %2706 = vdwg.mxu0
    %2707 = vmatpush.bf16.msra.mxu0 0
    %2708 = vmatpush.bf16.msra.mxu0 0
    %2709 = vmatpush.bf16.msra.mxu0 0
    %2710 = vmatpush.bf16.msra.mxu0 0
    %2711 = vmatpush.bf16.msra.mxu0 0
    %2712 = vmatpush.bf16.msra.mxu0 0
    %2713 = vmatpush.bf16.msra.mxu0 %v113
    %2714 = vmatpush.bf16.msra.mxu0 %v112
    %2715 = vmatmul.bf16.gmra.mxu0 %v2692
    %v2716 = vpop.f32.mrf.mxu0
    %v2717 = vadd.f32 %v2704, %v2716
    %v2718 = vpop.f32.mrf.mxu0
    %2719 = vdwg.mxu0
    %v2720 = vmax.f32 %v2717, 0.0
    %v2721 = vmax.f32 %v2684, %v2720
    %s2722 = scalar_lea.vmem %s0, 172
    %v2723 = vld [vmem:[%s2722] sm:$0x3]
    %2725 = vst [vmem:[#allocation1] ss:$9 sm:$0xff] %v2723
    %v2726 = vld [vmem:[#allocation1] sm:$0xff]
    %v2727 = vld [vmem:[#allocation1 + $0x9] sm:$0xff]
    %v2729 = vsel %vm124, %v2727, 0
    %2731 = vmatpush.bf16.msra.mxu0 %v111
    %2732 = vmatpush.bf16.msra.mxu0 %v110
    %2733 = vmatpush.bf16.msra.mxu0 %v109
    %2734 = vmatpush.bf16.msra.mxu0 %v108
    %2735 = vmatpush.bf16.msra.mxu0 %v107
    %2736 = vmatpush.bf16.msra.mxu0 %v106
    %2737 = vmatpush.bf16.msra.mxu0 %v105
    %2738 = vmatpush.bf16.msra.mxu0 %v104
    %2739 = vmatmul.bf16.gmra.mxu0 %v2726
    %v2740 = vpop.f32.mrf.mxu0
    %v2741 = vadd.f32 %v57, %v2740
    %v2742 = vpop.f32.mrf.mxu0
    %2743 = vdwg.mxu0
    %2744 = vmatpush.bf16.msra.mxu0 0
    %2745 = vmatpush.bf16.msra.mxu0 0
    %2746 = vmatpush.bf16.msra.mxu0 0
    %2747 = vmatpush.bf16.msra.mxu0 0
    %2748 = vmatpush.bf16.msra.mxu0 0
    %2749 = vmatpush.bf16.msra.mxu0 0
    %2750 = vmatpush.bf16.msra.mxu0 %v113
    %2751 = vmatpush.bf16.msra.mxu0 %v112
    %2752 = vmatmul.bf16.gmra.mxu0 %v2729
    %v2753 = vpop.f32.mrf.mxu0
    %v2754 = vadd.f32 %v2741, %v2753
    %v2755 = vpop.f32.mrf.mxu0
    %2756 = vdwg.mxu0
    %v2757 = vmax.f32 %v2754, 0.0
    %v2758 = vmax.f32 %v2721, %v2757
    %v2759 = vpack.c.bf16 %v2758, %v2758
    %s2760 = scalar_lea.vmem %s3, 704
    %v2761 = vld [vmem:[%s2760] sm:$0xf]
    %v2762 = vld [vmem:[%s2760 + $0x4] sm:$0xf]
    %v2763 = vld [vmem:[%s2760 + $0x8] sm:$0xf]
    %v2764 = vld [vmem:[%s2760 + $0xc] sm:$0xf]
    %v2765 = vld [vmem:[%s2760 + $0x10] sm:$0xf]
    %v2766 = vld [vmem:[%s2760 + $0x14] sm:$0xf]
    %v2767 = vld [vmem:[%s2760 + $0x18] sm:$0xf]
    %v2768 = vld [vmem:[%s2760 + $0x1c] sm:$0xf]
    %v2769 = vld [vmem:[%s2760 + $0x20] sm:$0xf]
    %v2770 = vld [vmem:[%s2760 + $0x24] sm:$0xf]
    %v2771 = vld [vmem:[%s2760 + $0x28] sm:$0xf]
    %v2772 = vld [vmem:[%s2760 + $0x2c] sm:$0xf]
    %v2773 = vld [vmem:[%s2760 + $0x30] sm:$0xf]
    %v2774 = vld [vmem:[%s2760 + $0x34] sm:$0xf]
    %v2775 = vld [vmem:[%s2760 + $0x38] sm:$0xf]
    %v2776 = vld [vmem:[%s2760 + $0x3c] sm:$0xf]
    %v2793 = vunpack.c.l.b16 %v2761
    %v2794 = vunpack.c.l.b16 %v2762
    %v2795 = vunpack.c.l.b16 %v2763
    %v2796 = vunpack.c.l.b16 %v2764
    %v2797 = vunpack.c.l.b16 %v2765
    %v2798 = vunpack.c.l.b16 %v2766
    %v2799 = vunpack.c.l.b16 %v2767
    %v2800 = vunpack.c.l.b16 %v2768
    %v2801 = vunpack.c.l.b16 %v2769
    %v2802 = vunpack.c.l.b16 %v2770
    %v2803 = vunpack.c.l.b16 %v2771
    %v2804 = vunpack.c.l.b16 %v2772
    %v2805 = vunpack.c.l.b16 %v2773
    %v2806 = vunpack.c.l.b16 %v2774
    %v2807 = vunpack.c.l.b16 %v2775
    %v2808 = vunpack.c.l.b16 %v2776
    %v2809 = vpack.c.b16 %v2794, %v2793
    %v2810 = vpack.c.b16 %v2796, %v2795
    %v2811 = vpack.c.b16 %v2798, %v2797
    %v2812 = vpack.c.b16 %v2800, %v2799
    %v2813 = vpack.c.b16 %v2802, %v2801
    %v2814 = vpack.c.b16 %v2804, %v2803
    %v2815 = vpack.c.b16 %v2806, %v2805
    %v2816 = vpack.c.b16 %v2808, %v2807
    %2825 = vmatpush.bf16.msra.mxu0 %v2816
    %2826 = vmatpush.bf16.msra.mxu0 %v2815
    %2827 = vmatpush.bf16.msra.mxu0 %v2814
    %2828 = vmatpush.bf16.msra.mxu0 %v2813
    %2829 = vmatpush.bf16.msra.mxu0 %v2812
    %2830 = vmatpush.bf16.msra.mxu0 %v2811
    %2831 = vmatpush.bf16.msra.mxu0 %v2810
    %2832 = vmatpush.bf16.msra.mxu0 %v2809
    %2833 = vmatmul.bf16.gmra.mxu0 %v2759
    %v2834 = vpop.f32.mrf.mxu0
    %v2835 = vadd.f32 0.0, %v2834
    %v2836 = vpop.f32.mrf.mxu0
    %2837 = vdwg.mxu0
    %v2838 = vadd.f32 %v2611, %v2835
    %s2839 = scalar_lea.vmem %s0, 24
    %v2840 = vld [vmem:[%s2839] sm:$0x3]
    %2842 = vst [vmem:[#allocation1] ss:$9 sm:$0xff] %v2840
    %v2843 = vld [vmem:[#allocation1] sm:$0xff]
    %v2844 = vld [vmem:[#allocation1 + $0x9] sm:$0xff]
    %v2846 = vsel %vm124, %v2844, 0
    %2848 = vmatpush.bf16.msra.mxu0 %v111
    %2849 = vmatpush.bf16.msra.mxu0 %v110
    %2850 = vmatpush.bf16.msra.mxu0 %v109
    %2851 = vmatpush.bf16.msra.mxu0 %v108
    %2852 = vmatpush.bf16.msra.mxu0 %v107
    %2853 = vmatpush.bf16.msra.mxu0 %v106
    %2854 = vmatpush.bf16.msra.mxu0 %v105
    %2855 = vmatpush.bf16.msra.mxu0 %v104
    %2856 = vmatmul.bf16.gmra.mxu0 %v2843
    %v2857 = vpop.f32.mrf.mxu0
    %v2858 = vadd.f32 %v57, %v2857
    %v2859 = vpop.f32.mrf.mxu0
    %2860 = vdwg.mxu0
    %2861 = vmatpush.bf16.msra.mxu0 0
    %2862 = vmatpush.bf16.msra.mxu0 0
    %2863 = vmatpush.bf16.msra.mxu0 0
    %2864 = vmatpush.bf16.msra.mxu0 0
    %2865 = vmatpush.bf16.msra.mxu0 0
    %2866 = vmatpush.bf16.msra.mxu0 0
    %2867 = vmatpush.bf16.msra.mxu0 %v113
    %2868 = vmatpush.bf16.msra.mxu0 %v112
    %2869 = vmatmul.bf16.gmra.mxu0 %v2846
    %v2870 = vpop.f32.mrf.mxu0
    %v2871 = vadd.f32 %v2858, %v2870
    %v2872 = vpop.f32.mrf.mxu0
    %2873 = vdwg.mxu0
    %v2874 = vmax.f32 %v2871, 0.0
    %s2875 = scalar_lea.vmem %s0, 74
    %v2876 = vld [vmem:[%s2875] sm:$0x3]
    %2878 = vst [vmem:[#allocation1] ss:$9 sm:$0xff] %v2876
    %v2879 = vld [vmem:[#allocation1] sm:$0xff]
    %v2880 = vld [vmem:[#allocation1 + $0x9] sm:$0xff]
    %v2882 = vsel %vm124, %v2880, 0
    %2884 = vmatpush.bf16.msra.mxu0 %v111
    %2885 = vmatpush.bf16.msra.mxu0 %v110
    %2886 = vmatpush.bf16.msra.mxu0 %v109
    %2887 = vmatpush.bf16.msra.mxu0 %v108
    %2888 = vmatpush.bf16.msra.mxu0 %v107
    %2889 = vmatpush.bf16.msra.mxu0 %v106
    %2890 = vmatpush.bf16.msra.mxu0 %v105
    %2891 = vmatpush.bf16.msra.mxu0 %v104
    %2892 = vmatmul.bf16.gmra.mxu0 %v2879
    %v2893 = vpop.f32.mrf.mxu0
    %v2894 = vadd.f32 %v57, %v2893
    %v2895 = vpop.f32.mrf.mxu0
    %2896 = vdwg.mxu0
    %2897 = vmatpush.bf16.msra.mxu0 0
    %2898 = vmatpush.bf16.msra.mxu0 0
    %2899 = vmatpush.bf16.msra.mxu0 0
    %2900 = vmatpush.bf16.msra.mxu0 0
    %2901 = vmatpush.bf16.msra.mxu0 0
    %2902 = vmatpush.bf16.msra.mxu0 0
    %2903 = vmatpush.bf16.msra.mxu0 %v113
    %2904 = vmatpush.bf16.msra.mxu0 %v112
    %2905 = vmatmul.bf16.gmra.mxu0 %v2882
    %v2906 = vpop.f32.mrf.mxu0
    %v2907 = vadd.f32 %v2894, %v2906
    %v2908 = vpop.f32.mrf.mxu0
    %2909 = vdwg.mxu0
    %v2910 = vmax.f32 %v2907, 0.0
    %v2911 = vmax.f32 %v2874, %v2910
    %s2912 = scalar_lea.vmem %s0, 124
    %v2913 = vld [vmem:[%s2912] sm:$0x3]
    %2915 = vst [vmem:[#allocation1] ss:$9 sm:$0xff] %v2913
    %v2916 = vld [vmem:[#allocation1] sm:$0xff]
    %v2917 = vld [vmem:[#allocation1 + $0x9] sm:$0xff]
    %v2919 = vsel %vm124, %v2917, 0
    %2921 = vmatpush.bf16.msra.mxu0 %v111
    %2922 = vmatpush.bf16.msra.mxu0 %v110
    %2923 = vmatpush.bf16.msra.mxu0 %v109
    %2924 = vmatpush.bf16.msra.mxu0 %v108
    %2925 = vmatpush.bf16.msra.mxu0 %v107
    %2926 = vmatpush.bf16.msra.mxu0 %v106
    %2927 = vmatpush.bf16.msra.mxu0 %v105
    %2928 = vmatpush.bf16.msra.mxu0 %v104
    %2929 = vmatmul.bf16.gmra.mxu0 %v2916
    %v2930 = vpop.f32.mrf.mxu0
    %v2931 = vadd.f32 %v57, %v2930
    %v2932 = vpop.f32.mrf.mxu0
    %2933 = vdwg.mxu0
    %2934 = vmatpush.bf16.msra.mxu0 0
    %2935 = vmatpush.bf16.msra.mxu0 0
    %2936 = vmatpush.bf16.msra.mxu0 0
    %2937 = vmatpush.bf16.msra.mxu0 0
    %2938 = vmatpush.bf16.msra.mxu0 0
    %2939 = vmatpush.bf16.msra.mxu0 0
    %2940 = vmatpush.bf16.msra.mxu0 %v113
    %2941 = vmatpush.bf16.msra.mxu0 %v112
    %2942 = vmatmul.bf16.gmra.mxu0 %v2919
    %v2943 = vpop.f32.mrf.mxu0
    %v2944 = vadd.f32 %v2931, %v2943
    %v2945 = vpop.f32.mrf.mxu0
    %2946 = vdwg.mxu0
    %v2947 = vmax.f32 %v2944, 0.0
    %v2948 = vmax.f32 %v2911, %v2947
    %s2949 = scalar_lea.vmem %s0, 174
    %v2950 = vld [vmem:[%s2949] sm:$0x3]
    %2952 = vst [vmem:[#allocation1] ss:$9 sm:$0xff] %v2950
    %v2953 = vld [vmem:[#allocation1] sm:$0xff]
    %v2954 = vld [vmem:[#allocation1 + $0x9] sm:$0xff]
    %v2956 = vsel %vm124, %v2954, 0
    %2958 = vmatpush.bf16.msra.mxu0 %v111
    %2959 = vmatpush.bf16.msra.mxu0 %v110
    %2960 = vmatpush.bf16.msra.mxu0 %v109
    %2961 = vmatpush.bf16.msra.mxu0 %v108
    %2962 = vmatpush.bf16.msra.mxu0 %v107
    %2963 = vmatpush.bf16.msra.mxu0 %v106
    %2964 = vmatpush.bf16.msra.mxu0 %v105
    %2965 = vmatpush.bf16.msra.mxu0 %v104
    %2966 = vmatmul.bf16.gmra.mxu0 %v2953
    %v2967 = vpop.f32.mrf.mxu0
    %v2968 = vadd.f32 %v57, %v2967
    %v2969 = vpop.f32.mrf.mxu0
    %2970 = vdwg.mxu0
    %2971 = vmatpush.bf16.msra.mxu0 0
    %2972 = vmatpush.bf16.msra.mxu0 0
    %2973 = vmatpush.bf16.msra.mxu0 0
    %2974 = vmatpush.bf16.msra.mxu0 0
    %2975 = vmatpush.bf16.msra.mxu0 0
    %2976 = vmatpush.bf16.msra.mxu0 0
    %2977 = vmatpush.bf16.msra.mxu0 %v113
    %2978 = vmatpush.bf16.msra.mxu0 %v112
    %2979 = vmatmul.bf16.gmra.mxu0 %v2956
    %v2980 = vpop.f32.mrf.mxu0
    %v2981 = vadd.f32 %v2968, %v2980
    %v2982 = vpop.f32.mrf.mxu0
    %2983 = vdwg.mxu0
    %v2984 = vmax.f32 %v2981, 0.0
    %v2985 = vmax.f32 %v2948, %v2984
    %v2986 = vpack.c.bf16 %v2985, %v2985
    %s2987 = scalar_lea.vmem %s3, 768
    %v2988 = vld [vmem:[%s2987] sm:$0xf]
    %v2989 = vld [vmem:[%s2987 + $0x4] sm:$0xf]
    %v2990 = vld [vmem:[%s2987 + $0x8] sm:$0xf]
    %v2991 = vld [vmem:[%s2987 + $0xc] sm:$0xf]
    %v2992 = vld [vmem:[%s2987 + $0x10] sm:$0xf]
    %v2993 = vld [vmem:[%s2987 + $0x14] sm:$0xf]
    %v2994 = vld [vmem:[%s2987 + $0x18] sm:$0xf]
    %v2995 = vld [vmem:[%s2987 + $0x1c] sm:$0xf]
    %v2996 = vld [vmem:[%s2987 + $0x20] sm:$0xf]
    %v2997 = vld [vmem:[%s2987 + $0x24] sm:$0xf]
    %v2998 = vld [vmem:[%s2987 + $0x28] sm:$0xf]
    %v2999 = vld [vmem:[%s2987 + $0x2c] sm:$0xf]
    %v3000 = vld [vmem:[%s2987 + $0x30] sm:$0xf]
    %v3001 = vld [vmem:[%s2987 + $0x34] sm:$0xf]
    %v3002 = vld [vmem:[%s2987 + $0x38] sm:$0xf]
    %v3003 = vld [vmem:[%s2987 + $0x3c] sm:$0xf]
    %v3020 = vunpack.c.l.b16 %v2988
    %v3021 = vunpack.c.l.b16 %v2989
    %v3022 = vunpack.c.l.b16 %v2990
    %v3023 = vunpack.c.l.b16 %v2991
    %v3024 = vunpack.c.l.b16 %v2992
    %v3025 = vunpack.c.l.b16 %v2993
    %v3026 = vunpack.c.l.b16 %v2994
    %v3027 = vunpack.c.l.b16 %v2995
    %v3028 = vunpack.c.l.b16 %v2996
    %v3029 = vunpack.c.l.b16 %v2997
    %v3030 = vunpack.c.l.b16 %v2998
    %v3031 = vunpack.c.l.b16 %v2999
    %v3032 = vunpack.c.l.b16 %v3000
    %v3033 = vunpack.c.l.b16 %v3001
    %v3034 = vunpack.c.l.b16 %v3002
    %v3035 = vunpack.c.l.b16 %v3003
    %v3036 = vpack.c.b16 %v3021, %v3020
    %v3037 = vpack.c.b16 %v3023, %v3022
    %v3038 = vpack.c.b16 %v3025, %v3024
    %v3039 = vpack.c.b16 %v3027, %v3026
    %v3040 = vpack.c.b16 %v3029, %v3028
    %v3041 = vpack.c.b16 %v3031, %v3030
    %v3042 = vpack.c.b16 %v3033, %v3032
    %v3043 = vpack.c.b16 %v3035, %v3034
    %3052 = vmatpush.bf16.msra.mxu0 %v3043
    %3053 = vmatpush.bf16.msra.mxu0 %v3042
    %3054 = vmatpush.bf16.msra.mxu0 %v3041
    %3055 = vmatpush.bf16.msra.mxu0 %v3040
    %3056 = vmatpush.bf16.msra.mxu0 %v3039
    %3057 = vmatpush.bf16.msra.mxu0 %v3038
    %3058 = vmatpush.bf16.msra.mxu0 %v3037
    %3059 = vmatpush.bf16.msra.mxu0 %v3036
    %3060 = vmatmul.bf16.gmra.mxu0 %v2986
    %v3061 = vpop.f32.mrf.mxu0
    %v3062 = vadd.f32 0.0, %v3061
    %v3063 = vpop.f32.mrf.mxu0
    %3064 = vdwg.mxu0
    %v3065 = vadd.f32 %v2838, %v3062
    %s3066 = scalar_lea.vmem %s0, 26
    %v3067 = vld [vmem:[%s3066] sm:$0x3]
    %3069 = vst [vmem:[#allocation1] ss:$9 sm:$0xff] %v3067
    %v3070 = vld [vmem:[#allocation1] sm:$0xff]
    %v3071 = vld [vmem:[#allocation1 + $0x9] sm:$0xff]
    %v3073 = vsel %vm124, %v3071, 0
    %3075 = vmatpush.bf16.msra.mxu0 %v111
    %3076 = vmatpush.bf16.msra.mxu0 %v110
    %3077 = vmatpush.bf16.msra.mxu0 %v109
    %3078 = vmatpush.bf16.msra.mxu0 %v108
    %3079 = vmatpush.bf16.msra.mxu0 %v107
    %3080 = vmatpush.bf16.msra.mxu0 %v106
    %3081 = vmatpush.bf16.msra.mxu0 %v105
    %3082 = vmatpush.bf16.msra.mxu0 %v104
    %3083 = vmatmul.bf16.gmra.mxu0 %v3070
    %v3084 = vpop.f32.mrf.mxu0
    %v3085 = vadd.f32 %v57, %v3084
    %v3086 = vpop.f32.mrf.mxu0
    %3087 = vdwg.mxu0
    %3088 = vmatpush.bf16.msra.mxu0 0
    %3089 = vmatpush.bf16.msra.mxu0 0
    %3090 = vmatpush.bf16.msra.mxu0 0
    %3091 = vmatpush.bf16.msra.mxu0 0
    %3092 = vmatpush.bf16.msra.mxu0 0
    %3093 = vmatpush.bf16.msra.mxu0 0
    %3094 = vmatpush.bf16.msra.mxu0 %v113
    %3095 = vmatpush.bf16.msra.mxu0 %v112
    %3096 = vmatmul.bf16.gmra.mxu0 %v3073
    %v3097 = vpop.f32.mrf.mxu0
    %v3098 = vadd.f32 %v3085, %v3097
    %v3099 = vpop.f32.mrf.mxu0
    %3100 = vdwg.mxu0
    %v3101 = vmax.f32 %v3098, 0.0
    %s3102 = scalar_lea.vmem %s0, 76
    %v3103 = vld [vmem:[%s3102] sm:$0x3]
    %3105 = vst [vmem:[#allocation1] ss:$9 sm:$0xff] %v3103
    %v3106 = vld [vmem:[#allocation1] sm:$0xff]
    %v3107 = vld [vmem:[#allocation1 + $0x9] sm:$0xff]
    %v3109 = vsel %vm124, %v3107, 0
    %3111 = vmatpush.bf16.msra.mxu0 %v111
    %3112 = vmatpush.bf16.msra.mxu0 %v110
    %3113 = vmatpush.bf16.msra.mxu0 %v109
    %3114 = vmatpush.bf16.msra.mxu0 %v108
    %3115 = vmatpush.bf16.msra.mxu0 %v107
    %3116 = vmatpush.bf16.msra.mxu0 %v106
    %3117 = vmatpush.bf16.msra.mxu0 %v105
    %3118 = vmatpush.bf16.msra.mxu0 %v104
    %3119 = vmatmul.bf16.gmra.mxu0 %v3106
    %v3120 = vpop.f32.mrf.mxu0
    %v3121 = vadd.f32 %v57, %v3120
    %v3122 = vpop.f32.mrf.mxu0
    %3123 = vdwg.mxu0
    %3124 = vmatpush.bf16.msra.mxu0 0
    %3125 = vmatpush.bf16.msra.mxu0 0
    %3126 = vmatpush.bf16.msra.mxu0 0
    %3127 = vmatpush.bf16.msra.mxu0 0
    %3128 = vmatpush.bf16.msra.mxu0 0
    %3129 = vmatpush.bf16.msra.mxu0 0
    %3130 = vmatpush.bf16.msra.mxu0 %v113
    %3131 = vmatpush.bf16.msra.mxu0 %v112
    %3132 = vmatmul.bf16.gmra.mxu0 %v3109
    %v3133 = vpop.f32.mrf.mxu0
    %v3134 = vadd.f32 %v3121, %v3133
    %v3135 = vpop.f32.mrf.mxu0
    %3136 = vdwg.mxu0
    %v3137 = vmax.f32 %v3134, 0.0
    %v3138 = vmax.f32 %v3101, %v3137
    %s3139 = scalar_lea.vmem %s0, 126
    %v3140 = vld [vmem:[%s3139] sm:$0x3]
    %3142 = vst [vmem:[#allocation1] ss:$9 sm:$0xff] %v3140
    %v3143 = vld [vmem:[#allocation1] sm:$0xff]
    %v3144 = vld [vmem:[#allocation1 + $0x9] sm:$0xff]
    %v3146 = vsel %vm124, %v3144, 0
    %3148 = vmatpush.bf16.msra.mxu0 %v111
    %3149 = vmatpush.bf16.msra.mxu0 %v110
    %3150 = vmatpush.bf16.msra.mxu0 %v109
    %3151 = vmatpush.bf16.msra.mxu0 %v108
    %3152 = vmatpush.bf16.msra.mxu0 %v107
    %3153 = vmatpush.bf16.msra.mxu0 %v106
    %3154 = vmatpush.bf16.msra.mxu0 %v105
    %3155 = vmatpush.bf16.msra.mxu0 %v104
    %3156 = vmatmul.bf16.gmra.mxu0 %v3143
    %v3157 = vpop.f32.mrf.mxu0
    %v3158 = vadd.f32 %v57, %v3157
    %v3159 = vpop.f32.mrf.mxu0
    %3160 = vdwg.mxu0
    %3161 = vmatpush.bf16.msra.mxu0 0
    %3162 = vmatpush.bf16.msra.mxu0 0
    %3163 = vmatpush.bf16.msra.mxu0 0
    %3164 = vmatpush.bf16.msra.mxu0 0
    %3165 = vmatpush.bf16.msra.mxu0 0
    %3166 = vmatpush.bf16.msra.mxu0 0
    %3167 = vmatpush.bf16.msra.mxu0 %v113
    %3168 = vmatpush.bf16.msra.mxu0 %v112
    %3169 = vmatmul.bf16.gmra.mxu0 %v3146
    %v3170 = vpop.f32.mrf.mxu0
    %v3171 = vadd.f32 %v3158, %v3170
    %v3172 = vpop.f32.mrf.mxu0
    %3173 = vdwg.mxu0
    %v3174 = vmax.f32 %v3171, 0.0
    %v3175 = vmax.f32 %v3138, %v3174
    %s3176 = scalar_lea.vmem %s0, 176
    %v3177 = vld [vmem:[%s3176] sm:$0x3]
    %3179 = vst [vmem:[#allocation1] ss:$9 sm:$0xff] %v3177
    %v3180 = vld [vmem:[#allocation1] sm:$0xff]
    %v3181 = vld [vmem:[#allocation1 + $0x9] sm:$0xff]
    %v3183 = vsel %vm124, %v3181, 0
    %3185 = vmatpush.bf16.msra.mxu0 %v111
    %3186 = vmatpush.bf16.msra.mxu0 %v110
    %3187 = vmatpush.bf16.msra.mxu0 %v109
    %3188 = vmatpush.bf16.msra.mxu0 %v108
    %3189 = vmatpush.bf16.msra.mxu0 %v107
    %3190 = vmatpush.bf16.msra.mxu0 %v106
    %3191 = vmatpush.bf16.msra.mxu0 %v105
    %3192 = vmatpush.bf16.msra.mxu0 %v104
    %3193 = vmatmul.bf16.gmra.mxu0 %v3180
    %v3194 = vpop.f32.mrf.mxu0
    %v3195 = vadd.f32 %v57, %v3194
    %v3196 = vpop.f32.mrf.mxu0
    %3197 = vdwg.mxu0
    %3198 = vmatpush.bf16.msra.mxu0 0
    %3199 = vmatpush.bf16.msra.mxu0 0
    %3200 = vmatpush.bf16.msra.mxu0 0
    %3201 = vmatpush.bf16.msra.mxu0 0
    %3202 = vmatpush.bf16.msra.mxu0 0
    %3203 = vmatpush.bf16.msra.mxu0 0
    %3204 = vmatpush.bf16.msra.mxu0 %v113
    %3205 = vmatpush.bf16.msra.mxu0 %v112
    %3206 = vmatmul.bf16.gmra.mxu0 %v3183
    %v3207 = vpop.f32.mrf.mxu0
    %v3208 = vadd.f32 %v3195, %v3207
    %v3209 = vpop.f32.mrf.mxu0
    %3210 = vdwg.mxu0
    %v3211 = vmax.f32 %v3208, 0.0
    %v3212 = vmax.f32 %v3175, %v3211
    %v3213 = vpack.c.bf16 %v3212, %v3212
    %s3214 = scalar_lea.vmem %s3, 832
    %v3215 = vld [vmem:[%s3214] sm:$0xf]
    %v3216 = vld [vmem:[%s3214 + $0x4] sm:$0xf]
    %v3217 = vld [vmem:[%s3214 + $0x8] sm:$0xf]
    %v3218 = vld [vmem:[%s3214 + $0xc] sm:$0xf]
    %v3219 = vld [vmem:[%s3214 + $0x10] sm:$0xf]
    %v3220 = vld [vmem:[%s3214 + $0x14] sm:$0xf]
    %v3221 = vld [vmem:[%s3214 + $0x18] sm:$0xf]
    %v3222 = vld [vmem:[%s3214 + $0x1c] sm:$0xf]
    %v3223 = vld [vmem:[%s3214 + $0x20] sm:$0xf]
    %v3224 = vld [vmem:[%s3214 + $0x24] sm:$0xf]
    %v3225 = vld [vmem:[%s3214 + $0x28] sm:$0xf]
    %v3226 = vld [vmem:[%s3214 + $0x2c] sm:$0xf]
    %v3227 = vld [vmem:[%s3214 + $0x30] sm:$0xf]
    %v3228 = vld [vmem:[%s3214 + $0x34] sm:$0xf]
    %v3229 = vld [vmem:[%s3214 + $0x38] sm:$0xf]
    %v3230 = vld [vmem:[%s3214 + $0x3c] sm:$0xf]
    %v3247 = vunpack.c.l.b16 %v3215
    %v3248 = vunpack.c.l.b16 %v3216
    %v3249 = vunpack.c.l.b16 %v3217
    %v3250 = vunpack.c.l.b16 %v3218
    %v3251 = vunpack.c.l.b16 %v3219
    %v3252 = vunpack.c.l.b16 %v3220
    %v3253 = vunpack.c.l.b16 %v3221
    %v3254 = vunpack.c.l.b16 %v3222
    %v3255 = vunpack.c.l.b16 %v3223
    %v3256 = vunpack.c.l.b16 %v3224
    %v3257 = vunpack.c.l.b16 %v3225
    %v3258 = vunpack.c.l.b16 %v3226
    %v3259 = vunpack.c.l.b16 %v3227
    %v3260 = vunpack.c.l.b16 %v3228
    %v3261 = vunpack.c.l.b16 %v3229
    %v3262 = vunpack.c.l.b16 %v3230
    %v3263 = vpack.c.b16 %v3248, %v3247
    %v3264 = vpack.c.b16 %v3250, %v3249
    %v3265 = vpack.c.b16 %v3252, %v3251
    %v3266 = vpack.c.b16 %v3254, %v3253
    %v3267 = vpack.c.b16 %v3256, %v3255
    %v3268 = vpack.c.b16 %v3258, %v3257
    %v3269 = vpack.c.b16 %v3260, %v3259
    %v3270 = vpack.c.b16 %v3262, %v3261
    %3279 = vmatpush.bf16.msra.mxu0 %v3270
    %3280 = vmatpush.bf16.msra.mxu0 %v3269
    %3281 = vmatpush.bf16.msra.mxu0 %v3268
    %3282 = vmatpush.bf16.msra.mxu0 %v3267
    %3283 = vmatpush.bf16.msra.mxu0 %v3266
    %3284 = vmatpush.bf16.msra.mxu0 %v3265
    %3285 = vmatpush.bf16.msra.mxu0 %v3264
    %3286 = vmatpush.bf16.msra.mxu0 %v3263
    %3287 = vmatmul.bf16.gmra.mxu0 %v3213
    %v3288 = vpop.f32.mrf.mxu0
    %v3289 = vadd.f32 0.0, %v3288
    %v3290 = vpop.f32.mrf.mxu0
    %3291 = vdwg.mxu0
    %v3292 = vadd.f32 %v3065, %v3289
    %s3293 = scalar_lea.vmem %s0, 28
    %v3294 = vld [vmem:[%s3293] sm:$0x3]
    %3296 = vst [vmem:[#allocation1] ss:$9 sm:$0xff] %v3294
    %v3297 = vld [vmem:[#allocation1] sm:$0xff]
    %v3298 = vld [vmem:[#allocation1 + $0x9] sm:$0xff]
    %v3300 = vsel %vm124, %v3298, 0
    %3302 = vmatpush.bf16.msra.mxu0 %v111
    %3303 = vmatpush.bf16.msra.mxu0 %v110
    %3304 = vmatpush.bf16.msra.mxu0 %v109
    %3305 = vmatpush.bf16.msra.mxu0 %v108
    %3306 = vmatpush.bf16.msra.mxu0 %v107
    %3307 = vmatpush.bf16.msra.mxu0 %v106
    %3308 = vmatpush.bf16.msra.mxu0 %v105
    %3309 = vmatpush.bf16.msra.mxu0 %v104
    %3310 = vmatmul.bf16.gmra.mxu0 %v3297
    %v3311 = vpop.f32.mrf.mxu0
    %v3312 = vadd.f32 %v57, %v3311
    %v3313 = vpop.f32.mrf.mxu0
    %3314 = vdwg.mxu0
    %3315 = vmatpush.bf16.msra.mxu0 0
    %3316 = vmatpush.bf16.msra.mxu0 0
    %3317 = vmatpush.bf16.msra.mxu0 0
    %3318 = vmatpush.bf16.msra.mxu0 0
    %3319 = vmatpush.bf16.msra.mxu0 0
    %3320 = vmatpush.bf16.msra.mxu0 0
    %3321 = vmatpush.bf16.msra.mxu0 %v113
    %3322 = vmatpush.bf16.msra.mxu0 %v112
    %3323 = vmatmul.bf16.gmra.mxu0 %v3300
    %v3324 = vpop.f32.mrf.mxu0
    %v3325 = vadd.f32 %v3312, %v3324
    %v3326 = vpop.f32.mrf.mxu0
    %3327 = vdwg.mxu0
    %v3328 = vmax.f32 %v3325, 0.0
    %s3329 = scalar_lea.vmem %s0, 78
    %v3330 = vld [vmem:[%s3329] sm:$0x3]
    %3332 = vst [vmem:[#allocation1] ss:$9 sm:$0xff] %v3330
    %v3333 = vld [vmem:[#allocation1] sm:$0xff]
    %v3334 = vld [vmem:[#allocation1 + $0x9] sm:$0xff]
    %v3336 = vsel %vm124, %v3334, 0
    %3338 = vmatpush.bf16.msra.mxu0 %v111
    %3339 = vmatpush.bf16.msra.mxu0 %v110
    %3340 = vmatpush.bf16.msra.mxu0 %v109
    %3341 = vmatpush.bf16.msra.mxu0 %v108
    %3342 = vmatpush.bf16.msra.mxu0 %v107
    %3343 = vmatpush.bf16.msra.mxu0 %v106
    %3344 = vmatpush.bf16.msra.mxu0 %v105
    %3345 = vmatpush.bf16.msra.mxu0 %v104
    %3346 = vmatmul.bf16.gmra.mxu0 %v3333
    %v3347 = vpop.f32.mrf.mxu0
    %v3348 = vadd.f32 %v57, %v3347
    %v3349 = vpop.f32.mrf.mxu0
    %3350 = vdwg.mxu0
    %3351 = vmatpush.bf16.msra.mxu0 0
    %3352 = vmatpush.bf16.msra.mxu0 0
    %3353 = vmatpush.bf16.msra.mxu0 0
    %3354 = vmatpush.bf16.msra.mxu0 0
    %3355 = vmatpush.bf16.msra.mxu0 0
    %3356 = vmatpush.bf16.msra.mxu0 0
    %3357 = vmatpush.bf16.msra.mxu0 %v113
    %3358 = vmatpush.bf16.msra.mxu0 %v112
    %3359 = vmatmul.bf16.gmra.mxu0 %v3336
    %v3360 = vpop.f32.mrf.mxu0
    %v3361 = vadd.f32 %v3348, %v3360
    %v3362 = vpop.f32.mrf.mxu0
    %3363 = vdwg.mxu0
    %v3364 = vmax.f32 %v3361, 0.0
    %v3365 = vmax.f32 %v3328, %v3364
    %s3366 = scalar_lea.vmem %s0, 128
    %v3367 = vld [vmem:[%s3366] sm:$0x3]
    %3369 = vst [vmem:[#allocation1] ss:$9 sm:$0xff] %v3367
    %v3370 = vld [vmem:[#allocation1] sm:$0xff]
    %v3371 = vld [vmem:[#allocation1 + $0x9] sm:$0xff]
    %v3373 = vsel %vm124, %v3371, 0
    %3375 = vmatpush.bf16.msra.mxu0 %v111
    %3376 = vmatpush.bf16.msra.mxu0 %v110
    %3377 = vmatpush.bf16.msra.mxu0 %v109
    %3378 = vmatpush.bf16.msra.mxu0 %v108
    %3379 = vmatpush.bf16.msra.mxu0 %v107
    %3380 = vmatpush.bf16.msra.mxu0 %v106
    %3381 = vmatpush.bf16.msra.mxu0 %v105
    %3382 = vmatpush.bf16.msra.mxu0 %v104
    %3383 = vmatmul.bf16.gmra.mxu0 %v3370
    %v3384 = vpop.f32.mrf.mxu0
    %v3385 = vadd.f32 %v57, %v3384
    %v3386 = vpop.f32.mrf.mxu0
    %3387 = vdwg.mxu0
    %3388 = vmatpush.bf16.msra.mxu0 0
    %3389 = vmatpush.bf16.msra.mxu0 0
    %3390 = vmatpush.bf16.msra.mxu0 0
    %3391 = vmatpush.bf16.msra.mxu0 0
    %3392 = vmatpush.bf16.msra.mxu0 0
    %3393 = vmatpush.bf16.msra.mxu0 0
    %3394 = vmatpush.bf16.msra.mxu0 %v113
    %3395 = vmatpush.bf16.msra.mxu0 %v112
    %3396 = vmatmul.bf16.gmra.mxu0 %v3373
    %v3397 = vpop.f32.mrf.mxu0
    %v3398 = vadd.f32 %v3385, %v3397
    %v3399 = vpop.f32.mrf.mxu0
    %3400 = vdwg.mxu0
    %v3401 = vmax.f32 %v3398, 0.0
    %v3402 = vmax.f32 %v3365, %v3401
    %s3403 = scalar_lea.vmem %s0, 178
    %v3404 = vld [vmem:[%s3403] sm:$0x3]
    %3406 = vst [vmem:[#allocation1] ss:$9 sm:$0xff] %v3404
    %v3407 = vld [vmem:[#allocation1] sm:$0xff]
    %v3408 = vld [vmem:[#allocation1 + $0x9] sm:$0xff]
    %v3410 = vsel %vm124, %v3408, 0
    %3412 = vmatpush.bf16.msra.mxu0 %v111
    %3413 = vmatpush.bf16.msra.mxu0 %v110
    %3414 = vmatpush.bf16.msra.mxu0 %v109
    %3415 = vmatpush.bf16.msra.mxu0 %v108
    %3416 = vmatpush.bf16.msra.mxu0 %v107
    %3417 = vmatpush.bf16.msra.mxu0 %v106
    %3418 = vmatpush.bf16.msra.mxu0 %v105
    %3419 = vmatpush.bf16.msra.mxu0 %v104
    %3420 = vmatmul.bf16.gmra.mxu0 %v3407
    %v3421 = vpop.f32.mrf.mxu0
    %v3422 = vadd.f32 %v57, %v3421
    %v3423 = vpop.f32.mrf.mxu0
    %3424 = vdwg.mxu0
    %3425 = vmatpush.bf16.msra.mxu0 0
    %3426 = vmatpush.bf16.msra.mxu0 0
    %3427 = vmatpush.bf16.msra.mxu0 0
    %3428 = vmatpush.bf16.msra.mxu0 0
    %3429 = vmatpush.bf16.msra.mxu0 0
    %3430 = vmatpush.bf16.msra.mxu0 0
    %3431 = vmatpush.bf16.msra.mxu0 %v113
    %3432 = vmatpush.bf16.msra.mxu0 %v112
    %3433 = vmatmul.bf16.gmra.mxu0 %v3410
    %v3434 = vpop.f32.mrf.mxu0
    %v3435 = vadd.f32 %v3422, %v3434
    %v3436 = vpop.f32.mrf.mxu0
    %3437 = vdwg.mxu0
    %v3438 = vmax.f32 %v3435, 0.0
    %v3439 = vmax.f32 %v3402, %v3438
    %v3440 = vpack.c.bf16 %v3439, %v3439
    %s3441 = scalar_lea.vmem %s3, 896
    %v3442 = vld [vmem:[%s3441] sm:$0xf]
    %v3443 = vld [vmem:[%s3441 + $0x4] sm:$0xf]
    %v3444 = vld [vmem:[%s3441 + $0x8] sm:$0xf]
    %v3445 = vld [vmem:[%s3441 + $0xc] sm:$0xf]
    %v3446 = vld [vmem:[%s3441 + $0x10] sm:$0xf]
    %v3447 = vld [vmem:[%s3441 + $0x14] sm:$0xf]
    %v3448 = vld [vmem:[%s3441 + $0x18] sm:$0xf]
    %v3449 = vld [vmem:[%s3441 + $0x1c] sm:$0xf]
    %v3450 = vld [vmem:[%s3441 + $0x20] sm:$0xf]
    %v3451 = vld [vmem:[%s3441 + $0x24] sm:$0xf]
    %v3452 = vld [vmem:[%s3441 + $0x28] sm:$0xf]
    %v3453 = vld [vmem:[%s3441 + $0x2c] sm:$0xf]
    %v3454 = vld [vmem:[%s3441 + $0x30] sm:$0xf]
    %v3455 = vld [vmem:[%s3441 + $0x34] sm:$0xf]
    %v3456 = vld [vmem:[%s3441 + $0x38] sm:$0xf]
    %v3457 = vld [vmem:[%s3441 + $0x3c] sm:$0xf]
    %v3474 = vunpack.c.l.b16 %v3442
    %v3475 = vunpack.c.l.b16 %v3443
    %v3476 = vunpack.c.l.b16 %v3444
    %v3477 = vunpack.c.l.b16 %v3445
    %v3478 = vunpack.c.l.b16 %v3446
    %v3479 = vunpack.c.l.b16 %v3447
    %v3480 = vunpack.c.l.b16 %v3448
    %v3481 = vunpack.c.l.b16 %v3449
    %v3482 = vunpack.c.l.b16 %v3450
    %v3483 = vunpack.c.l.b16 %v3451
    %v3484 = vunpack.c.l.b16 %v3452
    %v3485 = vunpack.c.l.b16 %v3453
    %v3486 = vunpack.c.l.b16 %v3454
    %v3487 = vunpack.c.l.b16 %v3455
    %v3488 = vunpack.c.l.b16 %v3456
    %v3489 = vunpack.c.l.b16 %v3457
    %v3490 = vpack.c.b16 %v3475, %v3474
    %v3491 = vpack.c.b16 %v3477, %v3476
    %v3492 = vpack.c.b16 %v3479, %v3478
    %v3493 = vpack.c.b16 %v3481, %v3480
    %v3494 = vpack.c.b16 %v3483, %v3482
    %v3495 = vpack.c.b16 %v3485, %v3484
    %v3496 = vpack.c.b16 %v3487, %v3486
    %v3497 = vpack.c.b16 %v3489, %v3488
    %3506 = vmatpush.bf16.msra.mxu0 %v3497
    %3507 = vmatpush.bf16.msra.mxu0 %v3496
    %3508 = vmatpush.bf16.msra.mxu0 %v3495
    %3509 = vmatpush.bf16.msra.mxu0 %v3494
    %3510 = vmatpush.bf16.msra.mxu0 %v3493
    %3511 = vmatpush.bf16.msra.mxu0 %v3492
    %3512 = vmatpush.bf16.msra.mxu0 %v3491
    %3513 = vmatpush.bf16.msra.mxu0 %v3490
    %3514 = vmatmul.bf16.gmra.mxu0 %v3440
    %v3515 = vpop.f32.mrf.mxu0
    %v3516 = vadd.f32 0.0, %v3515
    %v3517 = vpop.f32.mrf.mxu0
    %3518 = vdwg.mxu0
    %v3519 = vadd.f32 %v3292, %v3516
    %s3520 = scalar_lea.vmem %s0, 30
    %v3521 = vld [vmem:[%s3520] sm:$0x3]
    %3523 = vst [vmem:[#allocation1] ss:$9 sm:$0xff] %v3521
    %v3524 = vld [vmem:[#allocation1] sm:$0xff]
    %v3525 = vld [vmem:[#allocation1 + $0x9] sm:$0xff]
    %v3527 = vsel %vm124, %v3525, 0
    %3529 = vmatpush.bf16.msra.mxu0 %v111
    %3530 = vmatpush.bf16.msra.mxu0 %v110
    %3531 = vmatpush.bf16.msra.mxu0 %v109
    %3532 = vmatpush.bf16.msra.mxu0 %v108
    %3533 = vmatpush.bf16.msra.mxu0 %v107
    %3534 = vmatpush.bf16.msra.mxu0 %v106
    %3535 = vmatpush.bf16.msra.mxu0 %v105
    %3536 = vmatpush.bf16.msra.mxu0 %v104
    %3537 = vmatmul.bf16.gmra.mxu0 %v3524
    %v3538 = vpop.f32.mrf.mxu0
    %v3539 = vadd.f32 %v57, %v3538
    %v3540 = vpop.f32.mrf.mxu0
    %3541 = vdwg.mxu0
    %3542 = vmatpush.bf16.msra.mxu0 0
    %3543 = vmatpush.bf16.msra.mxu0 0
    %3544 = vmatpush.bf16.msra.mxu0 0
    %3545 = vmatpush.bf16.msra.mxu0 0
    %3546 = vmatpush.bf16.msra.mxu0 0
    %3547 = vmatpush.bf16.msra.mxu0 0
    %3548 = vmatpush.bf16.msra.mxu0 %v113
    %3549 = vmatpush.bf16.msra.mxu0 %v112
    %3550 = vmatmul.bf16.gmra.mxu0 %v3527
    %v3551 = vpop.f32.mrf.mxu0
    %v3552 = vadd.f32 %v3539, %v3551
    %v3553 = vpop.f32.mrf.mxu0
    %3554 = vdwg.mxu0
    %v3555 = vmax.f32 %v3552, 0.0
    %s3556 = scalar_lea.vmem %s0, 80
    %v3557 = vld [vmem:[%s3556] sm:$0x3]
    %3559 = vst [vmem:[#allocation1] ss:$9 sm:$0xff] %v3557
    %v3560 = vld [vmem:[#allocation1] sm:$0xff]
    %v3561 = vld [vmem:[#allocation1 + $0x9] sm:$0xff]
    %v3563 = vsel %vm124, %v3561, 0
    %3565 = vmatpush.bf16.msra.mxu0 %v111
    %3566 = vmatpush.bf16.msra.mxu0 %v110
    %3567 = vmatpush.bf16.msra.mxu0 %v109
    %3568 = vmatpush.bf16.msra.mxu0 %v108
    %3569 = vmatpush.bf16.msra.mxu0 %v107
    %3570 = vmatpush.bf16.msra.mxu0 %v106
    %3571 = vmatpush.bf16.msra.mxu0 %v105
    %3572 = vmatpush.bf16.msra.mxu0 %v104
    %3573 = vmatmul.bf16.gmra.mxu0 %v3560
    %v3574 = vpop.f32.mrf.mxu0
    %v3575 = vadd.f32 %v57, %v3574
    %v3576 = vpop.f32.mrf.mxu0
    %3577 = vdwg.mxu0
    %3578 = vmatpush.bf16.msra.mxu0 0
    %3579 = vmatpush.bf16.msra.mxu0 0
    %3580 = vmatpush.bf16.msra.mxu0 0
    %3581 = vmatpush.bf16.msra.mxu0 0
    %3582 = vmatpush.bf16.msra.mxu0 0
    %3583 = vmatpush.bf16.msra.mxu0 0
    %3584 = vmatpush.bf16.msra.mxu0 %v113
    %3585 = vmatpush.bf16.msra.mxu0 %v112
    %3586 = vmatmul.bf16.gmra.mxu0 %v3563
    %v3587 = vpop.f32.mrf.mxu0
    %v3588 = vadd.f32 %v3575, %v3587
    %v3589 = vpop.f32.mrf.mxu0
    %3590 = vdwg.mxu0
    %v3591 = vmax.f32 %v3588, 0.0
    %v3592 = vmax.f32 %v3555, %v3591
    %s3593 = scalar_lea.vmem %s0, 130
    %v3594 = vld [vmem:[%s3593] sm:$0x3]
    %3596 = vst [vmem:[#allocation1] ss:$9 sm:$0xff] %v3594
    %v3597 = vld [vmem:[#allocation1] sm:$0xff]
    %v3598 = vld [vmem:[#allocation1 + $0x9] sm:$0xff]
    %v3600 = vsel %vm124, %v3598, 0
    %3602 = vmatpush.bf16.msra.mxu0 %v111
    %3603 = vmatpush.bf16.msra.mxu0 %v110
    %3604 = vmatpush.bf16.msra.mxu0 %v109
    %3605 = vmatpush.bf16.msra.mxu0 %v108
    %3606 = vmatpush.bf16.msra.mxu0 %v107
    %3607 = vmatpush.bf16.msra.mxu0 %v106
    %3608 = vmatpush.bf16.msra.mxu0 %v105
    %3609 = vmatpush.bf16.msra.mxu0 %v104
    %3610 = vmatmul.bf16.gmra.mxu0 %v3597
    %v3611 = vpop.f32.mrf.mxu0
    %v3612 = vadd.f32 %v57, %v3611
    %v3613 = vpop.f32.mrf.mxu0
    %3614 = vdwg.mxu0
    %3615 = vmatpush.bf16.msra.mxu0 0
    %3616 = vmatpush.bf16.msra.mxu0 0
    %3617 = vmatpush.bf16.msra.mxu0 0
    %3618 = vmatpush.bf16.msra.mxu0 0
    %3619 = vmatpush.bf16.msra.mxu0 0
    %3620 = vmatpush.bf16.msra.mxu0 0
    %3621 = vmatpush.bf16.msra.mxu0 %v113
    %3622 = vmatpush.bf16.msra.mxu0 %v112
    %3623 = vmatmul.bf16.gmra.mxu0 %v3600
    %v3624 = vpop.f32.mrf.mxu0
    %v3625 = vadd.f32 %v3612, %v3624
    %v3626 = vpop.f32.mrf.mxu0
    %3627 = vdwg.mxu0
    %v3628 = vmax.f32 %v3625, 0.0
    %v3629 = vmax.f32 %v3592, %v3628
    %s3630 = scalar_lea.vmem %s0, 180
    %v3631 = vld [vmem:[%s3630] sm:$0x3]
    %3633 = vst [vmem:[#allocation1] ss:$9 sm:$0xff] %v3631
    %v3634 = vld [vmem:[#allocation1] sm:$0xff]
    %v3635 = vld [vmem:[#allocation1 + $0x9] sm:$0xff]
    %v3637 = vsel %vm124, %v3635, 0
    %3639 = vmatpush.bf16.msra.mxu0 %v111
    %3640 = vmatpush.bf16.msra.mxu0 %v110
    %3641 = vmatpush.bf16.msra.mxu0 %v109
    %3642 = vmatpush.bf16.msra.mxu0 %v108
    %3643 = vmatpush.bf16.msra.mxu0 %v107
    %3644 = vmatpush.bf16.msra.mxu0 %v106
    %3645 = vmatpush.bf16.msra.mxu0 %v105
    %3646 = vmatpush.bf16.msra.mxu0 %v104
    %3647 = vmatmul.bf16.gmra.mxu0 %v3634
    %v3648 = vpop.f32.mrf.mxu0
    %v3649 = vadd.f32 %v57, %v3648
    %v3650 = vpop.f32.mrf.mxu0
    %3651 = vdwg.mxu0
    %3652 = vmatpush.bf16.msra.mxu0 0
    %3653 = vmatpush.bf16.msra.mxu0 0
    %3654 = vmatpush.bf16.msra.mxu0 0
    %3655 = vmatpush.bf16.msra.mxu0 0
    %3656 = vmatpush.bf16.msra.mxu0 0
    %3657 = vmatpush.bf16.msra.mxu0 0
    %3658 = vmatpush.bf16.msra.mxu0 %v113
    %3659 = vmatpush.bf16.msra.mxu0 %v112
    %3660 = vmatmul.bf16.gmra.mxu0 %v3637
    %v3661 = vpop.f32.mrf.mxu0
    %v3662 = vadd.f32 %v3649, %v3661
    %v3663 = vpop.f32.mrf.mxu0
    %3664 = vdwg.mxu0
    %v3665 = vmax.f32 %v3662, 0.0
    %v3666 = vmax.f32 %v3629, %v3665
    %v3667 = vpack.c.bf16 %v3666, %v3666
    %s3668 = scalar_lea.vmem %s3, 960
    %v3669 = vld [vmem:[%s3668] sm:$0xf]
    %v3670 = vld [vmem:[%s3668 + $0x4] sm:$0xf]
    %v3671 = vld [vmem:[%s3668 + $0x8] sm:$0xf]
    %v3672 = vld [vmem:[%s3668 + $0xc] sm:$0xf]
    %v3673 = vld [vmem:[%s3668 + $0x10] sm:$0xf]
    %v3674 = vld [vmem:[%s3668 + $0x14] sm:$0xf]
    %v3675 = vld [vmem:[%s3668 + $0x18] sm:$0xf]
    %v3676 = vld [vmem:[%s3668 + $0x1c] sm:$0xf]
    %v3677 = vld [vmem:[%s3668 + $0x20] sm:$0xf]
    %v3678 = vld [vmem:[%s3668 + $0x24] sm:$0xf]
    %v3679 = vld [vmem:[%s3668 + $0x28] sm:$0xf]
    %v3680 = vld [vmem:[%s3668 + $0x2c] sm:$0xf]
    %v3681 = vld [vmem:[%s3668 + $0x30] sm:$0xf]
    %v3682 = vld [vmem:[%s3668 + $0x34] sm:$0xf]
    %v3683 = vld [vmem:[%s3668 + $0x38] sm:$0xf]
    %v3684 = vld [vmem:[%s3668 + $0x3c] sm:$0xf]
    %v3701 = vunpack.c.l.b16 %v3669
    %v3702 = vunpack.c.l.b16 %v3670
    %v3703 = vunpack.c.l.b16 %v3671
    %v3704 = vunpack.c.l.b16 %v3672
    %v3705 = vunpack.c.l.b16 %v3673
    %v3706 = vunpack.c.l.b16 %v3674
    %v3707 = vunpack.c.l.b16 %v3675
    %v3708 = vunpack.c.l.b16 %v3676
    %v3709 = vunpack.c.l.b16 %v3677
    %v3710 = vunpack.c.l.b16 %v3678
    %v3711 = vunpack.c.l.b16 %v3679
    %v3712 = vunpack.c.l.b16 %v3680
    %v3713 = vunpack.c.l.b16 %v3681
    %v3714 = vunpack.c.l.b16 %v3682
    %v3715 = vunpack.c.l.b16 %v3683
    %v3716 = vunpack.c.l.b16 %v3684
    %v3717 = vpack.c.b16 %v3702, %v3701
    %v3718 = vpack.c.b16 %v3704, %v3703
    %v3719 = vpack.c.b16 %v3706, %v3705
    %v3720 = vpack.c.b16 %v3708, %v3707
    %v3721 = vpack.c.b16 %v3710, %v3709
    %v3722 = vpack.c.b16 %v3712, %v3711
    %v3723 = vpack.c.b16 %v3714, %v3713
    %v3724 = vpack.c.b16 %v3716, %v3715
    %3733 = vmatpush.bf16.msra.mxu0 %v3724
    %3734 = vmatpush.bf16.msra.mxu0 %v3723
    %3735 = vmatpush.bf16.msra.mxu0 %v3722
    %3736 = vmatpush.bf16.msra.mxu0 %v3721
    %3737 = vmatpush.bf16.msra.mxu0 %v3720
    %3738 = vmatpush.bf16.msra.mxu0 %v3719
    %3739 = vmatpush.bf16.msra.mxu0 %v3718
    %3740 = vmatpush.bf16.msra.mxu0 %v3717
    %3741 = vmatmul.bf16.gmra.mxu0 %v3667
    %v3742 = vpop.f32.mrf.mxu0
    %v3743 = vadd.f32 0.0, %v3742
    %v3744 = vpop.f32.mrf.mxu0
    %3745 = vdwg.mxu0
    %v3746 = vadd.f32 %v3519, %v3743
    %s3747 = scalar_lea.vmem %s0, 32
    %v3748 = vld [vmem:[%s3747] sm:$0x3]
    %3750 = vst [vmem:[#allocation1] ss:$9 sm:$0xff] %v3748
    %v3751 = vld [vmem:[#allocation1] sm:$0xff]
    %v3752 = vld [vmem:[#allocation1 + $0x9] sm:$0xff]
    %v3754 = vsel %vm124, %v3752, 0
    %3756 = vmatpush.bf16.msra.mxu0 %v111
    %3757 = vmatpush.bf16.msra.mxu0 %v110
    %3758 = vmatpush.bf16.msra.mxu0 %v109
    %3759 = vmatpush.bf16.msra.mxu0 %v108
    %3760 = vmatpush.bf16.msra.mxu0 %v107
    %3761 = vmatpush.bf16.msra.mxu0 %v106
    %3762 = vmatpush.bf16.msra.mxu0 %v105
    %3763 = vmatpush.bf16.msra.mxu0 %v104
    %3764 = vmatmul.bf16.gmra.mxu0 %v3751
    %v3765 = vpop.f32.mrf.mxu0
    %v3766 = vadd.f32 %v57, %v3765
    %v3767 = vpop.f32.mrf.mxu0
    %3768 = vdwg.mxu0
    %3769 = vmatpush.bf16.msra.mxu0 0
    %3770 = vmatpush.bf16.msra.mxu0 0
    %3771 = vmatpush.bf16.msra.mxu0 0
    %3772 = vmatpush.bf16.msra.mxu0 0
    %3773 = vmatpush.bf16.msra.mxu0 0
    %3774 = vmatpush.bf16.msra.mxu0 0
    %3775 = vmatpush.bf16.msra.mxu0 %v113
    %3776 = vmatpush.bf16.msra.mxu0 %v112
    %3777 = vmatmul.bf16.gmra.mxu0 %v3754
    %v3778 = vpop.f32.mrf.mxu0
    %v3779 = vadd.f32 %v3766, %v3778
    %v3780 = vpop.f32.mrf.mxu0
    %3781 = vdwg.mxu0
    %v3782 = vmax.f32 %v3779, 0.0
    %s3783 = scalar_lea.vmem %s0, 82
    %v3784 = vld [vmem:[%s3783] sm:$0x3]
    %3786 = vst [vmem:[#allocation1] ss:$9 sm:$0xff] %v3784
    %v3787 = vld [vmem:[#allocation1] sm:$0xff]
    %v3788 = vld [vmem:[#allocation1 + $0x9] sm:$0xff]
    %v3790 = vsel %vm124, %v3788, 0
    %3792 = vmatpush.bf16.msra.mxu0 %v111
    %3793 = vmatpush.bf16.msra.mxu0 %v110
    %3794 = vmatpush.bf16.msra.mxu0 %v109
    %3795 = vmatpush.bf16.msra.mxu0 %v108
    %3796 = vmatpush.bf16.msra.mxu0 %v107
    %3797 = vmatpush.bf16.msra.mxu0 %v106
    %3798 = vmatpush.bf16.msra.mxu0 %v105
    %3799 = vmatpush.bf16.msra.mxu0 %v104
    %3800 = vmatmul.bf16.gmra.mxu0 %v3787
    %v3801 = vpop.f32.mrf.mxu0
    %v3802 = vadd.f32 %v57, %v3801
    %v3803 = vpop.f32.mrf.mxu0
    %3804 = vdwg.mxu0
    %3805 = vmatpush.bf16.msra.mxu0 0
    %3806 = vmatpush.bf16.msra.mxu0 0
    %3807 = vmatpush.bf16.msra.mxu0 0
    %3808 = vmatpush.bf16.msra.mxu0 0
    %3809 = vmatpush.bf16.msra.mxu0 0
    %3810 = vmatpush.bf16.msra.mxu0 0
    %3811 = vmatpush.bf16.msra.mxu0 %v113
    %3812 = vmatpush.bf16.msra.mxu0 %v112
    %3813 = vmatmul.bf16.gmra.mxu0 %v3790
    %v3814 = vpop.f32.mrf.mxu0
    %v3815 = vadd.f32 %v3802, %v3814
    %v3816 = vpop.f32.mrf.mxu0
    %3817 = vdwg.mxu0
    %v3818 = vmax.f32 %v3815, 0.0
    %v3819 = vmax.f32 %v3782, %v3818
    %s3820 = scalar_lea.vmem %s0, 132
    %v3821 = vld [vmem:[%s3820] sm:$0x3]
    %3823 = vst [vmem:[#allocation1] ss:$9 sm:$0xff] %v3821
    %v3824 = vld [vmem:[#allocation1] sm:$0xff]
    %v3825 = vld [vmem:[#allocation1 + $0x9] sm:$0xff]
    %v3827 = vsel %vm124, %v3825, 0
    %3829 = vmatpush.bf16.msra.mxu0 %v111
    %3830 = vmatpush.bf16.msra.mxu0 %v110
    %3831 = vmatpush.bf16.msra.mxu0 %v109
    %3832 = vmatpush.bf16.msra.mxu0 %v108
    %3833 = vmatpush.bf16.msra.mxu0 %v107
    %3834 = vmatpush.bf16.msra.mxu0 %v106
    %3835 = vmatpush.bf16.msra.mxu0 %v105
    %3836 = vmatpush.bf16.msra.mxu0 %v104
    %3837 = vmatmul.bf16.gmra.mxu0 %v3824
    %v3838 = vpop.f32.mrf.mxu0
    %v3839 = vadd.f32 %v57, %v3838
    %v3840 = vpop.f32.mrf.mxu0
    %3841 = vdwg.mxu0
    %3842 = vmatpush.bf16.msra.mxu0 0
    %3843 = vmatpush.bf16.msra.mxu0 0
    %3844 = vmatpush.bf16.msra.mxu0 0
    %3845 = vmatpush.bf16.msra.mxu0 0
    %3846 = vmatpush.bf16.msra.mxu0 0
    %3847 = vmatpush.bf16.msra.mxu0 0
    %3848 = vmatpush.bf16.msra.mxu0 %v113
    %3849 = vmatpush.bf16.msra.mxu0 %v112
    %3850 = vmatmul.bf16.gmra.mxu0 %v3827
    %v3851 = vpop.f32.mrf.mxu0
    %v3852 = vadd.f32 %v3839, %v3851
    %v3853 = vpop.f32.mrf.mxu0
    %3854 = vdwg.mxu0
    %v3855 = vmax.f32 %v3852, 0.0
    %v3856 = vmax.f32 %v3819, %v3855
    %s3857 = scalar_lea.vmem %s0, 182
    %v3858 = vld [vmem:[%s3857] sm:$0x3]
    %3860 = vst [vmem:[#allocation1] ss:$9 sm:$0xff] %v3858
    %v3861 = vld [vmem:[#allocation1] sm:$0xff]
    %v3862 = vld [vmem:[#allocation1 + $0x9] sm:$0xff]
    %v3864 = vsel %vm124, %v3862, 0
    %3866 = vmatpush.bf16.msra.mxu0 %v111
    %3867 = vmatpush.bf16.msra.mxu0 %v110
    %3868 = vmatpush.bf16.msra.mxu0 %v109
    %3869 = vmatpush.bf16.msra.mxu0 %v108
    %3870 = vmatpush.bf16.msra.mxu0 %v107
    %3871 = vmatpush.bf16.msra.mxu0 %v106
    %3872 = vmatpush.bf16.msra.mxu0 %v105
    %3873 = vmatpush.bf16.msra.mxu0 %v104
    %3874 = vmatmul.bf16.gmra.mxu0 %v3861
    %v3875 = vpop.f32.mrf.mxu0
    %v3876 = vadd.f32 %v57, %v3875
    %v3877 = vpop.f32.mrf.mxu0
    %3878 = vdwg.mxu0
    %3879 = vmatpush.bf16.msra.mxu0 0
    %3880 = vmatpush.bf16.msra.mxu0 0
    %3881 = vmatpush.bf16.msra.mxu0 0
    %3882 = vmatpush.bf16.msra.mxu0 0
    %3883 = vmatpush.bf16.msra.mxu0 0
    %3884 = vmatpush.bf16.msra.mxu0 0
    %3885 = vmatpush.bf16.msra.mxu0 %v113
    %3886 = vmatpush.bf16.msra.mxu0 %v112
    %3887 = vmatmul.bf16.gmra.mxu0 %v3864
    %v3888 = vpop.f32.mrf.mxu0
    %v3889 = vadd.f32 %v3876, %v3888
    %v3890 = vpop.f32.mrf.mxu0
    %3891 = vdwg.mxu0
    %v3892 = vmax.f32 %v3889, 0.0
    %v3893 = vmax.f32 %v3856, %v3892
    %v3894 = vpack.c.bf16 %v3893, %v3893
    %s3895 = scalar_lea.vmem %s3, 1024
    %v3896 = vld [vmem:[%s3895] sm:$0xf]
    %v3897 = vld [vmem:[%s3895 + $0x4] sm:$0xf]
    %v3898 = vld [vmem:[%s3895 + $0x8] sm:$0xf]
    %v3899 = vld [vmem:[%s3895 + $0xc] sm:$0xf]
    %v3900 = vld [vmem:[%s3895 + $0x10] sm:$0xf]
    %v3901 = vld [vmem:[%s3895 + $0x14] sm:$0xf]
    %v3902 = vld [vmem:[%s3895 + $0x18] sm:$0xf]
    %v3903 = vld [vmem:[%s3895 + $0x1c] sm:$0xf]
    %v3904 = vld [vmem:[%s3895 + $0x20] sm:$0xf]
    %v3905 = vld [vmem:[%s3895 + $0x24] sm:$0xf]
    %v3906 = vld [vmem:[%s3895 + $0x28] sm:$0xf]
    %v3907 = vld [vmem:[%s3895 + $0x2c] sm:$0xf]
    %v3908 = vld [vmem:[%s3895 + $0x30] sm:$0xf]
    %v3909 = vld [vmem:[%s3895 + $0x34] sm:$0xf]
    %v3910 = vld [vmem:[%s3895 + $0x38] sm:$0xf]
    %v3911 = vld [vmem:[%s3895 + $0x3c] sm:$0xf]
    %v3928 = vunpack.c.l.b16 %v3896
    %v3929 = vunpack.c.l.b16 %v3897
    %v3930 = vunpack.c.l.b16 %v3898
    %v3931 = vunpack.c.l.b16 %v3899
    %v3932 = vunpack.c.l.b16 %v3900
    %v3933 = vunpack.c.l.b16 %v3901
    %v3934 = vunpack.c.l.b16 %v3902
    %v3935 = vunpack.c.l.b16 %v3903
    %v3936 = vunpack.c.l.b16 %v3904
    %v3937 = vunpack.c.l.b16 %v3905
    %v3938 = vunpack.c.l.b16 %v3906
    %v3939 = vunpack.c.l.b16 %v3907
    %v3940 = vunpack.c.l.b16 %v3908
    %v3941 = vunpack.c.l.b16 %v3909
    %v3942 = vunpack.c.l.b16 %v3910
    %v3943 = vunpack.c.l.b16 %v3911
    %v3944 = vpack.c.b16 %v3929, %v3928
    %v3945 = vpack.c.b16 %v3931, %v3930
    %v3946 = vpack.c.b16 %v3933, %v3932
    %v3947 = vpack.c.b16 %v3935, %v3934
    %v3948 = vpack.c.b16 %v3937, %v3936
    %v3949 = vpack.c.b16 %v3939, %v3938
    %v3950 = vpack.c.b16 %v3941, %v3940
    %v3951 = vpack.c.b16 %v3943, %v3942
    %3960 = vmatpush.bf16.msra.mxu0 %v3951
    %3961 = vmatpush.bf16.msra.mxu0 %v3950
    %3962 = vmatpush.bf16.msra.mxu0 %v3949
    %3963 = vmatpush.bf16.msra.mxu0 %v3948
    %3964 = vmatpush.bf16.msra.mxu0 %v3947
    %3965 = vmatpush.bf16.msra.mxu0 %v3946
    %3966 = vmatpush.bf16.msra.mxu0 %v3945
    %3967 = vmatpush.bf16.msra.mxu0 %v3944
    %3968 = vmatmul.bf16.gmra.mxu0 %v3894
    %v3969 = vpop.f32.mrf.mxu0
    %v3970 = vadd.f32 0.0, %v3969
    %v3971 = vpop.f32.mrf.mxu0
    %3972 = vdwg.mxu0
    %v3973 = vadd.f32 %v3746, %v3970
    %s3974 = scalar_lea.vmem %s0, 34
    %v3975 = vld [vmem:[%s3974] sm:$0x3]
    %3977 = vst [vmem:[#allocation1] ss:$9 sm:$0xff] %v3975
    %v3978 = vld [vmem:[#allocation1] sm:$0xff]
    %v3979 = vld [vmem:[#allocation1 + $0x9] sm:$0xff]
    %v3981 = vsel %vm124, %v3979, 0
    %3983 = vmatpush.bf16.msra.mxu0 %v111
    %3984 = vmatpush.bf16.msra.mxu0 %v110
    %3985 = vmatpush.bf16.msra.mxu0 %v109
    %3986 = vmatpush.bf16.msra.mxu0 %v108
    %3987 = vmatpush.bf16.msra.mxu0 %v107
    %3988 = vmatpush.bf16.msra.mxu0 %v106
    %3989 = vmatpush.bf16.msra.mxu0 %v105
    %3990 = vmatpush.bf16.msra.mxu0 %v104
    %3991 = vmatmul.bf16.gmra.mxu0 %v3978
    %v3992 = vpop.f32.mrf.mxu0
    %v3993 = vadd.f32 %v57, %v3992
    %v3994 = vpop.f32.mrf.mxu0
    %3995 = vdwg.mxu0
    %3996 = vmatpush.bf16.msra.mxu0 0
    %3997 = vmatpush.bf16.msra.mxu0 0
    %3998 = vmatpush.bf16.msra.mxu0 0
    %3999 = vmatpush.bf16.msra.mxu0 0
    %4000 = vmatpush.bf16.msra.mxu0 0
    %4001 = vmatpush.bf16.msra.mxu0 0
    %4002 = vmatpush.bf16.msra.mxu0 %v113
    %4003 = vmatpush.bf16.msra.mxu0 %v112
    %4004 = vmatmul.bf16.gmra.mxu0 %v3981
    %v4005 = vpop.f32.mrf.mxu0
    %v4006 = vadd.f32 %v3993, %v4005
    %v4007 = vpop.f32.mrf.mxu0
    %4008 = vdwg.mxu0
    %v4009 = vmax.f32 %v4006, 0.0
    %s4010 = scalar_lea.vmem %s0, 84
    %v4011 = vld [vmem:[%s4010] sm:$0x3]
    %4013 = vst [vmem:[#allocation1] ss:$9 sm:$0xff] %v4011
    %v4014 = vld [vmem:[#allocation1] sm:$0xff]
    %v4015 = vld [vmem:[#allocation1 + $0x9] sm:$0xff]
    %v4017 = vsel %vm124, %v4015, 0
    %4019 = vmatpush.bf16.msra.mxu0 %v111
    %4020 = vmatpush.bf16.msra.mxu0 %v110
    %4021 = vmatpush.bf16.msra.mxu0 %v109
    %4022 = vmatpush.bf16.msra.mxu0 %v108
    %4023 = vmatpush.bf16.msra.mxu0 %v107
    %4024 = vmatpush.bf16.msra.mxu0 %v106
    %4025 = vmatpush.bf16.msra.mxu0 %v105
    %4026 = vmatpush.bf16.msra.mxu0 %v104
    %4027 = vmatmul.bf16.gmra.mxu0 %v4014
    %v4028 = vpop.f32.mrf.mxu0
    %v4029 = vadd.f32 %v57, %v4028
    %v4030 = vpop.f32.mrf.mxu0
    %4031 = vdwg.mxu0
    %4032 = vmatpush.bf16.msra.mxu0 0
    %4033 = vmatpush.bf16.msra.mxu0 0
    %4034 = vmatpush.bf16.msra.mxu0 0
    %4035 = vmatpush.bf16.msra.mxu0 0
    %4036 = vmatpush.bf16.msra.mxu0 0
    %4037 = vmatpush.bf16.msra.mxu0 0
    %4038 = vmatpush.bf16.msra.mxu0 %v113
    %4039 = vmatpush.bf16.msra.mxu0 %v112
    %4040 = vmatmul.bf16.gmra.mxu0 %v4017
    %v4041 = vpop.f32.mrf.mxu0
    %v4042 = vadd.f32 %v4029, %v4041
    %v4043 = vpop.f32.mrf.mxu0
    %4044 = vdwg.mxu0
    %v4045 = vmax.f32 %v4042, 0.0
    %v4046 = vmax.f32 %v4009, %v4045
    %s4047 = scalar_lea.vmem %s0, 134
    %v4048 = vld [vmem:[%s4047] sm:$0x3]
    %4050 = vst [vmem:[#allocation1] ss:$9 sm:$0xff] %v4048
    %v4051 = vld [vmem:[#allocation1] sm:$0xff]
    %v4052 = vld [vmem:[#allocation1 + $0x9] sm:$0xff]
    %v4054 = vsel %vm124, %v4052, 0
    %4056 = vmatpush.bf16.msra.mxu0 %v111
    %4057 = vmatpush.bf16.msra.mxu0 %v110
    %4058 = vmatpush.bf16.msra.mxu0 %v109
    %4059 = vmatpush.bf16.msra.mxu0 %v108
    %4060 = vmatpush.bf16.msra.mxu0 %v107
    %4061 = vmatpush.bf16.msra.mxu0 %v106
    %4062 = vmatpush.bf16.msra.mxu0 %v105
    %4063 = vmatpush.bf16.msra.mxu0 %v104
    %4064 = vmatmul.bf16.gmra.mxu0 %v4051
    %v4065 = vpop.f32.mrf.mxu0
    %v4066 = vadd.f32 %v57, %v4065
    %v4067 = vpop.f32.mrf.mxu0
    %4068 = vdwg.mxu0
    %4069 = vmatpush.bf16.msra.mxu0 0
    %4070 = vmatpush.bf16.msra.mxu0 0
    %4071 = vmatpush.bf16.msra.mxu0 0
    %4072 = vmatpush.bf16.msra.mxu0 0
    %4073 = vmatpush.bf16.msra.mxu0 0
    %4074 = vmatpush.bf16.msra.mxu0 0
    %4075 = vmatpush.bf16.msra.mxu0 %v113
    %4076 = vmatpush.bf16.msra.mxu0 %v112
    %4077 = vmatmul.bf16.gmra.mxu0 %v4054
    %v4078 = vpop.f32.mrf.mxu0
    %v4079 = vadd.f32 %v4066, %v4078
    %v4080 = vpop.f32.mrf.mxu0
    %4081 = vdwg.mxu0
    %v4082 = vmax.f32 %v4079, 0.0
    %v4083 = vmax.f32 %v4046, %v4082
    %s4084 = scalar_lea.vmem %s0, 184
    %v4085 = vld [vmem:[%s4084] sm:$0x3]
    %4087 = vst [vmem:[#allocation1] ss:$9 sm:$0xff] %v4085
    %v4088 = vld [vmem:[#allocation1] sm:$0xff]
    %v4089 = vld [vmem:[#allocation1 + $0x9] sm:$0xff]
    %v4091 = vsel %vm124, %v4089, 0
    %4093 = vmatpush.bf16.msra.mxu0 %v111
    %4094 = vmatpush.bf16.msra.mxu0 %v110
    %4095 = vmatpush.bf16.msra.mxu0 %v109
    %4096 = vmatpush.bf16.msra.mxu0 %v108
    %4097 = vmatpush.bf16.msra.mxu0 %v107
    %4098 = vmatpush.bf16.msra.mxu0 %v106
    %4099 = vmatpush.bf16.msra.mxu0 %v105
    %4100 = vmatpush.bf16.msra.mxu0 %v104
    %4101 = vmatmul.bf16.gmra.mxu0 %v4088
    %v4102 = vpop.f32.mrf.mxu0
    %v4103 = vadd.f32 %v57, %v4102
    %v4104 = vpop.f32.mrf.mxu0
    %4105 = vdwg.mxu0
    %4106 = vmatpush.bf16.msra.mxu0 0
    %4107 = vmatpush.bf16.msra.mxu0 0
    %4108 = vmatpush.bf16.msra.mxu0 0
    %4109 = vmatpush.bf16.msra.mxu0 0
    %4110 = vmatpush.bf16.msra.mxu0 0
    %4111 = vmatpush.bf16.msra.mxu0 0
    %4112 = vmatpush.bf16.msra.mxu0 %v113
    %4113 = vmatpush.bf16.msra.mxu0 %v112
    %4114 = vmatmul.bf16.gmra.mxu0 %v4091
    %v4115 = vpop.f32.mrf.mxu0
    %v4116 = vadd.f32 %v4103, %v4115
    %v4117 = vpop.f32.mrf.mxu0
    %4118 = vdwg.mxu0
    %v4119 = vmax.f32 %v4116, 0.0
    %v4120 = vmax.f32 %v4083, %v4119
    %v4121 = vpack.c.bf16 %v4120, %v4120
    %s4122 = scalar_lea.vmem %s3, 1088
    %v4123 = vld [vmem:[%s4122] sm:$0xf]
    %v4124 = vld [vmem:[%s4122 + $0x4] sm:$0xf]
    %v4125 = vld [vmem:[%s4122 + $0x8] sm:$0xf]
    %v4126 = vld [vmem:[%s4122 + $0xc] sm:$0xf]
    %v4127 = vld [vmem:[%s4122 + $0x10] sm:$0xf]
    %v4128 = vld [vmem:[%s4122 + $0x14] sm:$0xf]
    %v4129 = vld [vmem:[%s4122 + $0x18] sm:$0xf]
    %v4130 = vld [vmem:[%s4122 + $0x1c] sm:$0xf]
    %v4131 = vld [vmem:[%s4122 + $0x20] sm:$0xf]
    %v4132 = vld [vmem:[%s4122 + $0x24] sm:$0xf]
    %v4133 = vld [vmem:[%s4122 + $0x28] sm:$0xf]
    %v4134 = vld [vmem:[%s4122 + $0x2c] sm:$0xf]
    %v4135 = vld [vmem:[%s4122 + $0x30] sm:$0xf]
    %v4136 = vld [vmem:[%s4122 + $0x34] sm:$0xf]
    %v4137 = vld [vmem:[%s4122 + $0x38] sm:$0xf]
    %v4138 = vld [vmem:[%s4122 + $0x3c] sm:$0xf]
    %v4155 = vunpack.c.l.b16 %v4123
    %v4156 = vunpack.c.l.b16 %v4124
    %v4157 = vunpack.c.l.b16 %v4125
    %v4158 = vunpack.c.l.b16 %v4126
    %v4159 = vunpack.c.l.b16 %v4127
    %v4160 = vunpack.c.l.b16 %v4128
    %v4161 = vunpack.c.l.b16 %v4129
    %v4162 = vunpack.c.l.b16 %v4130
    %v4163 = vunpack.c.l.b16 %v4131
    %v4164 = vunpack.c.l.b16 %v4132
    %v4165 = vunpack.c.l.b16 %v4133
    %v4166 = vunpack.c.l.b16 %v4134
    %v4167 = vunpack.c.l.b16 %v4135
    %v4168 = vunpack.c.l.b16 %v4136
    %v4169 = vunpack.c.l.b16 %v4137
    %v4170 = vunpack.c.l.b16 %v4138
    %v4171 = vpack.c.b16 %v4156, %v4155
    %v4172 = vpack.c.b16 %v4158, %v4157
    %v4173 = vpack.c.b16 %v4160, %v4159
    %v4174 = vpack.c.b16 %v4162, %v4161
    %v4175 = vpack.c.b16 %v4164, %v4163
    %v4176 = vpack.c.b16 %v4166, %v4165
    %v4177 = vpack.c.b16 %v4168, %v4167
    %v4178 = vpack.c.b16 %v4170, %v4169
    %4187 = vmatpush.bf16.msra.mxu0 %v4178
    %4188 = vmatpush.bf16.msra.mxu0 %v4177
    %4189 = vmatpush.bf16.msra.mxu0 %v4176
    %4190 = vmatpush.bf16.msra.mxu0 %v4175
    %4191 = vmatpush.bf16.msra.mxu0 %v4174
    %4192 = vmatpush.bf16.msra.mxu0 %v4173
    %4193 = vmatpush.bf16.msra.mxu0 %v4172
    %4194 = vmatpush.bf16.msra.mxu0 %v4171
    %4195 = vmatmul.bf16.gmra.mxu0 %v4121
    %v4196 = vpop.f32.mrf.mxu0
    %v4197 = vadd.f32 0.0, %v4196
    %v4198 = vpop.f32.mrf.mxu0
    %4199 = vdwg.mxu0
    %v4200 = vadd.f32 %v3973, %v4197
    %s4201 = scalar_lea.vmem %s0, 36
    %v4202 = vld [vmem:[%s4201] sm:$0x3]
    %4204 = vst [vmem:[#allocation1] ss:$9 sm:$0xff] %v4202
    %v4205 = vld [vmem:[#allocation1] sm:$0xff]
    %v4206 = vld [vmem:[#allocation1 + $0x9] sm:$0xff]
    %v4208 = vsel %vm124, %v4206, 0
    %4210 = vmatpush.bf16.msra.mxu0 %v111
    %4211 = vmatpush.bf16.msra.mxu0 %v110
    %4212 = vmatpush.bf16.msra.mxu0 %v109
    %4213 = vmatpush.bf16.msra.mxu0 %v108
    %4214 = vmatpush.bf16.msra.mxu0 %v107
    %4215 = vmatpush.bf16.msra.mxu0 %v106
    %4216 = vmatpush.bf16.msra.mxu0 %v105
    %4217 = vmatpush.bf16.msra.mxu0 %v104
    %4218 = vmatmul.bf16.gmra.mxu0 %v4205
    %v4219 = vpop.f32.mrf.mxu0
    %v4220 = vadd.f32 %v57, %v4219
    %v4221 = vpop.f32.mrf.mxu0
    %4222 = vdwg.mxu0
    %4223 = vmatpush.bf16.msra.mxu0 0
    %4224 = vmatpush.bf16.msra.mxu0 0
    %4225 = vmatpush.bf16.msra.mxu0 0
    %4226 = vmatpush.bf16.msra.mxu0 0
    %4227 = vmatpush.bf16.msra.mxu0 0
    %4228 = vmatpush.bf16.msra.mxu0 0
    %4229 = vmatpush.bf16.msra.mxu0 %v113
    %4230 = vmatpush.bf16.msra.mxu0 %v112
    %4231 = vmatmul.bf16.gmra.mxu0 %v4208
    %v4232 = vpop.f32.mrf.mxu0
    %v4233 = vadd.f32 %v4220, %v4232
    %v4234 = vpop.f32.mrf.mxu0
    %4235 = vdwg.mxu0
    %v4236 = vmax.f32 %v4233, 0.0
    %s4237 = scalar_lea.vmem %s0, 86
    %v4238 = vld [vmem:[%s4237] sm:$0x3]
    %4240 = vst [vmem:[#allocation1] ss:$9 sm:$0xff] %v4238
    %v4241 = vld [vmem:[#allocation1] sm:$0xff]
    %v4242 = vld [vmem:[#allocation1 + $0x9] sm:$0xff]
    %v4244 = vsel %vm124, %v4242, 0
    %4246 = vmatpush.bf16.msra.mxu0 %v111
    %4247 = vmatpush.bf16.msra.mxu0 %v110
    %4248 = vmatpush.bf16.msra.mxu0 %v109
    %4249 = vmatpush.bf16.msra.mxu0 %v108
    %4250 = vmatpush.bf16.msra.mxu0 %v107
    %4251 = vmatpush.bf16.msra.mxu0 %v106
    %4252 = vmatpush.bf16.msra.mxu0 %v105
    %4253 = vmatpush.bf16.msra.mxu0 %v104
    %4254 = vmatmul.bf16.gmra.mxu0 %v4241
    %v4255 = vpop.f32.mrf.mxu0
    %v4256 = vadd.f32 %v57, %v4255
    %v4257 = vpop.f32.mrf.mxu0
    %4258 = vdwg.mxu0
    %4259 = vmatpush.bf16.msra.mxu0 0
    %4260 = vmatpush.bf16.msra.mxu0 0
    %4261 = vmatpush.bf16.msra.mxu0 0
    %4262 = vmatpush.bf16.msra.mxu0 0
    %4263 = vmatpush.bf16.msra.mxu0 0
    %4264 = vmatpush.bf16.msra.mxu0 0
    %4265 = vmatpush.bf16.msra.mxu0 %v113
    %4266 = vmatpush.bf16.msra.mxu0 %v112
    %4267 = vmatmul.bf16.gmra.mxu0 %v4244
    %v4268 = vpop.f32.mrf.mxu0
    %v4269 = vadd.f32 %v4256, %v4268
    %v4270 = vpop.f32.mrf.mxu0
    %4271 = vdwg.mxu0
    %v4272 = vmax.f32 %v4269, 0.0
    %v4273 = vmax.f32 %v4236, %v4272
    %s4274 = scalar_lea.vmem %s0, 136
    %v4275 = vld [vmem:[%s4274] sm:$0x3]
    %4277 = vst [vmem:[#allocation1] ss:$9 sm:$0xff] %v4275
    %v4278 = vld [vmem:[#allocation1] sm:$0xff]
    %v4279 = vld [vmem:[#allocation1 + $0x9] sm:$0xff]
    %v4281 = vsel %vm124, %v4279, 0
    %4283 = vmatpush.bf16.msra.mxu0 %v111
    %4284 = vmatpush.bf16.msra.mxu0 %v110
    %4285 = vmatpush.bf16.msra.mxu0 %v109
    %4286 = vmatpush.bf16.msra.mxu0 %v108
    %4287 = vmatpush.bf16.msra.mxu0 %v107
    %4288 = vmatpush.bf16.msra.mxu0 %v106
    %4289 = vmatpush.bf16.msra.mxu0 %v105
    %4290 = vmatpush.bf16.msra.mxu0 %v104
    %4291 = vmatmul.bf16.gmra.mxu0 %v4278
    %v4292 = vpop.f32.mrf.mxu0
    %v4293 = vadd.f32 %v57, %v4292
    %v4294 = vpop.f32.mrf.mxu0
    %4295 = vdwg.mxu0
    %4296 = vmatpush.bf16.msra.mxu0 0
    %4297 = vmatpush.bf16.msra.mxu0 0
    %4298 = vmatpush.bf16.msra.mxu0 0
    %4299 = vmatpush.bf16.msra.mxu0 0
    %4300 = vmatpush.bf16.msra.mxu0 0
    %4301 = vmatpush.bf16.msra.mxu0 0
    %4302 = vmatpush.bf16.msra.mxu0 %v113
    %4303 = vmatpush.bf16.msra.mxu0 %v112
    %4304 = vmatmul.bf16.gmra.mxu0 %v4281
    %v4305 = vpop.f32.mrf.mxu0
    %v4306 = vadd.f32 %v4293, %v4305
    %v4307 = vpop.f32.mrf.mxu0
    %4308 = vdwg.mxu0
    %v4309 = vmax.f32 %v4306, 0.0
    %v4310 = vmax.f32 %v4273, %v4309
    %s4311 = scalar_lea.vmem %s0, 186
    %v4312 = vld [vmem:[%s4311] sm:$0x3]
    %4314 = vst [vmem:[#allocation1] ss:$9 sm:$0xff] %v4312
    %v4315 = vld [vmem:[#allocation1] sm:$0xff]
    %v4316 = vld [vmem:[#allocation1 + $0x9] sm:$0xff]
    %v4318 = vsel %vm124, %v4316, 0
    %4320 = vmatpush.bf16.msra.mxu0 %v111
    %4321 = vmatpush.bf16.msra.mxu0 %v110
    %4322 = vmatpush.bf16.msra.mxu0 %v109
    %4323 = vmatpush.bf16.msra.mxu0 %v108
    %4324 = vmatpush.bf16.msra.mxu0 %v107
    %4325 = vmatpush.bf16.msra.mxu0 %v106
    %4326 = vmatpush.bf16.msra.mxu0 %v105
    %4327 = vmatpush.bf16.msra.mxu0 %v104
    %4328 = vmatmul.bf16.gmra.mxu0 %v4315
    %v4329 = vpop.f32.mrf.mxu0
    %v4330 = vadd.f32 %v57, %v4329
    %v4331 = vpop.f32.mrf.mxu0
    %4332 = vdwg.mxu0
    %4333 = vmatpush.bf16.msra.mxu0 0
    %4334 = vmatpush.bf16.msra.mxu0 0
    %4335 = vmatpush.bf16.msra.mxu0 0
    %4336 = vmatpush.bf16.msra.mxu0 0
    %4337 = vmatpush.bf16.msra.mxu0 0
    %4338 = vmatpush.bf16.msra.mxu0 0
    %4339 = vmatpush.bf16.msra.mxu0 %v113
    %4340 = vmatpush.bf16.msra.mxu0 %v112
    %4341 = vmatmul.bf16.gmra.mxu0 %v4318
    %v4342 = vpop.f32.mrf.mxu0
    %v4343 = vadd.f32 %v4330, %v4342
    %v4344 = vpop.f32.mrf.mxu0
    %4345 = vdwg.mxu0
    %v4346 = vmax.f32 %v4343, 0.0
    %v4347 = vmax.f32 %v4310, %v4346
    %v4348 = vpack.c.bf16 %v4347, %v4347
    %s4349 = scalar_lea.vmem %s3, 1152
    %v4350 = vld [vmem:[%s4349] sm:$0xf]
    %v4351 = vld [vmem:[%s4349 + $0x4] sm:$0xf]
    %v4352 = vld [vmem:[%s4349 + $0x8] sm:$0xf]
    %v4353 = vld [vmem:[%s4349 + $0xc] sm:$0xf]
    %v4354 = vld [vmem:[%s4349 + $0x10] sm:$0xf]
    %v4355 = vld [vmem:[%s4349 + $0x14] sm:$0xf]
    %v4356 = vld [vmem:[%s4349 + $0x18] sm:$0xf]
    %v4357 = vld [vmem:[%s4349 + $0x1c] sm:$0xf]
    %v4358 = vld [vmem:[%s4349 + $0x20] sm:$0xf]
    %v4359 = vld [vmem:[%s4349 + $0x24] sm:$0xf]
    %v4360 = vld [vmem:[%s4349 + $0x28] sm:$0xf]
    %v4361 = vld [vmem:[%s4349 + $0x2c] sm:$0xf]
    %v4362 = vld [vmem:[%s4349 + $0x30] sm:$0xf]
    %v4363 = vld [vmem:[%s4349 + $0x34] sm:$0xf]
    %v4364 = vld [vmem:[%s4349 + $0x38] sm:$0xf]
    %v4365 = vld [vmem:[%s4349 + $0x3c] sm:$0xf]
    %v4382 = vunpack.c.l.b16 %v4350
    %v4383 = vunpack.c.l.b16 %v4351
    %v4384 = vunpack.c.l.b16 %v4352
    %v4385 = vunpack.c.l.b16 %v4353
    %v4386 = vunpack.c.l.b16 %v4354
    %v4387 = vunpack.c.l.b16 %v4355
    %v4388 = vunpack.c.l.b16 %v4356
    %v4389 = vunpack.c.l.b16 %v4357
    %v4390 = vunpack.c.l.b16 %v4358
    %v4391 = vunpack.c.l.b16 %v4359
    %v4392 = vunpack.c.l.b16 %v4360
    %v4393 = vunpack.c.l.b16 %v4361
    %v4394 = vunpack.c.l.b16 %v4362
    %v4395 = vunpack.c.l.b16 %v4363
    %v4396 = vunpack.c.l.b16 %v4364
    %v4397 = vunpack.c.l.b16 %v4365
    %v4398 = vpack.c.b16 %v4383, %v4382
    %v4399 = vpack.c.b16 %v4385, %v4384
    %v4400 = vpack.c.b16 %v4387, %v4386
    %v4401 = vpack.c.b16 %v4389, %v4388
    %v4402 = vpack.c.b16 %v4391, %v4390
    %v4403 = vpack.c.b16 %v4393, %v4392
    %v4404 = vpack.c.b16 %v4395, %v4394
    %v4405 = vpack.c.b16 %v4397, %v4396
    %4414 = vmatpush.bf16.msra.mxu0 %v4405
    %4415 = vmatpush.bf16.msra.mxu0 %v4404
    %4416 = vmatpush.bf16.msra.mxu0 %v4403
    %4417 = vmatpush.bf16.msra.mxu0 %v4402
    %4418 = vmatpush.bf16.msra.mxu0 %v4401
    %4419 = vmatpush.bf16.msra.mxu0 %v4400
    %4420 = vmatpush.bf16.msra.mxu0 %v4399
    %4421 = vmatpush.bf16.msra.mxu0 %v4398
    %4422 = vmatmul.bf16.gmra.mxu0 %v4348
    %v4423 = vpop.f32.mrf.mxu0
    %v4424 = vadd.f32 0.0, %v4423
    %v4425 = vpop.f32.mrf.mxu0
    %4426 = vdwg.mxu0
    %v4427 = vadd.f32 %v4200, %v4424
    %s4428 = scalar_lea.vmem %s0, 38
    %v4429 = vld [vmem:[%s4428] sm:$0x3]
    %4431 = vst [vmem:[#allocation1] ss:$9 sm:$0xff] %v4429
    %v4432 = vld [vmem:[#allocation1] sm:$0xff]
    %v4433 = vld [vmem:[#allocation1 + $0x9] sm:$0xff]
    %v4435 = vsel %vm124, %v4433, 0
    %4437 = vmatpush.bf16.msra.mxu0 %v111
    %4438 = vmatpush.bf16.msra.mxu0 %v110
    %4439 = vmatpush.bf16.msra.mxu0 %v109
    %4440 = vmatpush.bf16.msra.mxu0 %v108
    %4441 = vmatpush.bf16.msra.mxu0 %v107
    %4442 = vmatpush.bf16.msra.mxu0 %v106
    %4443 = vmatpush.bf16.msra.mxu0 %v105
    %4444 = vmatpush.bf16.msra.mxu0 %v104
    %4445 = vmatmul.bf16.gmra.mxu0 %v4432
    %v4446 = vpop.f32.mrf.mxu0
    %v4447 = vadd.f32 %v57, %v4446
    %v4448 = vpop.f32.mrf.mxu0
    %4449 = vdwg.mxu0
    %4450 = vmatpush.bf16.msra.mxu0 0
    %4451 = vmatpush.bf16.msra.mxu0 0
    %4452 = vmatpush.bf16.msra.mxu0 0
    %4453 = vmatpush.bf16.msra.mxu0 0
    %4454 = vmatpush.bf16.msra.mxu0 0
    %4455 = vmatpush.bf16.msra.mxu0 0
    %4456 = vmatpush.bf16.msra.mxu0 %v113
    %4457 = vmatpush.bf16.msra.mxu0 %v112
    %4458 = vmatmul.bf16.gmra.mxu0 %v4435
    %v4459 = vpop.f32.mrf.mxu0
    %v4460 = vadd.f32 %v4447, %v4459
    %v4461 = vpop.f32.mrf.mxu0
    %4462 = vdwg.mxu0
    %v4463 = vmax.f32 %v4460, 0.0
    %s4464 = scalar_lea.vmem %s0, 88
    %v4465 = vld [vmem:[%s4464] sm:$0x3]
    %4467 = vst [vmem:[#allocation1] ss:$9 sm:$0xff] %v4465
    %v4468 = vld [vmem:[#allocation1] sm:$0xff]
    %v4469 = vld [vmem:[#allocation1 + $0x9] sm:$0xff]
    %v4471 = vsel %vm124, %v4469, 0
    %4473 = vmatpush.bf16.msra.mxu0 %v111
    %4474 = vmatpush.bf16.msra.mxu0 %v110
    %4475 = vmatpush.bf16.msra.mxu0 %v109
    %4476 = vmatpush.bf16.msra.mxu0 %v108
    %4477 = vmatpush.bf16.msra.mxu0 %v107
    %4478 = vmatpush.bf16.msra.mxu0 %v106
    %4479 = vmatpush.bf16.msra.mxu0 %v105
    %4480 = vmatpush.bf16.msra.mxu0 %v104
    %4481 = vmatmul.bf16.gmra.mxu0 %v4468
    %v4482 = vpop.f32.mrf.mxu0
    %v4483 = vadd.f32 %v57, %v4482
    %v4484 = vpop.f32.mrf.mxu0
    %4485 = vdwg.mxu0
    %4486 = vmatpush.bf16.msra.mxu0 0
    %4487 = vmatpush.bf16.msra.mxu0 0
    %4488 = vmatpush.bf16.msra.mxu0 0
    %4489 = vmatpush.bf16.msra.mxu0 0
    %4490 = vmatpush.bf16.msra.mxu0 0
    %4491 = vmatpush.bf16.msra.mxu0 0
    %4492 = vmatpush.bf16.msra.mxu0 %v113
    %4493 = vmatpush.bf16.msra.mxu0 %v112
    %4494 = vmatmul.bf16.gmra.mxu0 %v4471
    %v4495 = vpop.f32.mrf.mxu0
    %v4496 = vadd.f32 %v4483, %v4495
    %v4497 = vpop.f32.mrf.mxu0
    %4498 = vdwg.mxu0
    %v4499 = vmax.f32 %v4496, 0.0
    %v4500 = vmax.f32 %v4463, %v4499
    %s4501 = scalar_lea.vmem %s0, 138
    %v4502 = vld [vmem:[%s4501] sm:$0x3]
    %4504 = vst [vmem:[#allocation1] ss:$9 sm:$0xff] %v4502
    %v4505 = vld [vmem:[#allocation1] sm:$0xff]
    %v4506 = vld [vmem:[#allocation1 + $0x9] sm:$0xff]
    %v4508 = vsel %vm124, %v4506, 0
    %4510 = vmatpush.bf16.msra.mxu0 %v111
    %4511 = vmatpush.bf16.msra.mxu0 %v110
    %4512 = vmatpush.bf16.msra.mxu0 %v109
    %4513 = vmatpush.bf16.msra.mxu0 %v108
    %4514 = vmatpush.bf16.msra.mxu0 %v107
    %4515 = vmatpush.bf16.msra.mxu0 %v106
    %4516 = vmatpush.bf16.msra.mxu0 %v105
    %4517 = vmatpush.bf16.msra.mxu0 %v104
    %4518 = vmatmul.bf16.gmra.mxu0 %v4505
    %v4519 = vpop.f32.mrf.mxu0
    %v4520 = vadd.f32 %v57, %v4519
    %v4521 = vpop.f32.mrf.mxu0
    %4522 = vdwg.mxu0
    %4523 = vmatpush.bf16.msra.mxu0 0
    %4524 = vmatpush.bf16.msra.mxu0 0
    %4525 = vmatpush.bf16.msra.mxu0 0
    %4526 = vmatpush.bf16.msra.mxu0 0
    %4527 = vmatpush.bf16.msra.mxu0 0
    %4528 = vmatpush.bf16.msra.mxu0 0
    %4529 = vmatpush.bf16.msra.mxu0 %v113
    %4530 = vmatpush.bf16.msra.mxu0 %v112
    %4531 = vmatmul.bf16.gmra.mxu0 %v4508
    %v4532 = vpop.f32.mrf.mxu0
    %v4533 = vadd.f32 %v4520, %v4532
    %v4534 = vpop.f32.mrf.mxu0
    %4535 = vdwg.mxu0
    %v4536 = vmax.f32 %v4533, 0.0
    %v4537 = vmax.f32 %v4500, %v4536
    %s4538 = scalar_lea.vmem %s0, 188
    %v4539 = vld [vmem:[%s4538] sm:$0x3]
    %4541 = vst [vmem:[#allocation1] ss:$9 sm:$0xff] %v4539
    %v4542 = vld [vmem:[#allocation1] sm:$0xff]
    %v4543 = vld [vmem:[#allocation1 + $0x9] sm:$0xff]
    %v4545 = vsel %vm124, %v4543, 0
    %4547 = vmatpush.bf16.msra.mxu0 %v111
    %4548 = vmatpush.bf16.msra.mxu0 %v110
    %4549 = vmatpush.bf16.msra.mxu0 %v109
    %4550 = vmatpush.bf16.msra.mxu0 %v108
    %4551 = vmatpush.bf16.msra.mxu0 %v107
    %4552 = vmatpush.bf16.msra.mxu0 %v106
    %4553 = vmatpush.bf16.msra.mxu0 %v105
    %4554 = vmatpush.bf16.msra.mxu0 %v104
    %4555 = vmatmul.bf16.gmra.mxu0 %v4542
    %v4556 = vpop.f32.mrf.mxu0
    %v4557 = vadd.f32 %v57, %v4556
    %v4558 = vpop.f32.mrf.mxu0
    %4559 = vdwg.mxu0
    %4560 = vmatpush.bf16.msra.mxu0 0
    %4561 = vmatpush.bf16.msra.mxu0 0
    %4562 = vmatpush.bf16.msra.mxu0 0
    %4563 = vmatpush.bf16.msra.mxu0 0
    %4564 = vmatpush.bf16.msra.mxu0 0
    %4565 = vmatpush.bf16.msra.mxu0 0
    %4566 = vmatpush.bf16.msra.mxu0 %v113
    %4567 = vmatpush.bf16.msra.mxu0 %v112
    %4568 = vmatmul.bf16.gmra.mxu0 %v4545
    %v4569 = vpop.f32.mrf.mxu0
    %v4570 = vadd.f32 %v4557, %v4569
    %v4571 = vpop.f32.mrf.mxu0
    %4572 = vdwg.mxu0
    %v4573 = vmax.f32 %v4570, 0.0
    %v4574 = vmax.f32 %v4537, %v4573
    %v4575 = vpack.c.bf16 %v4574, %v4574
    %s4576 = scalar_lea.vmem %s3, 1216
    %v4577 = vld [vmem:[%s4576] sm:$0xf]
    %v4578 = vld [vmem:[%s4576 + $0x4] sm:$0xf]
    %v4579 = vld [vmem:[%s4576 + $0x8] sm:$0xf]
    %v4580 = vld [vmem:[%s4576 + $0xc] sm:$0xf]
    %v4581 = vld [vmem:[%s4576 + $0x10] sm:$0xf]
    %v4582 = vld [vmem:[%s4576 + $0x14] sm:$0xf]
    %v4583 = vld [vmem:[%s4576 + $0x18] sm:$0xf]
    %v4584 = vld [vmem:[%s4576 + $0x1c] sm:$0xf]
    %v4585 = vld [vmem:[%s4576 + $0x20] sm:$0xf]
    %v4586 = vld [vmem:[%s4576 + $0x24] sm:$0xf]
    %v4587 = vld [vmem:[%s4576 + $0x28] sm:$0xf]
    %v4588 = vld [vmem:[%s4576 + $0x2c] sm:$0xf]
    %v4589 = vld [vmem:[%s4576 + $0x30] sm:$0xf]
    %v4590 = vld [vmem:[%s4576 + $0x34] sm:$0xf]
    %v4591 = vld [vmem:[%s4576 + $0x38] sm:$0xf]
    %v4592 = vld [vmem:[%s4576 + $0x3c] sm:$0xf]
    %v4609 = vunpack.c.l.b16 %v4577
    %v4610 = vunpack.c.l.b16 %v4578
    %v4611 = vunpack.c.l.b16 %v4579
    %v4612 = vunpack.c.l.b16 %v4580
    %v4613 = vunpack.c.l.b16 %v4581
    %v4614 = vunpack.c.l.b16 %v4582
    %v4615 = vunpack.c.l.b16 %v4583
    %v4616 = vunpack.c.l.b16 %v4584
    %v4617 = vunpack.c.l.b16 %v4585
    %v4618 = vunpack.c.l.b16 %v4586
    %v4619 = vunpack.c.l.b16 %v4587
    %v4620 = vunpack.c.l.b16 %v4588
    %v4621 = vunpack.c.l.b16 %v4589
    %v4622 = vunpack.c.l.b16 %v4590
    %v4623 = vunpack.c.l.b16 %v4591
    %v4624 = vunpack.c.l.b16 %v4592
    %v4625 = vpack.c.b16 %v4610, %v4609
    %v4626 = vpack.c.b16 %v4612, %v4611
    %v4627 = vpack.c.b16 %v4614, %v4613
    %v4628 = vpack.c.b16 %v4616, %v4615
    %v4629 = vpack.c.b16 %v4618, %v4617
    %v4630 = vpack.c.b16 %v4620, %v4619
    %v4631 = vpack.c.b16 %v4622, %v4621
    %v4632 = vpack.c.b16 %v4624, %v4623
    %4641 = vmatpush.bf16.msra.mxu0 %v4632
    %4642 = vmatpush.bf16.msra.mxu0 %v4631
    %4643 = vmatpush.bf16.msra.mxu0 %v4630
    %4644 = vmatpush.bf16.msra.mxu0 %v4629
    %4645 = vmatpush.bf16.msra.mxu0 %v4628
    %4646 = vmatpush.bf16.msra.mxu0 %v4627
    %4647 = vmatpush.bf16.msra.mxu0 %v4626
    %4648 = vmatpush.bf16.msra.mxu0 %v4625
    %4649 = vmatmul.bf16.gmra.mxu0 %v4575
    %v4650 = vpop.f32.mrf.mxu0
    %v4651 = vadd.f32 0.0, %v4650
    %v4652 = vpop.f32.mrf.mxu0
    %4653 = vdwg.mxu0
    %v4654 = vadd.f32 %v4427, %v4651
    %s4655 = scalar_lea.vmem %s0, 40
    %v4656 = vld [vmem:[%s4655] sm:$0x3]
    %4658 = vst [vmem:[#allocation1] ss:$9 sm:$0xff] %v4656
    %v4659 = vld [vmem:[#allocation1] sm:$0xff]
    %v4660 = vld [vmem:[#allocation1 + $0x9] sm:$0xff]
    %v4662 = vsel %vm124, %v4660, 0
    %4664 = vmatpush.bf16.msra.mxu0 %v111
    %4665 = vmatpush.bf16.msra.mxu0 %v110
    %4666 = vmatpush.bf16.msra.mxu0 %v109
    %4667 = vmatpush.bf16.msra.mxu0 %v108
    %4668 = vmatpush.bf16.msra.mxu0 %v107
    %4669 = vmatpush.bf16.msra.mxu0 %v106
    %4670 = vmatpush.bf16.msra.mxu0 %v105
    %4671 = vmatpush.bf16.msra.mxu0 %v104
    %4672 = vmatmul.bf16.gmra.mxu0 %v4659
    %v4673 = vpop.f32.mrf.mxu0
    %v4674 = vadd.f32 %v57, %v4673
    %v4675 = vpop.f32.mrf.mxu0
    %4676 = vdwg.mxu0
    %4677 = vmatpush.bf16.msra.mxu0 0
    %4678 = vmatpush.bf16.msra.mxu0 0
    %4679 = vmatpush.bf16.msra.mxu0 0
    %4680 = vmatpush.bf16.msra.mxu0 0
    %4681 = vmatpush.bf16.msra.mxu0 0
    %4682 = vmatpush.bf16.msra.mxu0 0
    %4683 = vmatpush.bf16.msra.mxu0 %v113
    %4684 = vmatpush.bf16.msra.mxu0 %v112
    %4685 = vmatmul.bf16.gmra.mxu0 %v4662
    %v4686 = vpop.f32.mrf.mxu0
    %v4687 = vadd.f32 %v4674, %v4686
    %v4688 = vpop.f32.mrf.mxu0
    %4689 = vdwg.mxu0
    %v4690 = vmax.f32 %v4687, 0.0
    %s4691 = scalar_lea.vmem %s0, 90
    %v4692 = vld [vmem:[%s4691] sm:$0x3]
    %4694 = vst [vmem:[#allocation1] ss:$9 sm:$0xff] %v4692
    %v4695 = vld [vmem:[#allocation1] sm:$0xff]
    %v4696 = vld [vmem:[#allocation1 + $0x9] sm:$0xff]
    %v4698 = vsel %vm124, %v4696, 0
    %4700 = vmatpush.bf16.msra.mxu0 %v111
    %4701 = vmatpush.bf16.msra.mxu0 %v110
    %4702 = vmatpush.bf16.msra.mxu0 %v109
    %4703 = vmatpush.bf16.msra.mxu0 %v108
    %4704 = vmatpush.bf16.msra.mxu0 %v107
    %4705 = vmatpush.bf16.msra.mxu0 %v106
    %4706 = vmatpush.bf16.msra.mxu0 %v105
    %4707 = vmatpush.bf16.msra.mxu0 %v104
    %4708 = vmatmul.bf16.gmra.mxu0 %v4695
    %v4709 = vpop.f32.mrf.mxu0
    %v4710 = vadd.f32 %v57, %v4709
    %v4711 = vpop.f32.mrf.mxu0
    %4712 = vdwg.mxu0
    %4713 = vmatpush.bf16.msra.mxu0 0
    %4714 = vmatpush.bf16.msra.mxu0 0
    %4715 = vmatpush.bf16.msra.mxu0 0
    %4716 = vmatpush.bf16.msra.mxu0 0
    %4717 = vmatpush.bf16.msra.mxu0 0
    %4718 = vmatpush.bf16.msra.mxu0 0
    %4719 = vmatpush.bf16.msra.mxu0 %v113
    %4720 = vmatpush.bf16.msra.mxu0 %v112
    %4721 = vmatmul.bf16.gmra.mxu0 %v4698
    %v4722 = vpop.f32.mrf.mxu0
    %v4723 = vadd.f32 %v4710, %v4722
    %v4724 = vpop.f32.mrf.mxu0
    %4725 = vdwg.mxu0
    %v4726 = vmax.f32 %v4723, 0.0
    %v4727 = vmax.f32 %v4690, %v4726
    %s4728 = scalar_lea.vmem %s0, 140
    %v4729 = vld [vmem:[%s4728] sm:$0x3]
    %4731 = vst [vmem:[#allocation1] ss:$9 sm:$0xff] %v4729
    %v4732 = vld [vmem:[#allocation1] sm:$0xff]
    %v4733 = vld [vmem:[#allocation1 + $0x9] sm:$0xff]
    %v4735 = vsel %vm124, %v4733, 0
    %4737 = vmatpush.bf16.msra.mxu0 %v111
    %4738 = vmatpush.bf16.msra.mxu0 %v110
    %4739 = vmatpush.bf16.msra.mxu0 %v109
    %4740 = vmatpush.bf16.msra.mxu0 %v108
    %4741 = vmatpush.bf16.msra.mxu0 %v107
    %4742 = vmatpush.bf16.msra.mxu0 %v106
    %4743 = vmatpush.bf16.msra.mxu0 %v105
    %4744 = vmatpush.bf16.msra.mxu0 %v104
    %4745 = vmatmul.bf16.gmra.mxu0 %v4732
    %v4746 = vpop.f32.mrf.mxu0
    %v4747 = vadd.f32 %v57, %v4746
    %v4748 = vpop.f32.mrf.mxu0
    %4749 = vdwg.mxu0
    %4750 = vmatpush.bf16.msra.mxu0 0
    %4751 = vmatpush.bf16.msra.mxu0 0
    %4752 = vmatpush.bf16.msra.mxu0 0
    %4753 = vmatpush.bf16.msra.mxu0 0
    %4754 = vmatpush.bf16.msra.mxu0 0
    %4755 = vmatpush.bf16.msra.mxu0 0
    %4756 = vmatpush.bf16.msra.mxu0 %v113
    %4757 = vmatpush.bf16.msra.mxu0 %v112
    %4758 = vmatmul.bf16.gmra.mxu0 %v4735
    %v4759 = vpop.f32.mrf.mxu0
    %v4760 = vadd.f32 %v4747, %v4759
    %v4761 = vpop.f32.mrf.mxu0
    %4762 = vdwg.mxu0
    %v4763 = vmax.f32 %v4760, 0.0
    %v4764 = vmax.f32 %v4727, %v4763
    %s4765 = scalar_lea.vmem %s0, 190
    %v4766 = vld [vmem:[%s4765] sm:$0x3]
    %4768 = vst [vmem:[#allocation1] ss:$9 sm:$0xff] %v4766
    %v4769 = vld [vmem:[#allocation1] sm:$0xff]
    %v4770 = vld [vmem:[#allocation1 + $0x9] sm:$0xff]
    %v4772 = vsel %vm124, %v4770, 0
    %4774 = vmatpush.bf16.msra.mxu0 %v111
    %4775 = vmatpush.bf16.msra.mxu0 %v110
    %4776 = vmatpush.bf16.msra.mxu0 %v109
    %4777 = vmatpush.bf16.msra.mxu0 %v108
    %4778 = vmatpush.bf16.msra.mxu0 %v107
    %4779 = vmatpush.bf16.msra.mxu0 %v106
    %4780 = vmatpush.bf16.msra.mxu0 %v105
    %4781 = vmatpush.bf16.msra.mxu0 %v104
    %4782 = vmatmul.bf16.gmra.mxu0 %v4769
    %v4783 = vpop.f32.mrf.mxu0
    %v4784 = vadd.f32 %v57, %v4783
    %v4785 = vpop.f32.mrf.mxu0
    %4786 = vdwg.mxu0
    %4787 = vmatpush.bf16.msra.mxu0 0
    %4788 = vmatpush.bf16.msra.mxu0 0
    %4789 = vmatpush.bf16.msra.mxu0 0
    %4790 = vmatpush.bf16.msra.mxu0 0
    %4791 = vmatpush.bf16.msra.mxu0 0
    %4792 = vmatpush.bf16.msra.mxu0 0
    %4793 = vmatpush.bf16.msra.mxu0 %v113
    %4794 = vmatpush.bf16.msra.mxu0 %v112
    %4795 = vmatmul.bf16.gmra.mxu0 %v4772
    %v4796 = vpop.f32.mrf.mxu0
    %v4797 = vadd.f32 %v4784, %v4796
    %v4798 = vpop.f32.mrf.mxu0
    %4799 = vdwg.mxu0
    %v4800 = vmax.f32 %v4797, 0.0
    %v4801 = vmax.f32 %v4764, %v4800
    %v4802 = vpack.c.bf16 %v4801, %v4801
    %s4803 = scalar_lea.vmem %s3, 1280
    %v4804 = vld [vmem:[%s4803] sm:$0xf]
    %v4805 = vld [vmem:[%s4803 + $0x4] sm:$0xf]
    %v4806 = vld [vmem:[%s4803 + $0x8] sm:$0xf]
    %v4807 = vld [vmem:[%s4803 + $0xc] sm:$0xf]
    %v4808 = vld [vmem:[%s4803 + $0x10] sm:$0xf]
    %v4809 = vld [vmem:[%s4803 + $0x14] sm:$0xf]
    %v4810 = vld [vmem:[%s4803 + $0x18] sm:$0xf]
    %v4811 = vld [vmem:[%s4803 + $0x1c] sm:$0xf]
    %v4812 = vld [vmem:[%s4803 + $0x20] sm:$0xf]
    %v4813 = vld [vmem:[%s4803 + $0x24] sm:$0xf]
    %v4814 = vld [vmem:[%s4803 + $0x28] sm:$0xf]
    %v4815 = vld [vmem:[%s4803 + $0x2c] sm:$0xf]
    %v4816 = vld [vmem:[%s4803 + $0x30] sm:$0xf]
    %v4817 = vld [vmem:[%s4803 + $0x34] sm:$0xf]
    %v4818 = vld [vmem:[%s4803 + $0x38] sm:$0xf]
    %v4819 = vld [vmem:[%s4803 + $0x3c] sm:$0xf]
    %v4836 = vunpack.c.l.b16 %v4804
    %v4837 = vunpack.c.l.b16 %v4805
    %v4838 = vunpack.c.l.b16 %v4806
    %v4839 = vunpack.c.l.b16 %v4807
    %v4840 = vunpack.c.l.b16 %v4808
    %v4841 = vunpack.c.l.b16 %v4809
    %v4842 = vunpack.c.l.b16 %v4810
    %v4843 = vunpack.c.l.b16 %v4811
    %v4844 = vunpack.c.l.b16 %v4812
    %v4845 = vunpack.c.l.b16 %v4813
    %v4846 = vunpack.c.l.b16 %v4814
    %v4847 = vunpack.c.l.b16 %v4815
    %v4848 = vunpack.c.l.b16 %v4816
    %v4849 = vunpack.c.l.b16 %v4817
    %v4850 = vunpack.c.l.b16 %v4818
    %v4851 = vunpack.c.l.b16 %v4819
    %v4852 = vpack.c.b16 %v4837, %v4836
    %v4853 = vpack.c.b16 %v4839, %v4838
    %v4854 = vpack.c.b16 %v4841, %v4840
    %v4855 = vpack.c.b16 %v4843, %v4842
    %v4856 = vpack.c.b16 %v4845, %v4844
    %v4857 = vpack.c.b16 %v4847, %v4846
    %v4858 = vpack.c.b16 %v4849, %v4848
    %v4859 = vpack.c.b16 %v4851, %v4850
    %4868 = vmatpush.bf16.msra.mxu0 %v4859
    %4869 = vmatpush.bf16.msra.mxu0 %v4858
    %4870 = vmatpush.bf16.msra.mxu0 %v4857
    %4871 = vmatpush.bf16.msra.mxu0 %v4856
    %4872 = vmatpush.bf16.msra.mxu0 %v4855
    %4873 = vmatpush.bf16.msra.mxu0 %v4854
    %4874 = vmatpush.bf16.msra.mxu0 %v4853
    %4875 = vmatpush.bf16.msra.mxu0 %v4852
    %4876 = vmatmul.bf16.gmra.mxu0 %v4802
    %v4877 = vpop.f32.mrf.mxu0
    %v4878 = vadd.f32 0.0, %v4877
    %v4879 = vpop.f32.mrf.mxu0
    %4880 = vdwg.mxu0
    %v4881 = vadd.f32 %v4654, %v4878
    %s4882 = scalar_lea.vmem %s0, 42
    %v4883 = vld [vmem:[%s4882] sm:$0x3]
    %4885 = vst [vmem:[#allocation1] ss:$9 sm:$0xff] %v4883
    %v4886 = vld [vmem:[#allocation1] sm:$0xff]
    %v4887 = vld [vmem:[#allocation1 + $0x9] sm:$0xff]
    %v4889 = vsel %vm124, %v4887, 0
    %4891 = vmatpush.bf16.msra.mxu0 %v111
    %4892 = vmatpush.bf16.msra.mxu0 %v110
    %4893 = vmatpush.bf16.msra.mxu0 %v109
    %4894 = vmatpush.bf16.msra.mxu0 %v108
    %4895 = vmatpush.bf16.msra.mxu0 %v107
    %4896 = vmatpush.bf16.msra.mxu0 %v106
    %4897 = vmatpush.bf16.msra.mxu0 %v105
    %4898 = vmatpush.bf16.msra.mxu0 %v104
    %4899 = vmatmul.bf16.gmra.mxu0 %v4886
    %v4900 = vpop.f32.mrf.mxu0
    %v4901 = vadd.f32 %v57, %v4900
    %v4902 = vpop.f32.mrf.mxu0
    %4903 = vdwg.mxu0
    %4904 = vmatpush.bf16.msra.mxu0 0
    %4905 = vmatpush.bf16.msra.mxu0 0
    %4906 = vmatpush.bf16.msra.mxu0 0
    %4907 = vmatpush.bf16.msra.mxu0 0
    %4908 = vmatpush.bf16.msra.mxu0 0
    %4909 = vmatpush.bf16.msra.mxu0 0
    %4910 = vmatpush.bf16.msra.mxu0 %v113
    %4911 = vmatpush.bf16.msra.mxu0 %v112
    %4912 = vmatmul.bf16.gmra.mxu0 %v4889
    %v4913 = vpop.f32.mrf.mxu0
    %v4914 = vadd.f32 %v4901, %v4913
    %v4915 = vpop.f32.mrf.mxu0
    %4916 = vdwg.mxu0
    %v4917 = vmax.f32 %v4914, 0.0
    %s4918 = scalar_lea.vmem %s0, 92
    %v4919 = vld [vmem:[%s4918] sm:$0x3]
    %4921 = vst [vmem:[#allocation1] ss:$9 sm:$0xff] %v4919
    %v4922 = vld [vmem:[#allocation1] sm:$0xff]
    %v4923 = vld [vmem:[#allocation1 + $0x9] sm:$0xff]
    %v4925 = vsel %vm124, %v4923, 0
    %4927 = vmatpush.bf16.msra.mxu0 %v111
    %4928 = vmatpush.bf16.msra.mxu0 %v110
    %4929 = vmatpush.bf16.msra.mxu0 %v109
    %4930 = vmatpush.bf16.msra.mxu0 %v108
    %4931 = vmatpush.bf16.msra.mxu0 %v107
    %4932 = vmatpush.bf16.msra.mxu0 %v106
    %4933 = vmatpush.bf16.msra.mxu0 %v105
    %4934 = vmatpush.bf16.msra.mxu0 %v104
    %4935 = vmatmul.bf16.gmra.mxu0 %v4922
    %v4936 = vpop.f32.mrf.mxu0
    %v4937 = vadd.f32 %v57, %v4936
    %v4938 = vpop.f32.mrf.mxu0
    %4939 = vdwg.mxu0
    %4940 = vmatpush.bf16.msra.mxu0 0
    %4941 = vmatpush.bf16.msra.mxu0 0
    %4942 = vmatpush.bf16.msra.mxu0 0
    %4943 = vmatpush.bf16.msra.mxu0 0
    %4944 = vmatpush.bf16.msra.mxu0 0
    %4945 = vmatpush.bf16.msra.mxu0 0
    %4946 = vmatpush.bf16.msra.mxu0 %v113
    %4947 = vmatpush.bf16.msra.mxu0 %v112
    %4948 = vmatmul.bf16.gmra.mxu0 %v4925
    %v4949 = vpop.f32.mrf.mxu0
    %v4950 = vadd.f32 %v4937, %v4949
    %v4951 = vpop.f32.mrf.mxu0
    %4952 = vdwg.mxu0
    %v4953 = vmax.f32 %v4950, 0.0
    %v4954 = vmax.f32 %v4917, %v4953
    %s4955 = scalar_lea.vmem %s0, 142
    %v4956 = vld [vmem:[%s4955] sm:$0x3]
    %4958 = vst [vmem:[#allocation1] ss:$9 sm:$0xff] %v4956
    %v4959 = vld [vmem:[#allocation1] sm:$0xff]
    %v4960 = vld [vmem:[#allocation1 + $0x9] sm:$0xff]
    %v4962 = vsel %vm124, %v4960, 0
    %4964 = vmatpush.bf16.msra.mxu0 %v111
    %4965 = vmatpush.bf16.msra.mxu0 %v110
    %4966 = vmatpush.bf16.msra.mxu0 %v109
    %4967 = vmatpush.bf16.msra.mxu0 %v108
    %4968 = vmatpush.bf16.msra.mxu0 %v107
    %4969 = vmatpush.bf16.msra.mxu0 %v106
    %4970 = vmatpush.bf16.msra.mxu0 %v105
    %4971 = vmatpush.bf16.msra.mxu0 %v104
    %4972 = vmatmul.bf16.gmra.mxu0 %v4959
    %v4973 = vpop.f32.mrf.mxu0
    %v4974 = vadd.f32 %v57, %v4973
    %v4975 = vpop.f32.mrf.mxu0
    %4976 = vdwg.mxu0
    %4977 = vmatpush.bf16.msra.mxu0 0
    %4978 = vmatpush.bf16.msra.mxu0 0
    %4979 = vmatpush.bf16.msra.mxu0 0
    %4980 = vmatpush.bf16.msra.mxu0 0
    %4981 = vmatpush.bf16.msra.mxu0 0
    %4982 = vmatpush.bf16.msra.mxu0 0
    %4983 = vmatpush.bf16.msra.mxu0 %v113
    %4984 = vmatpush.bf16.msra.mxu0 %v112
    %4985 = vmatmul.bf16.gmra.mxu0 %v4962
    %v4986 = vpop.f32.mrf.mxu0
    %v4987 = vadd.f32 %v4974, %v4986
    %v4988 = vpop.f32.mrf.mxu0
    %4989 = vdwg.mxu0
    %v4990 = vmax.f32 %v4987, 0.0
    %v4991 = vmax.f32 %v4954, %v4990
    %s4992 = scalar_lea.vmem %s0, 192
    %v4993 = vld [vmem:[%s4992] sm:$0x3]
    %4995 = vst [vmem:[#allocation1] ss:$9 sm:$0xff] %v4993
    %v4996 = vld [vmem:[#allocation1] sm:$0xff]
    %v4997 = vld [vmem:[#allocation1 + $0x9] sm:$0xff]
    %v4999 = vsel %vm124, %v4997, 0
    %5001 = vmatpush.bf16.msra.mxu0 %v111
    %5002 = vmatpush.bf16.msra.mxu0 %v110
    %5003 = vmatpush.bf16.msra.mxu0 %v109
    %5004 = vmatpush.bf16.msra.mxu0 %v108
    %5005 = vmatpush.bf16.msra.mxu0 %v107
    %5006 = vmatpush.bf16.msra.mxu0 %v106
    %5007 = vmatpush.bf16.msra.mxu0 %v105
    %5008 = vmatpush.bf16.msra.mxu0 %v104
    %5009 = vmatmul.bf16.gmra.mxu0 %v4996
    %v5010 = vpop.f32.mrf.mxu0
    %v5011 = vadd.f32 %v57, %v5010
    %v5012 = vpop.f32.mrf.mxu0
    %5013 = vdwg.mxu0
    %5014 = vmatpush.bf16.msra.mxu0 0
    %5015 = vmatpush.bf16.msra.mxu0 0
    %5016 = vmatpush.bf16.msra.mxu0 0
    %5017 = vmatpush.bf16.msra.mxu0 0
    %5018 = vmatpush.bf16.msra.mxu0 0
    %5019 = vmatpush.bf16.msra.mxu0 0
    %5020 = vmatpush.bf16.msra.mxu0 %v113
    %5021 = vmatpush.bf16.msra.mxu0 %v112
    %5022 = vmatmul.bf16.gmra.mxu0 %v4999
    %v5023 = vpop.f32.mrf.mxu0
    %v5024 = vadd.f32 %v5011, %v5023
    %v5025 = vpop.f32.mrf.mxu0
    %5026 = vdwg.mxu0
    %v5027 = vmax.f32 %v5024, 0.0
    %v5028 = vmax.f32 %v4991, %v5027
    %v5029 = vpack.c.bf16 %v5028, %v5028
    %s5030 = scalar_lea.vmem %s3, 1344
    %v5031 = vld [vmem:[%s5030] sm:$0xf]
    %v5032 = vld [vmem:[%s5030 + $0x4] sm:$0xf]
    %v5033 = vld [vmem:[%s5030 + $0x8] sm:$0xf]
    %v5034 = vld [vmem:[%s5030 + $0xc] sm:$0xf]
    %v5035 = vld [vmem:[%s5030 + $0x10] sm:$0xf]
    %v5036 = vld [vmem:[%s5030 + $0x14] sm:$0xf]
    %v5037 = vld [vmem:[%s5030 + $0x18] sm:$0xf]
    %v5038 = vld [vmem:[%s5030 + $0x1c] sm:$0xf]
    %v5039 = vld [vmem:[%s5030 + $0x20] sm:$0xf]
    %v5040 = vld [vmem:[%s5030 + $0x24] sm:$0xf]
    %v5041 = vld [vmem:[%s5030 + $0x28] sm:$0xf]
    %v5042 = vld [vmem:[%s5030 + $0x2c] sm:$0xf]
    %v5043 = vld [vmem:[%s5030 + $0x30] sm:$0xf]
    %v5044 = vld [vmem:[%s5030 + $0x34] sm:$0xf]
    %v5045 = vld [vmem:[%s5030 + $0x38] sm:$0xf]
    %v5046 = vld [vmem:[%s5030 + $0x3c] sm:$0xf]
    %v5063 = vunpack.c.l.b16 %v5031
    %v5064 = vunpack.c.l.b16 %v5032
    %v5065 = vunpack.c.l.b16 %v5033
    %v5066 = vunpack.c.l.b16 %v5034
    %v5067 = vunpack.c.l.b16 %v5035
    %v5068 = vunpack.c.l.b16 %v5036
    %v5069 = vunpack.c.l.b16 %v5037
    %v5070 = vunpack.c.l.b16 %v5038
    %v5071 = vunpack.c.l.b16 %v5039
    %v5072 = vunpack.c.l.b16 %v5040
    %v5073 = vunpack.c.l.b16 %v5041
    %v5074 = vunpack.c.l.b16 %v5042
    %v5075 = vunpack.c.l.b16 %v5043
    %v5076 = vunpack.c.l.b16 %v5044
    %v5077 = vunpack.c.l.b16 %v5045
    %v5078 = vunpack.c.l.b16 %v5046
    %v5079 = vpack.c.b16 %v5064, %v5063
    %v5080 = vpack.c.b16 %v5066, %v5065
    %v5081 = vpack.c.b16 %v5068, %v5067
    %v5082 = vpack.c.b16 %v5070, %v5069
    %v5083 = vpack.c.b16 %v5072, %v5071
    %v5084 = vpack.c.b16 %v5074, %v5073
    %v5085 = vpack.c.b16 %v5076, %v5075
    %v5086 = vpack.c.b16 %v5078, %v5077
    %5095 = vmatpush.bf16.msra.mxu0 %v5086
    %5096 = vmatpush.bf16.msra.mxu0 %v5085
    %5097 = vmatpush.bf16.msra.mxu0 %v5084
    %5098 = vmatpush.bf16.msra.mxu0 %v5083
    %5099 = vmatpush.bf16.msra.mxu0 %v5082
    %5100 = vmatpush.bf16.msra.mxu0 %v5081
    %5101 = vmatpush.bf16.msra.mxu0 %v5080
    %5102 = vmatpush.bf16.msra.mxu0 %v5079
    %5103 = vmatmul.bf16.gmra.mxu0 %v5029
    %v5104 = vpop.f32.mrf.mxu0
    %v5105 = vadd.f32 0.0, %v5104
    %v5106 = vpop.f32.mrf.mxu0
    %5107 = vdwg.mxu0
    %v5108 = vadd.f32 %v4881, %v5105
    %s5109 = scalar_lea.vmem %s0, 44
    %v5110 = vld [vmem:[%s5109] sm:$0x3]
    %5112 = vst [vmem:[#allocation1] ss:$9 sm:$0xff] %v5110
    %v5113 = vld [vmem:[#allocation1] sm:$0xff]
    %v5114 = vld [vmem:[#allocation1 + $0x9] sm:$0xff]
    %v5116 = vsel %vm124, %v5114, 0
    %5118 = vmatpush.bf16.msra.mxu0 %v111
    %5119 = vmatpush.bf16.msra.mxu0 %v110
    %5120 = vmatpush.bf16.msra.mxu0 %v109
    %5121 = vmatpush.bf16.msra.mxu0 %v108
    %5122 = vmatpush.bf16.msra.mxu0 %v107
    %5123 = vmatpush.bf16.msra.mxu0 %v106
    %5124 = vmatpush.bf16.msra.mxu0 %v105
    %5125 = vmatpush.bf16.msra.mxu0 %v104
    %5126 = vmatmul.bf16.gmra.mxu0 %v5113
    %v5127 = vpop.f32.mrf.mxu0
    %v5128 = vadd.f32 %v57, %v5127
    %v5129 = vpop.f32.mrf.mxu0
    %5130 = vdwg.mxu0
    %5131 = vmatpush.bf16.msra.mxu0 0
    %5132 = vmatpush.bf16.msra.mxu0 0
    %5133 = vmatpush.bf16.msra.mxu0 0
    %5134 = vmatpush.bf16.msra.mxu0 0
    %5135 = vmatpush.bf16.msra.mxu0 0
    %5136 = vmatpush.bf16.msra.mxu0 0
    %5137 = vmatpush.bf16.msra.mxu0 %v113
    %5138 = vmatpush.bf16.msra.mxu0 %v112
    %5139 = vmatmul.bf16.gmra.mxu0 %v5116
    %v5140 = vpop.f32.mrf.mxu0
    %v5141 = vadd.f32 %v5128, %v5140
    %v5142 = vpop.f32.mrf.mxu0
    %5143 = vdwg.mxu0
    %v5144 = vmax.f32 %v5141, 0.0
    %s5145 = scalar_lea.vmem %s0, 94
    %v5146 = vld [vmem:[%s5145] sm:$0x3]
    %5148 = vst [vmem:[#allocation1] ss:$9 sm:$0xff] %v5146
    %v5149 = vld [vmem:[#allocation1] sm:$0xff]
    %v5150 = vld [vmem:[#allocation1 + $0x9] sm:$0xff]
    %v5152 = vsel %vm124, %v5150, 0
    %5154 = vmatpush.bf16.msra.mxu0 %v111
    %5155 = vmatpush.bf16.msra.mxu0 %v110
    %5156 = vmatpush.bf16.msra.mxu0 %v109
    %5157 = vmatpush.bf16.msra.mxu0 %v108
    %5158 = vmatpush.bf16.msra.mxu0 %v107
    %5159 = vmatpush.bf16.msra.mxu0 %v106
    %5160 = vmatpush.bf16.msra.mxu0 %v105
    %5161 = vmatpush.bf16.msra.mxu0 %v104
    %5162 = vmatmul.bf16.gmra.mxu0 %v5149
    %v5163 = vpop.f32.mrf.mxu0
    %v5164 = vadd.f32 %v57, %v5163
    %v5165 = vpop.f32.mrf.mxu0
    %5166 = vdwg.mxu0
    %5167 = vmatpush.bf16.msra.mxu0 0
    %5168 = vmatpush.bf16.msra.mxu0 0
    %5169 = vmatpush.bf16.msra.mxu0 0
    %5170 = vmatpush.bf16.msra.mxu0 0
    %5171 = vmatpush.bf16.msra.mxu0 0
    %5172 = vmatpush.bf16.msra.mxu0 0
    %5173 = vmatpush.bf16.msra.mxu0 %v113
    %5174 = vmatpush.bf16.msra.mxu0 %v112
    %5175 = vmatmul.bf16.gmra.mxu0 %v5152
    %v5176 = vpop.f32.mrf.mxu0
    %v5177 = vadd.f32 %v5164, %v5176
    %v5178 = vpop.f32.mrf.mxu0
    %5179 = vdwg.mxu0
    %v5180 = vmax.f32 %v5177, 0.0
    %v5181 = vmax.f32 %v5144, %v5180
    %s5182 = scalar_lea.vmem %s0, 144
    %v5183 = vld [vmem:[%s5182] sm:$0x3]
    %5185 = vst [vmem:[#allocation1] ss:$9 sm:$0xff] %v5183
    %v5186 = vld [vmem:[#allocation1] sm:$0xff]
    %v5187 = vld [vmem:[#allocation1 + $0x9] sm:$0xff]
    %v5189 = vsel %vm124, %v5187, 0
    %5191 = vmatpush.bf16.msra.mxu0 %v111
    %5192 = vmatpush.bf16.msra.mxu0 %v110
    %5193 = vmatpush.bf16.msra.mxu0 %v109
    %5194 = vmatpush.bf16.msra.mxu0 %v108
    %5195 = vmatpush.bf16.msra.mxu0 %v107
    %5196 = vmatpush.bf16.msra.mxu0 %v106
    %5197 = vmatpush.bf16.msra.mxu0 %v105
    %5198 = vmatpush.bf16.msra.mxu0 %v104
    %5199 = vmatmul.bf16.gmra.mxu0 %v5186
    %v5200 = vpop.f32.mrf.mxu0
    %v5201 = vadd.f32 %v57, %v5200
    %v5202 = vpop.f32.mrf.mxu0
    %5203 = vdwg.mxu0
    %5204 = vmatpush.bf16.msra.mxu0 0
    %5205 = vmatpush.bf16.msra.mxu0 0
    %5206 = vmatpush.bf16.msra.mxu0 0
    %5207 = vmatpush.bf16.msra.mxu0 0
    %5208 = vmatpush.bf16.msra.mxu0 0
    %5209 = vmatpush.bf16.msra.mxu0 0
    %5210 = vmatpush.bf16.msra.mxu0 %v113
    %5211 = vmatpush.bf16.msra.mxu0 %v112
    %5212 = vmatmul.bf16.gmra.mxu0 %v5189
    %v5213 = vpop.f32.mrf.mxu0
    %v5214 = vadd.f32 %v5201, %v5213
    %v5215 = vpop.f32.mrf.mxu0
    %5216 = vdwg.mxu0
    %v5217 = vmax.f32 %v5214, 0.0
    %v5218 = vmax.f32 %v5181, %v5217
    %s5219 = scalar_lea.vmem %s0, 194
    %v5220 = vld [vmem:[%s5219] sm:$0x3]
    %5222 = vst [vmem:[#allocation1] ss:$9 sm:$0xff] %v5220
    %v5223 = vld [vmem:[#allocation1] sm:$0xff]
    %v5224 = vld [vmem:[#allocation1 + $0x9] sm:$0xff]
    %v5226 = vsel %vm124, %v5224, 0
    %5228 = vmatpush.bf16.msra.mxu0 %v111
    %5229 = vmatpush.bf16.msra.mxu0 %v110
    %5230 = vmatpush.bf16.msra.mxu0 %v109
    %5231 = vmatpush.bf16.msra.mxu0 %v108
    %5232 = vmatpush.bf16.msra.mxu0 %v107
    %5233 = vmatpush.bf16.msra.mxu0 %v106
    %5234 = vmatpush.bf16.msra.mxu0 %v105
    %5235 = vmatpush.bf16.msra.mxu0 %v104
    %5236 = vmatmul.bf16.gmra.mxu0 %v5223
    %v5237 = vpop.f32.mrf.mxu0
    %v5238 = vadd.f32 %v57, %v5237
    %v5239 = vpop.f32.mrf.mxu0
    %5240 = vdwg.mxu0
    %5241 = vmatpush.bf16.msra.mxu0 0
    %5242 = vmatpush.bf16.msra.mxu0 0
    %5243 = vmatpush.bf16.msra.mxu0 0
    %5244 = vmatpush.bf16.msra.mxu0 0
    %5245 = vmatpush.bf16.msra.mxu0 0
    %5246 = vmatpush.bf16.msra.mxu0 0
    %5247 = vmatpush.bf16.msra.mxu0 %v113
    %5248 = vmatpush.bf16.msra.mxu0 %v112
    %5249 = vmatmul.bf16.gmra.mxu0 %v5226
    %v5250 = vpop.f32.mrf.mxu0
    %v5251 = vadd.f32 %v5238, %v5250
    %v5252 = vpop.f32.mrf.mxu0
    %5253 = vdwg.mxu0
    %v5254 = vmax.f32 %v5251, 0.0
    %v5255 = vmax.f32 %v5218, %v5254
    %v5256 = vpack.c.bf16 %v5255, %v5255
    %s5257 = scalar_lea.vmem %s3, 1408
    %v5258 = vld [vmem:[%s5257] sm:$0xf]
    %v5259 = vld [vmem:[%s5257 + $0x4] sm:$0xf]
    %v5260 = vld [vmem:[%s5257 + $0x8] sm:$0xf]
    %v5261 = vld [vmem:[%s5257 + $0xc] sm:$0xf]
    %v5262 = vld [vmem:[%s5257 + $0x10] sm:$0xf]
    %v5263 = vld [vmem:[%s5257 + $0x14] sm:$0xf]
    %v5264 = vld [vmem:[%s5257 + $0x18] sm:$0xf]
    %v5265 = vld [vmem:[%s5257 + $0x1c] sm:$0xf]
    %v5266 = vld [vmem:[%s5257 + $0x20] sm:$0xf]
    %v5267 = vld [vmem:[%s5257 + $0x24] sm:$0xf]
    %v5268 = vld [vmem:[%s5257 + $0x28] sm:$0xf]
    %v5269 = vld [vmem:[%s5257 + $0x2c] sm:$0xf]
    %v5270 = vld [vmem:[%s5257 + $0x30] sm:$0xf]
    %v5271 = vld [vmem:[%s5257 + $0x34] sm:$0xf]
    %v5272 = vld [vmem:[%s5257 + $0x38] sm:$0xf]
    %v5273 = vld [vmem:[%s5257 + $0x3c] sm:$0xf]
    %v5290 = vunpack.c.l.b16 %v5258
    %v5291 = vunpack.c.l.b16 %v5259
    %v5292 = vunpack.c.l.b16 %v5260
    %v5293 = vunpack.c.l.b16 %v5261
    %v5294 = vunpack.c.l.b16 %v5262
    %v5295 = vunpack.c.l.b16 %v5263
    %v5296 = vunpack.c.l.b16 %v5264
    %v5297 = vunpack.c.l.b16 %v5265
    %v5298 = vunpack.c.l.b16 %v5266
    %v5299 = vunpack.c.l.b16 %v5267
    %v5300 = vunpack.c.l.b16 %v5268
    %v5301 = vunpack.c.l.b16 %v5269
    %v5302 = vunpack.c.l.b16 %v5270
    %v5303 = vunpack.c.l.b16 %v5271
    %v5304 = vunpack.c.l.b16 %v5272
    %v5305 = vunpack.c.l.b16 %v5273
    %v5306 = vpack.c.b16 %v5291, %v5290
    %v5307 = vpack.c.b16 %v5293, %v5292
    %v5308 = vpack.c.b16 %v5295, %v5294
    %v5309 = vpack.c.b16 %v5297, %v5296
    %v5310 = vpack.c.b16 %v5299, %v5298
    %v5311 = vpack.c.b16 %v5301, %v5300
    %v5312 = vpack.c.b16 %v5303, %v5302
    %v5313 = vpack.c.b16 %v5305, %v5304
    %5322 = vmatpush.bf16.msra.mxu0 %v5313
    %5323 = vmatpush.bf16.msra.mxu0 %v5312
    %5324 = vmatpush.bf16.msra.mxu0 %v5311
    %5325 = vmatpush.bf16.msra.mxu0 %v5310
    %5326 = vmatpush.bf16.msra.mxu0 %v5309
    %5327 = vmatpush.bf16.msra.mxu0 %v5308
    %5328 = vmatpush.bf16.msra.mxu0 %v5307
    %5329 = vmatpush.bf16.msra.mxu0 %v5306
    %5330 = vmatmul.bf16.gmra.mxu0 %v5256
    %v5331 = vpop.f32.mrf.mxu0
    %v5332 = vadd.f32 0.0, %v5331
    %v5333 = vpop.f32.mrf.mxu0
    %5334 = vdwg.mxu0
    %v5335 = vadd.f32 %v5108, %v5332
    %s5336 = scalar_lea.vmem %s0, 46
    %v5337 = vld [vmem:[%s5336] sm:$0x3]
    %5339 = vst [vmem:[#allocation1] ss:$9 sm:$0xff] %v5337
    %v5340 = vld [vmem:[#allocation1] sm:$0xff]
    %v5341 = vld [vmem:[#allocation1 + $0x9] sm:$0xff]
    %v5343 = vsel %vm124, %v5341, 0
    %5345 = vmatpush.bf16.msra.mxu0 %v111
    %5346 = vmatpush.bf16.msra.mxu0 %v110
    %5347 = vmatpush.bf16.msra.mxu0 %v109
    %5348 = vmatpush.bf16.msra.mxu0 %v108
    %5349 = vmatpush.bf16.msra.mxu0 %v107
    %5350 = vmatpush.bf16.msra.mxu0 %v106
    %5351 = vmatpush.bf16.msra.mxu0 %v105
    %5352 = vmatpush.bf16.msra.mxu0 %v104
    %5353 = vmatmul.bf16.gmra.mxu0 %v5340
    %v5354 = vpop.f32.mrf.mxu0
    %v5355 = vadd.f32 %v57, %v5354
    %v5356 = vpop.f32.mrf.mxu0
    %5357 = vdwg.mxu0
    %5358 = vmatpush.bf16.msra.mxu0 0
    %5359 = vmatpush.bf16.msra.mxu0 0
    %5360 = vmatpush.bf16.msra.mxu0 0
    %5361 = vmatpush.bf16.msra.mxu0 0
    %5362 = vmatpush.bf16.msra.mxu0 0
    %5363 = vmatpush.bf16.msra.mxu0 0
    %5364 = vmatpush.bf16.msra.mxu0 %v113
    %5365 = vmatpush.bf16.msra.mxu0 %v112
    %5366 = vmatmul.bf16.gmra.mxu0 %v5343
    %v5367 = vpop.f32.mrf.mxu0
    %v5368 = vadd.f32 %v5355, %v5367
    %v5369 = vpop.f32.mrf.mxu0
    %5370 = vdwg.mxu0
    %v5371 = vmax.f32 %v5368, 0.0
    %s5372 = scalar_lea.vmem %s0, 96
    %v5373 = vld [vmem:[%s5372] sm:$0x3]
    %5375 = vst [vmem:[#allocation1] ss:$9 sm:$0xff] %v5373
    %v5376 = vld [vmem:[#allocation1] sm:$0xff]
    %v5377 = vld [vmem:[#allocation1 + $0x9] sm:$0xff]
    %v5379 = vsel %vm124, %v5377, 0
    %5381 = vmatpush.bf16.msra.mxu0 %v111
    %5382 = vmatpush.bf16.msra.mxu0 %v110
    %5383 = vmatpush.bf16.msra.mxu0 %v109
    %5384 = vmatpush.bf16.msra.mxu0 %v108
    %5385 = vmatpush.bf16.msra.mxu0 %v107
    %5386 = vmatpush.bf16.msra.mxu0 %v106
    %5387 = vmatpush.bf16.msra.mxu0 %v105
    %5388 = vmatpush.bf16.msra.mxu0 %v104
    %5389 = vmatmul.bf16.gmra.mxu0 %v5376
    %v5390 = vpop.f32.mrf.mxu0
    %v5391 = vadd.f32 %v57, %v5390
    %v5392 = vpop.f32.mrf.mxu0
    %5393 = vdwg.mxu0
    %5394 = vmatpush.bf16.msra.mxu0 0
    %5395 = vmatpush.bf16.msra.mxu0 0
    %5396 = vmatpush.bf16.msra.mxu0 0
    %5397 = vmatpush.bf16.msra.mxu0 0
    %5398 = vmatpush.bf16.msra.mxu0 0
    %5399 = vmatpush.bf16.msra.mxu0 0
    %5400 = vmatpush.bf16.msra.mxu0 %v113
    %5401 = vmatpush.bf16.msra.mxu0 %v112
    %5402 = vmatmul.bf16.gmra.mxu0 %v5379
    %v5403 = vpop.f32.mrf.mxu0
    %v5404 = vadd.f32 %v5391, %v5403
    %v5405 = vpop.f32.mrf.mxu0
    %5406 = vdwg.mxu0
    %v5407 = vmax.f32 %v5404, 0.0
    %v5408 = vmax.f32 %v5371, %v5407
    %s5409 = scalar_lea.vmem %s0, 146
    %v5410 = vld [vmem:[%s5409] sm:$0x3]
    %5412 = vst [vmem:[#allocation1] ss:$9 sm:$0xff] %v5410
    %v5413 = vld [vmem:[#allocation1] sm:$0xff]
    %v5414 = vld [vmem:[#allocation1 + $0x9] sm:$0xff]
    %v5416 = vsel %vm124, %v5414, 0
    %5418 = vmatpush.bf16.msra.mxu0 %v111
    %5419 = vmatpush.bf16.msra.mxu0 %v110
    %5420 = vmatpush.bf16.msra.mxu0 %v109
    %5421 = vmatpush.bf16.msra.mxu0 %v108
    %5422 = vmatpush.bf16.msra.mxu0 %v107
    %5423 = vmatpush.bf16.msra.mxu0 %v106
    %5424 = vmatpush.bf16.msra.mxu0 %v105
    %5425 = vmatpush.bf16.msra.mxu0 %v104
    %5426 = vmatmul.bf16.gmra.mxu0 %v5413
    %v5427 = vpop.f32.mrf.mxu0
    %v5428 = vadd.f32 %v57, %v5427
    %v5429 = vpop.f32.mrf.mxu0
    %5430 = vdwg.mxu0
    %5431 = vmatpush.bf16.msra.mxu0 0
    %5432 = vmatpush.bf16.msra.mxu0 0
    %5433 = vmatpush.bf16.msra.mxu0 0
    %5434 = vmatpush.bf16.msra.mxu0 0
    %5435 = vmatpush.bf16.msra.mxu0 0
    %5436 = vmatpush.bf16.msra.mxu0 0
    %5437 = vmatpush.bf16.msra.mxu0 %v113
    %5438 = vmatpush.bf16.msra.mxu0 %v112
    %5439 = vmatmul.bf16.gmra.mxu0 %v5416
    %v5440 = vpop.f32.mrf.mxu0
    %v5441 = vadd.f32 %v5428, %v5440
    %v5442 = vpop.f32.mrf.mxu0
    %5443 = vdwg.mxu0
    %v5444 = vmax.f32 %v5441, 0.0
    %v5445 = vmax.f32 %v5408, %v5444
    %s5446 = scalar_lea.vmem %s0, 196
    %v5447 = vld [vmem:[%s5446] sm:$0x3]
    %5449 = vst [vmem:[#allocation1] ss:$9 sm:$0xff] %v5447
    %v5450 = vld [vmem:[#allocation1] sm:$0xff]
    %v5451 = vld [vmem:[#allocation1 + $0x9] sm:$0xff]
    %v5453 = vsel %vm124, %v5451, 0
    %5455 = vmatpush.bf16.msra.mxu0 %v111
    %5456 = vmatpush.bf16.msra.mxu0 %v110
    %5457 = vmatpush.bf16.msra.mxu0 %v109
    %5458 = vmatpush.bf16.msra.mxu0 %v108
    %5459 = vmatpush.bf16.msra.mxu0 %v107
    %5460 = vmatpush.bf16.msra.mxu0 %v106
    %5461 = vmatpush.bf16.msra.mxu0 %v105
    %5462 = vmatpush.bf16.msra.mxu0 %v104
    %5463 = vmatmul.bf16.gmra.mxu0 %v5450
    %v5464 = vpop.f32.mrf.mxu0
    %v5465 = vadd.f32 %v57, %v5464
    %v5466 = vpop.f32.mrf.mxu0
    %5467 = vdwg.mxu0
    %5468 = vmatpush.bf16.msra.mxu0 0
    %5469 = vmatpush.bf16.msra.mxu0 0
    %5470 = vmatpush.bf16.msra.mxu0 0
    %5471 = vmatpush.bf16.msra.mxu0 0
    %5472 = vmatpush.bf16.msra.mxu0 0
    %5473 = vmatpush.bf16.msra.mxu0 0
    %5474 = vmatpush.bf16.msra.mxu0 %v113
    %5475 = vmatpush.bf16.msra.mxu0 %v112
    %5476 = vmatmul.bf16.gmra.mxu0 %v5453
    %v5477 = vpop.f32.mrf.mxu0
    %v5478 = vadd.f32 %v5465, %v5477
    %v5479 = vpop.f32.mrf.mxu0
    %5480 = vdwg.mxu0
    %v5481 = vmax.f32 %v5478, 0.0
    %v5482 = vmax.f32 %v5445, %v5481
    %v5483 = vpack.c.bf16 %v5482, %v5482
    %s5484 = scalar_lea.vmem %s3, 1472
    %v5485 = vld [vmem:[%s5484] sm:$0xf]
    %v5486 = vld [vmem:[%s5484 + $0x4] sm:$0xf]
    %v5487 = vld [vmem:[%s5484 + $0x8] sm:$0xf]
    %v5488 = vld [vmem:[%s5484 + $0xc] sm:$0xf]
    %v5489 = vld [vmem:[%s5484 + $0x10] sm:$0xf]
    %v5490 = vld [vmem:[%s5484 + $0x14] sm:$0xf]
    %v5491 = vld [vmem:[%s5484 + $0x18] sm:$0xf]
    %v5492 = vld [vmem:[%s5484 + $0x1c] sm:$0xf]
    %v5493 = vld [vmem:[%s5484 + $0x20] sm:$0xf]
    %v5494 = vld [vmem:[%s5484 + $0x24] sm:$0xf]
    %v5495 = vld [vmem:[%s5484 + $0x28] sm:$0xf]
    %v5496 = vld [vmem:[%s5484 + $0x2c] sm:$0xf]
    %v5497 = vld [vmem:[%s5484 + $0x30] sm:$0xf]
    %v5498 = vld [vmem:[%s5484 + $0x34] sm:$0xf]
    %v5499 = vld [vmem:[%s5484 + $0x38] sm:$0xf]
    %v5500 = vld [vmem:[%s5484 + $0x3c] sm:$0xf]
    %v5517 = vunpack.c.l.b16 %v5485
    %v5518 = vunpack.c.l.b16 %v5486
    %v5519 = vunpack.c.l.b16 %v5487
    %v5520 = vunpack.c.l.b16 %v5488
    %v5521 = vunpack.c.l.b16 %v5489
    %v5522 = vunpack.c.l.b16 %v5490
    %v5523 = vunpack.c.l.b16 %v5491
    %v5524 = vunpack.c.l.b16 %v5492
    %v5525 = vunpack.c.l.b16 %v5493
    %v5526 = vunpack.c.l.b16 %v5494
    %v5527 = vunpack.c.l.b16 %v5495
    %v5528 = vunpack.c.l.b16 %v5496
    %v5529 = vunpack.c.l.b16 %v5497
    %v5530 = vunpack.c.l.b16 %v5498
    %v5531 = vunpack.c.l.b16 %v5499
    %v5532 = vunpack.c.l.b16 %v5500
    %v5533 = vpack.c.b16 %v5518, %v5517
    %v5534 = vpack.c.b16 %v5520, %v5519
    %v5535 = vpack.c.b16 %v5522, %v5521
    %v5536 = vpack.c.b16 %v5524, %v5523
    %v5537 = vpack.c.b16 %v5526, %v5525
    %v5538 = vpack.c.b16 %v5528, %v5527
    %v5539 = vpack.c.b16 %v5530, %v5529
    %v5540 = vpack.c.b16 %v5532, %v5531
    %5549 = vmatpush.bf16.msra.mxu0 %v5540
    %5550 = vmatpush.bf16.msra.mxu0 %v5539
    %5551 = vmatpush.bf16.msra.mxu0 %v5538
    %5552 = vmatpush.bf16.msra.mxu0 %v5537
    %5553 = vmatpush.bf16.msra.mxu0 %v5536
    %5554 = vmatpush.bf16.msra.mxu0 %v5535
    %5555 = vmatpush.bf16.msra.mxu0 %v5534
    %5556 = vmatpush.bf16.msra.mxu0 %v5533
    %5557 = vmatmul.bf16.gmra.mxu0 %v5483
    %v5558 = vpop.f32.mrf.mxu0
    %v5559 = vadd.f32 0.0, %v5558
    %v5560 = vpop.f32.mrf.mxu0
    %5561 = vdwg.mxu0
    %v5562 = vadd.f32 %v5335, %v5559
    %s5563 = scalar_lea.vmem %s0, 48
    %v5564 = vld [vmem:[%s5563] sm:$0x3]
    %5566 = vst [vmem:[#allocation1] ss:$9 sm:$0xff] %v5564
    %v5567 = vld [vmem:[#allocation1] sm:$0xff]
    %v5568 = vld [vmem:[#allocation1 + $0x9] sm:$0xff]
    %v5570 = vsel %vm124, %v5568, 0
    %5572 = vmatpush.bf16.msra.mxu0 %v111
    %5573 = vmatpush.bf16.msra.mxu0 %v110
    %5574 = vmatpush.bf16.msra.mxu0 %v109
    %5575 = vmatpush.bf16.msra.mxu0 %v108
    %5576 = vmatpush.bf16.msra.mxu0 %v107
    %5577 = vmatpush.bf16.msra.mxu0 %v106
    %5578 = vmatpush.bf16.msra.mxu0 %v105
    %5579 = vmatpush.bf16.msra.mxu0 %v104
    %5580 = vmatmul.bf16.gmra.mxu0 %v5567
    %v5581 = vpop.f32.mrf.mxu0
    %v5582 = vadd.f32 %v57, %v5581
    %v5583 = vpop.f32.mrf.mxu0
    %5584 = vdwg.mxu0
    %5585 = vmatpush.bf16.msra.mxu0 0
    %5586 = vmatpush.bf16.msra.mxu0 0
    %5587 = vmatpush.bf16.msra.mxu0 0
    %5588 = vmatpush.bf16.msra.mxu0 0
    %5589 = vmatpush.bf16.msra.mxu0 0
    %5590 = vmatpush.bf16.msra.mxu0 0
    %5591 = vmatpush.bf16.msra.mxu0 %v113
    %5592 = vmatpush.bf16.msra.mxu0 %v112
    %5593 = vmatmul.bf16.gmra.mxu0 %v5570
    %v5594 = vpop.f32.mrf.mxu0
    %v5595 = vadd.f32 %v5582, %v5594
    %v5596 = vpop.f32.mrf.mxu0
    %5597 = vdwg.mxu0
    %v5598 = vmax.f32 %v5595, 0.0
    %s5599 = scalar_lea.vmem %s0, 98
    %v5600 = vld [vmem:[%s5599] sm:$0x3]
    %5602 = vst [vmem:[#allocation1] ss:$9 sm:$0xff] %v5600
    %v5603 = vld [vmem:[#allocation1] sm:$0xff]
    %v5604 = vld [vmem:[#allocation1 + $0x9] sm:$0xff]
    %v5606 = vsel %vm124, %v5604, 0
    %5608 = vmatpush.bf16.msra.mxu0 %v111
    %5609 = vmatpush.bf16.msra.mxu0 %v110
    %5610 = vmatpush.bf16.msra.mxu0 %v109
    %5611 = vmatpush.bf16.msra.mxu0 %v108
    %5612 = vmatpush.bf16.msra.mxu0 %v107
    %5613 = vmatpush.bf16.msra.mxu0 %v106
    %5614 = vmatpush.bf16.msra.mxu0 %v105
    %5615 = vmatpush.bf16.msra.mxu0 %v104
    %5616 = vmatmul.bf16.gmra.mxu0 %v5603
    %v5617 = vpop.f32.mrf.mxu0
    %v5618 = vadd.f32 %v57, %v5617
    %v5619 = vpop.f32.mrf.mxu0
    %5620 = vdwg.mxu0
    %5621 = vmatpush.bf16.msra.mxu0 0
    %5622 = vmatpush.bf16.msra.mxu0 0
    %5623 = vmatpush.bf16.msra.mxu0 0
    %5624 = vmatpush.bf16.msra.mxu0 0
    %5625 = vmatpush.bf16.msra.mxu0 0
    %5626 = vmatpush.bf16.msra.mxu0 0
    %5627 = vmatpush.bf16.msra.mxu0 %v113
    %5628 = vmatpush.bf16.msra.mxu0 %v112
    %5629 = vmatmul.bf16.gmra.mxu0 %v5606
    %v5630 = vpop.f32.mrf.mxu0
    %v5631 = vadd.f32 %v5618, %v5630
    %v5632 = vpop.f32.mrf.mxu0
    %5633 = vdwg.mxu0
    %v5634 = vmax.f32 %v5631, 0.0
    %v5635 = vmax.f32 %v5598, %v5634
    %s5636 = scalar_lea.vmem %s0, 148
    %v5637 = vld [vmem:[%s5636] sm:$0x3]
    %5639 = vst [vmem:[#allocation1] ss:$9 sm:$0xff] %v5637
    %v5640 = vld [vmem:[#allocation1] sm:$0xff]
    %v5641 = vld [vmem:[#allocation1 + $0x9] sm:$0xff]
    %v5643 = vsel %vm124, %v5641, 0
    %5645 = vmatpush.bf16.msra.mxu0 %v111
    %5646 = vmatpush.bf16.msra.mxu0 %v110
    %5647 = vmatpush.bf16.msra.mxu0 %v109
    %5648 = vmatpush.bf16.msra.mxu0 %v108
    %5649 = vmatpush.bf16.msra.mxu0 %v107
    %5650 = vmatpush.bf16.msra.mxu0 %v106
    %5651 = vmatpush.bf16.msra.mxu0 %v105
    %5652 = vmatpush.bf16.msra.mxu0 %v104
    %5653 = vmatmul.bf16.gmra.mxu0 %v5640
    %v5654 = vpop.f32.mrf.mxu0
    %v5655 = vadd.f32 %v57, %v5654
    %v5656 = vpop.f32.mrf.mxu0
    %5657 = vdwg.mxu0
    %5658 = vmatpush.bf16.msra.mxu0 0
    %5659 = vmatpush.bf16.msra.mxu0 0
    %5660 = vmatpush.bf16.msra.mxu0 0
    %5661 = vmatpush.bf16.msra.mxu0 0
    %5662 = vmatpush.bf16.msra.mxu0 0
    %5663 = vmatpush.bf16.msra.mxu0 0
    %5664 = vmatpush.bf16.msra.mxu0 %v113
    %5665 = vmatpush.bf16.msra.mxu0 %v112
    %5666 = vmatmul.bf16.gmra.mxu0 %v5643
    %v5667 = vpop.f32.mrf.mxu0
    %v5668 = vadd.f32 %v5655, %v5667
    %v5669 = vpop.f32.mrf.mxu0
    %5670 = vdwg.mxu0
    %v5671 = vmax.f32 %v5668, 0.0
    %v5672 = vmax.f32 %v5635, %v5671
    %s5673 = scalar_lea.vmem %s0, 198
    %v5674 = vld [vmem:[%s5673] sm:$0x3]
    %5676 = vst [vmem:[#allocation1] ss:$9 sm:$0xff] %v5674
    %v5677 = vld [vmem:[#allocation1] sm:$0xff]
    %v5678 = vld [vmem:[#allocation1 + $0x9] sm:$0xff]
    %v5680 = vsel %vm124, %v5678, 0
    %5682 = vmatpush.bf16.msra.mxu0 %v111
    %5683 = vmatpush.bf16.msra.mxu0 %v110
    %5684 = vmatpush.bf16.msra.mxu0 %v109
    %5685 = vmatpush.bf16.msra.mxu0 %v108
    %5686 = vmatpush.bf16.msra.mxu0 %v107
    %5687 = vmatpush.bf16.msra.mxu0 %v106
    %5688 = vmatpush.bf16.msra.mxu0 %v105
    %5689 = vmatpush.bf16.msra.mxu0 %v104
    %5690 = vmatmul.bf16.gmra.mxu0 %v5677
    %v5691 = vpop.f32.mrf.mxu0
    %v5692 = vadd.f32 %v57, %v5691
    %v5693 = vpop.f32.mrf.mxu0
    %5694 = vdwg.mxu0
    %5695 = vmatpush.bf16.msra.mxu0 0
    %5696 = vmatpush.bf16.msra.mxu0 0
    %5697 = vmatpush.bf16.msra.mxu0 0
    %5698 = vmatpush.bf16.msra.mxu0 0
    %5699 = vmatpush.bf16.msra.mxu0 0
    %5700 = vmatpush.bf16.msra.mxu0 0
    %5701 = vmatpush.bf16.msra.mxu0 %v113
    %5702 = vmatpush.bf16.msra.mxu0 %v112
    %5703 = vmatmul.bf16.gmra.mxu0 %v5680
    %v5704 = vpop.f32.mrf.mxu0
    %v5705 = vadd.f32 %v5692, %v5704
    %v5706 = vpop.f32.mrf.mxu0
    %5707 = vdwg.mxu0
    %v5708 = vmax.f32 %v5705, 0.0
    %v5709 = vmax.f32 %v5672, %v5708
    %v5710 = vpack.c.bf16 %v5709, %v5709
    %s5711 = scalar_lea.vmem %s3, 1536
    %v5712 = vld [vmem:[%s5711] sm:$0xf]
    %v5713 = vld [vmem:[%s5711 + $0x4] sm:$0xf]
    %v5714 = vld [vmem:[%s5711 + $0x8] sm:$0xf]
    %v5715 = vld [vmem:[%s5711 + $0xc] sm:$0xf]
    %v5716 = vld [vmem:[%s5711 + $0x10] sm:$0xf]
    %v5717 = vld [vmem:[%s5711 + $0x14] sm:$0xf]
    %v5718 = vld [vmem:[%s5711 + $0x18] sm:$0xf]
    %v5719 = vld [vmem:[%s5711 + $0x1c] sm:$0xf]
    %v5720 = vld [vmem:[%s5711 + $0x20] sm:$0xf]
    %v5721 = vld [vmem:[%s5711 + $0x24] sm:$0xf]
    %v5722 = vld [vmem:[%s5711 + $0x28] sm:$0xf]
    %v5723 = vld [vmem:[%s5711 + $0x2c] sm:$0xf]
    %v5724 = vld [vmem:[%s5711 + $0x30] sm:$0xf]
    %v5725 = vld [vmem:[%s5711 + $0x34] sm:$0xf]
    %v5726 = vld [vmem:[%s5711 + $0x38] sm:$0xf]
    %v5727 = vld [vmem:[%s5711 + $0x3c] sm:$0xf]
    %v5744 = vunpack.c.l.b16 %v5712
    %v5745 = vunpack.c.l.b16 %v5713
    %v5746 = vunpack.c.l.b16 %v5714
    %v5747 = vunpack.c.l.b16 %v5715
    %v5748 = vunpack.c.l.b16 %v5716
    %v5749 = vunpack.c.l.b16 %v5717
    %v5750 = vunpack.c.l.b16 %v5718
    %v5751 = vunpack.c.l.b16 %v5719
    %v5752 = vunpack.c.l.b16 %v5720
    %v5753 = vunpack.c.l.b16 %v5721
    %v5754 = vunpack.c.l.b16 %v5722
    %v5755 = vunpack.c.l.b16 %v5723
    %v5756 = vunpack.c.l.b16 %v5724
    %v5757 = vunpack.c.l.b16 %v5725
    %v5758 = vunpack.c.l.b16 %v5726
    %v5759 = vunpack.c.l.b16 %v5727
    %v5760 = vpack.c.b16 %v5745, %v5744
    %v5761 = vpack.c.b16 %v5747, %v5746
    %v5762 = vpack.c.b16 %v5749, %v5748
    %v5763 = vpack.c.b16 %v5751, %v5750
    %v5764 = vpack.c.b16 %v5753, %v5752
    %v5765 = vpack.c.b16 %v5755, %v5754
    %v5766 = vpack.c.b16 %v5757, %v5756
    %v5767 = vpack.c.b16 %v5759, %v5758
    %5776 = vmatpush.bf16.msra.mxu0 %v5767
    %5777 = vmatpush.bf16.msra.mxu0 %v5766
    %5778 = vmatpush.bf16.msra.mxu0 %v5765
    %5779 = vmatpush.bf16.msra.mxu0 %v5764
    %5780 = vmatpush.bf16.msra.mxu0 %v5763
    %5781 = vmatpush.bf16.msra.mxu0 %v5762
    %5782 = vmatpush.bf16.msra.mxu0 %v5761
    %5783 = vmatpush.bf16.msra.mxu0 %v5760
    %5784 = vmatmul.bf16.gmra.mxu0 %v5710
    %v5785 = vpop.f32.mrf.mxu0
    %v5786 = vadd.f32 0.0, %v5785
    %v5787 = vpop.f32.mrf.mxu0
    %5788 = vdwg.mxu0
    %v5789 = vadd.f32 %v5562, %v5786
    %v5790 = vld [vmem:[%s4] sm:$0x1]
    %v5792 = vperm.slane %v5790, 0
    %v5794 = vadd.f32 %v5789, %v5792
    %v5795 = vmax.f32 %v5794, 0.0
    %v5796 = vpack.c.bf16 %v5795, %v5795
    %v5797 = vld [vmem:[%s5] sm:$0xf]
    %v5798 = vld [vmem:[%s5 + $0x4] sm:$0xf]
    %v5799 = vld [vmem:[%s5 + $0x8] sm:$0xf]
    %v5800 = vld [vmem:[%s5 + $0xc] sm:$0xf]
    %v5801 = vld [vmem:[%s5 + $0x10] sm:$0xf]
    %v5802 = vld [vmem:[%s5 + $0x14] sm:$0xf]
    %v5803 = vld [vmem:[%s5 + $0x18] sm:$0xf]
    %v5804 = vld [vmem:[%s5 + $0x1c] sm:$0xf]
    %v5805 = vld [vmem:[%s5 + $0x20] sm:$0xf]
    %v5806 = vld [vmem:[%s5 + $0x24] sm:$0xf]
    %v5807 = vld [vmem:[%s5 + $0x28] sm:$0xf]
    %v5808 = vld [vmem:[%s5 + $0x2c] sm:$0xf]
    %v5809 = vld [vmem:[%s5 + $0x30] sm:$0xf]
    %v5810 = vld [vmem:[%s5 + $0x34] sm:$0xf]
    %v5811 = vld [vmem:[%s5 + $0x38] sm:$0xf]
    %v5812 = vld [vmem:[%s5 + $0x3c] sm:$0xf]
    %v5813 = vld [vmem:[%s6] sm:$0x1]
    %v5815 = vperm.slane %v5813, 0
    %v5833 = vunpack.c.l.b16 %v5797
    %v5834 = vunpack.c.l.b16 %v5798
    %v5835 = vunpack.c.l.b16 %v5799
    %v5836 = vunpack.c.l.b16 %v5800
    %v5837 = vunpack.c.l.b16 %v5801
    %v5838 = vunpack.c.l.b16 %v5802
    %v5839 = vunpack.c.l.b16 %v5803
    %v5840 = vunpack.c.l.b16 %v5804
    %v5841 = vunpack.c.l.b16 %v5805
    %v5842 = vunpack.c.l.b16 %v5806
    %v5843 = vunpack.c.l.b16 %v5807
    %v5844 = vunpack.c.l.b16 %v5808
    %v5845 = vunpack.c.l.b16 %v5809
    %v5846 = vunpack.c.l.b16 %v5810
    %v5847 = vunpack.c.l.b16 %v5811
    %v5848 = vunpack.c.l.b16 %v5812
    %v5849 = vpack.c.b16 %v5834, %v5833
    %v5850 = vpack.c.b16 %v5836, %v5835
    %v5851 = vpack.c.b16 %v5838, %v5837
    %v5852 = vpack.c.b16 %v5840, %v5839
    %v5853 = vpack.c.b16 %v5842, %v5841
    %v5854 = vpack.c.b16 %v5844, %v5843
    %v5855 = vpack.c.b16 %v5846, %v5845
    %v5856 = vpack.c.b16 %v5848, %v5847
    %5865 = vmatpush.bf16.msra.mxu0 %v5856
    %5866 = vmatpush.bf16.msra.mxu0 %v5855
    %5867 = vmatpush.bf16.msra.mxu0 %v5854
    %5868 = vmatpush.bf16.msra.mxu0 %v5853
    %5869 = vmatpush.bf16.msra.mxu0 %v5852
    %5870 = vmatpush.bf16.msra.mxu0 %v5851
    %5871 = vmatpush.bf16.msra.mxu0 %v5850
    %5872 = vmatpush.bf16.msra.mxu0 %v5849
    %5873 = vmatmul.bf16.gmra.mxu0 %v5796
    %v5874 = vpop.f32.mrf.mxu0
    %v5875 = vadd.f32 %v5815, %v5874
    %v5876 = vpop.f32.mrf.mxu0
    %5877 = vdwg.mxu0
    %v5878 = vmax.f32 %v5875, 0.0
    %v5879 = vpack.c.bf16 %v5878, %v5878
    %v5880 = vld [vmem:[%s7] sm:$0xf]
    %v5881 = vld [vmem:[%s7 + $0x4] sm:$0xf]
    %v5882 = vld [vmem:[%s7 + $0x8] sm:$0xf]
    %v5883 = vld [vmem:[%s7 + $0xc] sm:$0xf]
    %v5884 = vld [vmem:[%s7 + $0x10] sm:$0xf]
    %v5885 = vld [vmem:[%s7 + $0x14] sm:$0xf]
    %v5886 = vld [vmem:[%s7 + $0x18] sm:$0xf]
    %v5887 = vld [vmem:[%s7 + $0x1c] sm:$0xf]
    %v5888 = vld [vmem:[%s7 + $0x20] sm:$0xf]
    %v5889 = vld [vmem:[%s7 + $0x24] sm:$0xf]
    %v5890 = vld [vmem:[%s7 + $0x28] sm:$0xf]
    %v5891 = vld [vmem:[%s7 + $0x2c] sm:$0xf]
    %v5892 = vld [vmem:[%s7 + $0x30] sm:$0xf]
    %v5893 = vld [vmem:[%s7 + $0x34] sm:$0xf]
    %v5894 = vld [vmem:[%s7 + $0x38] sm:$0xf]
    %v5895 = vld [vmem:[%s7 + $0x3c] sm:$0xf]
    %v5896 = vld [vmem:[%s8] sm:$0x1]
    %v5898 = vperm.slane %v5896, 0
    %v5916 = vunpack.c.l.b16 %v5880
    %v5917 = vunpack.c.l.b16 %v5881
    %v5918 = vunpack.c.l.b16 %v5882
    %v5919 = vunpack.c.l.b16 %v5883
    %v5920 = vunpack.c.l.b16 %v5884
    %v5921 = vunpack.c.l.b16 %v5885
    %v5922 = vunpack.c.l.b16 %v5886
    %v5923 = vunpack.c.l.b16 %v5887
    %v5924 = vunpack.c.l.b16 %v5888
    %v5925 = vunpack.c.l.b16 %v5889
    %v5926 = vunpack.c.l.b16 %v5890
    %v5927 = vunpack.c.l.b16 %v5891
    %v5928 = vunpack.c.l.b16 %v5892
    %v5929 = vunpack.c.l.b16 %v5893
    %v5930 = vunpack.c.l.b16 %v5894
    %v5931 = vunpack.c.l.b16 %v5895
    %v5932 = vpack.c.b16 %v5917, %v5916
    %v5933 = vpack.c.b16 %v5919, %v5918
    %v5934 = vpack.c.b16 %v5921, %v5920
    %v5935 = vpack.c.b16 %v5923, %v5922
    %v5936 = vpack.c.b16 %v5925, %v5924
    %v5937 = vpack.c.b16 %v5927, %v5926
    %v5938 = vpack.c.b16 %v5929, %v5928
    %v5939 = vpack.c.b16 %v5931, %v5930
    %5948 = vmatpush.bf16.msra.mxu0 %v5939
    %5949 = vmatpush.bf16.msra.mxu0 %v5938
    %5950 = vmatpush.bf16.msra.mxu0 %v5937
    %5951 = vmatpush.bf16.msra.mxu0 %v5936
    %5952 = vmatpush.bf16.msra.mxu0 %v5935
    %5953 = vmatpush.bf16.msra.mxu0 %v5934
    %5954 = vmatpush.bf16.msra.mxu0 %v5933
    %5955 = vmatpush.bf16.msra.mxu0 %v5932
    %5956 = vmatmul.bf16.gmra.mxu0 %v5879
    %v5957 = vpop.f32.mrf.mxu0
    %v5958 = vadd.f32 %v5898, %v5957
    %v5959 = vpop.f32.mrf.mxu0
    %5960 = vdwg.mxu0
    %5961 = vst [vmem:[#allocation2] sm:$0x3] %v5958
    // Predicated region
    $region38: #{net_forward.3} parent=1 // pred_check
      _
    $region39: #{net_forward.3} parent=1 // pred_check_branch
      %5963 = sbr.rel (0) target = $region41
    $region40: #{net_forward.3} parent=1 // pred_region
      %5965 = vsyncadd [#allocation3], 0
      %s5967 = sshll.u32 [#allocation2], 4
      %s5968 = int_to_ptr.vmem [resolvable:$true] %s5967
      %s5969 = sshll.u32 %s9, 4
      %s5970 = int_to_ptr.hbm [resolvable:$true] %s5969
      %5972 = dma.vmem_to_hbm [thread:$0]  %s5968, 32, %s5970, [#allocation3]
    $region41: #{net_forward.3} parent=1 // pred_fallthru
      _
    // Predicated region
    $region42: #{net_forward.3} parent=1 // pred_check
      _
    $region43: #{net_forward.3} parent=1 // pred_check_branch
      %5974 = sbr.rel (0) target = $region45
    $region44: #{net_forward.3} parent=1 // pred_region
      %5976 = dma.done [#allocation3], 32
    $region45: #{net_forward.3} parent=1 // pred_fallthru
      _
    %5977 = vsyncpa [#allocation3], 1

</llo_original>
